<compile_context>
chip_gen: v7x
topology: tpu7x:2x2x1
jax: 0.10.0
libtpu: 0.0.40
codegen_flags: <defaults>
</compile_context>

<pallas_src>
import functools

import jax
import jax.numpy as jnp
from jax import lax
from jax.experimental import pallas as pl
from jax.experimental.pallas import tpu as pltpu

HEAD_SIZE = 64
HEAD_SIZE_DIVISOR = 8
LN_X_EPS = 1e-5 * (HEAD_SIZE_DIVISOR ** 2)   # GroupNorm eps used by ln_x
CHUNK_LEN = 16                               # T must be a multiple of this (reference contract)

_ROW_TILES = (512, 256, 128, 64, 32, 16, 8)
_COL_TILES = (512, 256, 128)


def _pick_div(n, prefs):
    for t in prefs:
        if t <= n and n % t == 0:
            return t
    return n


# ----------------------------- in-kernel math helpers -----------------------------

def _sigmoid(z):
    return 1.0 / (1.0 + jnp.exp(-z))


def _neg_softplus_neg(z):
    # -softplus(-z) - 0.5, stable, built only from exp/log/abs/max (guaranteed Mosaic lowering).
    return -(jnp.maximum(-z, 0.0) + jnp.log(1.0 + jnp.exp(-jnp.abs(z)))) - 0.5


# ----------------------------- Pallas kernels -------------------------------

def _mix_matmul_kernel(x_ref, xx_ref, m_ref, w_ref, o_ref):
    """(x + xx*m) @ W with bf16 MXU operands, f32 accumulation."""
    xm = x_ref[...].astype(jnp.float32) + xx_ref[...].astype(jnp.float32) * m_ref[...]
    o_ref[...] = jnp.dot(xm.astype(jnp.bfloat16), w_ref[...],
                         preferred_element_type=jnp.float32).astype(o_ref.dtype)


def _gated_matmul_kernel(y_ref, g_ref, w_ref, o_ref):
    """(y * g) @ W with bf16 MXU operands."""
    prod = y_ref[...].astype(jnp.float32) * g_ref[...].astype(jnp.float32)
    o_ref[...] = jnp.dot(prod.astype(jnp.bfloat16), w_ref[...],
                         preferred_element_type=jnp.float32).astype(o_ref.dtype)


def _mix_lora_kernel(x_ref, xx_ref, m_ref, w1_ref, w2_ref, b0_ref, o_ref, *, inner, outer):
    """Fused time-shift mix + LoRA pair + activation epilogue:
       out = outer(b0 + inner((x + xx*m) @ w1) @ w2)."""
    xm = x_ref[...].astype(jnp.float32) + xx_ref[...].astype(jnp.float32) * m_ref[...]
    h = jnp.dot(xm.astype(jnp.bfloat16), w1_ref[...], preferred_element_type=jnp.float32)
    if inner == "tanh":
        h = jnp.tanh(h)
    elif inner == "sigmoid":
        h = _sigmoid(h)
    z = jnp.dot(h.astype(jnp.bfloat16), w2_ref[...], preferred_element_type=jnp.float32)
    z = z + b0_ref[...]
    if outer == "sigmoid":
        z = _sigmoid(z)
    elif outer == "softclamp":        # -softplus(-z) - 0.5  (the RWKV-7 decay clamp)
        z = _neg_softplus_neg(z)
    o_ref[...] = z.astype(o_ref.dtype)


def _layernorm_kernel(x_ref, g_ref, b_ref, o_ref, *, eps):
    x = x_ref[...].astype(jnp.float32)
    mean = jnp.mean(x, axis=-1, keepdims=True)
    xc = x - mean
    var = jnp.mean(xc * xc, axis=-1, keepdims=True)
    o_ref[...] = (xc * lax.rsqrt(var + eps) * g_ref[...] + b_ref[...]).astype(o_ref.dtype)


def _groupnorm_kernel(x_ref, gavg_ref, gsel_ref, gamma_ref, beta_ref, o_ref, *, eps):
    """GroupNorm on lane-dense (rows, C) tiles; per-group stats via tiny MXU matmuls."""
    x = x_ref[...].astype(jnp.float32)
    gavg = gavg_ref[...]                      # (C, G): 1/N on own group, else 0
    gsel = gsel_ref[...]                      # (G, C): 0/1 group selector
    mean_g = jnp.dot(x, gavg, preferred_element_type=jnp.float32)        # (rows, G)
    ex2_g = jnp.dot(x * x, gavg, preferred_element_type=jnp.float32)     # (rows, G)
    mean = jnp.dot(mean_g, gsel, preferred_element_type=jnp.float32)     # (rows, C)
    ex2 = jnp.dot(ex2_g, gsel, preferred_element_type=jnp.float32)       # (rows, C)
    var = jnp.maximum(ex2 - mean * mean, 0.0)
    y = (x - mean) * lax.rsqrt(var + eps)
    o_ref[...] = (y * gamma_ref[...] + beta_ref[...]).astype(o_ref.dtype)


def _cmix_kernel(x_ref, xx_ref, m_ref, wk_ref, wv_ref, o_ref, acc_ref):
    """Channel-mix: value(relu(key(x + xx*m))^2), hidden dim tiled with f32 accumulator."""
    @pl.when(pl.program_id(1) == 0)
    def _():
        acc_ref[...] = jnp.zeros_like(acc_ref)

    xm = x_ref[...].astype(jnp.float32) + xx_ref[...].astype(jnp.float32) * m_ref[...]
    h = jnp.dot(xm.astype(jnp.bfloat16), wk_ref[...], preferred_element_type=jnp.float32)
    h = jnp.maximum(h, 0.0)
    h = h * h
    acc_ref[...] += jnp.dot(h.astype(jnp.bfloat16), wv_ref[...],
                            preferred_element_type=jnp.float32)

    @pl.when(pl.program_id(1) == pl.num_programs(1) - 1)
    def _():
        o_ref[...] = acc_ref[...].astype(o_ref.dtype)


def _wkv7_kernel(w_ref, q_ref, k_ref, v_ref, a_ref, b_ref, y_ref, *, blk_heads):
    """RWKV-7 recurrence.  Block layout is (T, blk_heads*64); for blk_heads=2 two independent
       64x64 head states sit side-by-side in one (64, 128) f32 S so every op is 128-lane dense.
       S <- S * diag(exp(-exp(w_t))) + v_t k_t^T + (S a_t) b_t^T ;  y_t = S q_t  (per head)."""
    T, L = y_ref.shape
    N = L // blk_heads
    nchunks = T // CHUNK_LEN

    if blk_heads == 2:
        lane = lax.broadcasted_iota(jnp.int32, (1, L), 1)
        left = lane < N                                    # lanes 0..N-1 = head 0 of the pair

    def chunk_body(c, S):
        base = pl.multiple_of(c * CHUNK_LEN, CHUNK_LEN)
        dc = jnp.exp(-jnp.exp(w_ref[pl.ds(base, CHUNK_LEN), :].astype(jnp.float32)))
        qc = q_ref[pl.ds(base, CHUNK_LEN), :].astype(jnp.float32)
        kc = k_ref[pl.ds(base, CHUNK_LEN), :].astype(jnp.float32)
        vc = v_ref[pl.ds(base, CHUNK_LEN), :].astype(jnp.float32)
        ac = a_ref[pl.ds(base, CHUNK_LEN), :].astype(jnp.float32)
        bc = b_ref[pl.ds(base, CHUNK_LEN), :].astype(jnp.float32)

        rows = []
        for t in range(CHUNK_LEN):                         # unrolled inner loop
            wt = dc[t:t + 1, :]
            qt = qc[t:t + 1, :]
            kt = kc[t:t + 1, :]
            at = ac[t:t + 1, :]
            bt = bc[t:t + 1, :]
            if blk_heads == 1:
                vt = jnp.transpose(vc[t:t + 1, :])                         # (N, 1)
                sa = jnp.sum(S * at, axis=1, keepdims=True)                # (N, 1)
                S = S * wt + vt * kt + sa * bt
                rows.append(jnp.transpose(jnp.sum(S * qt, axis=1, keepdims=True)))
            else:
                vcol = jnp.transpose(vc[t:t + 1, :])                       # (2N, 1)
                vsel = jnp.where(left, vcol[0:N, :], vcol[N:, :])          # (N, 2N)
                P = S * at
                sl = jnp.sum(jnp.where(left, P, 0.0), axis=1, keepdims=True)
                sr = jnp.sum(P, axis=1, keepdims=True) - sl
                ssel = jnp.where(left, sl, sr)                             # (N, 2N)
                S = S * wt + vsel * kt + ssel * bt
                Q = S * qt
                yl = jnp.sum(jnp.where(left, Q, 0.0), axis=1, keepdims=True)
                yr = jnp.sum(Q, axis=1, keepdims=True) - yl
                rows.append(jnp.transpose(jnp.concatenate([yl, yr], axis=0)))   # (1, 2N)
        y_ref[pl.ds(base, CHUNK_LEN), :] = jnp.concatenate(rows, axis=0).astype(y_ref.dtype)
        return S

    lax.fori_loop(0, nchunks, chunk_body, jnp.zeros((N, L), jnp.float32))


# ------------------------------ kernel wrappers -------------------------------

def mix_matmul(x2d, xx2d, m, w, out_dtype=jnp.bfloat16):
    M, C = x2d.shape
    Nw = w.shape[1]
    tm = _pick_div(M, _ROW_TILES)
    tn = _pick_div(Nw, _COL_TILES)
    return pl.pallas_call(
        _mix_matmul_kernel,
        out_shape=jax.ShapeDtypeStruct((M, Nw), out_dtype),
        grid=(M // tm, Nw // tn),
        in_specs=[pl.BlockSpec((tm, C), lambda i, j: (i, 0)),
                  pl.BlockSpec((tm, C), lambda i, j: (i, 0)),
                  pl.BlockSpec((1, C), lambda i, j: (0, 0)),
                  pl.BlockSpec((C, tn), lambda i, j: (0, j))],
        out_specs=pl.BlockSpec((tm, tn), lambda i, j: (i, j)),
        compiler_params=pltpu.CompilerParams(dimension_semantics=("parallel", "parallel")),
    )(x2d, xx2d, m.reshape(1, C), w)


def gated_matmul(y2d, g2d, w, out_dtype=jnp.float32):
    M, C = y2d.shape
    Nw = w.shape[1]
    tm = _pick_div(M, _ROW_TILES)
    tn = _pick_div(Nw, _COL_TILES)
    return pl.pallas_call(
        _gated_matmul_kernel,
        out_shape=jax.ShapeDtypeStruct((M, Nw), out_dtype),
        grid=(M // tm, Nw // tn),
        in_specs=[pl.BlockSpec((tm, C), lambda i, j: (i, 0)),
                  pl.BlockSpec((tm, C), lambda i, j: (i, 0)),
                  pl.BlockSpec((C, tn), lambda i, j: (0, j))],
        out_specs=pl.BlockSpec((tm, tn), lambda i, j: (i, j)),
        compiler_params=pltpu.CompilerParams(dimension_semantics=("parallel", "parallel")),
    )(y2d, g2d, w)


def mix_lora(x2d, xx2d, m, w1, w2, b0, *, inner, outer, out_dtype):
    M, C = x2d.shape
    D = w1.shape[1]
    tm = _pick_div(M, _ROW_TILES)
    return pl.pallas_call(
        functools.partial(_mix_lora_kernel, inner=inner, outer=outer),
        out_shape=jax.ShapeDtypeStruct((M, C), out_dtype),
        grid=(M // tm,),
        in_specs=[pl.BlockSpec((tm, C), lambda i: (i, 0)),
                  pl.BlockSpec((tm, C), lambda i: (i, 0)),
                  pl.BlockSpec((1, C), lambda i: (0, 0)),
                  pl.BlockSpec((C, D), lambda i: (0, 0)),
                  pl.BlockSpec((D, C), lambda i: (0, 0)),
                  pl.BlockSpec((1, C), lambda i: (0, 0))],
        out_specs=pl.BlockSpec((tm, C), lambda i: (i, 0)),
        compiler_params=pltpu.CompilerParams(dimension_semantics=("parallel",)),
    )(x2d, xx2d, m.reshape(1, C), w1, w2, b0.reshape(1, C))


def layer_norm(x, gamma, beta, eps=1e-5):
    B, T, C = x.shape
    M = B * T
    tm = _pick_div(M, _ROW_TILES)
    y = pl.pallas_call(
        functools.partial(_layernorm_kernel, eps=eps),
        out_shape=jax.ShapeDtypeStruct((M, C), jnp.float32),
        grid=(M // tm,),
        in_specs=[pl.BlockSpec((tm, C), lambda i: (i, 0)),
                  pl.BlockSpec((1, C), lambda i: (0, 0)),
                  pl.BlockSpec((1, C), lambda i: (0, 0))],
        out_specs=pl.BlockSpec((tm, C), lambda i: (i, 0)),
        compiler_params=pltpu.CompilerParams(dimension_semantics=("parallel",)),
    )(x.reshape(M, C), gamma.reshape(1, C), beta.reshape(1, C))
    return y.reshape(B, T, C)


def group_norm(x2d, gamma, beta, num_groups, eps):
    """torch.nn.GroupNorm(num_groups, C) on a (rows, C) tensor (lane-dense, no param tiling)."""
    R, C = x2d.shape
    G = num_groups
    N = C // G
    gid = jnp.arange(C, dtype=jnp.int32) // N
    gavg = (gid[:, None] == jnp.arange(G)[None, :]).astype(jnp.float32) / float(N)   # (C, G)
    gsel = (jnp.arange(G)[:, None] == gid[None, :]).astype(jnp.float32)              # (G, C)
    tm = _pick_div(R, _ROW_TILES)
    return pl.pallas_call(
        functools.partial(_groupnorm_kernel, eps=eps),
        out_shape=jax.ShapeDtypeStruct((R, C), jnp.float32),
        grid=(R // tm,),
        in_specs=[pl.BlockSpec((tm, C), lambda i: (i, 0)),
                  pl.BlockSpec((C, G), lambda i: (0, 0)),
                  pl.BlockSpec((G, C), lambda i: (0, 0)),
                  pl.BlockSpec((1, C), lambda i: (0, 0)),
                  pl.BlockSpec((1, C), lambda i: (0, 0))],
        out_specs=pl.BlockSpec((tm, C), lambda i: (i, 0)),
        compiler_params=pltpu.CompilerParams(dimension_semantics=("parallel",)),
    )(x2d, gavg, gsel, gamma.reshape(1, C), beta.reshape(1, C))


def cmix_mlp(x2d, xx2d, m, w_key, w_val):
    M, C = x2d.shape
    HID = w_key.shape[1]
    tm = _pick_div(M, _ROW_TILES)
    th = _pick_div(HID, _COL_TILES)
    return pl.pallas_call(
        _cmix_kernel,
        out_shape=jax.ShapeDtypeStruct((M, C), jnp.float32),
        grid=(M // tm, HID // th),
        in_specs=[pl.BlockSpec((tm, C), lambda i, j: (i, 0)),
                  pl.BlockSpec((tm, C), lambda i, j: (i, 0)),
                  pl.BlockSpec((1, C), lambda i, j: (0, 0)),
                  pl.BlockSpec((C, th), lambda i, j: (0, j)),
                  pl.BlockSpec((th, C), lambda i, j: (j, 0))],
        out_specs=pl.BlockSpec((tm, C), lambda i, j: (i, 0)),
        scratch_shapes=[pltpu.VMEM((tm, C), jnp.float32)],
        compiler_params=pltpu.CompilerParams(dimension_semantics=("parallel", "arbitrary")),
    )(x2d, xx2d, m.reshape(1, C), w_key, w_val)


def wkv7(r, w, k, v, a, b, H):
    """RUN_CUDA_RWKV7g equivalent.  Inputs (B, T, C) bfloat16, output (B, T, C) bfloat16."""
    B, T, C = r.shape
    N = C // H
    assert N == HEAD_SIZE and T % CHUNK_LEN == 0
    if H % 2 == 0:
        # Two heads per grid step -> 128-lane-dense blocks directly on the (B, T, C) layout
        # (no HBM transposes at all).
        spec = pl.BlockSpec((None, T, 2 * N), lambda i, j: (i, 0, j))
        y = pl.pallas_call(
            functools.partial(_wkv7_kernel, blk_heads=2),
            out_shape=jax.ShapeDtypeStruct((B, T, C), jnp.bfloat16),
            grid=(B, C // (2 * N)),
            in_specs=[spec] * 6,
            out_specs=spec,
            compiler_params=pltpu.CompilerParams(dimension_semantics=("parallel", "parallel")),
        )(w, r, k, v, a, b)
        return y
    # TODO(synk): odd head counts (>1) fall back to a per-head (B*H, T, N) layout which needs an
    # extra HBM transpose on each side; real RWKV-7 configs have even H so this path is cold.
    def to_heads(z):
        return z.reshape(B, T, H, N).transpose(0, 2, 1, 3).reshape(B * H, T, N)
    ins = tuple(to_heads(z) for z in (w, r, k, v, a, b))
    spec = pl.BlockSpec((None, T, N), lambda i: (i, 0, 0))
    y = pl.pallas_call(
        functools.partial(_wkv7_kernel, blk_heads=1),
        out_shape=jax.ShapeDtypeStruct((B * H, T, N), jnp.bfloat16),
        grid=(B * H,),
        in_specs=[spec] * 6,
        out_specs=spec,
        compiler_params=pltpu.CompilerParams(dimension_semantics=("parallel",)),
    )(*ins)
    return y.reshape(B, H, T, N).transpose(0, 2, 1, 3).reshape(B, T, C)


# ------------------------------ plain-JAX glue -------------------------------

def time_shift(x):
    """nn.ZeroPad2d((0,0,1,-1)) on (B, T, C): shift sequence right by one, zero first step."""
    B, T, C = x.shape
    return jnp.pad(x, ((0, 0), (1, 0), (0, 0)))[:, :T, :]


def rwkv_tmix_forward(p, x, v_first, *, layer_id, H):
    B, T, C = x.shape
    N = C // H
    BT = B * T

    xx3 = time_shift(x) - x
    xb = x.reshape(BT, C).astype(jnp.bfloat16)       # bf16 contract of the reference CUDA path
    xxb = xx3.reshape(BT, C).astype(jnp.bfloat16)

    r = mix_matmul(xb, xxb, p["x_r"], p["W_r"], out_dtype=jnp.bfloat16)
    k = mix_matmul(xb, xxb, p["x_k"], p["W_k"], out_dtype=jnp.bfloat16)
    v = mix_matmul(xb, xxb, p["x_v"], p["W_v"], out_dtype=jnp.float32)

    w = mix_lora(xb, xxb, p["x_w"], p["w1"], p["w2"], p["w0"],
                 inner="tanh", outer="softclamp", out_dtype=jnp.bfloat16)
    a = mix_lora(xb, xxb, p["x_a"], p["a1"], p["a2"], p["a0"],
                 inner="none", outer="sigmoid", out_dtype=jnp.float32)
    g = mix_lora(xb, xxb, p["x_g"], p["g1"], p["g2"], jnp.zeros((C,), jnp.float32),
                 inner="sigmoid", outer="none", out_dtype=jnp.bfloat16)

    if layer_id == 0:
        v_first_out = v.reshape(B, T, C)
    else:
        v_first_out = v_first
        gate = mix_lora(xb, xxb, p["x_v"], p["v1"], p["v2"], p["v0"],
                        inner="none", outer="sigmoid", out_dtype=jnp.float32)
        v = v + (v_first.reshape(BT, C) - v) * gate

    rf = r.astype(jnp.float32)
    kf = k.astype(jnp.float32)

    kk = kf * p["k_k"].reshape(1, C)
    kk_h = kk.reshape(BT, H, N)
    nrm = jnp.sqrt(jnp.sum(kk_h * kk_h, axis=-1, keepdims=True))
    kk = (kk_h / jnp.maximum(nrm, 1e-12)).reshape(BT, C)          # F.normalize(p=2, dim=-1)
    k2 = kf * (1.0 + (a - 1.0) * p["k_a"].reshape(1, C))

    to3 = lambda z: z.reshape(B, T, C).astype(jnp.bfloat16)
    y = wkv7(r.reshape(B, T, C), w.reshape(B, T, C),
             to3(k2), to3(v), to3(-kk), to3(kk * a), H=H)

    y2 = group_norm(y.reshape(BT, C), p["ln_x_w"], p["ln_x_b"], H, LN_X_EPS)

    rk = jnp.sum((rf * k2).reshape(BT, H, N) * p["r_k"].reshape(1, H, N),
                 axis=-1, keepdims=True)
    y2 = y2 + (rk * v.reshape(BT, H, N)).reshape(BT, C)

    out = gated_matmul(y2, g, p["W_o"])
    return out.reshape(B, T, C), v_first_out


def rwkv_cmix_forward(p, x):
    B, T, C = x.shape
    xx3 = time_shift(x) - x
    out = cmix_mlp(x.reshape(B * T, C).astype(jnp.bfloat16),
                   xx3.reshape(B * T, C).astype(jnp.bfloat16),
                   p["x_k"], p["W_key"], p["W_val"])
    return out.reshape(B, T, C)


def block_forward(p, x, v_first, *, layer_id, H):
    if layer_id == 0:
        x = layer_norm(x, p["ln0_w"], p["ln0_b"])
    x_attn, v_first = rwkv_tmix_forward(
        p["att"], layer_norm(x, p["ln1_w"], p["ln1_b"]), v_first, layer_id=layer_id, H=H)
    x = x + x_attn
    x = x + rwkv_cmix_forward(p["ffn"], layer_norm(x, p["ln2_w"], p["ln2_b"]))
    return x, v_first


# --------------------------- deterministic init ------------------------------

def _lin(key, n_in, n_out, scale=0.02):
    # TODO(synk): torch zero/orthogonal inits replaced by scaled gaussians so the paths are
    # non-trivial; stored bf16 (native MXU operand dtype).
    return (jax.random.normal(key, (n_in, n_out), jnp.float32) * scale).astype(jnp.bfloat16)


def init_tmix_params(key, C, H, n_layer, layer_id):
    N = C // H
    ks = jax.random.split(key, 13)
    r0 = layer_id / max(n_layer - 1, 1)
    r1 = 1.0 - layer_id / n_layer
    ddd = jnp.arange(C, dtype=jnp.float32) / C
    D_DECAY = max(32, int(round(1.8 * (C ** 0.5) / 32) * 32))
    D_AAA = max(32, int(round(1.8 * (C ** 0.5) / 32) * 32))
    D_MV = max(32, int(round(1.3 * (C ** 0.5) / 32) * 32))
    D_GATE = max(32, int(round(0.6 * (C ** 0.8) / 32) * 32))
    n = jnp.arange(C, dtype=jnp.float32)
    decay_speed = -7.0 + 5.0 * (n / (C - 1)) ** (0.85 + 1.0 * (r0 ** 0.5))
    return dict(
        x_r=1.0 - ddd ** (0.2 * r1),
        x_w=1.0 - ddd ** (0.9 * r1),
        x_k=1.0 - (ddd ** (0.9 * r1) + 0.4 * r0),
        x_v=1.0 - (ddd ** (0.4 * r1) + 0.6 * r0),
        x_a=1.0 - ddd ** (0.9 * r1),
        x_g=1.0 - ddd ** (0.2 * r1),
        w0=decay_speed + 0.5,
        w1=_lin(ks[0], C, D_DECAY, 0.05), w2=_lin(ks[1], D_DECAY, C, 0.05),
        a0=jnp.zeros((C,), jnp.float32),
        a1=_lin(ks[2], C, D_AAA, 0.05), a2=_lin(ks[3], D_AAA, C, 0.05),
        v0=jnp.ones((C,), jnp.float32),
        v1=_lin(ks[4], C, D_MV, 0.05), v2=_lin(ks[5], D_MV, C, 0.05),
        g1=_lin(ks[6], C, D_GATE, 0.05), g2=_lin(ks[7], D_GATE, C, 0.05),
        k_k=jnp.full((C,), 0.85, jnp.float32),
        k_a=jnp.ones((C,), jnp.float32),
        r_k=jax.random.normal(ks[8], (H, N), jnp.float32) * 0.05,
        W_r=_lin(ks[9], C, C), W_k=_lin(ks[10], C, C),
        W_v=_lin(ks[11], C, C), W_o=_lin(ks[12], C, C),
        ln_x_w=jnp.ones((C,), jnp.float32), ln_x_b=jnp.zeros((C,), jnp.float32),
    )


def init_cmix_params(key, C, n_layer, layer_id):
    r1 = 1.0 - layer_id / n_layer
    ddd = jnp.arange(C, dtype=jnp.float32) / C
    k1, k2 = jax.random.split(key)
    return dict(
        x_k=1.0 - ddd ** (r1 ** 4),
        W_key=_lin(k1, C, 4 * C), W_val=_lin(k2, 4 * C, C),
    )


def init_block_params(key, C, H, n_layer, layer_id):
    k1, k2 = jax.random.split(key)
    p = dict(
        ln1_w=jnp.ones((C,), jnp.float32), ln1_b=jnp.zeros((C,), jnp.float32),
        ln2_w=jnp.ones((C,), jnp.float32), ln2_b=jnp.zeros((C,), jnp.float32),
        att=init_tmix_params(k1, C, H, n_layer, layer_id),
        ffn=init_cmix_params(k2, C, n_layer, layer_id),
    )
    if layer_id == 0:
        p["ln0_w"] = jnp.ones((C,), jnp.float32)
        p["ln0_b"] = jnp.zeros((C,), jnp.float32)
    return p


# ---------------------------------- main -------------------------------------

if __name__ == "__main__":
    B, T, C, H = 2, 16, 128, 2            # T is a multiple of CHUNK_LEN=16; head_size=64
    assert C // H == HEAD_SIZE and T % CHUNK_LEN == 0

    key = jax.random.PRNGKey(0)
    kx, k0, k1 = jax.random.split(key, 3)
    x = jax.random.normal(kx, (B, T, C), jnp.float32)
    v_first = jnp.zeros((B, T, C), jnp.float32)

    p0 = init_block_params(k0, C, H, n_layer=2, layer_id=0)
    p1 = init_block_params(k1, C, H, n_layer=2, layer_id=1)

    block0 = jax.jit(functools.partial(block_forward, layer_id=0, H=H))
    block1 = jax.jit(functools.partial(block_forward, layer_id=1, H=H))

    x, v_first = block0(p0, x, v_first)   # layer 0: ln0 path + v_first = v
    x, v_first = block1(p1, x, v_first)   # layer 1: v-residual LoRA path
    x = jax.block_until_ready(x)
    v_first = jax.block_until_ready(v_first)

    assert x.shape == (B, T, C) and v_first.shape == (B, T, C)
    assert bool(jnp.all(jnp.isfinite(x))) and bool(jnp.all(jnp.isfinite(v_first)))
    print("KERNEL_OK")
</pallas_src>

<mosaic_0001>
module attributes {stable_mosaic.version = 11 : i64} {
  func.func @_mix_matmul_kernel(%arg0: i32, %arg1: i32, %arg2: memref<32x128xbf16, #tpu.memory_space<vmem>>, %arg3: memref<32x128xbf16, #tpu.memory_space<vmem>>, %arg4: memref<1x128xf32, #tpu.memory_space<vmem>>, %arg5: memref<128x128xbf16, #tpu.memory_space<vmem>>, %arg6: memref<32x128xbf16, #tpu.memory_space<vmem>>) attributes {dimension_semantics = [#tpu.dimension_semantics<parallel>, #tpu.dimension_semantics<parallel>], iteration_bounds = array<i64: 1, 1>, scalar_prefetch = 0 : i64, scratch_operands = 0 : i64, tpu.core_type = #tpu.core_type<tc>, window_params = [{transform_indices = @transform_0, window_bounds = array<i64: 32, 128>}, {transform_indices = @transform_1, window_bounds = array<i64: 32, 128>}, {pipeline_mode = #tpu.pipeline_mode<synchronous>, transform_indices = @transform_2, window_bounds = array<i64: 1, 128>}, {transform_indices = @transform_3, window_bounds = array<i64: 128, 128>}, {transform_indices = @transform_4, window_bounds = array<i64: 32, 128>}]} {
    %c0 = arith.constant 0 : index
    %c0_0 = arith.constant 0 : index
    %0 = vector.load %arg2[%c0, %c0_0] : memref<32x128xbf16, #tpu.memory_space<vmem>>, vector<32x128xbf16>
    %1 = arith.extf %0 : vector<32x128xbf16> to vector<32x128xf32>
    %c0_1 = arith.constant 0 : index
    %c0_2 = arith.constant 0 : index
    %2 = vector.load %arg3[%c0_1, %c0_2] : memref<32x128xbf16, #tpu.memory_space<vmem>>, vector<32x128xbf16>
    %3 = arith.extf %2 : vector<32x128xbf16> to vector<32x128xf32>
    %c0_3 = arith.constant 0 : index
    %c0_4 = arith.constant 0 : index
    %4 = vector.load %arg4[%c0_3, %c0_4] : memref<1x128xf32, #tpu.memory_space<vmem>>, vector<1x128xf32>
    %5 = vector.broadcast %4 : vector<1x128xf32> to vector<32x128xf32>
    %6 = arith.mulf %3, %5 : vector<32x128xf32>
    %7 = arith.addf %1, %6 : vector<32x128xf32>
    %8 = arith.truncf %7 : vector<32x128xf32> to vector<32x128xbf16>
    %c0_5 = arith.constant 0 : index
    %c0_6 = arith.constant 0 : index
    %9 = vector.load %arg5[%c0_5, %c0_6] : memref<128x128xbf16, #tpu.memory_space<vmem>>, vector<128x128xbf16>
    %cst = arith.constant dense<0.000000e+00> : vector<32x128xf32>
    %10 = tpu.matmul %8, %9, %cst {dimension_numbers = #tpu.dot_dimension_numbers<[1], [0], [0], [1], [0, 0, 1, 1], [], []>} : vector<32x128xbf16>, vector<128x128xbf16>, vector<32x128xf32> -> vector<32x128xf32>
    %11 = arith.truncf %10 : vector<32x128xf32> to vector<32x128xbf16>
    %c0_7 = arith.constant 0 : index
    %c0_8 = arith.constant 0 : index
    %12 = vector.load %arg6[%c0_7, %c0_8] : memref<32x128xbf16, #tpu.memory_space<vmem>>, vector<32x128xbf16>
    tpu.vector_store %arg6[%c0_7, %c0_8], %11 {strides = array<i32>} : memref<32x128xbf16, #tpu.memory_space<vmem>>, vector<32x128xbf16>,
    return
  }
  func.func @transform_0(%arg0: i32, %arg1: i32) -> (i32, i32) {
    %c0_i32 = arith.constant 0 : i32
    %c0_i32_0 = arith.constant 0 : i32
    return %arg0, %c0_i32 : i32, i32
  }
  func.func @transform_1(%arg0: i32, %arg1: i32) -> (i32, i32) {
    %c0_i32 = arith.constant 0 : i32
    %c0_i32_0 = arith.constant 0 : i32
    return %arg0, %c0_i32 : i32, i32
  }
  func.func @transform_2(%arg0: i32, %arg1: i32) -> (i32, i32) {
    %c0_i32 = arith.constant 0 : i32
    %c0_i32_0 = arith.constant 0 : i32
    %c0_i32_1 = arith.constant 0 : i32
    return %c0_i32, %c0_i32_0 : i32, i32
  }
  func.func @transform_3(%arg0: i32, %arg1: i32) -> (i32, i32) {
    %c0_i32 = arith.constant 0 : i32
    %c0_i32_0 = arith.constant 0 : i32
    return %c0_i32, %arg1 : i32, i32
  }
  func.func @transform_4(%arg0: i32, %arg1: i32) -> (i32, i32) {
    %c0_i32 = arith.constant 0 : i32
    return %arg0, %arg1 : i32, i32
  }
}

module attributes {stable_mosaic.version = 11 : i64} {
  func.func @_layernorm_kernel(%arg0: i32, %arg1: memref<32x128xf32, #tpu.memory_space<vmem>>, %arg2: memref<1x128xf32, #tpu.memory_space<vmem>>, %arg3: memref<1x128xf32, #tpu.memory_space<vmem>>, %arg4: memref<32x128xf32, #tpu.memory_space<vmem>>) attributes {dimension_semantics = [#tpu.dimension_semantics<parallel>], iteration_bounds = array<i64: 1>, scalar_prefetch = 0 : i64, scratch_operands = 0 : i64, tpu.core_type = #tpu.core_type<tc>, window_params = [{transform_indices = @transform_0, window_bounds = array<i64: 32, 128>}, {pipeline_mode = #tpu.pipeline_mode<synchronous>, transform_indices = @transform_1, window_bounds = array<i64: 1, 128>}, {pipeline_mode = #tpu.pipeline_mode<synchronous>, transform_indices = @transform_2, window_bounds = array<i64: 1, 128>}, {transform_indices = @transform_3, window_bounds = array<i64: 32, 128>}]} {
    %c0 = arith.constant 0 : index
    %c0_0 = arith.constant 0 : index
    %0 = vector.load %arg1[%c0, %c0_0] : memref<32x128xf32, #tpu.memory_space<vmem>>, vector<32x128xf32>
    %cst = arith.constant dense<0.000000e+00> : vector<32xf32>
    %1 = vector.multi_reduction <add>, %0, %cst [1] : vector<32x128xf32> to vector<32xf32>
    %2 = vector.shape_cast %1 : vector<32xf32> to vector<32x1xf32>
    %cst_1 = arith.constant 1.280000e+02 : f32
    %3 = vector.broadcast %cst_1 : f32 to vector<32x1xf32>
    %4 = arith.divf %2, %3 : vector<32x1xf32>
    %5 = vector.broadcast %4 : vector<32x1xf32> to vector<32x128xf32>
    %6 = arith.subf %0, %5 : vector<32x128xf32>
    %7 = arith.mulf %6, %6 : vector<32x128xf32>
    %cst_2 = arith.constant dense<0.000000e+00> : vector<32xf32>
    %8 = vector.multi_reduction <add>, %7, %cst_2 [1] : vector<32x128xf32> to vector<32xf32>
    %9 = vector.shape_cast %8 : vector<32xf32> to vector<32x1xf32>
    %cst_3 = arith.constant 1.280000e+02 : f32
    %10 = vector.broadcast %cst_3 : f32 to vector<32x1xf32>
    %11 = arith.divf %9, %10 : vector<32x1xf32>
    %cst_4 = arith.constant 9.99999974E-6 : f32
    %12 = vector.broadcast %cst_4 : f32 to vector<32x1xf32>
    %13 = arith.addf %11, %12 : vector<32x1xf32>
    %14 = math.rsqrt %13 : vector<32x1xf32>
    %15 = vector.broadcast %14 : vector<32x1xf32> to vector<32x128xf32>
    %16 = arith.mulf %6, %15 : vector<32x128xf32>
    %c0_5 = arith.constant 0 : index
    %c0_6 = arith.constant 0 : index
    %17 = vector.load %arg2[%c0_5, %c0_6] : memref<1x128xf32, #tpu.memory_space<vmem>>, vector<1x128xf32>
    %18 = vector.broadcast %17 : vector<1x128xf32> to vector<32x128xf32>
    %19 = arith.mulf %16, %18 : vector<32x128xf32>
    %c0_7 = arith.constant 0 : index
    %c0_8 = arith.constant 0 : index
    %20 = vector.load %arg3[%c0_7, %c0_8] : memref<1x128xf32, #tpu.memory_space<vmem>>, vector<1x128xf32>
    %21 = vector.broadcast %20 : vector<1x128xf32> to vector<32x128xf32>
    %22 = arith.addf %19, %21 : vector<32x128xf32>
    %c0_9 = arith.constant 0 : index
    %c0_10 = arith.constant 0 : index
    %23 = vector.load %arg4[%c0_9, %c0_10] : memref<32x128xf32, #tpu.memory_space<vmem>>, vector<32x128xf32>
    tpu.vector_store %arg4[%c0_9, %c0_10], %22 {strides = array<i32>} : memref<32x128xf32, #tpu.memory_space<vmem>>, vector<32x128xf32>,
    return
  }
  func.func @transform_0(%arg0: i32) -> (i32, i32) {
    %c0_i32 = arith.constant 0 : i32
    %c0_i32_0 = arith.constant 0 : i32
    return %arg0, %c0_i32 : i32, i32
  }
  func.func @transform_1(%arg0: i32) -> (i32, i32) {
    %c0_i32 = arith.constant 0 : i32
    %c0_i32_0 = arith.constant 0 : i32
    %c0_i32_1 = arith.constant 0 : i32
    return %c0_i32, %c0_i32_0 : i32, i32
  }
  func.func @transform_2(%arg0: i32) -> (i32, i32) {
    %c0_i32 = arith.constant 0 : i32
    %c0_i32_0 = arith.constant 0 : i32
    %c0_i32_1 = arith.constant 0 : i32
    return %c0_i32, %c0_i32_0 : i32, i32
  }
  func.func @transform_3(%arg0: i32) -> (i32, i32) {
    %c0_i32 = arith.constant 0 : i32
    %c0_i32_0 = arith.constant 0 : i32
    return %arg0, %c0_i32 : i32, i32
  }
}

module attributes {stable_mosaic.version = 11 : i64} {
  func.func @_mix_matmul_kernel(%arg0: i32, %arg1: i32, %arg2: memref<32x128xbf16, #tpu.memory_space<vmem>>, %arg3: memref<32x128xbf16, #tpu.memory_space<vmem>>, %arg4: memref<1x128xf32, #tpu.memory_space<vmem>>, %arg5: memref<128x128xbf16, #tpu.memory_space<vmem>>, %arg6: memref<32x128xf32, #tpu.memory_space<vmem>>) attributes {dimension_semantics = [#tpu.dimension_semantics<parallel>, #tpu.dimension_semantics<parallel>], iteration_bounds = array<i64: 1, 1>, scalar_prefetch = 0 : i64, scratch_operands = 0 : i64, tpu.core_type = #tpu.core_type<tc>, window_params = [{transform_indices = @transform_0, window_bounds = array<i64: 32, 128>}, {transform_indices = @transform_1, window_bounds = array<i64: 32, 128>}, {pipeline_mode = #tpu.pipeline_mode<synchronous>, transform_indices = @transform_2, window_bounds = array<i64: 1, 128>}, {transform_indices = @transform_3, window_bounds = array<i64: 128, 128>}, {transform_indices = @transform_4, window_bounds = array<i64: 32, 128>}]} {
    %c0 = arith.constant 0 : index
    %c0_0 = arith.constant 0 : index
    %0 = vector.load %arg2[%c0, %c0_0] : memref<32x128xbf16, #tpu.memory_space<vmem>>, vector<32x128xbf16>
    %1 = arith.extf %0 : vector<32x128xbf16> to vector<32x128xf32>
    %c0_1 = arith.constant 0 : index
    %c0_2 = arith.constant 0 : index
    %2 = vector.load %arg3[%c0_1, %c0_2] : memref<32x128xbf16, #tpu.memory_space<vmem>>, vector<32x128xbf16>
    %3 = arith.extf %2 : vector<32x128xbf16> to vector<32x128xf32>
    %c0_3 = arith.constant 0 : index
    %c0_4 = arith.constant 0 : index
    %4 = vector.load %arg4[%c0_3, %c0_4] : memref<1x128xf32, #tpu.memory_space<vmem>>, vector<1x128xf32>
    %5 = vector.broadcast %4 : vector<1x128xf32> to vector<32x128xf32>
    %6 = arith.mulf %3, %5 : vector<32x128xf32>
    %7 = arith.addf %1, %6 : vector<32x128xf32>
    %8 = arith.truncf %7 : vector<32x128xf32> to vector<32x128xbf16>
    %c0_5 = arith.constant 0 : index
    %c0_6 = arith.constant 0 : index
    %9 = vector.load %arg5[%c0_5, %c0_6] : memref<128x128xbf16, #tpu.memory_space<vmem>>, vector<128x128xbf16>
    %cst = arith.constant dense<0.000000e+00> : vector<32x128xf32>
    %10 = tpu.matmul %8, %9, %cst {dimension_numbers = #tpu.dot_dimension_numbers<[1], [0], [0], [1], [0, 0, 1, 1], [], []>} : vector<32x128xbf16>, vector<128x128xbf16>, vector<32x128xf32> -> vector<32x128xf32>
    %c0_7 = arith.constant 0 : index
    %c0_8 = arith.constant 0 : index
    %11 = vector.load %arg6[%c0_7, %c0_8] : memref<32x128xf32, #tpu.memory_space<vmem>>, vector<32x128xf32>
    tpu.vector_store %arg6[%c0_7, %c0_8], %10 {strides = array<i32>} : memref<32x128xf32, #tpu.memory_space<vmem>>, vector<32x128xf32>,
    return
  }
  func.func @transform_0(%arg0: i32, %arg1: i32) -> (i32, i32) {
    %c0_i32 = arith.constant 0 : i32
    %c0_i32_0 = arith.constant 0 : i32
    return %arg0, %c0_i32 : i32, i32
  }
  func.func @transform_1(%arg0: i32, %arg1: i32) -> (i32, i32) {
    %c0_i32 = arith.constant 0 : i32
    %c0_i32_0 = arith.constant 0 : i32
    return %arg0, %c0_i32 : i32, i32
  }
  func.func @transform_2(%arg0: i32, %arg1: i32) -> (i32, i32) {
    %c0_i32 = arith.constant 0 : i32
    %c0_i32_0 = arith.constant 0 : i32
    %c0_i32_1 = arith.constant 0 : i32
    return %c0_i32, %c0_i32_0 : i32, i32
  }
  func.func @transform_3(%arg0: i32, %arg1: i32) -> (i32, i32) {
    %c0_i32 = arith.constant 0 : i32
    %c0_i32_0 = arith.constant 0 : i32
    return %c0_i32, %arg1 : i32, i32
  }
  func.func @transform_4(%arg0: i32, %arg1: i32) -> (i32, i32) {
    %c0_i32 = arith.constant 0 : i32
    return %arg0, %arg1 : i32, i32
  }
}

module attributes {stable_mosaic.version = 11 : i64} {
  func.func @_mix_lora_kernel(%arg0: i32, %arg1: memref<32x128xbf16, #tpu.memory_space<vmem>>, %arg2: memref<32x128xbf16, #tpu.memory_space<vmem>>, %arg3: memref<1x128xf32, #tpu.memory_space<vmem>>, %arg4: memref<128x32xbf16, #tpu.memory_space<vmem>>, %arg5: memref<32x128xbf16, #tpu.memory_space<vmem>>, %arg6: memref<1x128xf32, #tpu.memory_space<vmem>>, %arg7: memref<32x128xf32, #tpu.memory_space<vmem>>) attributes {dimension_semantics = [#tpu.dimension_semantics<parallel>], iteration_bounds = array<i64: 1>, scalar_prefetch = 0 : i64, scratch_operands = 0 : i64, tpu.core_type = #tpu.core_type<tc>, window_params = [{transform_indices = @transform_0, window_bounds = array<i64: 32, 128>}, {transform_indices = @transform_1, window_bounds = array<i64: 32, 128>}, {pipeline_mode = #tpu.pipeline_mode<synchronous>, transform_indices = @transform_2, window_bounds = array<i64: 1, 128>}, {pipeline_mode = #tpu.pipeline_mode<synchronous>, transform_indices = @transform_3, window_bounds = array<i64: 128, 32>}, {pipeline_mode = #tpu.pipeline_mode<synchronous>, transform_indices = @transform_4, window_bounds = array<i64: 32, 128>}, {pipeline_mode = #tpu.pipeline_mode<synchronous>, transform_indices = @transform_5, window_bounds = array<i64: 1, 128>}, {transform_indices = @transform_6, window_bounds = array<i64: 32, 128>}]} {
    %c0 = arith.constant 0 : index
    %c0_0 = arith.constant 0 : index
    %0 = vector.load %arg1[%c0, %c0_0] : memref<32x128xbf16, #tpu.memory_space<vmem>>, vector<32x128xbf16>
    %1 = arith.extf %0 : vector<32x128xbf16> to vector<32x128xf32>
    %c0_1 = arith.constant 0 : index
    %c0_2 = arith.constant 0 : index
    %2 = vector.load %arg2[%c0_1, %c0_2] : memref<32x128xbf16, #tpu.memory_space<vmem>>, vector<32x128xbf16>
    %3 = arith.extf %2 : vector<32x128xbf16> to vector<32x128xf32>
    %c0_3 = arith.constant 0 : index
    %c0_4 = arith.constant 0 : index
    %4 = vector.load %arg3[%c0_3, %c0_4] : memref<1x128xf32, #tpu.memory_space<vmem>>, vector<1x128xf32>
    %5 = vector.broadcast %4 : vector<1x128xf32> to vector<32x128xf32>
    %6 = arith.mulf %3, %5 : vector<32x128xf32>
    %7 = arith.addf %1, %6 : vector<32x128xf32>
    %8 = arith.truncf %7 : vector<32x128xf32> to vector<32x128xbf16>
    %c0_5 = arith.constant 0 : index
    %c0_6 = arith.constant 0 : index
    %9 = vector.load %arg4[%c0_5, %c0_6] : memref<128x32xbf16, #tpu.memory_space<vmem>>, vector<128x32xbf16>
    %cst = arith.constant dense<0.000000e+00> : vector<32x32xf32>
    %10 = tpu.matmul %8, %9, %cst {dimension_numbers = #tpu.dot_dimension_numbers<[1], [0], [0], [1], [0, 0, 1, 1], [], []>} : vector<32x128xbf16>, vector<128x32xbf16>, vector<32x32xf32> -> vector<32x32xf32>
    %11 = arith.truncf %10 : vector<32x32xf32> to vector<32x32xbf16>
    %c0_7 = arith.constant 0 : index
    %c0_8 = arith.constant 0 : index
    %12 = vector.load %arg5[%c0_7, %c0_8] : memref<32x128xbf16, #tpu.memory_space<vmem>>, vector<32x128xbf16>
    %cst_9 = arith.constant dense<0.000000e+00> : vector<32x128xf32>
    %13 = tpu.matmul %11, %12, %cst_9 {dimension_numbers = #tpu.dot_dimension_numbers<[1], [0], [0], [1], [0, 0, 1, 1], [], []>} : vector<32x32xbf16>, vector<32x128xbf16>, vector<32x128xf32> -> vector<32x128xf32>
    %c0_10 = arith.constant 0 : index
    %c0_11 = arith.constant 0 : index
    %14 = vector.load %arg6[%c0_10, %c0_11] : memref<1x128xf32, #tpu.memory_space<vmem>>, vector<1x128xf32>
    %15 = vector.broadcast %14 : vector<1x128xf32> to vector<32x128xf32>
    %16 = arith.addf %13, %15 : vector<32x128xf32>
    %cst_12 = arith.constant 0.000000e+00 : f32
    %17 = vector.broadcast %cst_12 : f32 to vector<32x128xf32>
    %18 = arith.subf %17, %16 : vector<32x128xf32>
    %19 = math.exp %18 : vector<32x128xf32>
    %cst_13 = arith.constant 1.000000e+00 : f32
    %20 = vector.broadcast %cst_13 : f32 to vector<32x128xf32>
    %21 = arith.addf %20, %19 : vector<32x128xf32>
    %cst_14 = arith.constant 1.000000e+00 : f32
    %22 = vector.broadcast %cst_14 : f32 to vector<32x128xf32>
    %23 = arith.divf %22, %21 : vector<32x128xf32>
    %c0_15 = arith.constant 0 : index
    %c0_16 = arith.constant 0 : index
    %24 = vector.load %arg7[%c0_15, %c0_16] : memref<32x128xf32, #tpu.memory_space<vmem>>, vector<32x128xf32>
    tpu.vector_store %arg7[%c0_15, %c0_16], %23 {strides = array<i32>} : memref<32x128xf32, #tpu.memory_space<vmem>>, vector<32x128xf32>,
    return
  }
  func.func @transform_0(%arg0: i32) -> (i32, i32) {
    %c0_i32 = arith.constant 0 : i32
    %c0_i32_0 = arith.constant 0 : i32
    return %arg0, %c0_i32 : i32, i32
  }
  func.func @transform_1(%arg0: i32) -> (i32, i32) {
    %c0_i32 = arith.constant 0 : i32
    %c0_i32_0 = arith.constant 0 : i32
    return %arg0, %c0_i32 : i32, i32
  }
  func.func @transform_2(%arg0: i32) -> (i32, i32) {
    %c0_i32 = arith.constant 0 : i32
    %c0_i32_0 = arith.constant 0 : i32
    %c0_i32_1 = arith.constant 0 : i32
    return %c0_i32, %c0_i32_0 : i32, i32
  }
  func.func @transform_3(%arg0: i32) -> (i32, i32) {
    %c0_i32 = arith.constant 0 : i32
    %c0_i32_0 = arith.constant 0 : i32
    %c0_i32_1 = arith.constant 0 : i32
    return %c0_i32, %c0_i32_0 : i32, i32
  }
  func.func @transform_4(%arg0: i32) -> (i32, i32) {
    %c0_i32 = arith.constant 0 : i32
    %c0_i32_0 = arith.constant 0 : i32
    %c0_i32_1 = arith.constant 0 : i32
    return %c0_i32, %c0_i32_0 : i32, i32
  }
  func.func @transform_5(%arg0: i32) -> (i32, i32) {
    %c0_i32 = arith.constant 0 : i32
    %c0_i32_0 = arith.constant 0 : i32
    %c0_i32_1 = arith.constant 0 : i32
    return %c0_i32, %c0_i32_0 : i32, i32
  }
  func.func @transform_6(%arg0: i32) -> (i32, i32) {
    %c0_i32 = arith.constant 0 : i32
    %c0_i32_0 = arith.constant 0 : i32
    return %arg0, %c0_i32 : i32, i32
  }
}

module attributes {stable_mosaic.version = 11 : i64} {
  func.func @_mix_lora_kernel(%arg0: i32, %arg1: memref<32x128xbf16, #tpu.memory_space<vmem>>, %arg2: memref<32x128xbf16, #tpu.memory_space<vmem>>, %arg3: memref<1x128xf32, #tpu.memory_space<vmem>>, %arg4: memref<128x32xbf16, #tpu.memory_space<vmem>>, %arg5: memref<32x128xbf16, #tpu.memory_space<vmem>>, %arg6: memref<1x128xf32, #tpu.memory_space<vmem>>, %arg7: memref<32x128xbf16, #tpu.memory_space<vmem>>) attributes {dimension_semantics = [#tpu.dimension_semantics<parallel>], iteration_bounds = array<i64: 1>, scalar_prefetch = 0 : i64, scratch_operands = 0 : i64, tpu.core_type = #tpu.core_type<tc>, window_params = [{transform_indices = @transform_0, window_bounds = array<i64: 32, 128>}, {transform_indices = @transform_1, window_bounds = array<i64: 32, 128>}, {pipeline_mode = #tpu.pipeline_mode<synchronous>, transform_indices = @transform_2, window_bounds = array<i64: 1, 128>}, {pipeline_mode = #tpu.pipeline_mode<synchronous>, transform_indices = @transform_3, window_bounds = array<i64: 128, 32>}, {pipeline_mode = #tpu.pipeline_mode<synchronous>, transform_indices = @transform_4, window_bounds = array<i64: 32, 128>}, {pipeline_mode = #tpu.pipeline_mode<synchronous>, transform_indices = @transform_5, window_bounds = array<i64: 1, 128>}, {transform_indices = @transform_6, window_bounds = array<i64: 32, 128>}]} {
    %c0 = arith.constant 0 : index
    %c0_0 = arith.constant 0 : index
    %0 = vector.load %arg1[%c0, %c0_0] : memref<32x128xbf16, #tpu.memory_space<vmem>>, vector<32x128xbf16>
    %1 = arith.extf %0 : vector<32x128xbf16> to vector<32x128xf32>
    %c0_1 = arith.constant 0 : index
    %c0_2 = arith.constant 0 : index
    %2 = vector.load %arg2[%c0_1, %c0_2] : memref<32x128xbf16, #tpu.memory_space<vmem>>, vector<32x128xbf16>
    %3 = arith.extf %2 : vector<32x128xbf16> to vector<32x128xf32>
    %c0_3 = arith.constant 0 : index
    %c0_4 = arith.constant 0 : index
    %4 = vector.load %arg3[%c0_3, %c0_4] : memref<1x128xf32, #tpu.memory_space<vmem>>, vector<1x128xf32>
    %5 = vector.broadcast %4 : vector<1x128xf32> to vector<32x128xf32>
    %6 = arith.mulf %3, %5 : vector<32x128xf32>
    %7 = arith.addf %1, %6 : vector<32x128xf32>
    %8 = arith.truncf %7 : vector<32x128xf32> to vector<32x128xbf16>
    %c0_5 = arith.constant 0 : index
    %c0_6 = arith.constant 0 : index
    %9 = vector.load %arg4[%c0_5, %c0_6] : memref<128x32xbf16, #tpu.memory_space<vmem>>, vector<128x32xbf16>
    %cst = arith.constant dense<0.000000e+00> : vector<32x32xf32>
    %10 = tpu.matmul %8, %9, %cst {dimension_numbers = #tpu.dot_dimension_numbers<[1], [0], [0], [1], [0, 0, 1, 1], [], []>} : vector<32x128xbf16>, vector<128x32xbf16>, vector<32x32xf32> -> vector<32x32xf32>
    %11 = math.tanh %10 : vector<32x32xf32>
    %12 = arith.truncf %11 : vector<32x32xf32> to vector<32x32xbf16>
    %c0_7 = arith.constant 0 : index
    %c0_8 = arith.constant 0 : index
    %13 = vector.load %arg5[%c0_7, %c0_8] : memref<32x128xbf16, #tpu.memory_space<vmem>>, vector<32x128xbf16>
    %cst_9 = arith.constant dense<0.000000e+00> : vector<32x128xf32>
    %14 = tpu.matmul %12, %13, %cst_9 {dimension_numbers = #tpu.dot_dimension_numbers<[1], [0], [0], [1], [0, 0, 1, 1], [], []>} : vector<32x32xbf16>, vector<32x128xbf16>, vector<32x128xf32> -> vector<32x128xf32>
    %c0_10 = arith.constant 0 : index
    %c0_11 = arith.constant 0 : index
    %15 = vector.load %arg6[%c0_10, %c0_11] : memref<1x128xf32, #tpu.memory_space<vmem>>, vector<1x128xf32>
    %16 = vector.broadcast %15 : vector<1x128xf32> to vector<32x128xf32>
    %17 = arith.addf %14, %16 : vector<32x128xf32>
    %cst_12 = arith.constant 0.000000e+00 : f32
    %18 = vector.broadcast %cst_12 : f32 to vector<32x128xf32>
    %19 = arith.subf %18, %17 : vector<32x128xf32>
    %cst_13 = arith.constant 0.000000e+00 : f32
    %20 = vector.broadcast %cst_13 : f32 to vector<32x128xf32>
    %21 = arith.maximumf %19, %20 : vector<32x128xf32>
    %22 = math.absf %17 : vector<32x128xf32>
    %cst_14 = arith.constant 0.000000e+00 : f32
    %23 = vector.broadcast %cst_14 : f32 to vector<32x128xf32>
    %24 = arith.subf %23, %22 : vector<32x128xf32>
    %25 = math.exp %24 : vector<32x128xf32>
    %cst_15 = arith.constant 1.000000e+00 : f32
    %26 = vector.broadcast %cst_15 : f32 to vector<32x128xf32>
    %27 = arith.addf %26, %25 : vector<32x128xf32>
    %28 = math.log %27 : vector<32x128xf32>
    %29 = arith.addf %21, %28 : vector<32x128xf32>
    %cst_16 = arith.constant 0.000000e+00 : f32
    %30 = vector.broadcast %cst_16 : f32 to vector<32x128xf32>
    %31 = arith.subf %30, %29 : vector<32x128xf32>
    %cst_17 = arith.constant 5.000000e-01 : f32
    %32 = vector.broadcast %cst_17 : f32 to vector<32x128xf32>
    %33 = arith.subf %31, %32 : vector<32x128xf32>
    %34 = arith.truncf %33 : vector<32x128xf32> to vector<32x128xbf16>
    %c0_18 = arith.constant 0 : index
    %c0_19 = arith.constant 0 : index
    %35 = vector.load %arg7[%c0_18, %c0_19] : memref<32x128xbf16, #tpu.memory_space<vmem>>, vector<32x128xbf16>
    tpu.vector_store %arg7[%c0_18, %c0_19], %34 {strides = array<i32>} : memref<32x128xbf16, #tpu.memory_space<vmem>>, vector<32x128xbf16>,
    return
  }
  func.func @transform_0(%arg0: i32) -> (i32, i32) {
    %c0_i32 = arith.constant 0 : i32
    %c0_i32_0 = arith.constant 0 : i32
    return %arg0, %c0_i32 : i32, i32
  }
  func.func @transform_1(%arg0: i32) -> (i32, i32) {
    %c0_i32 = arith.constant 0 : i32
    %c0_i32_0 = arith.constant 0 : i32
    return %arg0, %c0_i32 : i32, i32
  }
  func.func @transform_2(%arg0: i32) -> (i32, i32) {
    %c0_i32 = arith.constant 0 : i32
    %c0_i32_0 = arith.constant 0 : i32
    %c0_i32_1 = arith.constant 0 : i32
    return %c0_i32, %c0_i32_0 : i32, i32
  }
  func.func @transform_3(%arg0: i32) -> (i32, i32) {
    %c0_i32 = arith.constant 0 : i32
    %c0_i32_0 = arith.constant 0 : i32
    %c0_i32_1 = arith.constant 0 : i32
    return %c0_i32, %c0_i32_0 : i32, i32
  }
  func.func @transform_4(%arg0: i32) -> (i32, i32) {
    %c0_i32 = arith.constant 0 : i32
    %c0_i32_0 = arith.constant 0 : i32
    %c0_i32_1 = arith.constant 0 : i32
    return %c0_i32, %c0_i32_0 : i32, i32
  }
  func.func @transform_5(%arg0: i32) -> (i32, i32) {
    %c0_i32 = arith.constant 0 : i32
    %c0_i32_0 = arith.constant 0 : i32
    %c0_i32_1 = arith.constant 0 : i32
    return %c0_i32, %c0_i32_0 : i32, i32
  }
  func.func @transform_6(%arg0: i32) -> (i32, i32) {
    %c0_i32 = arith.constant 0 : i32
    %c0_i32_0 = arith.constant 0 : i32
    return %arg0, %c0_i32 : i32, i32
  }
}

module attributes {stable_mosaic.version = 11 : i64} {
  func.func @_wkv7_kernel(%arg0: i32, %arg1: i32, %arg2: memref<1x16x128xbf16, #tpu.memory_space<vmem>>, %arg3: memref<1x16x128xbf16, #tpu.memory_space<vmem>>, %arg4: memref<1x16x128xbf16, #tpu.memory_space<vmem>>, %arg5: memref<1x16x128xbf16, #tpu.memory_space<vmem>>, %arg6: memref<1x16x128xbf16, #tpu.memory_space<vmem>>, %arg7: memref<1x16x128xbf16, #tpu.memory_space<vmem>>, %arg8: memref<1x16x128xbf16, #tpu.memory_space<vmem>>) attributes {dimension_semantics = [#tpu.dimension_semantics<parallel>, #tpu.dimension_semantics<parallel>], iteration_bounds = array<i64: 2, 1>, scalar_prefetch = 0 : i64, scratch_operands = 0 : i64, tpu.core_type = #tpu.core_type<tc>, window_params = [{transform_indices = @transform_0, window_bounds = array<i64: 1, 16, 128>}, {transform_indices = @transform_1, window_bounds = array<i64: 1, 16, 128>}, {transform_indices = @transform_2, window_bounds = array<i64: 1, 16, 128>}, {transform_indices = @transform_3, window_bounds = array<i64: 1, 16, 128>}, {transform_indices = @transform_4, window_bounds = array<i64: 1, 16, 128>}, {transform_indices = @transform_5, window_bounds = array<i64: 1, 16, 128>}, {transform_indices = @transform_6, window_bounds = array<i64: 1, 16, 128>}]} {
    %0 = tpu.iota {dimensions = array<i32: 1>} : vector<1x128xi32>
    %c64_i32 = arith.constant 64 : i32
    %1 = vector.broadcast %c64_i32 : i32 to vector<1x128xi32>
    %2 = arith.cmpi slt, %0, %1 : vector<1x128xi32>
    %cst = arith.constant 0.000000e+00 : f32
    %3 = vector.broadcast %cst : f32 to vector<64x128xf32>
    %c0_i32 = arith.constant 0 : i32
    %c16_i32 = arith.constant 16 : i32
    %4 = arith.muli %c0_i32, %c16_i32 : i32
    %5 = tpu.assume_multiple %4, 16 : i32
    %c0 = arith.constant 0 : index
    %6 = arith.index_cast %5 : i32 to index
    %c0_0 = arith.constant 0 : index
    %7 = vector.load %arg2[%c0, %6, %c0_0] : memref<1x16x128xbf16, #tpu.memory_space<vmem>>, vector<1x16x128xbf16>
    %8 = vector.shape_cast %7 : vector<1x16x128xbf16> to vector<16x128xbf16>
    %9 = arith.extf %8 : vector<16x128xbf16> to vector<16x128xf32>
    %10 = math.exp %9 : vector<16x128xf32>
    %cst_1 = arith.constant 0.000000e+00 : f32
    %11 = vector.broadcast %cst_1 : f32 to vector<16x128xf32>
    %12 = arith.subf %11, %10 : vector<16x128xf32>
    %13 = math.exp %12 : vector<16x128xf32>
    %c0_2 = arith.constant 0 : index
    %14 = arith.index_cast %5 : i32 to index
    %c0_3 = arith.constant 0 : index
    %15 = vector.load %arg3[%c0_2, %14, %c0_3] : memref<1x16x128xbf16, #tpu.memory_space<vmem>>, vector<1x16x128xbf16>
    %16 = vector.shape_cast %15 : vector<1x16x128xbf16> to vector<16x128xbf16>
    %17 = arith.extf %16 : vector<16x128xbf16> to vector<16x128xf32>
    %c0_4 = arith.constant 0 : index
    %18 = arith.index_cast %5 : i32 to index
    %c0_5 = arith.constant 0 : index
    %19 = vector.load %arg4[%c0_4, %18, %c0_5] : memref<1x16x128xbf16, #tpu.memory_space<vmem>>, vector<1x16x128xbf16>
    %20 = vector.shape_cast %19 : vector<1x16x128xbf16> to vector<16x128xbf16>
    %21 = arith.extf %20 : vector<16x128xbf16> to vector<16x128xf32>
    %c0_6 = arith.constant 0 : index
    %22 = arith.index_cast %5 : i32 to index
    %c0_7 = arith.constant 0 : index
    %23 = vector.load %arg5[%c0_6, %22, %c0_7] : memref<1x16x128xbf16, #tpu.memory_space<vmem>>, vector<1x16x128xbf16>
    %24 = vector.shape_cast %23 : vector<1x16x128xbf16> to vector<16x128xbf16>
    %25 = arith.extf %24 : vector<16x128xbf16> to vector<16x128xf32>
    %c0_8 = arith.constant 0 : index
    %26 = arith.index_cast %5 : i32 to index
    %c0_9 = arith.constant 0 : index
    %27 = vector.load %arg6[%c0_8, %26, %c0_9] : memref<1x16x128xbf16, #tpu.memory_space<vmem>>, vector<1x16x128xbf16>
    %28 = vector.shape_cast %27 : vector<1x16x128xbf16> to vector<16x128xbf16>
    %29 = arith.extf %28 : vector<16x128xbf16> to vector<16x128xf32>
    %c0_10 = arith.constant 0 : index
    %30 = arith.index_cast %5 : i32 to index
    %c0_11 = arith.constant 0 : index
    %31 = vector.load %arg7[%c0_10, %30, %c0_11] : memref<1x16x128xbf16, #tpu.memory_space<vmem>>, vector<1x16x128xbf16>
    %32 = vector.shape_cast %31 : vector<1x16x128xbf16> to vector<16x128xbf16>
    %33 = arith.extf %32 : vector<16x128xbf16> to vector<16x128xf32>
    %34 = vector.extract_strided_slice %13 {offsets = [0, 0], sizes = [1, 128], strides = [1, 1]} : vector<16x128xf32> to vector<1x128xf32>
    %35 = vector.extract_strided_slice %17 {offsets = [0, 0], sizes = [1, 128], strides = [1, 1]} : vector<16x128xf32> to vector<1x128xf32>
    %36 = vector.extract_strided_slice %21 {offsets = [0, 0], sizes = [1, 128], strides = [1, 1]} : vector<16x128xf32> to vector<1x128xf32>
    %37 = vector.extract_strided_slice %29 {offsets = [0, 0], sizes = [1, 128], strides = [1, 1]} : vector<16x128xf32> to vector<1x128xf32>
    %38 = vector.extract_strided_slice %33 {offsets = [0, 0], sizes = [1, 128], strides = [1, 1]} : vector<16x128xf32> to vector<1x128xf32>
    %39 = vector.extract_strided_slice %25 {offsets = [0, 0], sizes = [1, 128], strides = [1, 1]} : vector<16x128xf32> to vector<1x128xf32>
    %40 = tpu.transpose %39, [1, 0] : vector<1x128xf32> -> vector<128x1xf32>
    %41 = vector.extract_strided_slice %40 {offsets = [0, 0], sizes = [64, 1], strides = [1, 1]} : vector<128x1xf32> to vector<64x1xf32>
    %42 = vector.extract_strided_slice %40 {offsets = [64, 0], sizes = [64, 1], strides = [1, 1]} : vector<128x1xf32> to vector<64x1xf32>
    %43 = vector.shape_cast %2 : vector<1x128xi1> to vector<1x128xi1>
    %44 = vector.broadcast %43 : vector<1x128xi1> to vector<64x128xi1>
    %45 = vector.shape_cast %41 : vector<64x1xf32> to vector<64x1xf32>
    %46 = vector.broadcast %45 : vector<64x1xf32> to vector<64x128xf32>
    %47 = vector.shape_cast %42 : vector<64x1xf32> to vector<64x1xf32>
    %48 = vector.broadcast %47 : vector<64x1xf32> to vector<64x128xf32>
    %49 = arith.select %44, %46, %48 : vector<64x128xi1>, vector<64x128xf32>
    %50 = vector.broadcast %37 : vector<1x128xf32> to vector<64x128xf32>
    %51 = arith.mulf %3, %50 : vector<64x128xf32>
    %cst_12 = arith.constant 0.000000e+00 : f32
    %52 = vector.shape_cast %2 : vector<1x128xi1> to vector<1x128xi1>
    %53 = vector.broadcast %52 : vector<1x128xi1> to vector<64x128xi1>
    %54 = vector.broadcast %cst_12 : f32 to vector<64x128xf32>
    %55 = arith.select %53, %51, %54 : vector<64x128xi1>, vector<64x128xf32>
    %cst_13 = arith.constant dense<0.000000e+00> : vector<64xf32>
    %56 = vector.multi_reduction <add>, %55, %cst_13 [1] : vector<64x128xf32> to vector<64xf32>
    %57 = vector.shape_cast %56 : vector<64xf32> to vector<64x1xf32>
    %cst_14 = arith.constant dense<0.000000e+00> : vector<64xf32>
    %58 = vector.multi_reduction <add>, %51, %cst_14 [1] : vector<64x128xf32> to vector<64xf32>
    %59 = vector.shape_cast %58 : vector<64xf32> to vector<64x1xf32>
    %60 = arith.subf %59, %57 : vector<64x1xf32>
    %61 = vector.shape_cast %2 : vector<1x128xi1> to vector<1x128xi1>
    %62 = vector.broadcast %61 : vector<1x128xi1> to vector<64x128xi1>
    %63 = vector.shape_cast %57 : vector<64x1xf32> to vector<64x1xf32>
    %64 = vector.broadcast %63 : vector<64x1xf32> to vector<64x128xf32>
    %65 = vector.shape_cast %60 : vector<64x1xf32> to vector<64x1xf32>
    %66 = vector.broadcast %65 : vector<64x1xf32> to vector<64x128xf32>
    %67 = arith.select %62, %64, %66 : vector<64x128xi1>, vector<64x128xf32>
    %68 = vector.broadcast %34 : vector<1x128xf32> to vector<64x128xf32>
    %69 = arith.mulf %3, %68 : vector<64x128xf32>
    %70 = vector.broadcast %36 : vector<1x128xf32> to vector<64x128xf32>
    %71 = arith.mulf %49, %70 : vector<64x128xf32>
    %72 = arith.addf %69, %71 : vector<64x128xf32>
    %73 = vector.broadcast %38 : vector<1x128xf32> to vector<64x128xf32>
    %74 = arith.mulf %67, %73 : vector<64x128xf32>
    %75 = arith.addf %72, %74 : vector<64x128xf32>
    %76 = vector.broadcast %35 : vector<1x128xf32> to vector<64x128xf32>
    %77 = arith.mulf %75, %76 : vector<64x128xf32>
    %cst_15 = arith.constant 0.000000e+00 : f32
    %78 = vector.shape_cast %2 : vector<1x128xi1> to vector<1x128xi1>
    %79 = vector.broadcast %78 : vector<1x128xi1> to vector<64x128xi1>
    %80 = vector.broadcast %cst_15 : f32 to vector<64x128xf32>
    %81 = arith.select %79, %77, %80 : vector<64x128xi1>, vector<64x128xf32>
    %cst_16 = arith.constant dense<0.000000e+00> : vector<64xf32>
    %82 = vector.multi_reduction <add>, %81, %cst_16 [1] : vector<64x128xf32> to vector<64xf32>
    %83 = vector.shape_cast %82 : vector<64xf32> to vector<64x1xf32>
    %cst_17 = arith.constant dense<0.000000e+00> : vector<64xf32>
    %84 = vector.multi_reduction <add>, %77, %cst_17 [1] : vector<64x128xf32> to vector<64xf32>
    %85 = vector.shape_cast %84 : vector<64xf32> to vector<64x1xf32>
    %86 = arith.subf %85, %83 : vector<64x1xf32>
    %87 = tpu.concatenate %83, %86 in 0 : vector<64x1xf32>, vector<64x1xf32> -> vector<128x1xf32>
    %88 = tpu.transpose %87, [1, 0] : vector<128x1xf32> -> vector<1x128xf32>
    %89 = vector.extract_strided_slice %13 {offsets = [1, 0], sizes = [1, 128], strides = [1, 1]} : vector<16x128xf32> to vector<1x128xf32>
    %90 = vector.extract_strided_slice %17 {offsets = [1, 0], sizes = [1, 128], strides = [1, 1]} : vector<16x128xf32> to vector<1x128xf32>
    %91 = vector.extract_strided_slice %21 {offsets = [1, 0], sizes = [1, 128], strides = [1, 1]} : vector<16x128xf32> to vector<1x128xf32>
    %92 = vector.extract_strided_slice %29 {offsets = [1, 0], sizes = [1, 128], strides = [1, 1]} : vector<16x128xf32> to vector<1x128xf32>
    %93 = vector.extract_strided_slice %33 {offsets = [1, 0], sizes = [1, 128], strides = [1, 1]} : vector<16x128xf32> to vector<1x128xf32>
    %94 = vector.extract_strided_slice %25 {offsets = [1, 0], sizes = [1, 128], strides = [1, 1]} : vector<16x128xf32> to vector<1x128xf32>
    %95 = tpu.transpose %94, [1, 0] : vector<1x128xf32> -> vector<128x1xf32>
    %96 = vector.extract_strided_slice %95 {offsets = [0, 0], sizes = [64, 1], strides = [1, 1]} : vector<128x1xf32> to vector<64x1xf32>
    %97 = vector.extract_strided_slice %95 {offsets = [64, 0], sizes = [64, 1], strides = [1, 1]} : vector<128x1xf32> to vector<64x1xf32>
    %98 = vector.shape_cast %2 : vector<1x128xi1> to vector<1x128xi1>
    %99 = vector.broadcast %98 : vector<1x128xi1> to vector<64x128xi1>
    %100 = vector.shape_cast %96 : vector<64x1xf32> to vector<64x1xf32>
    %101 = vector.broadcast %100 : vector<64x1xf32> to vector<64x128xf32>
    %102 = vector.shape_cast %97 : vector<64x1xf32> to vector<64x1xf32>
    %103 = vector.broadcast %102 : vector<64x1xf32> to vector<64x128xf32>
    %104 = arith.select %99, %101, %103 : vector<64x128xi1>, vector<64x128xf32>
    %105 = vector.broadcast %92 : vector<1x128xf32> to vector<64x128xf32>
    %106 = arith.mulf %75, %105 : vector<64x128xf32>
    %cst_18 = arith.constant 0.000000e+00 : f32
    %107 = vector.shape_cast %2 : vector<1x128xi1> to vector<1x128xi1>
    %108 = vector.broadcast %107 : vector<1x128xi1> to vector<64x128xi1>
    %109 = vector.broadcast %cst_18 : f32 to vector<64x128xf32>
    %110 = arith.select %108, %106, %109 : vector<64x128xi1>, vector<64x128xf32>
    %cst_19 = arith.constant dense<0.000000e+00> : vector<64xf32>
    %111 = vector.multi_reduction <add>, %110, %cst_19 [1] : vector<64x128xf32> to vector<64xf32>
    %112 = vector.shape_cast %111 : vector<64xf32> to vector<64x1xf32>
    %cst_20 = arith.constant dense<0.000000e+00> : vector<64xf32>
    %113 = vector.multi_reduction <add>, %106, %cst_20 [1] : vector<64x128xf32> to vector<64xf32>
    %114 = vector.shape_cast %113 : vector<64xf32> to vector<64x1xf32>
    %115 = arith.subf %114, %112 : vector<64x1xf32>
    %116 = vector.shape_cast %2 : vector<1x128xi1> to vector<1x128xi1>
    %117 = vector.broadcast %116 : vector<1x128xi1> to vector<64x128xi1>
    %118 = vector.shape_cast %112 : vector<64x1xf32> to vector<64x1xf32>
    %119 = vector.broadcast %118 : vector<64x1xf32> to vector<64x128xf32>
    %120 = vector.shape_cast %115 : vector<64x1xf32> to vector<64x1xf32>
    %121 = vector.broadcast %120 : vector<64x1xf32> to vector<64x128xf32>
    %122 = arith.select %117, %119, %121 : vector<64x128xi1>, vector<64x128xf32>
    %123 = vector.broadcast %89 : vector<1x128xf32> to vector<64x128xf32>
    %124 = arith.mulf %75, %123 : vector<64x128xf32>
    %125 = vector.broadcast %91 : vector<1x128xf32> to vector<64x128xf32>
    %126 = arith.mulf %104, %125 : vector<64x128xf32>
    %127 = arith.addf %124, %126 : vector<64x128xf32>
    %128 = vector.broadcast %93 : vector<1x128xf32> to vector<64x128xf32>
    %129 = arith.mulf %122, %128 : vector<64x128xf32>
    %130 = arith.addf %127, %129 : vector<64x128xf32>
    %131 = vector.broadcast %90 : vector<1x128xf32> to vector<64x128xf32>
    %132 = arith.mulf %130, %131 : vector<64x128xf32>
    %cst_21 = arith.constant 0.000000e+00 : f32
    %133 = vector.shape_cast %2 : vector<1x128xi1> to vector<1x128xi1>
    %134 = vector.broadcast %133 : vector<1x128xi1> to vector<64x128xi1>
    %135 = vector.broadcast %cst_21 : f32 to vector<64x128xf32>
    %136 = arith.select %134, %132, %135 : vector<64x128xi1>, vector<64x128xf32>
    %cst_22 = arith.constant dense<0.000000e+00> : vector<64xf32>
    %137 = vector.multi_reduction <add>, %136, %cst_22 [1] : vector<64x128xf32> to vector<64xf32>
    %138 = vector.shape_cast %137 : vector<64xf32> to vector<64x1xf32>
    %cst_23 = arith.constant dense<0.000000e+00> : vector<64xf32>
    %139 = vector.multi_reduction <add>, %132, %cst_23 [1] : vector<64x128xf32> to vector<64xf32>
    %140 = vector.shape_cast %139 : vector<64xf32> to vector<64x1xf32>
    %141 = arith.subf %140, %138 : vector<64x1xf32>
    %142 = tpu.concatenate %138, %141 in 0 : vector<64x1xf32>, vector<64x1xf32> -> vector<128x1xf32>
    %143 = tpu.transpose %142, [1, 0] : vector<128x1xf32> -> vector<1x128xf32>
    %144 = vector.extract_strided_slice %13 {offsets = [2, 0], sizes = [1, 128], strides = [1, 1]} : vector<16x128xf32> to vector<1x128xf32>
    %145 = vector.extract_strided_slice %17 {offsets = [2, 0], sizes = [1, 128], strides = [1, 1]} : vector<16x128xf32> to vector<1x128xf32>
    %146 = vector.extract_strided_slice %21 {offsets = [2, 0], sizes = [1, 128], strides = [1, 1]} : vector<16x128xf32> to vector<1x128xf32>
    %147 = vector.extract_strided_slice %29 {offsets = [2, 0], sizes = [1, 128], strides = [1, 1]} : vector<16x128xf32> to vector<1x128xf32>
    %148 = vector.extract_strided_slice %33 {offsets = [2, 0], sizes = [1, 128], strides = [1, 1]} : vector<16x128xf32> to vector<1x128xf32>
    %149 = vector.extract_strided_slice %25 {offsets = [2, 0], sizes = [1, 128], strides = [1, 1]} : vector<16x128xf32> to vector<1x128xf32>
    %150 = tpu.transpose %149, [1, 0] : vector<1x128xf32> -> vector<128x1xf32>
    %151 = vector.extract_strided_slice %150 {offsets = [0, 0], sizes = [64, 1], strides = [1, 1]} : vector<128x1xf32> to vector<64x1xf32>
    %152 = vector.extract_strided_slice %150 {offsets = [64, 0], sizes = [64, 1], strides = [1, 1]} : vector<128x1xf32> to vector<64x1xf32>
    %153 = vector.shape_cast %2 : vector<1x128xi1> to vector<1x128xi1>
    %154 = vector.broadcast %153 : vector<1x128xi1> to vector<64x128xi1>
    %155 = vector.shape_cast %151 : vector<64x1xf32> to vector<64x1xf32>
    %156 = vector.broadcast %155 : vector<64x1xf32> to vector<64x128xf32>
    %157 = vector.shape_cast %152 : vector<64x1xf32> to vector<64x1xf32>
    %158 = vector.broadcast %157 : vector<64x1xf32> to vector<64x128xf32>
    %159 = arith.select %154, %156, %158 : vector<64x128xi1>, vector<64x128xf32>
    %160 = vector.broadcast %147 : vector<1x128xf32> to vector<64x128xf32>
    %161 = arith.mulf %130, %160 : vector<64x128xf32>
    %cst_24 = arith.constant 0.000000e+00 : f32
    %162 = vector.shape_cast %2 : vector<1x128xi1> to vector<1x128xi1>
    %163 = vector.broadcast %162 : vector<1x128xi1> to vector<64x128xi1>
    %164 = vector.broadcast %cst_24 : f32 to vector<64x128xf32>
    %165 = arith.select %163, %161, %164 : vector<64x128xi1>, vector<64x128xf32>
    %cst_25 = arith.constant dense<0.000000e+00> : vector<64xf32>
    %166 = vector.multi_reduction <add>, %165, %cst_25 [1] : vector<64x128xf32> to vector<64xf32>
    %167 = vector.shape_cast %166 : vector<64xf32> to vector<64x1xf32>
    %cst_26 = arith.constant dense<0.000000e+00> : vector<64xf32>
    %168 = vector.multi_reduction <add>, %161, %cst_26 [1] : vector<64x128xf32> to vector<64xf32>
    %169 = vector.shape_cast %168 : vector<64xf32> to vector<64x1xf32>
    %170 = arith.subf %169, %167 : vector<64x1xf32>
    %171 = vector.shape_cast %2 : vector<1x128xi1> to vector<1x128xi1>
    %172 = vector.broadcast %171 : vector<1x128xi1> to vector<64x128xi1>
    %173 = vector.shape_cast %167 : vector<64x1xf32> to vector<64x1xf32>
    %174 = vector.broadcast %173 : vector<64x1xf32> to vector<64x128xf32>
    %175 = vector.shape_cast %170 : vector<64x1xf32> to vector<64x1xf32>
    %176 = vector.broadcast %175 : vector<64x1xf32> to vector<64x128xf32>
    %177 = arith.select %172, %174, %176 : vector<64x128xi1>, vector<64x128xf32>
    %178 = vector.broadcast %144 : vector<1x128xf32> to vector<64x128xf32>
    %179 = arith.mulf %130, %178 : vector<64x128xf32>
    %180 = vector.broadcast %146 : vector<1x128xf32> to vector<64x128xf32>
    %181 = arith.mulf %159, %180 : vector<64x128xf32>
    %182 = arith.addf %179, %181 : vector<64x128xf32>
    %183 = vector.broadcast %148 : vector<1x128xf32> to vector<64x128xf32>
    %184 = arith.mulf %177, %183 : vector<64x128xf32>
    %185 = arith.addf %182, %184 : vector<64x128xf32>
    %186 = vector.broadcast %145 : vector<1x128xf32> to vector<64x128xf32>
    %187 = arith.mulf %185, %186 : vector<64x128xf32>
    %cst_27 = arith.constant 0.000000e+00 : f32
    %188 = vector.shape_cast %2 : vector<1x128xi1> to vector<1x128xi1>
    %189 = vector.broadcast %188 : vector<1x128xi1> to vector<64x128xi1>
    %190 = vector.broadcast %cst_27 : f32 to vector<64x128xf32>
    %191 = arith.select %189, %187, %190 : vector<64x128xi1>, vector<64x128xf32>
    %cst_28 = arith.constant dense<0.000000e+00> : vector<64xf32>
    %192 = vector.multi_reduction <add>, %191, %cst_28 [1] : vector<64x128xf32> to vector<64xf32>
    %193 = vector.shape_cast %192 : vector<64xf32> to vector<64x1xf32>
    %cst_29 = arith.constant dense<0.000000e+00> : vector<64xf32>
    %194 = vector.multi_reduction <add>, %187, %cst_29 [1] : vector<64x128xf32> to vector<64xf32>
    %195 = vector.shape_cast %194 : vector<64xf32> to vector<64x1xf32>
    %196 = arith.subf %195, %193 : vector<64x1xf32>
    %197 = tpu.concatenate %193, %196 in 0 : vector<64x1xf32>, vector<64x1xf32> -> vector<128x1xf32>
    %198 = tpu.transpose %197, [1, 0] : vector<128x1xf32> -> vector<1x128xf32>
    %199 = vector.extract_strided_slice %13 {offsets = [3, 0], sizes = [1, 128], strides = [1, 1]} : vector<16x128xf32> to vector<1x128xf32>
    %200 = vector.extract_strided_slice %17 {offsets = [3, 0], sizes = [1, 128], strides = [1, 1]} : vector<16x128xf32> to vector<1x128xf32>
    %201 = vector.extract_strided_slice %21 {offsets = [3, 0], sizes = [1, 128], strides = [1, 1]} : vector<16x128xf32> to vector<1x128xf32>
    %202 = vector.extract_strided_slice %29 {offsets = [3, 0], sizes = [1, 128], strides = [1, 1]} : vector<16x128xf32> to vector<1x128xf32>
    %203 = vector.extract_strided_slice %33 {offsets = [3, 0], sizes = [1, 128], strides = [1, 1]} : vector<16x128xf32> to vector<1x128xf32>
    %204 = vector.extract_strided_slice %25 {offsets = [3, 0], sizes = [1, 128], strides = [1, 1]} : vector<16x128xf32> to vector<1x128xf32>
    %205 = tpu.transpose %204, [1, 0] : vector<1x128xf32> -> vector<128x1xf32>
    %206 = vector.extract_strided_slice %205 {offsets = [0, 0], sizes = [64, 1], strides = [1, 1]} : vector<128x1xf32> to vector<64x1xf32>
    %207 = vector.extract_strided_slice %205 {offsets = [64, 0], sizes = [64, 1], strides = [1, 1]} : vector<128x1xf32> to vector<64x1xf32>
    %208 = vector.shape_cast %2 : vector<1x128xi1> to vector<1x128xi1>
    %209 = vector.broadcast %208 : vector<1x128xi1> to vector<64x128xi1>
    %210 = vector.shape_cast %206 : vector<64x1xf32> to vector<64x1xf32>
    %211 = vector.broadcast %210 : vector<64x1xf32> to vector<64x128xf32>
    %212 = vector.shape_cast %207 : vector<64x1xf32> to vector<64x1xf32>
    %213 = vector.broadcast %212 : vector<64x1xf32> to vector<64x128xf32>
    %214 = arith.select %209, %211, %213 : vector<64x128xi1>, vector<64x128xf32>
    %215 = vector.broadcast %202 : vector<1x128xf32> to vector<64x128xf32>
    %216 = arith.mulf %185, %215 : vector<64x128xf32>
    %cst_30 = arith.constant 0.000000e+00 : f32
    %217 = vector.shape_cast %2 : vector<1x128xi1> to vector<1x128xi1>
    %218 = vector.broadcast %217 : vector<1x128xi1> to vector<64x128xi1>
    %219 = vector.broadcast %cst_30 : f32 to vector<64x128xf32>
    %220 = arith.select %218, %216, %219 : vector<64x128xi1>, vector<64x128xf32>
    %cst_31 = arith.constant dense<0.000000e+00> : vector<64xf32>
    %221 = vector.multi_reduction <add>, %220, %cst_31 [1] : vector<64x128xf32> to vector<64xf32>
    %222 = vector.shape_cast %221 : vector<64xf32> to vector<64x1xf32>
    %cst_32 = arith.constant dense<0.000000e+00> : vector<64xf32>
    %223 = vector.multi_reduction <add>, %216, %cst_32 [1] : vector<64x128xf32> to vector<64xf32>
    %224 = vector.shape_cast %223 : vector<64xf32> to vector<64x1xf32>
    %225 = arith.subf %224, %222 : vector<64x1xf32>
    %226 = vector.shape_cast %2 : vector<1x128xi1> to vector<1x128xi1>
    %227 = vector.broadcast %226 : vector<1x128xi1> to vector<64x128xi1>
    %228 = vector.shape_cast %222 : vector<64x1xf32> to vector<64x1xf32>
    %229 = vector.broadcast %228 : vector<64x1xf32> to vector<64x128xf32>
    %230 = vector.shape_cast %225 : vector<64x1xf32> to vector<64x1xf32>
    %231 = vector.broadcast %230 : vector<64x1xf32> to vector<64x128xf32>
    %232 = arith.select %227, %229, %231 : vector<64x128xi1>, vector<64x128xf32>
    %233 = vector.broadcast %199 : vector<1x128xf32> to vector<64x128xf32>
    %234 = arith.mulf %185, %233 : vector<64x128xf32>
    %235 = vector.broadcast %201 : vector<1x128xf32> to vector<64x128xf32>
    %236 = arith.mulf %214, %235 : vector<64x128xf32>
    %237 = arith.addf %234, %236 : vector<64x128xf32>
    %238 = vector.broadcast %203 : vector<1x128xf32> to vector<64x128xf32>
    %239 = arith.mulf %232, %238 : vector<64x128xf32>
    %240 = arith.addf %237, %239 : vector<64x128xf32>
    %241 = vector.broadcast %200 : vector<1x128xf32> to vector<64x128xf32>
    %242 = arith.mulf %240, %241 : vector<64x128xf32>
    %cst_33 = arith.constant 0.000000e+00 : f32
    %243 = vector.shape_cast %2 : vector<1x128xi1> to vector<1x128xi1>
    %244 = vector.broadcast %243 : vector<1x128xi1> to vector<64x128xi1>
    %245 = vector.broadcast %cst_33 : f32 to vector<64x128xf32>
    %246 = arith.select %244, %242, %245 : vector<64x128xi1>, vector<64x128xf32>
    %cst_34 = arith.constant dense<0.000000e+00> : vector<64xf32>
    %247 = vector.multi_reduction <add>, %246, %cst_34 [1] : vector<64x128xf32> to vector<64xf32>
    %248 = vector.shape_cast %247 : vector<64xf32> to vector<64x1xf32>
    %cst_35 = arith.constant dense<0.000000e+00> : vector<64xf32>
    %249 = vector.multi_reduction <add>, %242, %cst_35 [1] : vector<64x128xf32> to vector<64xf32>
    %250 = vector.shape_cast %249 : vector<64xf32> to vector<64x1xf32>
    %251 = arith.subf %250, %248 : vector<64x1xf32>
    %252 = tpu.concatenate %248, %251 in 0 : vector<64x1xf32>, vector<64x1xf32> -> vector<128x1xf32>
    %253 = tpu.transpose %252, [1, 0] : vector<128x1xf32> -> vector<1x128xf32>
    %254 = vector.extract_strided_slice %13 {offsets = [4, 0], sizes = [1, 128], strides = [1, 1]} : vector<16x128xf32> to vector<1x128xf32>
    %255 = vector.extract_strided_slice %17 {offsets = [4, 0], sizes = [1, 128], strides = [1, 1]} : vector<16x128xf32> to vector<1x128xf32>
    %256 = vector.extract_strided_slice %21 {offsets = [4, 0], sizes = [1, 128], strides = [1, 1]} : vector<16x128xf32> to vector<1x128xf32>
    %257 = vector.extract_strided_slice %29 {offsets = [4, 0], sizes = [1, 128], strides = [1, 1]} : vector<16x128xf32> to vector<1x128xf32>
    %258 = vector.extract_strided_slice %33 {offsets = [4, 0], sizes = [1, 128], strides = [1, 1]} : vector<16x128xf32> to vector<1x128xf32>
    %259 = vector.extract_strided_slice %25 {offsets = [4, 0], sizes = [1, 128], strides = [1, 1]} : vector<16x128xf32> to vector<1x128xf32>
    %260 = tpu.transpose %259, [1, 0] : vector<1x128xf32> -> vector<128x1xf32>
    %261 = vector.extract_strided_slice %260 {offsets = [0, 0], sizes = [64, 1], strides = [1, 1]} : vector<128x1xf32> to vector<64x1xf32>
    %262 = vector.extract_strided_slice %260 {offsets = [64, 0], sizes = [64, 1], strides = [1, 1]} : vector<128x1xf32> to vector<64x1xf32>
    %263 = vector.shape_cast %2 : vector<1x128xi1> to vector<1x128xi1>
    %264 = vector.broadcast %263 : vector<1x128xi1> to vector<64x128xi1>
    %265 = vector.shape_cast %261 : vector<64x1xf32> to vector<64x1xf32>
    %266 = vector.broadcast %265 : vector<64x1xf32> to vector<64x128xf32>
    %267 = vector.shape_cast %262 : vector<64x1xf32> to vector<64x1xf32>
    %268 = vector.broadcast %267 : vector<64x1xf32> to vector<64x128xf32>
    %269 = arith.select %264, %266, %268 : vector<64x128xi1>, vector<64x128xf32>
    %270 = vector.broadcast %257 : vector<1x128xf32> to vector<64x128xf32>
    %271 = arith.mulf %240, %270 : vector<64x128xf32>
    %cst_36 = arith.constant 0.000000e+00 : f32
    %272 = vector.shape_cast %2 : vector<1x128xi1> to vector<1x128xi1>
    %273 = vector.broadcast %272 : vector<1x128xi1> to vector<64x128xi1>
    %274 = vector.broadcast %cst_36 : f32 to vector<64x128xf32>
    %275 = arith.select %273, %271, %274 : vector<64x128xi1>, vector<64x128xf32>
    %cst_37 = arith.constant dense<0.000000e+00> : vector<64xf32>
    %276 = vector.multi_reduction <add>, %275, %cst_37 [1] : vector<64x128xf32> to vector<64xf32>
    %277 = vector.shape_cast %276 : vector<64xf32> to vector<64x1xf32>
    %cst_38 = arith.constant dense<0.000000e+00> : vector<64xf32>
    %278 = vector.multi_reduction <add>, %271, %cst_38 [1] : vector<64x128xf32> to vector<64xf32>
    %279 = vector.shape_cast %278 : vector<64xf32> to vector<64x1xf32>
    %280 = arith.subf %279, %277 : vector<64x1xf32>
    %281 = vector.shape_cast %2 : vector<1x128xi1> to vector<1x128xi1>
    %282 = vector.broadcast %281 : vector<1x128xi1> to vector<64x128xi1>
    %283 = vector.shape_cast %277 : vector<64x1xf32> to vector<64x1xf32>
    %284 = vector.broadcast %283 : vector<64x1xf32> to vector<64x128xf32>
    %285 = vector.shape_cast %280 : vector<64x1xf32> to vector<64x1xf32>
    %286 = vector.broadcast %285 : vector<64x1xf32> to vector<64x128xf32>
    %287 = arith.select %282, %284, %286 : vector<64x128xi1>, vector<64x128xf32>
    %288 = vector.broadcast %254 : vector<1x128xf32> to vector<64x128xf32>
    %289 = arith.mulf %240, %288 : vector<64x128xf32>
    %290 = vector.broadcast %256 : vector<1x128xf32> to vector<64x128xf32>
    %291 = arith.mulf %269, %290 : vector<64x128xf32>
    %292 = arith.addf %289, %291 : vector<64x128xf32>
    %293 = vector.broadcast %258 : vector<1x128xf32> to vector<64x128xf32>
    %294 = arith.mulf %287, %293 : vector<64x128xf32>
    %295 = arith.addf %292, %294 : vector<64x128xf32>
    %296 = vector.broadcast %255 : vector<1x128xf32> to vector<64x128xf32>
    %297 = arith.mulf %295, %296 : vector<64x128xf32>
    %cst_39 = arith.constant 0.000000e+00 : f32
    %298 = vector.shape_cast %2 : vector<1x128xi1> to vector<1x128xi1>
    %299 = vector.broadcast %298 : vector<1x128xi1> to vector<64x128xi1>
    %300 = vector.broadcast %cst_39 : f32 to vector<64x128xf32>
    %301 = arith.select %299, %297, %300 : vector<64x128xi1>, vector<64x128xf32>
    %cst_40 = arith.constant dense<0.000000e+00> : vector<64xf32>
    %302 = vector.multi_reduction <add>, %301, %cst_40 [1] : vector<64x128xf32> to vector<64xf32>
    %303 = vector.shape_cast %302 : vector<64xf32> to vector<64x1xf32>
    %cst_41 = arith.constant dense<0.000000e+00> : vector<64xf32>
    %304 = vector.multi_reduction <add>, %297, %cst_41 [1] : vector<64x128xf32> to vector<64xf32>
    %305 = vector.shape_cast %304 : vector<64xf32> to vector<64x1xf32>
    %306 = arith.subf %305, %303 : vector<64x1xf32>
    %307 = tpu.concatenate %303, %306 in 0 : vector<64x1xf32>, vector<64x1xf32> -> vector<128x1xf32>
    %308 = tpu.transpose %307, [1, 0] : vector<128x1xf32> -> vector<1x128xf32>
    %309 = vector.extract_strided_slice %13 {offsets = [5, 0], sizes = [1, 128], strides = [1, 1]} : vector<16x128xf32> to vector<1x128xf32>
    %310 = vector.extract_strided_slice %17 {offsets = [5, 0], sizes = [1, 128], strides = [1, 1]} : vector<16x128xf32> to vector<1x128xf32>
    %311 = vector.extract_strided_slice %21 {offsets = [5, 0], sizes = [1, 128], strides = [1, 1]} : vector<16x128xf32> to vector<1x128xf32>
    %312 = vector.extract_strided_slice %29 {offsets = [5, 0], sizes = [1, 128], strides = [1, 1]} : vector<16x128xf32> to vector<1x128xf32>
    %313 = vector.extract_strided_slice %33 {offsets = [5, 0], sizes = [1, 128], strides = [1, 1]} : vector<16x128xf32> to vector<1x128xf32>
    %314 = vector.extract_strided_slice %25 {offsets = [5, 0], sizes = [1, 128], strides = [1, 1]} : vector<16x128xf32> to vector<1x128xf32>
    %315 = tpu.transpose %314, [1, 0] : vector<1x128xf32> -> vector<128x1xf32>
    %316 = vector.extract_strided_slice %315 {offsets = [0, 0], sizes = [64, 1], strides = [1, 1]} : vector<128x1xf32> to vector<64x1xf32>
    %317 = vector.extract_strided_slice %315 {offsets = [64, 0], sizes = [64, 1], strides = [1, 1]} : vector<128x1xf32> to vector<64x1xf32>
    %318 = vector.shape_cast %2 : vector<1x128xi1> to vector<1x128xi1>
    %319 = vector.broadcast %318 : vector<1x128xi1> to vector<64x128xi1>
    %320 = vector.shape_cast %316 : vector<64x1xf32> to vector<64x1xf32>
    %321 = vector.broadcast %320 : vector<64x1xf32> to vector<64x128xf32>
    %322 = vector.shape_cast %317 : vector<64x1xf32> to vector<64x1xf32>
    %323 = vector.broadcast %322 : vector<64x1xf32> to vector<64x128xf32>
    %324 = arith.select %319, %321, %323 : vector<64x128xi1>, vector<64x128xf32>
    %325 = vector.broadcast %312 : vector<1x128xf32> to vector<64x128xf32>
    %326 = arith.mulf %295, %325 : vector<64x128xf32>
    %cst_42 = arith.constant 0.000000e+00 : f32
    %327 = vector.shape_cast %2 : vector<1x128xi1> to vector<1x128xi1>
    %328 = vector.broadcast %327 : vector<1x128xi1> to vector<64x128xi1>
    %329 = vector.broadcast %cst_42 : f32 to vector<64x128xf32>
    %330 = arith.select %328, %326, %329 : vector<64x128xi1>, vector<64x128xf32>
    %cst_43 = arith.constant dense<0.000000e+00> : vector<64xf32>
    %331 = vector.multi_reduction <add>, %330, %cst_43 [1] : vector<64x128xf32> to vector<64xf32>
    %332 = vector.shape_cast %331 : vector<64xf32> to vector<64x1xf32>
    %cst_44 = arith.constant dense<0.000000e+00> : vector<64xf32>
    %333 = vector.multi_reduction <add>, %326, %cst_44 [1] : vector<64x128xf32> to vector<64xf32>
    %334 = vector.shape_cast %333 : vector<64xf32> to vector<64x1xf32>
    %335 = arith.subf %334, %332 : vector<64x1xf32>
    %336 = vector.shape_cast %2 : vector<1x128xi1> to vector<1x128xi1>
    %337 = vector.broadcast %336 : vector<1x128xi1> to vector<64x128xi1>
    %338 = vector.shape_cast %332 : vector<64x1xf32> to vector<64x1xf32>
    %339 = vector.broadcast %338 : vector<64x1xf32> to vector<64x128xf32>
    %340 = vector.shape_cast %335 : vector<64x1xf32> to vector<64x1xf32>
    %341 = vector.broadcast %340 : vector<64x1xf32> to vector<64x128xf32>
    %342 = arith.select %337, %339, %341 : vector<64x128xi1>, vector<64x128xf32>
    %343 = vector.broadcast %309 : vector<1x128xf32> to vector<64x128xf32>
    %344 = arith.mulf %295, %343 : vector<64x128xf32>
    %345 = vector.broadcast %311 : vector<1x128xf32> to vector<64x128xf32>
    %346 = arith.mulf %324, %345 : vector<64x128xf32>
    %347 = arith.addf %344, %346 : vector<64x128xf32>
    %348 = vector.broadcast %313 : vector<1x128xf32> to vector<64x128xf32>
    %349 = arith.mulf %342, %348 : vector<64x128xf32>
    %350 = arith.addf %347, %349 : vector<64x128xf32>
    %351 = vector.broadcast %310 : vector<1x128xf32> to vector<64x128xf32>
    %352 = arith.mulf %350, %351 : vector<64x128xf32>
    %cst_45 = arith.constant 0.000000e+00 : f32
    %353 = vector.shape_cast %2 : vector<1x128xi1> to vector<1x128xi1>
    %354 = vector.broadcast %353 : vector<1x128xi1> to vector<64x128xi1>
    %355 = vector.broadcast %cst_45 : f32 to vector<64x128xf32>
    %356 = arith.select %354, %352, %355 : vector<64x128xi1>, vector<64x128xf32>
    %cst_46 = arith.constant dense<0.000000e+00> : vector<64xf32>
    %357 = vector.multi_reduction <add>, %356, %cst_46 [1] : vector<64x128xf32> to vector<64xf32>
    %358 = vector.shape_cast %357 : vector<64xf32> to vector<64x1xf32>
    %cst_47 = arith.constant dense<0.000000e+00> : vector<64xf32>
    %359 = vector.multi_reduction <add>, %352, %cst_47 [1] : vector<64x128xf32> to vector<64xf32>
    %360 = vector.shape_cast %359 : vector<64xf32> to vector<64x1xf32>
    %361 = arith.subf %360, %358 : vector<64x1xf32>
    %362 = tpu.concatenate %358, %361 in 0 : vector<64x1xf32>, vector<64x1xf32> -> vector<128x1xf32>
    %363 = tpu.transpose %362, [1, 0] : vector<128x1xf32> -> vector<1x128xf32>
    %364 = vector.extract_strided_slice %13 {offsets = [6, 0], sizes = [1, 128], strides = [1, 1]} : vector<16x128xf32> to vector<1x128xf32>
    %365 = vector.extract_strided_slice %17 {offsets = [6, 0], sizes = [1, 128], strides = [1, 1]} : vector<16x128xf32> to vector<1x128xf32>
    %366 = vector.extract_strided_slice %21 {offsets = [6, 0], sizes = [1, 128], strides = [1, 1]} : vector<16x128xf32> to vector<1x128xf32>
    %367 = vector.extract_strided_slice %29 {offsets = [6, 0], sizes = [1, 128], strides = [1, 1]} : vector<16x128xf32> to vector<1x128xf32>
    %368 = vector.extract_strided_slice %33 {offsets = [6, 0], sizes = [1, 128], strides = [1, 1]} : vector<16x128xf32> to vector<1x128xf32>
    %369 = vector.extract_strided_slice %25 {offsets = [6, 0], sizes = [1, 128], strides = [1, 1]} : vector<16x128xf32> to vector<1x128xf32>
    %370 = tpu.transpose %369, [1, 0] : vector<1x128xf32> -> vector<128x1xf32>
    %371 = vector.extract_strided_slice %370 {offsets = [0, 0], sizes = [64, 1], strides = [1, 1]} : vector<128x1xf32> to vector<64x1xf32>
    %372 = vector.extract_strided_slice %370 {offsets = [64, 0], sizes = [64, 1], strides = [1, 1]} : vector<128x1xf32> to vector<64x1xf32>
    %373 = vector.shape_cast %2 : vector<1x128xi1> to vector<1x128xi1>
    %374 = vector.broadcast %373 : vector<1x128xi1> to vector<64x128xi1>
    %375 = vector.shape_cast %371 : vector<64x1xf32> to vector<64x1xf32>
    %376 = vector.broadcast %375 : vector<64x1xf32> to vector<64x128xf32>
    %377 = vector.shape_cast %372 : vector<64x1xf32> to vector<64x1xf32>
    %378 = vector.broadcast %377 : vector<64x1xf32> to vector<64x128xf32>
    %379 = arith.select %374, %376, %378 : vector<64x128xi1>, vector<64x128xf32>
    %380 = vector.broadcast %367 : vector<1x128xf32> to vector<64x128xf32>
    %381 = arith.mulf %350, %380 : vector<64x128xf32>
    %cst_48 = arith.constant 0.000000e+00 : f32
    %382 = vector.shape_cast %2 : vector<1x128xi1> to vector<1x128xi1>
    %383 = vector.broadcast %382 : vector<1x128xi1> to vector<64x128xi1>
    %384 = vector.broadcast %cst_48 : f32 to vector<64x128xf32>
    %385 = arith.select %383, %381, %384 : vector<64x128xi1>, vector<64x128xf32>
    %cst_49 = arith.constant dense<0.000000e+00> : vector<64xf32>
    %386 = vector.multi_reduction <add>, %385, %cst_49 [1] : vector<64x128xf32> to vector<64xf32>
    %387 = vector.shape_cast %386 : vector<64xf32> to vector<64x1xf32>
    %cst_50 = arith.constant dense<0.000000e+00> : vector<64xf32>
    %388 = vector.multi_reduction <add>, %381, %cst_50 [1] : vector<64x128xf32> to vector<64xf32>
    %389 = vector.shape_cast %388 : vector<64xf32> to vector<64x1xf32>
    %390 = arith.subf %389, %387 : vector<64x1xf32>
    %391 = vector.shape_cast %2 : vector<1x128xi1> to vector<1x128xi1>
    %392 = vector.broadcast %391 : vector<1x128xi1> to vector<64x128xi1>
    %393 = vector.shape_cast %387 : vector<64x1xf32> to vector<64x1xf32>
    %394 = vector.broadcast %393 : vector<64x1xf32> to vector<64x128xf32>
    %395 = vector.shape_cast %390 : vector<64x1xf32> to vector<64x1xf32>
    %396 = vector.broadcast %395 : vector<64x1xf32> to vector<64x128xf32>
    %397 = arith.select %392, %394, %396 : vector<64x128xi1>, vector<64x128xf32>
    %398 = vector.broadcast %364 : vector<1x128xf32> to vector<64x128xf32>
    %399 = arith.mulf %350, %398 : vector<64x128xf32>
    %400 = vector.broadcast %366 : vector<1x128xf32> to vector<64x128xf32>
    %401 = arith.mulf %379, %400 : vector<64x128xf32>
    %402 = arith.addf %399, %401 : vector<64x128xf32>
    %403 = vector.broadcast %368 : vector<1x128xf32> to vector<64x128xf32>
    %404 = arith.mulf %397, %403 : vector<64x128xf32>
    %405 = arith.addf %402, %404 : vector<64x128xf32>
    %406 = vector.broadcast %365 : vector<1x128xf32> to vector<64x128xf32>
    %407 = arith.mulf %405, %406 : vector<64x128xf32>
    %cst_51 = arith.constant 0.000000e+00 : f32
    %408 = vector.shape_cast %2 : vector<1x128xi1> to vector<1x128xi1>
    %409 = vector.broadcast %408 : vector<1x128xi1> to vector<64x128xi1>
    %410 = vector.broadcast %cst_51 : f32 to vector<64x128xf32>
    %411 = arith.select %409, %407, %410 : vector<64x128xi1>, vector<64x128xf32>
    %cst_52 = arith.constant dense<0.000000e+00> : vector<64xf32>
    %412 = vector.multi_reduction <add>, %411, %cst_52 [1] : vector<64x128xf32> to vector<64xf32>
    %413 = vector.shape_cast %412 : vector<64xf32> to vector<64x1xf32>
    %cst_53 = arith.constant dense<0.000000e+00> : vector<64xf32>
    %414 = vector.multi_reduction <add>, %407, %cst_53 [1] : vector<64x128xf32> to vector<64xf32>
    %415 = vector.shape_cast %414 : vector<64xf32> to vector<64x1xf32>
    %416 = arith.subf %415, %413 : vector<64x1xf32>
    %417 = tpu.concatenate %413, %416 in 0 : vector<64x1xf32>, vector<64x1xf32> -> vector<128x1xf32>
    %418 = tpu.transpose %417, [1, 0] : vector<128x1xf32> -> vector<1x128xf32>
    %419 = vector.extract_strided_slice %13 {offsets = [7, 0], sizes = [1, 128], strides = [1, 1]} : vector<16x128xf32> to vector<1x128xf32>
    %420 = vector.extract_strided_slice %17 {offsets = [7, 0], sizes = [1, 128], strides = [1, 1]} : vector<16x128xf32> to vector<1x128xf32>
    %421 = vector.extract_strided_slice %21 {offsets = [7, 0], sizes = [1, 128], strides = [1, 1]} : vector<16x128xf32> to vector<1x128xf32>
    %422 = vector.extract_strided_slice %29 {offsets = [7, 0], sizes = [1, 128], strides = [1, 1]} : vector<16x128xf32> to vector<1x128xf32>
    %423 = vector.extract_strided_slice %33 {offsets = [7, 0], sizes = [1, 128], strides = [1, 1]} : vector<16x128xf32> to vector<1x128xf32>
    %424 = vector.extract_strided_slice %25 {offsets = [7, 0], sizes = [1, 128], strides = [1, 1]} : vector<16x128xf32> to vector<1x128xf32>
    %425 = tpu.transpose %424, [1, 0] : vector<1x128xf32> -> vector<128x1xf32>
    %426 = vector.extract_strided_slice %425 {offsets = [0, 0], sizes = [64, 1], strides = [1, 1]} : vector<128x1xf32> to vector<64x1xf32>
    %427 = vector.extract_strided_slice %425 {offsets = [64, 0], sizes = [64, 1], strides = [1, 1]} : vector<128x1xf32> to vector<64x1xf32>
    %428 = vector.shape_cast %2 : vector<1x128xi1> to vector<1x128xi1>
    %429 = vector.broadcast %428 : vector<1x128xi1> to vector<64x128xi1>
    %430 = vector.shape_cast %426 : vector<64x1xf32> to vector<64x1xf32>
    %431 = vector.broadcast %430 : vector<64x1xf32> to vector<64x128xf32>
    %432 = vector.shape_cast %427 : vector<64x1xf32> to vector<64x1xf32>
    %433 = vector.broadcast %432 : vector<64x1xf32> to vector<64x128xf32>
    %434 = arith.select %429, %431, %433 : vector<64x128xi1>, vector<64x128xf32>
    %435 = vector.broadcast %422 : vector<1x128xf32> to vector<64x128xf32>
    %436 = arith.mulf %405, %435 : vector<64x128xf32>
    %cst_54 = arith.constant 0.000000e+00 : f32
    %437 = vector.shape_cast %2 : vector<1x128xi1> to vector<1x128xi1>
    %438 = vector.broadcast %437 : vector<1x128xi1> to vector<64x128xi1>
    %439 = vector.broadcast %cst_54 : f32 to vector<64x128xf32>
    %440 = arith.select %438, %436, %439 : vector<64x128xi1>, vector<64x128xf32>
    %cst_55 = arith.constant dense<0.000000e+00> : vector<64xf32>
    %441 = vector.multi_reduction <add>, %440, %cst_55 [1] : vector<64x128xf32> to vector<64xf32>
    %442 = vector.shape_cast %441 : vector<64xf32> to vector<64x1xf32>
    %cst_56 = arith.constant dense<0.000000e+00> : vector<64xf32>
    %443 = vector.multi_reduction <add>, %436, %cst_56 [1] : vector<64x128xf32> to vector<64xf32>
    %444 = vector.shape_cast %443 : vector<64xf32> to vector<64x1xf32>
    %445 = arith.subf %444, %442 : vector<64x1xf32>
    %446 = vector.shape_cast %2 : vector<1x128xi1> to vector<1x128xi1>
    %447 = vector.broadcast %446 : vector<1x128xi1> to vector<64x128xi1>
    %448 = vector.shape_cast %442 : vector<64x1xf32> to vector<64x1xf32>
    %449 = vector.broadcast %448 : vector<64x1xf32> to vector<64x128xf32>
    %450 = vector.shape_cast %445 : vector<64x1xf32> to vector<64x1xf32>
    %451 = vector.broadcast %450 : vector<64x1xf32> to vector<64x128xf32>
    %452 = arith.select %447, %449, %451 : vector<64x128xi1>, vector<64x128xf32>
    %453 = vector.broadcast %419 : vector<1x128xf32> to vector<64x128xf32>
    %454 = arith.mulf %405, %453 : vector<64x128xf32>
    %455 = vector.broadcast %421 : vector<1x128xf32> to vector<64x128xf32>
    %456 = arith.mulf %434, %455 : vector<64x128xf32>
    %457 = arith.addf %454, %456 : vector<64x128xf32>
    %458 = vector.broadcast %423 : vector<1x128xf32> to vector<64x128xf32>
    %459 = arith.mulf %452, %458 : vector<64x128xf32>
    %460 = arith.addf %457, %459 : vector<64x128xf32>
    %461 = vector.broadcast %420 : vector<1x128xf32> to vector<64x128xf32>
    %462 = arith.mulf %460, %461 : vector<64x128xf32>
    %cst_57 = arith.constant 0.000000e+00 : f32
    %463 = vector.shape_cast %2 : vector<1x128xi1> to vector<1x128xi1>
    %464 = vector.broadcast %463 : vector<1x128xi1> to vector<64x128xi1>
    %465 = vector.broadcast %cst_57 : f32 to vector<64x128xf32>
    %466 = arith.select %464, %462, %465 : vector<64x128xi1>, vector<64x128xf32>
    %cst_58 = arith.constant dense<0.000000e+00> : vector<64xf32>
    %467 = vector.multi_reduction <add>, %466, %cst_58 [1] : vector<64x128xf32> to vector<64xf32>
    %468 = vector.shape_cast %467 : vector<64xf32> to vector<64x1xf32>
    %cst_59 = arith.constant dense<0.000000e+00> : vector<64xf32>
    %469 = vector.multi_reduction <add>, %462, %cst_59 [1] : vector<64x128xf32> to vector<64xf32>
    %470 = vector.shape_cast %469 : vector<64xf32> to vector<64x1xf32>
    %471 = arith.subf %470, %468 : vector<64x1xf32>
    %472 = tpu.concatenate %468, %471 in 0 : vector<64x1xf32>, vector<64x1xf32> -> vector<128x1xf32>
    %473 = tpu.transpose %472, [1, 0] : vector<128x1xf32> -> vector<1x128xf32>
    %474 = vector.extract_strided_slice %13 {offsets = [8, 0], sizes = [1, 128], strides = [1, 1]} : vector<16x128xf32> to vector<1x128xf32>
    %475 = vector.extract_strided_slice %17 {offsets = [8, 0], sizes = [1, 128], strides = [1, 1]} : vector<16x128xf32> to vector<1x128xf32>
    %476 = vector.extract_strided_slice %21 {offsets = [8, 0], sizes = [1, 128], strides = [1, 1]} : vector<16x128xf32> to vector<1x128xf32>
    %477 = vector.extract_strided_slice %29 {offsets = [8, 0], sizes = [1, 128], strides = [1, 1]} : vector<16x128xf32> to vector<1x128xf32>
    %478 = vector.extract_strided_slice %33 {offsets = [8, 0], sizes = [1, 128], strides = [1, 1]} : vector<16x128xf32> to vector<1x128xf32>
    %479 = vector.extract_strided_slice %25 {offsets = [8, 0], sizes = [1, 128], strides = [1, 1]} : vector<16x128xf32> to vector<1x128xf32>
    %480 = tpu.transpose %479, [1, 0] : vector<1x128xf32> -> vector<128x1xf32>
    %481 = vector.extract_strided_slice %480 {offsets = [0, 0], sizes = [64, 1], strides = [1, 1]} : vector<128x1xf32> to vector<64x1xf32>
    %482 = vector.extract_strided_slice %480 {offsets = [64, 0], sizes = [64, 1], strides = [1, 1]} : vector<128x1xf32> to vector<64x1xf32>
    %483 = vector.shape_cast %2 : vector<1x128xi1> to vector<1x128xi1>
    %484 = vector.broadcast %483 : vector<1x128xi1> to vector<64x128xi1>
    %485 = vector.shape_cast %481 : vector<64x1xf32> to vector<64x1xf32>
    %486 = vector.broadcast %485 : vector<64x1xf32> to vector<64x128xf32>
    %487 = vector.shape_cast %482 : vector<64x1xf32> to vector<64x1xf32>
    %488 = vector.broadcast %487 : vector<64x1xf32> to vector<64x128xf32>
    %489 = arith.select %484, %486, %488 : vector<64x128xi1>, vector<64x128xf32>
    %490 = vector.broadcast %477 : vector<1x128xf32> to vector<64x128xf32>
    %491 = arith.mulf %460, %490 : vector<64x128xf32>
    %cst_60 = arith.constant 0.000000e+00 : f32
    %492 = vector.shape_cast %2 : vector<1x128xi1> to vector<1x128xi1>
    %493 = vector.broadcast %492 : vector<1x128xi1> to vector<64x128xi1>
    %494 = vector.broadcast %cst_60 : f32 to vector<64x128xf32>
    %495 = arith.select %493, %491, %494 : vector<64x128xi1>, vector<64x128xf32>
    %cst_61 = arith.constant dense<0.000000e+00> : vector<64xf32>
    %496 = vector.multi_reduction <add>, %495, %cst_61 [1] : vector<64x128xf32> to vector<64xf32>
    %497 = vector.shape_cast %496 : vector<64xf32> to vector<64x1xf32>
    %cst_62 = arith.constant dense<0.000000e+00> : vector<64xf32>
    %498 = vector.multi_reduction <add>, %491, %cst_62 [1] : vector<64x128xf32> to vector<64xf32>
    %499 = vector.shape_cast %498 : vector<64xf32> to vector<64x1xf32>
    %500 = arith.subf %499, %497 : vector<64x1xf32>
    %501 = vector.shape_cast %2 : vector<1x128xi1> to vector<1x128xi1>
    %502 = vector.broadcast %501 : vector<1x128xi1> to vector<64x128xi1>
    %503 = vector.shape_cast %497 : vector<64x1xf32> to vector<64x1xf32>
    %504 = vector.broadcast %503 : vector<64x1xf32> to vector<64x128xf32>
    %505 = vector.shape_cast %500 : vector<64x1xf32> to vector<64x1xf32>
    %506 = vector.broadcast %505 : vector<64x1xf32> to vector<64x128xf32>
    %507 = arith.select %502, %504, %506 : vector<64x128xi1>, vector<64x128xf32>
    %508 = vector.broadcast %474 : vector<1x128xf32> to vector<64x128xf32>
    %509 = arith.mulf %460, %508 : vector<64x128xf32>
    %510 = vector.broadcast %476 : vector<1x128xf32> to vector<64x128xf32>
    %511 = arith.mulf %489, %510 : vector<64x128xf32>
    %512 = arith.addf %509, %511 : vector<64x128xf32>
    %513 = vector.broadcast %478 : vector<1x128xf32> to vector<64x128xf32>
    %514 = arith.mulf %507, %513 : vector<64x128xf32>
    %515 = arith.addf %512, %514 : vector<64x128xf32>
    %516 = vector.broadcast %475 : vector<1x128xf32> to vector<64x128xf32>
    %517 = arith.mulf %515, %516 : vector<64x128xf32>
    %cst_63 = arith.constant 0.000000e+00 : f32
    %518 = vector.shape_cast %2 : vector<1x128xi1> to vector<1x128xi1>
    %519 = vector.broadcast %518 : vector<1x128xi1> to vector<64x128xi1>
    %520 = vector.broadcast %cst_63 : f32 to vector<64x128xf32>
    %521 = arith.select %519, %517, %520 : vector<64x128xi1>, vector<64x128xf32>
    %cst_64 = arith.constant dense<0.000000e+00> : vector<64xf32>
    %522 = vector.multi_reduction <add>, %521, %cst_64 [1] : vector<64x128xf32> to vector<64xf32>
    %523 = vector.shape_cast %522 : vector<64xf32> to vector<64x1xf32>
    %cst_65 = arith.constant dense<0.000000e+00> : vector<64xf32>
    %524 = vector.multi_reduction <add>, %517, %cst_65 [1] : vector<64x128xf32> to vector<64xf32>
    %525 = vector.shape_cast %524 : vector<64xf32> to vector<64x1xf32>
    %526 = arith.subf %525, %523 : vector<64x1xf32>
    %527 = tpu.concatenate %523, %526 in 0 : vector<64x1xf32>, vector<64x1xf32> -> vector<128x1xf32>
    %528 = tpu.transpose %527, [1, 0] : vector<128x1xf32> -> vector<1x128xf32>
    %529 = vector.extract_strided_slice %13 {offsets = [9, 0], sizes = [1, 128], strides = [1, 1]} : vector<16x128xf32> to vector<1x128xf32>
    %530 = vector.extract_strided_slice %17 {offsets = [9, 0], sizes = [1, 128], strides = [1, 1]} : vector<16x128xf32> to vector<1x128xf32>
    %531 = vector.extract_strided_slice %21 {offsets = [9, 0], sizes = [1, 128], strides = [1, 1]} : vector<16x128xf32> to vector<1x128xf32>
    %532 = vector.extract_strided_slice %29 {offsets = [9, 0], sizes = [1, 128], strides = [1, 1]} : vector<16x128xf32> to vector<1x128xf32>
    %533 = vector.extract_strided_slice %33 {offsets = [9, 0], sizes = [1, 128], strides = [1, 1]} : vector<16x128xf32> to vector<1x128xf32>
    %534 = vector.extract_strided_slice %25 {offsets = [9, 0], sizes = [1, 128], strides = [1, 1]} : vector<16x128xf32> to vector<1x128xf32>
    %535 = tpu.transpose %534, [1, 0] : vector<1x128xf32> -> vector<128x1xf32>
    %536 = vector.extract_strided_slice %535 {offsets = [0, 0], sizes = [64, 1], strides = [1, 1]} : vector<128x1xf32> to vector<64x1xf32>
    %537 = vector.extract_strided_slice %535 {offsets = [64, 0], sizes = [64, 1], strides = [1, 1]} : vector<128x1xf32> to vector<64x1xf32>
    %538 = vector.shape_cast %2 : vector<1x128xi1> to vector<1x128xi1>
    %539 = vector.broadcast %538 : vector<1x128xi1> to vector<64x128xi1>
    %540 = vector.shape_cast %536 : vector<64x1xf32> to vector<64x1xf32>
    %541 = vector.broadcast %540 : vector<64x1xf32> to vector<64x128xf32>
    %542 = vector.shape_cast %537 : vector<64x1xf32> to vector<64x1xf32>
    %543 = vector.broadcast %542 : vector<64x1xf32> to vector<64x128xf32>
    %544 = arith.select %539, %541, %543 : vector<64x128xi1>, vector<64x128xf32>
    %545 = vector.broadcast %532 : vector<1x128xf32> to vector<64x128xf32>
    %546 = arith.mulf %515, %545 : vector<64x128xf32>
    %cst_66 = arith.constant 0.000000e+00 : f32
    %547 = vector.shape_cast %2 : vector<1x128xi1> to vector<1x128xi1>
    %548 = vector.broadcast %547 : vector<1x128xi1> to vector<64x128xi1>
    %549 = vector.broadcast %cst_66 : f32 to vector<64x128xf32>
    %550 = arith.select %548, %546, %549 : vector<64x128xi1>, vector<64x128xf32>
    %cst_67 = arith.constant dense<0.000000e+00> : vector<64xf32>
    %551 = vector.multi_reduction <add>, %550, %cst_67 [1] : vector<64x128xf32> to vector<64xf32>
    %552 = vector.shape_cast %551 : vector<64xf32> to vector<64x1xf32>
    %cst_68 = arith.constant dense<0.000000e+00> : vector<64xf32>
    %553 = vector.multi_reduction <add>, %546, %cst_68 [1] : vector<64x128xf32> to vector<64xf32>
    %554 = vector.shape_cast %553 : vector<64xf32> to vector<64x1xf32>
    %555 = arith.subf %554, %552 : vector<64x1xf32>
    %556 = vector.shape_cast %2 : vector<1x128xi1> to vector<1x128xi1>
    %557 = vector.broadcast %556 : vector<1x128xi1> to vector<64x128xi1>
    %558 = vector.shape_cast %552 : vector<64x1xf32> to vector<64x1xf32>
    %559 = vector.broadcast %558 : vector<64x1xf32> to vector<64x128xf32>
    %560 = vector.shape_cast %555 : vector<64x1xf32> to vector<64x1xf32>
    %561 = vector.broadcast %560 : vector<64x1xf32> to vector<64x128xf32>
    %562 = arith.select %557, %559, %561 : vector<64x128xi1>, vector<64x128xf32>
    %563 = vector.broadcast %529 : vector<1x128xf32> to vector<64x128xf32>
    %564 = arith.mulf %515, %563 : vector<64x128xf32>
    %565 = vector.broadcast %531 : vector<1x128xf32> to vector<64x128xf32>
    %566 = arith.mulf %544, %565 : vector<64x128xf32>
    %567 = arith.addf %564, %566 : vector<64x128xf32>
    %568 = vector.broadcast %533 : vector<1x128xf32> to vector<64x128xf32>
    %569 = arith.mulf %562, %568 : vector<64x128xf32>
    %570 = arith.addf %567, %569 : vector<64x128xf32>
    %571 = vector.broadcast %530 : vector<1x128xf32> to vector<64x128xf32>
    %572 = arith.mulf %570, %571 : vector<64x128xf32>
    %cst_69 = arith.constant 0.000000e+00 : f32
    %573 = vector.shape_cast %2 : vector<1x128xi1> to vector<1x128xi1>
    %574 = vector.broadcast %573 : vector<1x128xi1> to vector<64x128xi1>
    %575 = vector.broadcast %cst_69 : f32 to vector<64x128xf32>
    %576 = arith.select %574, %572, %575 : vector<64x128xi1>, vector<64x128xf32>
    %cst_70 = arith.constant dense<0.000000e+00> : vector<64xf32>
    %577 = vector.multi_reduction <add>, %576, %cst_70 [1] : vector<64x128xf32> to vector<64xf32>
    %578 = vector.shape_cast %577 : vector<64xf32> to vector<64x1xf32>
    %cst_71 = arith.constant dense<0.000000e+00> : vector<64xf32>
    %579 = vector.multi_reduction <add>, %572, %cst_71 [1] : vector<64x128xf32> to vector<64xf32>
    %580 = vector.shape_cast %579 : vector<64xf32> to vector<64x1xf32>
    %581 = arith.subf %580, %578 : vector<64x1xf32>
    %582 = tpu.concatenate %578, %581 in 0 : vector<64x1xf32>, vector<64x1xf32> -> vector<128x1xf32>
    %583 = tpu.transpose %582, [1, 0] : vector<128x1xf32> -> vector<1x128xf32>
    %584 = vector.extract_strided_slice %13 {offsets = [10, 0], sizes = [1, 128], strides = [1, 1]} : vector<16x128xf32> to vector<1x128xf32>
    %585 = vector.extract_strided_slice %17 {offsets = [10, 0], sizes = [1, 128], strides = [1, 1]} : vector<16x128xf32> to vector<1x128xf32>
    %586 = vector.extract_strided_slice %21 {offsets = [10, 0], sizes = [1, 128], strides = [1, 1]} : vector<16x128xf32> to vector<1x128xf32>
    %587 = vector.extract_strided_slice %29 {offsets = [10, 0], sizes = [1, 128], strides = [1, 1]} : vector<16x128xf32> to vector<1x128xf32>
    %588 = vector.extract_strided_slice %33 {offsets = [10, 0], sizes = [1, 128], strides = [1, 1]} : vector<16x128xf32> to vector<1x128xf32>
    %589 = vector.extract_strided_slice %25 {offsets = [10, 0], sizes = [1, 128], strides = [1, 1]} : vector<16x128xf32> to vector<1x128xf32>
    %590 = tpu.transpose %589, [1, 0] : vector<1x128xf32> -> vector<128x1xf32>
    %591 = vector.extract_strided_slice %590 {offsets = [0, 0], sizes = [64, 1], strides = [1, 1]} : vector<128x1xf32> to vector<64x1xf32>
    %592 = vector.extract_strided_slice %590 {offsets = [64, 0], sizes = [64, 1], strides = [1, 1]} : vector<128x1xf32> to vector<64x1xf32>
    %593 = vector.shape_cast %2 : vector<1x128xi1> to vector<1x128xi1>
    %594 = vector.broadcast %593 : vector<1x128xi1> to vector<64x128xi1>
    %595 = vector.shape_cast %591 : vector<64x1xf32> to vector<64x1xf32>
    %596 = vector.broadcast %595 : vector<64x1xf32> to vector<64x128xf32>
    %597 = vector.shape_cast %592 : vector<64x1xf32> to vector<64x1xf32>
    %598 = vector.broadcast %597 : vector<64x1xf32> to vector<64x128xf32>
    %599 = arith.select %594, %596, %598 : vector<64x128xi1>, vector<64x128xf32>
    %600 = vector.broadcast %587 : vector<1x128xf32> to vector<64x128xf32>
    %601 = arith.mulf %570, %600 : vector<64x128xf32>
    %cst_72 = arith.constant 0.000000e+00 : f32
    %602 = vector.shape_cast %2 : vector<1x128xi1> to vector<1x128xi1>
    %603 = vector.broadcast %602 : vector<1x128xi1> to vector<64x128xi1>
    %604 = vector.broadcast %cst_72 : f32 to vector<64x128xf32>
    %605 = arith.select %603, %601, %604 : vector<64x128xi1>, vector<64x128xf32>
    %cst_73 = arith.constant dense<0.000000e+00> : vector<64xf32>
    %606 = vector.multi_reduction <add>, %605, %cst_73 [1] : vector<64x128xf32> to vector<64xf32>
    %607 = vector.shape_cast %606 : vector<64xf32> to vector<64x1xf32>
    %cst_74 = arith.constant dense<0.000000e+00> : vector<64xf32>
    %608 = vector.multi_reduction <add>, %601, %cst_74 [1] : vector<64x128xf32> to vector<64xf32>
    %609 = vector.shape_cast %608 : vector<64xf32> to vector<64x1xf32>
    %610 = arith.subf %609, %607 : vector<64x1xf32>
    %611 = vector.shape_cast %2 : vector<1x128xi1> to vector<1x128xi1>
    %612 = vector.broadcast %611 : vector<1x128xi1> to vector<64x128xi1>
    %613 = vector.shape_cast %607 : vector<64x1xf32> to vector<64x1xf32>
    %614 = vector.broadcast %613 : vector<64x1xf32> to vector<64x128xf32>
    %615 = vector.shape_cast %610 : vector<64x1xf32> to vector<64x1xf32>
    %616 = vector.broadcast %615 : vector<64x1xf32> to vector<64x128xf32>
    %617 = arith.select %612, %614, %616 : vector<64x128xi1>, vector<64x128xf32>
    %618 = vector.broadcast %584 : vector<1x128xf32> to vector<64x128xf32>
    %619 = arith.mulf %570, %618 : vector<64x128xf32>
    %620 = vector.broadcast %586 : vector<1x128xf32> to vector<64x128xf32>
    %621 = arith.mulf %599, %620 : vector<64x128xf32>
    %622 = arith.addf %619, %621 : vector<64x128xf32>
    %623 = vector.broadcast %588 : vector<1x128xf32> to vector<64x128xf32>
    %624 = arith.mulf %617, %623 : vector<64x128xf32>
    %625 = arith.addf %622, %624 : vector<64x128xf32>
    %626 = vector.broadcast %585 : vector<1x128xf32> to vector<64x128xf32>
    %627 = arith.mulf %625, %626 : vector<64x128xf32>
    %cst_75 = arith.constant 0.000000e+00 : f32
    %628 = vector.shape_cast %2 : vector<1x128xi1> to vector<1x128xi1>
    %629 = vector.broadcast %628 : vector<1x128xi1> to vector<64x128xi1>
    %630 = vector.broadcast %cst_75 : f32 to vector<64x128xf32>
    %631 = arith.select %629, %627, %630 : vector<64x128xi1>, vector<64x128xf32>
    %cst_76 = arith.constant dense<0.000000e+00> : vector<64xf32>
    %632 = vector.multi_reduction <add>, %631, %cst_76 [1] : vector<64x128xf32> to vector<64xf32>
    %633 = vector.shape_cast %632 : vector<64xf32> to vector<64x1xf32>
    %cst_77 = arith.constant dense<0.000000e+00> : vector<64xf32>
    %634 = vector.multi_reduction <add>, %627, %cst_77 [1] : vector<64x128xf32> to vector<64xf32>
    %635 = vector.shape_cast %634 : vector<64xf32> to vector<64x1xf32>
    %636 = arith.subf %635, %633 : vector<64x1xf32>
    %637 = tpu.concatenate %633, %636 in 0 : vector<64x1xf32>, vector<64x1xf32> -> vector<128x1xf32>
    %638 = tpu.transpose %637, [1, 0] : vector<128x1xf32> -> vector<1x128xf32>
    %639 = vector.extract_strided_slice %13 {offsets = [11, 0], sizes = [1, 128], strides = [1, 1]} : vector<16x128xf32> to vector<1x128xf32>
    %640 = vector.extract_strided_slice %17 {offsets = [11, 0], sizes = [1, 128], strides = [1, 1]} : vector<16x128xf32> to vector<1x128xf32>
    %641 = vector.extract_strided_slice %21 {offsets = [11, 0], sizes = [1, 128], strides = [1, 1]} : vector<16x128xf32> to vector<1x128xf32>
    %642 = vector.extract_strided_slice %29 {offsets = [11, 0], sizes = [1, 128], strides = [1, 1]} : vector<16x128xf32> to vector<1x128xf32>
    %643 = vector.extract_strided_slice %33 {offsets = [11, 0], sizes = [1, 128], strides = [1, 1]} : vector<16x128xf32> to vector<1x128xf32>
    %644 = vector.extract_strided_slice %25 {offsets = [11, 0], sizes = [1, 128], strides = [1, 1]} : vector<16x128xf32> to vector<1x128xf32>
    %645 = tpu.transpose %644, [1, 0] : vector<1x128xf32> -> vector<128x1xf32>
    %646 = vector.extract_strided_slice %645 {offsets = [0, 0], sizes = [64, 1], strides = [1, 1]} : vector<128x1xf32> to vector<64x1xf32>
    %647 = vector.extract_strided_slice %645 {offsets = [64, 0], sizes = [64, 1], strides = [1, 1]} : vector<128x1xf32> to vector<64x1xf32>
    %648 = vector.shape_cast %2 : vector<1x128xi1> to vector<1x128xi1>
    %649 = vector.broadcast %648 : vector<1x128xi1> to vector<64x128xi1>
    %650 = vector.shape_cast %646 : vector<64x1xf32> to vector<64x1xf32>
    %651 = vector.broadcast %650 : vector<64x1xf32> to vector<64x128xf32>
    %652 = vector.shape_cast %647 : vector<64x1xf32> to vector<64x1xf32>
    %653 = vector.broadcast %652 : vector<64x1xf32> to vector<64x128xf32>
    %654 = arith.select %649, %651, %653 : vector<64x128xi1>, vector<64x128xf32>
    %655 = vector.broadcast %642 : vector<1x128xf32> to vector<64x128xf32>
    %656 = arith.mulf %625, %655 : vector<64x128xf32>
    %cst_78 = arith.constant 0.000000e+00 : f32
    %657 = vector.shape_cast %2 : vector<1x128xi1> to vector<1x128xi1>
    %658 = vector.broadcast %657 : vector<1x128xi1> to vector<64x128xi1>
    %659 = vector.broadcast %cst_78 : f32 to vector<64x128xf32>
    %660 = arith.select %658, %656, %659 : vector<64x128xi1>, vector<64x128xf32>
    %cst_79 = arith.constant dense<0.000000e+00> : vector<64xf32>
    %661 = vector.multi_reduction <add>, %660, %cst_79 [1] : vector<64x128xf32> to vector<64xf32>
    %662 = vector.shape_cast %661 : vector<64xf32> to vector<64x1xf32>
    %cst_80 = arith.constant dense<0.000000e+00> : vector<64xf32>
    %663 = vector.multi_reduction <add>, %656, %cst_80 [1] : vector<64x128xf32> to vector<64xf32>
    %664 = vector.shape_cast %663 : vector<64xf32> to vector<64x1xf32>
    %665 = arith.subf %664, %662 : vector<64x1xf32>
    %666 = vector.shape_cast %2 : vector<1x128xi1> to vector<1x128xi1>
    %667 = vector.broadcast %666 : vector<1x128xi1> to vector<64x128xi1>
    %668 = vector.shape_cast %662 : vector<64x1xf32> to vector<64x1xf32>
    %669 = vector.broadcast %668 : vector<64x1xf32> to vector<64x128xf32>
    %670 = vector.shape_cast %665 : vector<64x1xf32> to vector<64x1xf32>
    %671 = vector.broadcast %670 : vector<64x1xf32> to vector<64x128xf32>
    %672 = arith.select %667, %669, %671 : vector<64x128xi1>, vector<64x128xf32>
    %673 = vector.broadcast %639 : vector<1x128xf32> to vector<64x128xf32>
    %674 = arith.mulf %625, %673 : vector<64x128xf32>
    %675 = vector.broadcast %641 : vector<1x128xf32> to vector<64x128xf32>
    %676 = arith.mulf %654, %675 : vector<64x128xf32>
    %677 = arith.addf %674, %676 : vector<64x128xf32>
    %678 = vector.broadcast %643 : vector<1x128xf32> to vector<64x128xf32>
    %679 = arith.mulf %672, %678 : vector<64x128xf32>
    %680 = arith.addf %677, %679 : vector<64x128xf32>
    %681 = vector.broadcast %640 : vector<1x128xf32> to vector<64x128xf32>
    %682 = arith.mulf %680, %681 : vector<64x128xf32>
    %cst_81 = arith.constant 0.000000e+00 : f32
    %683 = vector.shape_cast %2 : vector<1x128xi1> to vector<1x128xi1>
    %684 = vector.broadcast %683 : vector<1x128xi1> to vector<64x128xi1>
    %685 = vector.broadcast %cst_81 : f32 to vector<64x128xf32>
    %686 = arith.select %684, %682, %685 : vector<64x128xi1>, vector<64x128xf32>
    %cst_82 = arith.constant dense<0.000000e+00> : vector<64xf32>
    %687 = vector.multi_reduction <add>, %686, %cst_82 [1] : vector<64x128xf32> to vector<64xf32>
    %688 = vector.shape_cast %687 : vector<64xf32> to vector<64x1xf32>
    %cst_83 = arith.constant dense<0.000000e+00> : vector<64xf32>
    %689 = vector.multi_reduction <add>, %682, %cst_83 [1] : vector<64x128xf32> to vector<64xf32>
    %690 = vector.shape_cast %689 : vector<64xf32> to vector<64x1xf32>
    %691 = arith.subf %690, %688 : vector<64x1xf32>
    %692 = tpu.concatenate %688, %691 in 0 : vector<64x1xf32>, vector<64x1xf32> -> vector<128x1xf32>
    %693 = tpu.transpose %692, [1, 0] : vector<128x1xf32> -> vector<1x128xf32>
    %694 = vector.extract_strided_slice %13 {offsets = [12, 0], sizes = [1, 128], strides = [1, 1]} : vector<16x128xf32> to vector<1x128xf32>
    %695 = vector.extract_strided_slice %17 {offsets = [12, 0], sizes = [1, 128], strides = [1, 1]} : vector<16x128xf32> to vector<1x128xf32>
    %696 = vector.extract_strided_slice %21 {offsets = [12, 0], sizes = [1, 128], strides = [1, 1]} : vector<16x128xf32> to vector<1x128xf32>
    %697 = vector.extract_strided_slice %29 {offsets = [12, 0], sizes = [1, 128], strides = [1, 1]} : vector<16x128xf32> to vector<1x128xf32>
    %698 = vector.extract_strided_slice %33 {offsets = [12, 0], sizes = [1, 128], strides = [1, 1]} : vector<16x128xf32> to vector<1x128xf32>
    %699 = vector.extract_strided_slice %25 {offsets = [12, 0], sizes = [1, 128], strides = [1, 1]} : vector<16x128xf32> to vector<1x128xf32>
    %700 = tpu.transpose %699, [1, 0] : vector<1x128xf32> -> vector<128x1xf32>
    %701 = vector.extract_strided_slice %700 {offsets = [0, 0], sizes = [64, 1], strides = [1, 1]} : vector<128x1xf32> to vector<64x1xf32>
    %702 = vector.extract_strided_slice %700 {offsets = [64, 0], sizes = [64, 1], strides = [1, 1]} : vector<128x1xf32> to vector<64x1xf32>
    %703 = vector.shape_cast %2 : vector<1x128xi1> to vector<1x128xi1>
    %704 = vector.broadcast %703 : vector<1x128xi1> to vector<64x128xi1>
    %705 = vector.shape_cast %701 : vector<64x1xf32> to vector<64x1xf32>
    %706 = vector.broadcast %705 : vector<64x1xf32> to vector<64x128xf32>
    %707 = vector.shape_cast %702 : vector<64x1xf32> to vector<64x1xf32>
    %708 = vector.broadcast %707 : vector<64x1xf32> to vector<64x128xf32>
    %709 = arith.select %704, %706, %708 : vector<64x128xi1>, vector<64x128xf32>
    %710 = vector.broadcast %697 : vector<1x128xf32> to vector<64x128xf32>
    %711 = arith.mulf %680, %710 : vector<64x128xf32>
    %cst_84 = arith.constant 0.000000e+00 : f32
    %712 = vector.shape_cast %2 : vector<1x128xi1> to vector<1x128xi1>
    %713 = vector.broadcast %712 : vector<1x128xi1> to vector<64x128xi1>
    %714 = vector.broadcast %cst_84 : f32 to vector<64x128xf32>
    %715 = arith.select %713, %711, %714 : vector<64x128xi1>, vector<64x128xf32>
    %cst_85 = arith.constant dense<0.000000e+00> : vector<64xf32>
    %716 = vector.multi_reduction <add>, %715, %cst_85 [1] : vector<64x128xf32> to vector<64xf32>
    %717 = vector.shape_cast %716 : vector<64xf32> to vector<64x1xf32>
    %cst_86 = arith.constant dense<0.000000e+00> : vector<64xf32>
    %718 = vector.multi_reduction <add>, %711, %cst_86 [1] : vector<64x128xf32> to vector<64xf32>
    %719 = vector.shape_cast %718 : vector<64xf32> to vector<64x1xf32>
    %720 = arith.subf %719, %717 : vector<64x1xf32>
    %721 = vector.shape_cast %2 : vector<1x128xi1> to vector<1x128xi1>
    %722 = vector.broadcast %721 : vector<1x128xi1> to vector<64x128xi1>
    %723 = vector.shape_cast %717 : vector<64x1xf32> to vector<64x1xf32>
    %724 = vector.broadcast %723 : vector<64x1xf32> to vector<64x128xf32>
    %725 = vector.shape_cast %720 : vector<64x1xf32> to vector<64x1xf32>
    %726 = vector.broadcast %725 : vector<64x1xf32> to vector<64x128xf32>
    %727 = arith.select %722, %724, %726 : vector<64x128xi1>, vector<64x128xf32>
    %728 = vector.broadcast %694 : vector<1x128xf32> to vector<64x128xf32>
    %729 = arith.mulf %680, %728 : vector<64x128xf32>
    %730 = vector.broadcast %696 : vector<1x128xf32> to vector<64x128xf32>
    %731 = arith.mulf %709, %730 : vector<64x128xf32>
    %732 = arith.addf %729, %731 : vector<64x128xf32>
    %733 = vector.broadcast %698 : vector<1x128xf32> to vector<64x128xf32>
    %734 = arith.mulf %727, %733 : vector<64x128xf32>
    %735 = arith.addf %732, %734 : vector<64x128xf32>
    %736 = vector.broadcast %695 : vector<1x128xf32> to vector<64x128xf32>
    %737 = arith.mulf %735, %736 : vector<64x128xf32>
    %cst_87 = arith.constant 0.000000e+00 : f32
    %738 = vector.shape_cast %2 : vector<1x128xi1> to vector<1x128xi1>
    %739 = vector.broadcast %738 : vector<1x128xi1> to vector<64x128xi1>
    %740 = vector.broadcast %cst_87 : f32 to vector<64x128xf32>
    %741 = arith.select %739, %737, %740 : vector<64x128xi1>, vector<64x128xf32>
    %cst_88 = arith.constant dense<0.000000e+00> : vector<64xf32>
    %742 = vector.multi_reduction <add>, %741, %cst_88 [1] : vector<64x128xf32> to vector<64xf32>
    %743 = vector.shape_cast %742 : vector<64xf32> to vector<64x1xf32>
    %cst_89 = arith.constant dense<0.000000e+00> : vector<64xf32>
    %744 = vector.multi_reduction <add>, %737, %cst_89 [1] : vector<64x128xf32> to vector<64xf32>
    %745 = vector.shape_cast %744 : vector<64xf32> to vector<64x1xf32>
    %746 = arith.subf %745, %743 : vector<64x1xf32>
    %747 = tpu.concatenate %743, %746 in 0 : vector<64x1xf32>, vector<64x1xf32> -> vector<128x1xf32>
    %748 = tpu.transpose %747, [1, 0] : vector<128x1xf32> -> vector<1x128xf32>
    %749 = vector.extract_strided_slice %13 {offsets = [13, 0], sizes = [1, 128], strides = [1, 1]} : vector<16x128xf32> to vector<1x128xf32>
    %750 = vector.extract_strided_slice %17 {offsets = [13, 0], sizes = [1, 128], strides = [1, 1]} : vector<16x128xf32> to vector<1x128xf32>
    %751 = vector.extract_strided_slice %21 {offsets = [13, 0], sizes = [1, 128], strides = [1, 1]} : vector<16x128xf32> to vector<1x128xf32>
    %752 = vector.extract_strided_slice %29 {offsets = [13, 0], sizes = [1, 128], strides = [1, 1]} : vector<16x128xf32> to vector<1x128xf32>
    %753 = vector.extract_strided_slice %33 {offsets = [13, 0], sizes = [1, 128], strides = [1, 1]} : vector<16x128xf32> to vector<1x128xf32>
    %754 = vector.extract_strided_slice %25 {offsets = [13, 0], sizes = [1, 128], strides = [1, 1]} : vector<16x128xf32> to vector<1x128xf32>
    %755 = tpu.transpose %754, [1, 0] : vector<1x128xf32> -> vector<128x1xf32>
    %756 = vector.extract_strided_slice %755 {offsets = [0, 0], sizes = [64, 1], strides = [1, 1]} : vector<128x1xf32> to vector<64x1xf32>
    %757 = vector.extract_strided_slice %755 {offsets = [64, 0], sizes = [64, 1], strides = [1, 1]} : vector<128x1xf32> to vector<64x1xf32>
    %758 = vector.shape_cast %2 : vector<1x128xi1> to vector<1x128xi1>
    %759 = vector.broadcast %758 : vector<1x128xi1> to vector<64x128xi1>
    %760 = vector.shape_cast %756 : vector<64x1xf32> to vector<64x1xf32>
    %761 = vector.broadcast %760 : vector<64x1xf32> to vector<64x128xf32>
    %762 = vector.shape_cast %757 : vector<64x1xf32> to vector<64x1xf32>
    %763 = vector.broadcast %762 : vector<64x1xf32> to vector<64x128xf32>
    %764 = arith.select %759, %761, %763 : vector<64x128xi1>, vector<64x128xf32>
    %765 = vector.broadcast %752 : vector<1x128xf32> to vector<64x128xf32>
    %766 = arith.mulf %735, %765 : vector<64x128xf32>
    %cst_90 = arith.constant 0.000000e+00 : f32
    %767 = vector.shape_cast %2 : vector<1x128xi1> to vector<1x128xi1>
    %768 = vector.broadcast %767 : vector<1x128xi1> to vector<64x128xi1>
    %769 = vector.broadcast %cst_90 : f32 to vector<64x128xf32>
    %770 = arith.select %768, %766, %769 : vector<64x128xi1>, vector<64x128xf32>
    %cst_91 = arith.constant dense<0.000000e+00> : vector<64xf32>
    %771 = vector.multi_reduction <add>, %770, %cst_91 [1] : vector<64x128xf32> to vector<64xf32>
    %772 = vector.shape_cast %771 : vector<64xf32> to vector<64x1xf32>
    %cst_92 = arith.constant dense<0.000000e+00> : vector<64xf32>
    %773 = vector.multi_reduction <add>, %766, %cst_92 [1] : vector<64x128xf32> to vector<64xf32>
    %774 = vector.shape_cast %773 : vector<64xf32> to vector<64x1xf32>
    %775 = arith.subf %774, %772 : vector<64x1xf32>
    %776 = vector.shape_cast %2 : vector<1x128xi1> to vector<1x128xi1>
    %777 = vector.broadcast %776 : vector<1x128xi1> to vector<64x128xi1>
    %778 = vector.shape_cast %772 : vector<64x1xf32> to vector<64x1xf32>
    %779 = vector.broadcast %778 : vector<64x1xf32> to vector<64x128xf32>
    %780 = vector.shape_cast %775 : vector<64x1xf32> to vector<64x1xf32>
    %781 = vector.broadcast %780 : vector<64x1xf32> to vector<64x128xf32>
    %782 = arith.select %777, %779, %781 : vector<64x128xi1>, vector<64x128xf32>
    %783 = vector.broadcast %749 : vector<1x128xf32> to vector<64x128xf32>
    %784 = arith.mulf %735, %783 : vector<64x128xf32>
    %785 = vector.broadcast %751 : vector<1x128xf32> to vector<64x128xf32>
    %786 = arith.mulf %764, %785 : vector<64x128xf32>
    %787 = arith.addf %784, %786 : vector<64x128xf32>
    %788 = vector.broadcast %753 : vector<1x128xf32> to vector<64x128xf32>
    %789 = arith.mulf %782, %788 : vector<64x128xf32>
    %790 = arith.addf %787, %789 : vector<64x128xf32>
    %791 = vector.broadcast %750 : vector<1x128xf32> to vector<64x128xf32>
    %792 = arith.mulf %790, %791 : vector<64x128xf32>
    %cst_93 = arith.constant 0.000000e+00 : f32
    %793 = vector.shape_cast %2 : vector<1x128xi1> to vector<1x128xi1>
    %794 = vector.broadcast %793 : vector<1x128xi1> to vector<64x128xi1>
    %795 = vector.broadcast %cst_93 : f32 to vector<64x128xf32>
    %796 = arith.select %794, %792, %795 : vector<64x128xi1>, vector<64x128xf32>
    %cst_94 = arith.constant dense<0.000000e+00> : vector<64xf32>
    %797 = vector.multi_reduction <add>, %796, %cst_94 [1] : vector<64x128xf32> to vector<64xf32>
    %798 = vector.shape_cast %797 : vector<64xf32> to vector<64x1xf32>
    %cst_95 = arith.constant dense<0.000000e+00> : vector<64xf32>
    %799 = vector.multi_reduction <add>, %792, %cst_95 [1] : vector<64x128xf32> to vector<64xf32>
    %800 = vector.shape_cast %799 : vector<64xf32> to vector<64x1xf32>
    %801 = arith.subf %800, %798 : vector<64x1xf32>
    %802 = tpu.concatenate %798, %801 in 0 : vector<64x1xf32>, vector<64x1xf32> -> vector<128x1xf32>
    %803 = tpu.transpose %802, [1, 0] : vector<128x1xf32> -> vector<1x128xf32>
    %804 = vector.extract_strided_slice %13 {offsets = [14, 0], sizes = [1, 128], strides = [1, 1]} : vector<16x128xf32> to vector<1x128xf32>
    %805 = vector.extract_strided_slice %17 {offsets = [14, 0], sizes = [1, 128], strides = [1, 1]} : vector<16x128xf32> to vector<1x128xf32>
    %806 = vector.extract_strided_slice %21 {offsets = [14, 0], sizes = [1, 128], strides = [1, 1]} : vector<16x128xf32> to vector<1x128xf32>
    %807 = vector.extract_strided_slice %29 {offsets = [14, 0], sizes = [1, 128], strides = [1, 1]} : vector<16x128xf32> to vector<1x128xf32>
    %808 = vector.extract_strided_slice %33 {offsets = [14, 0], sizes = [1, 128], strides = [1, 1]} : vector<16x128xf32> to vector<1x128xf32>
    %809 = vector.extract_strided_slice %25 {offsets = [14, 0], sizes = [1, 128], strides = [1, 1]} : vector<16x128xf32> to vector<1x128xf32>
    %810 = tpu.transpose %809, [1, 0] : vector<1x128xf32> -> vector<128x1xf32>
    %811 = vector.extract_strided_slice %810 {offsets = [0, 0], sizes = [64, 1], strides = [1, 1]} : vector<128x1xf32> to vector<64x1xf32>
    %812 = vector.extract_strided_slice %810 {offsets = [64, 0], sizes = [64, 1], strides = [1, 1]} : vector<128x1xf32> to vector<64x1xf32>
    %813 = vector.shape_cast %2 : vector<1x128xi1> to vector<1x128xi1>
    %814 = vector.broadcast %813 : vector<1x128xi1> to vector<64x128xi1>
    %815 = vector.shape_cast %811 : vector<64x1xf32> to vector<64x1xf32>
    %816 = vector.broadcast %815 : vector<64x1xf32> to vector<64x128xf32>
    %817 = vector.shape_cast %812 : vector<64x1xf32> to vector<64x1xf32>
    %818 = vector.broadcast %817 : vector<64x1xf32> to vector<64x128xf32>
    %819 = arith.select %814, %816, %818 : vector<64x128xi1>, vector<64x128xf32>
    %820 = vector.broadcast %807 : vector<1x128xf32> to vector<64x128xf32>
    %821 = arith.mulf %790, %820 : vector<64x128xf32>
    %cst_96 = arith.constant 0.000000e+00 : f32
    %822 = vector.shape_cast %2 : vector<1x128xi1> to vector<1x128xi1>
    %823 = vector.broadcast %822 : vector<1x128xi1> to vector<64x128xi1>
    %824 = vector.broadcast %cst_96 : f32 to vector<64x128xf32>
    %825 = arith.select %823, %821, %824 : vector<64x128xi1>, vector<64x128xf32>
    %cst_97 = arith.constant dense<0.000000e+00> : vector<64xf32>
    %826 = vector.multi_reduction <add>, %825, %cst_97 [1] : vector<64x128xf32> to vector<64xf32>
    %827 = vector.shape_cast %826 : vector<64xf32> to vector<64x1xf32>
    %cst_98 = arith.constant dense<0.000000e+00> : vector<64xf32>
    %828 = vector.multi_reduction <add>, %821, %cst_98 [1] : vector<64x128xf32> to vector<64xf32>
    %829 = vector.shape_cast %828 : vector<64xf32> to vector<64x1xf32>
    %830 = arith.subf %829, %827 : vector<64x1xf32>
    %831 = vector.shape_cast %2 : vector<1x128xi1> to vector<1x128xi1>
    %832 = vector.broadcast %831 : vector<1x128xi1> to vector<64x128xi1>
    %833 = vector.shape_cast %827 : vector<64x1xf32> to vector<64x1xf32>
    %834 = vector.broadcast %833 : vector<64x1xf32> to vector<64x128xf32>
    %835 = vector.shape_cast %830 : vector<64x1xf32> to vector<64x1xf32>
    %836 = vector.broadcast %835 : vector<64x1xf32> to vector<64x128xf32>
    %837 = arith.select %832, %834, %836 : vector<64x128xi1>, vector<64x128xf32>
    %838 = vector.broadcast %804 : vector<1x128xf32> to vector<64x128xf32>
    %839 = arith.mulf %790, %838 : vector<64x128xf32>
    %840 = vector.broadcast %806 : vector<1x128xf32> to vector<64x128xf32>
    %841 = arith.mulf %819, %840 : vector<64x128xf32>
    %842 = arith.addf %839, %841 : vector<64x128xf32>
    %843 = vector.broadcast %808 : vector<1x128xf32> to vector<64x128xf32>
    %844 = arith.mulf %837, %843 : vector<64x128xf32>
    %845 = arith.addf %842, %844 : vector<64x128xf32>
    %846 = vector.broadcast %805 : vector<1x128xf32> to vector<64x128xf32>
    %847 = arith.mulf %845, %846 : vector<64x128xf32>
    %cst_99 = arith.constant 0.000000e+00 : f32
    %848 = vector.shape_cast %2 : vector<1x128xi1> to vector<1x128xi1>
    %849 = vector.broadcast %848 : vector<1x128xi1> to vector<64x128xi1>
    %850 = vector.broadcast %cst_99 : f32 to vector<64x128xf32>
    %851 = arith.select %849, %847, %850 : vector<64x128xi1>, vector<64x128xf32>
    %cst_100 = arith.constant dense<0.000000e+00> : vector<64xf32>
    %852 = vector.multi_reduction <add>, %851, %cst_100 [1] : vector<64x128xf32> to vector<64xf32>
    %853 = vector.shape_cast %852 : vector<64xf32> to vector<64x1xf32>
    %cst_101 = arith.constant dense<0.000000e+00> : vector<64xf32>
    %854 = vector.multi_reduction <add>, %847, %cst_101 [1] : vector<64x128xf32> to vector<64xf32>
    %855 = vector.shape_cast %854 : vector<64xf32> to vector<64x1xf32>
    %856 = arith.subf %855, %853 : vector<64x1xf32>
    %857 = tpu.concatenate %853, %856 in 0 : vector<64x1xf32>, vector<64x1xf32> -> vector<128x1xf32>
    %858 = tpu.transpose %857, [1, 0] : vector<128x1xf32> -> vector<1x128xf32>
    %859 = vector.extract_strided_slice %13 {offsets = [15, 0], sizes = [1, 128], strides = [1, 1]} : vector<16x128xf32> to vector<1x128xf32>
    %860 = vector.extract_strided_slice %17 {offsets = [15, 0], sizes = [1, 128], strides = [1, 1]} : vector<16x128xf32> to vector<1x128xf32>
    %861 = vector.extract_strided_slice %21 {offsets = [15, 0], sizes = [1, 128], strides = [1, 1]} : vector<16x128xf32> to vector<1x128xf32>
    %862 = vector.extract_strided_slice %29 {offsets = [15, 0], sizes = [1, 128], strides = [1, 1]} : vector<16x128xf32> to vector<1x128xf32>
    %863 = vector.extract_strided_slice %33 {offsets = [15, 0], sizes = [1, 128], strides = [1, 1]} : vector<16x128xf32> to vector<1x128xf32>
    %864 = vector.extract_strided_slice %25 {offsets = [15, 0], sizes = [1, 128], strides = [1, 1]} : vector<16x128xf32> to vector<1x128xf32>
    %865 = tpu.transpose %864, [1, 0] : vector<1x128xf32> -> vector<128x1xf32>
    %866 = vector.extract_strided_slice %865 {offsets = [0, 0], sizes = [64, 1], strides = [1, 1]} : vector<128x1xf32> to vector<64x1xf32>
    %867 = vector.extract_strided_slice %865 {offsets = [64, 0], sizes = [64, 1], strides = [1, 1]} : vector<128x1xf32> to vector<64x1xf32>
    %868 = vector.shape_cast %2 : vector<1x128xi1> to vector<1x128xi1>
    %869 = vector.broadcast %868 : vector<1x128xi1> to vector<64x128xi1>
    %870 = vector.shape_cast %866 : vector<64x1xf32> to vector<64x1xf32>
    %871 = vector.broadcast %870 : vector<64x1xf32> to vector<64x128xf32>
    %872 = vector.shape_cast %867 : vector<64x1xf32> to vector<64x1xf32>
    %873 = vector.broadcast %872 : vector<64x1xf32> to vector<64x128xf32>
    %874 = arith.select %869, %871, %873 : vector<64x128xi1>, vector<64x128xf32>
    %875 = vector.broadcast %862 : vector<1x128xf32> to vector<64x128xf32>
    %876 = arith.mulf %845, %875 : vector<64x128xf32>
    %cst_102 = arith.constant 0.000000e+00 : f32
    %877 = vector.shape_cast %2 : vector<1x128xi1> to vector<1x128xi1>
    %878 = vector.broadcast %877 : vector<1x128xi1> to vector<64x128xi1>
    %879 = vector.broadcast %cst_102 : f32 to vector<64x128xf32>
    %880 = arith.select %878, %876, %879 : vector<64x128xi1>, vector<64x128xf32>
    %cst_103 = arith.constant dense<0.000000e+00> : vector<64xf32>
    %881 = vector.multi_reduction <add>, %880, %cst_103 [1] : vector<64x128xf32> to vector<64xf32>
    %882 = vector.shape_cast %881 : vector<64xf32> to vector<64x1xf32>
    %cst_104 = arith.constant dense<0.000000e+00> : vector<64xf32>
    %883 = vector.multi_reduction <add>, %876, %cst_104 [1] : vector<64x128xf32> to vector<64xf32>
    %884 = vector.shape_cast %883 : vector<64xf32> to vector<64x1xf32>
    %885 = arith.subf %884, %882 : vector<64x1xf32>
    %886 = vector.shape_cast %2 : vector<1x128xi1> to vector<1x128xi1>
    %887 = vector.broadcast %886 : vector<1x128xi1> to vector<64x128xi1>
    %888 = vector.shape_cast %882 : vector<64x1xf32> to vector<64x1xf32>
    %889 = vector.broadcast %888 : vector<64x1xf32> to vector<64x128xf32>
    %890 = vector.shape_cast %885 : vector<64x1xf32> to vector<64x1xf32>
    %891 = vector.broadcast %890 : vector<64x1xf32> to vector<64x128xf32>
    %892 = arith.select %887, %889, %891 : vector<64x128xi1>, vector<64x128xf32>
    %893 = vector.broadcast %859 : vector<1x128xf32> to vector<64x128xf32>
    %894 = arith.mulf %845, %893 : vector<64x128xf32>
    %895 = vector.broadcast %861 : vector<1x128xf32> to vector<64x128xf32>
    %896 = arith.mulf %874, %895 : vector<64x128xf32>
    %897 = arith.addf %894, %896 : vector<64x128xf32>
    %898 = vector.broadcast %863 : vector<1x128xf32> to vector<64x128xf32>
    %899 = arith.mulf %892, %898 : vector<64x128xf32>
    %900 = arith.addf %897, %899 : vector<64x128xf32>
    %901 = vector.broadcast %860 : vector<1x128xf32> to vector<64x128xf32>
    %902 = arith.mulf %900, %901 : vector<64x128xf32>
    %cst_105 = arith.constant 0.000000e+00 : f32
    %903 = vector.shape_cast %2 : vector<1x128xi1> to vector<1x128xi1>
    %904 = vector.broadcast %903 : vector<1x128xi1> to vector<64x128xi1>
    %905 = vector.broadcast %cst_105 : f32 to vector<64x128xf32>
    %906 = arith.select %904, %902, %905 : vector<64x128xi1>, vector<64x128xf32>
    %cst_106 = arith.constant dense<0.000000e+00> : vector<64xf32>
    %907 = vector.multi_reduction <add>, %906, %cst_106 [1] : vector<64x128xf32> to vector<64xf32>
    %908 = vector.shape_cast %907 : vector<64xf32> to vector<64x1xf32>
    %cst_107 = arith.constant dense<0.000000e+00> : vector<64xf32>
    %909 = vector.multi_reduction <add>, %902, %cst_107 [1] : vector<64x128xf32> to vector<64xf32>
    %910 = vector.shape_cast %909 : vector<64xf32> to vector<64x1xf32>
    %911 = arith.subf %910, %908 : vector<64x1xf32>
    %912 = tpu.concatenate %908, %911 in 0 : vector<64x1xf32>, vector<64x1xf32> -> vector<128x1xf32>
    %913 = tpu.transpose %912, [1, 0] : vector<128x1xf32> -> vector<1x128xf32>
    %914 = tpu.concatenate %88, %143, %198, %253, %308, %363, %418, %473, %528, %583, %638, %693, %748, %803, %858, %913 in 0 : vector<1x128xf32>, vector<1x128xf32>, vector<1x128xf32>, vector<1x128xf32>, vector<1x128xf32>, vector<1x128xf32>, vector<1x128xf32>, vector<1x128xf32>, vector<1x128xf32>, vector<1x128xf32>, vector<1x128xf32>, vector<1x128xf32>, vector<1x128xf32>, vector<1x128xf32>, vector<1x128xf32>, vector<1x128xf32> -> vector<16x128xf32>
    %915 = arith.truncf %914 : vector<16x128xf32> to vector<16x128xbf16>
    %c0_108 = arith.constant 0 : index
    %916 = arith.index_cast %5 : i32 to index
    %c0_109 = arith.constant 0 : index
    %917 = vector.load %arg8[%c0_108, %916, %c0_109] : memref<1x16x128xbf16, #tpu.memory_space<vmem>>, vector<1x16x128xbf16>
    %918 = vector.shape_cast %917 : vector<1x16x128xbf16> to vector<16x128xbf16>
    %919 = vector.shape_cast %915 : vector<16x128xbf16> to vector<1x16x128xbf16>
    tpu.vector_store %arg8[%c0_108, %916, %c0_109], %919 {strides = array<i32>} : memref<1x16x128xbf16, #tpu.memory_space<vmem>>, vector<1x16x128xbf16>,
    %c1_i32 = arith.constant 1 : i32
    return
  }
  func.func @transform_0(%arg0: i32, %arg1: i32) -> (i32, i32, i32) {
    %c0_i32 = arith.constant 0 : i32
    %c0_i32_0 = arith.constant 0 : i32
    return %arg0, %c0_i32, %arg1 : i32, i32, i32
  }
  func.func @transform_1(%arg0: i32, %arg1: i32) -> (i32, i32, i32) {
    %c0_i32 = arith.constant 0 : i32
    %c0_i32_0 = arith.constant 0 : i32
    return %arg0, %c0_i32, %arg1 : i32, i32, i32
  }
  func.func @transform_2(%arg0: i32, %arg1: i32) -> (i32, i32, i32) {
    %c0_i32 = arith.constant 0 : i32
    %c0_i32_0 = arith.constant 0 : i32
    return %arg0, %c0_i32, %arg1 : i32, i32, i32
  }
  func.func @transform_3(%arg0: i32, %arg1: i32) -> (i32, i32, i32) {
    %c0_i32 = arith.constant 0 : i32
    %c0_i32_0 = arith.constant 0 : i32
    return %arg0, %c0_i32, %arg1 : i32, i32, i32
  }
  func.func @transform_4(%arg0: i32, %arg1: i32) -> (i32, i32, i32) {
    %c0_i32 = arith.constant 0 : i32
    %c0_i32_0 = arith.constant 0 : i32
    return %arg0, %c0_i32, %arg1 : i32, i32, i32
  }
  func.func @transform_5(%arg0: i32, %arg1: i32) -> (i32, i32, i32) {
    %c0_i32 = arith.constant 0 : i32
    %c0_i32_0 = arith.constant 0 : i32
    return %arg0, %c0_i32, %arg1 : i32, i32, i32
  }
  func.func @transform_6(%arg0: i32, %arg1: i32) -> (i32, i32, i32) {
    %c0_i32 = arith.constant 0 : i32
    %c0_i32_0 = arith.constant 0 : i32
    return %arg0, %c0_i32, %arg1 : i32, i32, i32
  }
}

module attributes {stable_mosaic.version = 11 : i64} {
  func.func @_groupnorm_kernel(%arg0: i32, %arg1: memref<32x128xbf16, #tpu.memory_space<vmem>>, %arg2: memref<128x2xf32, #tpu.memory_space<vmem>>, %arg3: memref<2x128xf32, #tpu.memory_space<vmem>>, %arg4: memref<1x128xf32, #tpu.memory_space<vmem>>, %arg5: memref<1x128xf32, #tpu.memory_space<vmem>>, %arg6: memref<32x128xf32, #tpu.memory_space<vmem>>) attributes {dimension_semantics = [#tpu.dimension_semantics<parallel>], iteration_bounds = array<i64: 1>, scalar_prefetch = 0 : i64, scratch_operands = 0 : i64, tpu.core_type = #tpu.core_type<tc>, window_params = [{transform_indices = @transform_0, window_bounds = array<i64: 32, 128>}, {pipeline_mode = #tpu.pipeline_mode<synchronous>, transform_indices = @transform_1, window_bounds = array<i64: 128, 2>}, {pipeline_mode = #tpu.pipeline_mode<synchronous>, transform_indices = @transform_2, window_bounds = array<i64: 2, 128>}, {pipeline_mode = #tpu.pipeline_mode<synchronous>, transform_indices = @transform_3, window_bounds = array<i64: 1, 128>}, {pipeline_mode = #tpu.pipeline_mode<synchronous>, transform_indices = @transform_4, window_bounds = array<i64: 1, 128>}, {transform_indices = @transform_5, window_bounds = array<i64: 32, 128>}]} {
    %c0 = arith.constant 0 : index
    %c0_0 = arith.constant 0 : index
    %0 = vector.load %arg1[%c0, %c0_0] : memref<32x128xbf16, #tpu.memory_space<vmem>>, vector<32x128xbf16>
    %1 = arith.extf %0 : vector<32x128xbf16> to vector<32x128xf32>
    %c0_1 = arith.constant 0 : index
    %c0_2 = arith.constant 0 : index
    %2 = vector.load %arg2[%c0_1, %c0_2] : memref<128x2xf32, #tpu.memory_space<vmem>>, vector<128x2xf32>
    %c0_3 = arith.constant 0 : index
    %c0_4 = arith.constant 0 : index
    %3 = vector.load %arg3[%c0_3, %c0_4] : memref<2x128xf32, #tpu.memory_space<vmem>>, vector<2x128xf32>
    %cst = arith.constant dense<0.000000e+00> : vector<32x2xf32>
    %4 = tpu.matmul %1, %2, %cst {dimension_numbers = #tpu.dot_dimension_numbers<[1], [0], [0], [1], [0, 0, 1, 1], [], []>} : vector<32x128xf32>, vector<128x2xf32>, vector<32x2xf32> -> vector<32x2xf32>
    %5 = arith.mulf %1, %1 : vector<32x128xf32>
    %cst_5 = arith.constant dense<0.000000e+00> : vector<32x2xf32>
    %6 = tpu.matmul %5, %2, %cst_5 {dimension_numbers = #tpu.dot_dimension_numbers<[1], [0], [0], [1], [0, 0, 1, 1], [], []>} : vector<32x128xf32>, vector<128x2xf32>, vector<32x2xf32> -> vector<32x2xf32>
    %cst_6 = arith.constant dense<0.000000e+00> : vector<32x128xf32>
    %7 = tpu.matmul %4, %3, %cst_6 {dimension_numbers = #tpu.dot_dimension_numbers<[1], [0], [0], [1], [0, 0, 1, 1], [], []>} : vector<32x2xf32>, vector<2x128xf32>, vector<32x128xf32> -> vector<32x128xf32>
    %cst_7 = arith.constant dense<0.000000e+00> : vector<32x128xf32>
    %8 = tpu.matmul %6, %3, %cst_7 {dimension_numbers = #tpu.dot_dimension_numbers<[1], [0], [0], [1], [0, 0, 1, 1], [], []>} : vector<32x2xf32>, vector<2x128xf32>, vector<32x128xf32> -> vector<32x128xf32>
    %9 = arith.mulf %7, %7 : vector<32x128xf32>
    %10 = arith.subf %8, %9 : vector<32x128xf32>
    %cst_8 = arith.constant 0.000000e+00 : f32
    %11 = vector.broadcast %cst_8 : f32 to vector<32x128xf32>
    %12 = arith.maximumf %10, %11 : vector<32x128xf32>
    %13 = arith.subf %1, %7 : vector<32x128xf32>
    %cst_9 = arith.constant 6.400000e-04 : f32
    %14 = vector.broadcast %cst_9 : f32 to vector<32x128xf32>
    %15 = arith.addf %12, %14 : vector<32x128xf32>
    %16 = math.rsqrt %15 : vector<32x128xf32>
    %17 = arith.mulf %13, %16 : vector<32x128xf32>
    %c0_10 = arith.constant 0 : index
    %c0_11 = arith.constant 0 : index
    %18 = vector.load %arg4[%c0_10, %c0_11] : memref<1x128xf32, #tpu.memory_space<vmem>>, vector<1x128xf32>
    %19 = vector.broadcast %18 : vector<1x128xf32> to vector<32x128xf32>
    %20 = arith.mulf %17, %19 : vector<32x128xf32>
    %c0_12 = arith.constant 0 : index
    %c0_13 = arith.constant 0 : index
    %21 = vector.load %arg5[%c0_12, %c0_13] : memref<1x128xf32, #tpu.memory_space<vmem>>, vector<1x128xf32>
    %22 = vector.broadcast %21 : vector<1x128xf32> to vector<32x128xf32>
    %23 = arith.addf %20, %22 : vector<32x128xf32>
    %c0_14 = arith.constant 0 : index
    %c0_15 = arith.constant 0 : index
    %24 = vector.load %arg6[%c0_14, %c0_15] : memref<32x128xf32, #tpu.memory_space<vmem>>, vector<32x128xf32>
    tpu.vector_store %arg6[%c0_14, %c0_15], %23 {strides = array<i32>} : memref<32x128xf32, #tpu.memory_space<vmem>>, vector<32x128xf32>,
    return
  }
  func.func @transform_0(%arg0: i32) -> (i32, i32) {
    %c0_i32 = arith.constant 0 : i32
    %c0_i32_0 = arith.constant 0 : i32
    return %arg0, %c0_i32 : i32, i32
  }
  func.func @transform_1(%arg0: i32) -> (i32, i32) {
    %c0_i32 = arith.constant 0 : i32
    %c0_i32_0 = arith.constant 0 : i32
    %c0_i32_1 = arith.constant 0 : i32
    return %c0_i32, %c0_i32_0 : i32, i32
  }
  func.func @transform_2(%arg0: i32) -> (i32, i32) {
    %c0_i32 = arith.constant 0 : i32
    %c0_i32_0 = arith.constant 0 : i32
    %c0_i32_1 = arith.constant 0 : i32
    return %c0_i32, %c0_i32_0 : i32, i32
  }
  func.func @transform_3(%arg0: i32) -> (i32, i32) {
    %c0_i32 = arith.constant 0 : i32
    %c0_i32_0 = arith.constant 0 : i32
    %c0_i32_1 = arith.constant 0 : i32
    return %c0_i32, %c0_i32_0 : i32, i32
  }
  func.func @transform_4(%arg0: i32) -> (i32, i32) {
    %c0_i32 = arith.constant 0 : i32
    %c0_i32_0 = arith.constant 0 : i32
    %c0_i32_1 = arith.constant 0 : i32
    return %c0_i32, %c0_i32_0 : i32, i32
  }
  func.func @transform_5(%arg0: i32) -> (i32, i32) {
    %c0_i32 = arith.constant 0 : i32
    %c0_i32_0 = arith.constant 0 : i32
    return %arg0, %c0_i32 : i32, i32
  }
}

module attributes {stable_mosaic.version = 11 : i64} {
  func.func @_mix_lora_kernel(%arg0: i32, %arg1: memref<32x128xbf16, #tpu.memory_space<vmem>>, %arg2: memref<32x128xbf16, #tpu.memory_space<vmem>>, %arg3: memref<1x128xf32, #tpu.memory_space<vmem>>, %arg4: memref<128x32xbf16, #tpu.memory_space<vmem>>, %arg5: memref<32x128xbf16, #tpu.memory_space<vmem>>, %arg6: memref<1x128xf32, #tpu.memory_space<vmem>>, %arg7: memref<32x128xbf16, #tpu.memory_space<vmem>>) attributes {dimension_semantics = [#tpu.dimension_semantics<parallel>], iteration_bounds = array<i64: 1>, scalar_prefetch = 0 : i64, scratch_operands = 0 : i64, tpu.core_type = #tpu.core_type<tc>, window_params = [{transform_indices = @transform_0, window_bounds = array<i64: 32, 128>}, {transform_indices = @transform_1, window_bounds = array<i64: 32, 128>}, {pipeline_mode = #tpu.pipeline_mode<synchronous>, transform_indices = @transform_2, window_bounds = array<i64: 1, 128>}, {pipeline_mode = #tpu.pipeline_mode<synchronous>, transform_indices = @transform_3, window_bounds = array<i64: 128, 32>}, {pipeline_mode = #tpu.pipeline_mode<synchronous>, transform_indices = @transform_4, window_bounds = array<i64: 32, 128>}, {pipeline_mode = #tpu.pipeline_mode<synchronous>, transform_indices = @transform_5, window_bounds = array<i64: 1, 128>}, {transform_indices = @transform_6, window_bounds = array<i64: 32, 128>}]} {
    %c0 = arith.constant 0 : index
    %c0_0 = arith.constant 0 : index
    %0 = vector.load %arg1[%c0, %c0_0] : memref<32x128xbf16, #tpu.memory_space<vmem>>, vector<32x128xbf16>
    %1 = arith.extf %0 : vector<32x128xbf16> to vector<32x128xf32>
    %c0_1 = arith.constant 0 : index
    %c0_2 = arith.constant 0 : index
    %2 = vector.load %arg2[%c0_1, %c0_2] : memref<32x128xbf16, #tpu.memory_space<vmem>>, vector<32x128xbf16>
    %3 = arith.extf %2 : vector<32x128xbf16> to vector<32x128xf32>
    %c0_3 = arith.constant 0 : index
    %c0_4 = arith.constant 0 : index
    %4 = vector.load %arg3[%c0_3, %c0_4] : memref<1x128xf32, #tpu.memory_space<vmem>>, vector<1x128xf32>
    %5 = vector.broadcast %4 : vector<1x128xf32> to vector<32x128xf32>
    %6 = arith.mulf %3, %5 : vector<32x128xf32>
    %7 = arith.addf %1, %6 : vector<32x128xf32>
    %8 = arith.truncf %7 : vector<32x128xf32> to vector<32x128xbf16>
    %c0_5 = arith.constant 0 : index
    %c0_6 = arith.constant 0 : index
    %9 = vector.load %arg4[%c0_5, %c0_6] : memref<128x32xbf16, #tpu.memory_space<vmem>>, vector<128x32xbf16>
    %cst = arith.constant dense<0.000000e+00> : vector<32x32xf32>
    %10 = tpu.matmul %8, %9, %cst {dimension_numbers = #tpu.dot_dimension_numbers<[1], [0], [0], [1], [0, 0, 1, 1], [], []>} : vector<32x128xbf16>, vector<128x32xbf16>, vector<32x32xf32> -> vector<32x32xf32>
    %cst_7 = arith.constant 0.000000e+00 : f32
    %11 = vector.broadcast %cst_7 : f32 to vector<32x32xf32>
    %12 = arith.subf %11, %10 : vector<32x32xf32>
    %13 = math.exp %12 : vector<32x32xf32>
    %cst_8 = arith.constant 1.000000e+00 : f32
    %14 = vector.broadcast %cst_8 : f32 to vector<32x32xf32>
    %15 = arith.addf %14, %13 : vector<32x32xf32>
    %cst_9 = arith.constant 1.000000e+00 : f32
    %16 = vector.broadcast %cst_9 : f32 to vector<32x32xf32>
    %17 = arith.divf %16, %15 : vector<32x32xf32>
    %18 = arith.truncf %17 : vector<32x32xf32> to vector<32x32xbf16>
    %c0_10 = arith.constant 0 : index
    %c0_11 = arith.constant 0 : index
    %19 = vector.load %arg5[%c0_10, %c0_11] : memref<32x128xbf16, #tpu.memory_space<vmem>>, vector<32x128xbf16>
    %cst_12 = arith.constant dense<0.000000e+00> : vector<32x128xf32>
    %20 = tpu.matmul %18, %19, %cst_12 {dimension_numbers = #tpu.dot_dimension_numbers<[1], [0], [0], [1], [0, 0, 1, 1], [], []>} : vector<32x32xbf16>, vector<32x128xbf16>, vector<32x128xf32> -> vector<32x128xf32>
    %c0_13 = arith.constant 0 : index
    %c0_14 = arith.constant 0 : index
    %21 = vector.load %arg6[%c0_13, %c0_14] : memref<1x128xf32, #tpu.memory_space<vmem>>, vector<1x128xf32>
    %22 = vector.broadcast %21 : vector<1x128xf32> to vector<32x128xf32>
    %23 = arith.addf %20, %22 : vector<32x128xf32>
    %24 = arith.truncf %23 : vector<32x128xf32> to vector<32x128xbf16>
    %c0_15 = arith.constant 0 : index
    %c0_16 = arith.constant 0 : index
    %25 = vector.load %arg7[%c0_15, %c0_16] : memref<32x128xbf16, #tpu.memory_space<vmem>>, vector<32x128xbf16>
    tpu.vector_store %arg7[%c0_15, %c0_16], %24 {strides = array<i32>} : memref<32x128xbf16, #tpu.memory_space<vmem>>, vector<32x128xbf16>,
    return
  }
  func.func @transform_0(%arg0: i32) -> (i32, i32) {
    %c0_i32 = arith.constant 0 : i32
    %c0_i32_0 = arith.constant 0 : i32
    return %arg0, %c0_i32 : i32, i32
  }
  func.func @transform_1(%arg0: i32) -> (i32, i32) {
    %c0_i32 = arith.constant 0 : i32
    %c0_i32_0 = arith.constant 0 : i32
    return %arg0, %c0_i32 : i32, i32
  }
  func.func @transform_2(%arg0: i32) -> (i32, i32) {
    %c0_i32 = arith.constant 0 : i32
    %c0_i32_0 = arith.constant 0 : i32
    %c0_i32_1 = arith.constant 0 : i32
    return %c0_i32, %c0_i32_0 : i32, i32
  }
  func.func @transform_3(%arg0: i32) -> (i32, i32) {
    %c0_i32 = arith.constant 0 : i32
    %c0_i32_0 = arith.constant 0 : i32
    %c0_i32_1 = arith.constant 0 : i32
    return %c0_i32, %c0_i32_0 : i32, i32
  }
  func.func @transform_4(%arg0: i32) -> (i32, i32) {
    %c0_i32 = arith.constant 0 : i32
    %c0_i32_0 = arith.constant 0 : i32
    %c0_i32_1 = arith.constant 0 : i32
    return %c0_i32, %c0_i32_0 : i32, i32
  }
  func.func @transform_5(%arg0: i32) -> (i32, i32) {
    %c0_i32 = arith.constant 0 : i32
    %c0_i32_0 = arith.constant 0 : i32
    %c0_i32_1 = arith.constant 0 : i32
    return %c0_i32, %c0_i32_0 : i32, i32
  }
  func.func @transform_6(%arg0: i32) -> (i32, i32) {
    %c0_i32 = arith.constant 0 : i32
    %c0_i32_0 = arith.constant 0 : i32
    return %arg0, %c0_i32 : i32, i32
  }
}

module attributes {stable_mosaic.version = 11 : i64} {
  func.func @_gated_matmul_kernel(%arg0: i32, %arg1: i32, %arg2: memref<32x128xf32, #tpu.memory_space<vmem>>, %arg3: memref<32x128xbf16, #tpu.memory_space<vmem>>, %arg4: memref<128x128xbf16, #tpu.memory_space<vmem>>, %arg5: memref<32x128xf32, #tpu.memory_space<vmem>>) attributes {dimension_semantics = [#tpu.dimension_semantics<parallel>, #tpu.dimension_semantics<parallel>], iteration_bounds = array<i64: 1, 1>, scalar_prefetch = 0 : i64, scratch_operands = 0 : i64, tpu.core_type = #tpu.core_type<tc>, window_params = [{transform_indices = @transform_0, window_bounds = array<i64: 32, 128>}, {transform_indices = @transform_1, window_bounds = array<i64: 32, 128>}, {transform_indices = @transform_2, window_bounds = array<i64: 128, 128>}, {transform_indices = @transform_3, window_bounds = array<i64: 32, 128>}]} {
    %c0 = arith.constant 0 : index
    %c0_0 = arith.constant 0 : index
    %0 = vector.load %arg2[%c0, %c0_0] : memref<32x128xf32, #tpu.memory_space<vmem>>, vector<32x128xf32>
    %c0_1 = arith.constant 0 : index
    %c0_2 = arith.constant 0 : index
    %1 = vector.load %arg3[%c0_1, %c0_2] : memref<32x128xbf16, #tpu.memory_space<vmem>>, vector<32x128xbf16>
    %2 = arith.extf %1 : vector<32x128xbf16> to vector<32x128xf32>
    %3 = arith.mulf %0, %2 : vector<32x128xf32>
    %4 = arith.truncf %3 : vector<32x128xf32> to vector<32x128xbf16>
    %c0_3 = arith.constant 0 : index
    %c0_4 = arith.constant 0 : index
    %5 = vector.load %arg4[%c0_3, %c0_4] : memref<128x128xbf16, #tpu.memory_space<vmem>>, vector<128x128xbf16>
    %cst = arith.constant dense<0.000000e+00> : vector<32x128xf32>
    %6 = tpu.matmul %4, %5, %cst {dimension_numbers = #tpu.dot_dimension_numbers<[1], [0], [0], [1], [0, 0, 1, 1], [], []>} : vector<32x128xbf16>, vector<128x128xbf16>, vector<32x128xf32> -> vector<32x128xf32>
    %c0_5 = arith.constant 0 : index
    %c0_6 = arith.constant 0 : index
    %7 = vector.load %arg5[%c0_5, %c0_6] : memref<32x128xf32, #tpu.memory_space<vmem>>, vector<32x128xf32>
    tpu.vector_store %arg5[%c0_5, %c0_6], %6 {strides = array<i32>} : memref<32x128xf32, #tpu.memory_space<vmem>>, vector<32x128xf32>,
    return
  }
  func.func @transform_0(%arg0: i32, %arg1: i32) -> (i32, i32) {
    %c0_i32 = arith.constant 0 : i32
    %c0_i32_0 = arith.constant 0 : i32
    return %arg0, %c0_i32 : i32, i32
  }
  func.func @transform_1(%arg0: i32, %arg1: i32) -> (i32, i32) {
    %c0_i32 = arith.constant 0 : i32
    %c0_i32_0 = arith.constant 0 : i32
    return %arg0, %c0_i32 : i32, i32
  }
  func.func @transform_2(%arg0: i32, %arg1: i32) -> (i32, i32) {
    %c0_i32 = arith.constant 0 : i32
    %c0_i32_0 = arith.constant 0 : i32
    return %c0_i32, %arg1 : i32, i32
  }
  func.func @transform_3(%arg0: i32, %arg1: i32) -> (i32, i32) {
    %c0_i32 = arith.constant 0 : i32
    return %arg0, %arg1 : i32, i32
  }
}

module attributes {stable_mosaic.version = 11 : i64} {
  func.func @_cmix_kernel(%arg0: i32, %arg1: i32, %arg2: memref<32x128xbf16, #tpu.memory_space<vmem>>, %arg3: memref<32x128xbf16, #tpu.memory_space<vmem>>, %arg4: memref<1x128xf32, #tpu.memory_space<vmem>>, %arg5: memref<128x512xbf16, #tpu.memory_space<vmem>>, %arg6: memref<512x128xbf16, #tpu.memory_space<vmem>>, %arg7: memref<32x128xf32, #tpu.memory_space<vmem>>, %arg8: memref<32x128xf32, #tpu.memory_space<vmem>>) attributes {dimension_semantics = [#tpu.dimension_semantics<parallel>, #tpu.dimension_semantics<arbitrary>], iteration_bounds = array<i64: 1, 1>, scalar_prefetch = 0 : i64, scratch_operands = 1 : i64, tpu.core_type = #tpu.core_type<tc>, window_params = [{transform_indices = @transform_0, window_bounds = array<i64: 32, 128>}, {transform_indices = @transform_1, window_bounds = array<i64: 32, 128>}, {pipeline_mode = #tpu.pipeline_mode<synchronous>, transform_indices = @transform_2, window_bounds = array<i64: 1, 128>}, {transform_indices = @transform_3, window_bounds = array<i64: 128, 512>}, {transform_indices = @transform_4, window_bounds = array<i64: 512, 128>}, {transform_indices = @transform_5, window_bounds = array<i64: 32, 128>}]} {
    %c0_i32 = arith.constant 0 : i32
    %0 = arith.cmpi eq, %arg1, %c0_i32 : i32
    %1 = arith.extui %0 : i1 to i32
    %c0_i32_0 = arith.constant 0 : i32
    %2 = arith.cmpi ne, %1, %c0_i32_0 : i32
    scf.if %2 {
      %cst_18 = arith.constant 0.000000e+00 : f32
      %26 = vector.broadcast %cst_18 : f32 to vector<32x128xf32>
      %c0_19 = arith.constant 0 : index
      %c0_20 = arith.constant 0 : index
      %27 = vector.load %arg8[%c0_19, %c0_20] : memref<32x128xf32, #tpu.memory_space<vmem>>, vector<32x128xf32>
      tpu.vector_store %arg8[%c0_19, %c0_20], %26 {strides = array<i32>} : memref<32x128xf32, #tpu.memory_space<vmem>>, vector<32x128xf32>,
    } else {
    }
    %c0 = arith.constant 0 : index
    %c0_1 = arith.constant 0 : index
    %3 = vector.load %arg2[%c0, %c0_1] : memref<32x128xbf16, #tpu.memory_space<vmem>>, vector<32x128xbf16>
    %4 = arith.extf %3 : vector<32x128xbf16> to vector<32x128xf32>
    %c0_2 = arith.constant 0 : index
    %c0_3 = arith.constant 0 : index
    %5 = vector.load %arg3[%c0_2, %c0_3] : memref<32x128xbf16, #tpu.memory_space<vmem>>, vector<32x128xbf16>
    %6 = arith.extf %5 : vector<32x128xbf16> to vector<32x128xf32>
    %c0_4 = arith.constant 0 : index
    %c0_5 = arith.constant 0 : index
    %7 = vector.load %arg4[%c0_4, %c0_5] : memref<1x128xf32, #tpu.memory_space<vmem>>, vector<1x128xf32>
    %8 = vector.broadcast %7 : vector<1x128xf32> to vector<32x128xf32>
    %9 = arith.mulf %6, %8 : vector<32x128xf32>
    %10 = arith.addf %4, %9 : vector<32x128xf32>
    %11 = arith.truncf %10 : vector<32x128xf32> to vector<32x128xbf16>
    %c0_6 = arith.constant 0 : index
    %c0_7 = arith.constant 0 : index
    %12 = vector.load %arg5[%c0_6, %c0_7] : memref<128x512xbf16, #tpu.memory_space<vmem>>, vector<128x512xbf16>
    %cst = arith.constant dense<0.000000e+00> : vector<32x512xf32>
    %13 = tpu.matmul %11, %12, %cst {dimension_numbers = #tpu.dot_dimension_numbers<[1], [0], [0], [1], [0, 0, 1, 1], [], []>} : vector<32x128xbf16>, vector<128x512xbf16>, vector<32x512xf32> -> vector<32x512xf32>
    %cst_8 = arith.constant 0.000000e+00 : f32
    %14 = vector.broadcast %cst_8 : f32 to vector<32x512xf32>
    %15 = arith.maximumf %13, %14 : vector<32x512xf32>
    %16 = arith.mulf %15, %15 : vector<32x512xf32>
    %c0_9 = arith.constant 0 : index
    %c0_10 = arith.constant 0 : index
    %17 = vector.load %arg8[%c0_9, %c0_10] : memref<32x128xf32, #tpu.memory_space<vmem>>, vector<32x128xf32>
    %18 = arith.truncf %16 : vector<32x512xf32> to vector<32x512xbf16>
    %c0_11 = arith.constant 0 : index
    %c0_12 = arith.constant 0 : index
    %19 = vector.load %arg6[%c0_11, %c0_12] : memref<512x128xbf16, #tpu.memory_space<vmem>>, vector<512x128xbf16>
    %cst_13 = arith.constant dense<0.000000e+00> : vector<32x128xf32>
    %20 = tpu.matmul %18, %19, %cst_13 {dimension_numbers = #tpu.dot_dimension_numbers<[1], [0], [0], [1], [0, 0, 1, 1], [], []>} : vector<32x512xbf16>, vector<512x128xbf16>, vector<32x128xf32> -> vector<32x128xf32>
    %21 = arith.addf %17, %20 : vector<32x128xf32>
    %c0_14 = arith.constant 0 : index
    %c0_15 = arith.constant 0 : index
    %22 = vector.load %arg8[%c0_14, %c0_15] : memref<32x128xf32, #tpu.memory_space<vmem>>, vector<32x128xf32>
    tpu.vector_store %arg8[%c0_14, %c0_15], %21 {strides = array<i32>} : memref<32x128xf32, #tpu.memory_space<vmem>>, vector<32x128xf32>,
    %c0_i32_16 = arith.constant 0 : i32
    %23 = arith.cmpi eq, %arg1, %c0_i32_16 : i32
    %24 = arith.extui %23 : i1 to i32
    %c0_i32_17 = arith.constant 0 : i32
    %25 = arith.cmpi ne, %24, %c0_i32_17 : i32
    scf.if %25 {
      %c0_18 = arith.constant 0 : index
      %c0_19 = arith.constant 0 : index
      %26 = vector.load %arg8[%c0_18, %c0_19] : memref<32x128xf32, #tpu.memory_space<vmem>>, vector<32x128xf32>
      %c0_20 = arith.constant 0 : index
      %c0_21 = arith.constant 0 : index
      %27 = vector.load %arg7[%c0_20, %c0_21] : memref<32x128xf32, #tpu.memory_space<vmem>>, vector<32x128xf32>
      tpu.vector_store %arg7[%c0_20, %c0_21], %26 {strides = array<i32>} : memref<32x128xf32, #tpu.memory_space<vmem>>, vector<32x128xf32>,
    } else {
    }
    return
  }
  func.func @transform_0(%arg0: i32, %arg1: i32) -> (i32, i32) {
    %c0_i32 = arith.constant 0 : i32
    %c0_i32_0 = arith.constant 0 : i32
    return %arg0, %c0_i32 : i32, i32
  }
  func.func @transform_1(%arg0: i32, %arg1: i32) -> (i32, i32) {
    %c0_i32 = arith.constant 0 : i32
    %c0_i32_0 = arith.constant 0 : i32
    return %arg0, %c0_i32 : i32, i32
  }
  func.func @transform_2(%arg0: i32, %arg1: i32) -> (i32, i32) {
    %c0_i32 = arith.constant 0 : i32
    %c0_i32_0 = arith.constant 0 : i32
    %c0_i32_1 = arith.constant 0 : i32
    return %c0_i32, %c0_i32_0 : i32, i32
  }
  func.func @transform_3(%arg0: i32, %arg1: i32) -> (i32, i32) {
    %c0_i32 = arith.constant 0 : i32
    %c0_i32_0 = arith.constant 0 : i32
    return %c0_i32, %arg1 : i32, i32
  }
  func.func @transform_4(%arg0: i32, %arg1: i32) -> (i32, i32) {
    %c0_i32 = arith.constant 0 : i32
    %c0_i32_0 = arith.constant 0 : i32
    return %arg1, %c0_i32 : i32, i32
  }
  func.func @transform_5(%arg0: i32, %arg1: i32) -> (i32, i32) {
    %c0_i32 = arith.constant 0 : i32
    %c0_i32_0 = arith.constant 0 : i32
    return %arg0, %c0_i32 : i32, i32
  }
}

</mosaic_0001>

<llo_original>
// kernel: block_forward.13
$region0: #{block_forward.13}
  #allocation0 [shape = 'u32[]', space=smem, size = 0x4, offset = 0x4, fixed_abs, tag = 'smem constant byte address 0x4 - core index']
  #allocation1 [shape = 'u32[144,128]{1,0:T(1,128)}', space=vmem, size = 0x12000, scoped, tag = 'internal scratch']
  %s0 = inlined_call_operand.vmem [shape: f32[32,128], index: 0, kind: input, shape index: {}]
  %s1 = inlined_call_operand.vmem [shape: f32[1,128], index: 1, kind: input, shape index: {}]
  %s2 = inlined_call_operand.vmem [shape: f32[1,128], index: 2, kind: input, shape index: {}]
  %s3 = inlined_call_operand.vmem [shape: f32[32,128], index: 3, kind: output, shape index: {}]
  %s4 = sld [smem:[#allocation0]]
  $region22: #{block_forward.13} parent=0
    _
  %s6 = ssub.s32 1, %s4
  %s7 = scalar_select 0, %s6, %s4
  // Predicated region
  $region2: #{block_forward.13} parent=0 // pred_check
    _
  $region3: #{block_forward.13} parent=0 // pred_check_branch
    %9 = sbr.rel (0) target = $region5
  $region4: #{block_forward.13} parent=0 // pred_region
    _
  $region5: #{block_forward.13} parent=0 // pred_fallthru
    _
  // Predicated region
  $region6: #{block_forward.13} parent=0 // pred_check
    _
  $region7: #{block_forward.13} parent=0 // pred_check_branch
    %11 = sbr.rel (0) target = $region9
  $region8: #{block_forward.13} parent=0 // pred_region
    _
  $region9: #{block_forward.13} parent=0 // pred_fallthru
    _
  // Predicated region
  $region10: #{block_forward.13} parent=0 // pred_check
    _
  $region11: #{block_forward.13} parent=0 // pred_check_branch
    %13 = sbr.rel (0) target = $region13
  $region12: #{block_forward.13} parent=0 // pred_region
    _
  $region13: #{block_forward.13} parent=0 // pred_fallthru
    _
  %v14 = vld [vmem:[%s0] sm:$0xff]
  %v15 = vld [vmem:[%s0 + $0x8] sm:$0xff]
  %v16 = vld [vmem:[%s0 + $0x10] sm:$0xff]
  %v17 = vld [vmem:[%s0 + $0x18] sm:$0xff]
  %18 = vadd.xlane.f32.xlu0 %v14
  %v19 = vpop.xlane.xlu0 %18
  %20 = vadd.xlane.f32.xlu0 %v15
  %v21 = vpop.xlane.xlu0 %20
  %22 = vadd.xlane.f32.xlu0 %v16
  %v23 = vpop.xlane.xlu0 %22
  %24 = vadd.xlane.f32.xlu0 %v17
  %v25 = vpop.xlane.xlu0 %24
  %v26 = vrcp.pop 128.0
  %v27 = vmul.f32 %v19, %v26
  %v28 = vmul.f32 %v21, %v26
  %v29 = vmul.f32 %v23, %v26
  %v30 = vmul.f32 %v25, %v26
  %v31 = vsub.f32 %v14, %v27
  %v32 = vsub.f32 %v15, %v28
  %v33 = vsub.f32 %v16, %v29
  %v34 = vsub.f32 %v17, %v30
  %v35 = vmul.f32 %v31, %v31
  %v36 = vmul.f32 %v32, %v32
  %v37 = vmul.f32 %v33, %v33
  %v38 = vmul.f32 %v34, %v34
  %39 = vadd.xlane.f32.xlu0 %v35
  %v40 = vpop.xlane.xlu0 %39
  %41 = vadd.xlane.f32.xlu0 %v36
  %v42 = vpop.xlane.xlu0 %41
  %43 = vadd.xlane.f32.xlu0 %v37
  %v44 = vpop.xlane.xlu0 %43
  %45 = vadd.xlane.f32.xlu0 %v38
  %v46 = vpop.xlane.xlu0 %45
  %v47 = vmul.f32 %v40, %v26
  %v48 = vmul.f32 %v42, %v26
  %v49 = vmul.f32 %v44, %v26
  %v50 = vmul.f32 %v46, %v26
  %v51 = vadd.f32 %v47, 1e-05
  %v52 = vadd.f32 %v48, 1e-05
  %v53 = vadd.f32 %v49, 1e-05
  %v54 = vadd.f32 %v50, 1e-05
  %v55 = vrsqrt.pop %v51
  %v56 = vrsqrt.pop %v52
  %v57 = vrsqrt.pop %v53
  %v58 = vrsqrt.pop %v54
  %v59 = vmul.f32 %v31, %v55
  %v60 = vmul.f32 %v32, %v56
  %v61 = vmul.f32 %v33, %v57
  %v62 = vmul.f32 %v34, %v58
  %v63 = vld [vmem:[%s1] sm:$0x1]
  %v65 = vlaneseq
  %v66 = vshrl.u32 %v65, 7
  %v67 = vsub.s32 0, %v66
  %v68 = vrot.slane %v63, %v67
  %v70 = vmul.f32 %v59, %v68
  %v71 = vmul.f32 %v60, %v68
  %v72 = vmul.f32 %v61, %v68
  %v73 = vmul.f32 %v62, %v68
  %v74 = vld [vmem:[%s2] sm:$0x1]
  %v76 = vlaneseq
  %v77 = vshrl.u32 %v76, 7
  %v78 = vsub.s32 0, %v77
  %v79 = vrot.slane %v74, %v78
  %v81 = vadd.f32 %v70, %v79
  %v82 = vadd.f32 %v71, %v79
  %v83 = vadd.f32 %v72, %v79
  %v84 = vadd.f32 %v73, %v79
  %85 = vst [vmem:[%s3] sm:$0xff] %v81
  %86 = vst [vmem:[%s3 + $0x8] sm:$0xff] %v82
  %87 = vst [vmem:[%s3 + $0x10] sm:$0xff] %v83
  %88 = vst [vmem:[%s3 + $0x18] sm:$0xff] %v84
  // Predicated region
  $region14: #{block_forward.13} parent=0 // pred_check
    _
  $region15: #{block_forward.13} parent=0 // pred_check_branch
    %90 = sbr.rel (0) target = $region17
  $region16: #{block_forward.13} parent=0 // pred_region
    _
  $region17: #{block_forward.13} parent=0 // pred_fallthru
    _
  // Predicated region
  $region18: #{block_forward.13} parent=0 // pred_check
    _
  $region19: #{block_forward.13} parent=0 // pred_check_branch
    %92 = sbr.rel (0) target = $region21
  $region20: #{block_forward.13} parent=0 // pred_region
    _
  $region21: #{block_forward.13} parent=0 // pred_fallthru
    _

// kernel: block_forward.16
$region0: #{block_forward.16}
  #allocation0 [shape = 'u32[]', space=smem, size = 0x4, offset = 0x4, fixed_abs, tag = 'smem constant byte address 0x4 - core index']
  #allocation1 [shape = 'u32[144,128]{1,0:T(1,128)}', space=vmem, size = 0x12000, scoped, tag = 'internal scratch']
  %s0 = inlined_call_operand.vmem [shape: bf16[32,128], index: 0, kind: input, shape index: {}]
  %s1 = inlined_call_operand.vmem [shape: bf16[32,128], index: 1, kind: input, shape index: {}]
  %s2 = inlined_call_operand.vmem [shape: f32[1,128], index: 2, kind: input, shape index: {}]
  %s3 = inlined_call_operand.vmem [shape: bf16[128,128], index: 3, kind: input, shape index: {}]
  %s4 = inlined_call_operand.vmem [shape: bf16[32,128], index: 4, kind: output, shape index: {}]
  %s5 = sld [smem:[#allocation0]]
  $region26: #{block_forward.16} parent=0
    _
  %s7 = ssub.s32 1, %s5
  %s8 = scalar_select 0, %s7, %s5
  // Predicated region
  $region2: #{block_forward.16} parent=0 // pred_check
    _
  $region3: #{block_forward.16} parent=0 // pred_check_branch
    %10 = sbr.rel (0) target = $region5
  $region4: #{block_forward.16} parent=0 // pred_region
    _
  $region5: #{block_forward.16} parent=0 // pred_fallthru
    _
  // Predicated region
  $region6: #{block_forward.16} parent=0 // pred_check
    _
  $region7: #{block_forward.16} parent=0 // pred_check_branch
    %12 = sbr.rel (0) target = $region9
  $region8: #{block_forward.16} parent=0 // pred_region
    _
  $region9: #{block_forward.16} parent=0 // pred_fallthru
    _
  // Predicated region
  $region10: #{block_forward.16} parent=0 // pred_check
    _
  $region11: #{block_forward.16} parent=0 // pred_check_branch
    %14 = sbr.rel (0) target = $region13
  $region12: #{block_forward.16} parent=0 // pred_region
    _
  $region13: #{block_forward.16} parent=0 // pred_fallthru
    _
  // Predicated region
  $region14: #{block_forward.16} parent=0 // pred_check
    _
  $region15: #{block_forward.16} parent=0 // pred_check_branch
    %16 = sbr.rel (0) target = $region17
  $region16: #{block_forward.16} parent=0 // pred_region
    _
  $region17: #{block_forward.16} parent=0 // pred_fallthru
    _
  %v18 = vld [vmem:[%s0] sm:$0xf]
  %v19 = vld [vmem:[%s0 + $0x4] sm:$0xf]
  %v20 = vld [vmem:[%s0 + $0x8] sm:$0xf]
  %v21 = vld [vmem:[%s0 + $0xc] sm:$0xf]
  %v22 = vunpack.c.l.bf16 %v18
  %v23 = vunpack.c.l.bf16 %v19
  %v24 = vunpack.c.l.bf16 %v20
  %v25 = vunpack.c.l.bf16 %v21
  %v26 = vld [vmem:[%s1] sm:$0xf]
  %v27 = vld [vmem:[%s1 + $0x4] sm:$0xf]
  %v28 = vld [vmem:[%s1 + $0x8] sm:$0xf]
  %v29 = vld [vmem:[%s1 + $0xc] sm:$0xf]
  %v30 = vunpack.c.l.bf16 %v26
  %v31 = vunpack.c.l.bf16 %v27
  %v32 = vunpack.c.l.bf16 %v28
  %v33 = vunpack.c.l.bf16 %v29
  %v34 = vld [vmem:[%s2] sm:$0x1]
  %v36 = vlaneseq
  %v37 = vshrl.u32 %v36, 7
  %v38 = vsub.s32 0, %v37
  %v39 = vrot.slane %v34, %v38
  %v41 = vmul.f32 %v30, %v39
  %v42 = vmul.f32 %v31, %v39
  %v43 = vmul.f32 %v32, %v39
  %v44 = vmul.f32 %v33, %v39
  %v45 = vadd.f32 %v22, %v41
  %v46 = vadd.f32 %v23, %v42
  %v47 = vadd.f32 %v24, %v43
  %v48 = vadd.f32 %v25, %v44
  %v49 = vpack.c.bf16 %v46, %v45
  %v50 = vpack.c.bf16 %v48, %v47
  %v51 = vld [vmem:[%s3] sm:$0xf]
  %v52 = vld [vmem:[%s3 + $0x4] sm:$0xf]
  %v53 = vld [vmem:[%s3 + $0x8] sm:$0xf]
  %v54 = vld [vmem:[%s3 + $0xc] sm:$0xf]
  %v55 = vld [vmem:[%s3 + $0x10] sm:$0xf]
  %v56 = vld [vmem:[%s3 + $0x14] sm:$0xf]
  %v57 = vld [vmem:[%s3 + $0x18] sm:$0xf]
  %v58 = vld [vmem:[%s3 + $0x1c] sm:$0xf]
  %v59 = vld [vmem:[%s3 + $0x20] sm:$0xf]
  %v60 = vld [vmem:[%s3 + $0x24] sm:$0xf]
  %v61 = vld [vmem:[%s3 + $0x28] sm:$0xf]
  %v62 = vld [vmem:[%s3 + $0x2c] sm:$0xf]
  %v63 = vld [vmem:[%s3 + $0x30] sm:$0xf]
  %v64 = vld [vmem:[%s3 + $0x34] sm:$0xf]
  %v65 = vld [vmem:[%s3 + $0x38] sm:$0xf]
  %v66 = vld [vmem:[%s3 + $0x3c] sm:$0xf]
  %v83 = vunpack.c.l.b16 %v51
  %v84 = vunpack.c.l.b16 %v52
  %v85 = vunpack.c.l.b16 %v53
  %v86 = vunpack.c.l.b16 %v54
  %v87 = vunpack.c.l.b16 %v55
  %v88 = vunpack.c.l.b16 %v56
  %v89 = vunpack.c.l.b16 %v57
  %v90 = vunpack.c.l.b16 %v58
  %v91 = vunpack.c.l.b16 %v59
  %v92 = vunpack.c.l.b16 %v60
  %v93 = vunpack.c.l.b16 %v61
  %v94 = vunpack.c.l.b16 %v62
  %v95 = vunpack.c.l.b16 %v63
  %v96 = vunpack.c.l.b16 %v64
  %v97 = vunpack.c.l.b16 %v65
  %v98 = vunpack.c.l.b16 %v66
  %v99 = vpack.c.b16 %v84, %v83
  %v100 = vpack.c.b16 %v86, %v85
  %v101 = vpack.c.b16 %v88, %v87
  %v102 = vpack.c.b16 %v90, %v89
  %v103 = vpack.c.b16 %v92, %v91
  %v104 = vpack.c.b16 %v94, %v93
  %v105 = vpack.c.b16 %v96, %v95
  %v106 = vpack.c.b16 %v98, %v97
  %115 = vmatprep.subr.bf16.mxu0 0
  %116 = vmatpush1.bf16.msra.mxu0 %v99
  %117 = vmatprep.subr.bf16.mxu0 0
  %118 = vmatpush1.bf16.msra.mxu0 %v100
  %119 = vmatprep.subr.bf16.mxu0 0
  %120 = vmatpush1.bf16.msra.mxu0 %v101
  %121 = vmatprep.subr.bf16.mxu0 0
  %122 = vmatpush1.bf16.msra.mxu0 %v102
  %123 = vmatprep.subr.bf16.mxu0 0
  %124 = vmatpush1.bf16.msra.mxu0 %v103
  %125 = vmatprep.subr.bf16.mxu0 0
  %126 = vmatpush1.bf16.msra.mxu0 %v104
  %127 = vmatprep.subr.bf16.mxu0 0
  %128 = vmatpush1.bf16.msra.mxu0 %v105
  %129 = vmatprep.subr.bf16.mxu0 0
  %130 = vmatpush1.bf16.msra.mxu0 %v106
  %131 = vmatprep.subr.bf16.mxu0 0
  %132 = vmatpush1.bf16.msra.mxu0 0
  %133 = vmatprep.subr.bf16.mxu0 0
  %134 = vmatpush1.bf16.msra.mxu0 0
  %135 = vmatprep.subr.bf16.mxu0 0
  %136 = vmatpush1.bf16.msra.mxu0 0
  %137 = vmatprep.subr.bf16.mxu0 0
  %138 = vmatpush1.bf16.msra.mxu0 0
  %139 = vmatprep.subr.bf16.mxu0 0
  %140 = vmatpush1.bf16.msra.mxu0 0
  %141 = vmatprep.subr.bf16.mxu0 0
  %142 = vmatpush1.bf16.msra.mxu0 0
  %143 = vmatprep.subr.bf16.mxu0 0
  %144 = vmatpush1.bf16.msra.mxu0 0
  %145 = vmatprep.subr.bf16.mxu0 0
  %146 = vmatpush1.bf16.msra.mxu0 0
  %147 = vmatprep.mubr.bf16.mxu0 0
  %148 = vmatmul.mubr.bf16.gmra.mrb[0].mxu0 %v49
  %v149 = vpop.f32.mrb[0].mxu0
  %v150 = vadd.f32 0.0, %v149
  %v151 = vpop.f32.mrb[0].mxu0
  %v152 = vpop.f32.mrb[0].mxu0
  %v153 = vadd.f32 0.0, %v152
  %v154 = vpop.f32.mrb[0].mxu0
  %155 = vmatprep.mubr.bf16.mxu0 0
  %156 = vmatmul.mubr.bf16.gmra.mrb[0].mxu0 %v50
  %v157 = vpop.f32.mrb[0].mxu0
  %v158 = vadd.f32 0.0, %v157
  %v159 = vpop.f32.mrb[0].mxu0
  %v160 = vpop.f32.mrb[0].mxu0
  %v161 = vadd.f32 0.0, %v160
  %v162 = vpop.f32.mrb[0].mxu0
  %163 = vdwg.mxu0
  %v164 = vpack.c.bf16 %v153, %v150
  %v165 = vpack.c.bf16 %v161, %v158
  %v168 = vunpack.c.l.b16 %v164
  %v169 = vunpack.c.h.b16 %v164
  %v170 = vunpack.c.l.b16 %v165
  %v171 = vunpack.c.h.b16 %v165
  %v172 = vpack.c.b16 %v168, %v168
  %v173 = vpack.c.b16 %v169, %v169
  %v174 = vpack.c.b16 %v170, %v170
  %v175 = vpack.c.b16 %v171, %v171
  %180 = vst [vmem:[%s4] sm:$0xf] %v172
  %181 = vst [vmem:[%s4 + $0x4] sm:$0xf] %v173
  %182 = vst [vmem:[%s4 + $0x8] sm:$0xf] %v174
  %183 = vst [vmem:[%s4 + $0xc] sm:$0xf] %v175
  // Predicated region
  $region18: #{block_forward.16} parent=0 // pred_check
    _
  $region19: #{block_forward.16} parent=0 // pred_check_branch
    %185 = sbr.rel (0) target = $region21
  $region20: #{block_forward.16} parent=0 // pred_region
    _
  $region21: #{block_forward.16} parent=0 // pred_fallthru
    _
  // Predicated region
  $region22: #{block_forward.16} parent=0 // pred_check
    _
  $region23: #{block_forward.16} parent=0 // pred_check_branch
    %187 = sbr.rel (0) target = $region25
  $region24: #{block_forward.16} parent=0 // pred_region
    _
  $region25: #{block_forward.16} parent=0 // pred_fallthru
    _

// kernel: block_forward.17
$region0: #{block_forward.17}
  #allocation0 [shape = 'u32[]', space=smem, size = 0x4, offset = 0x4, fixed_abs, tag = 'smem constant byte address 0x4 - core index']
  #allocation1 [shape = 'u32[144,128]{1,0:T(1,128)}', space=vmem, size = 0x12000, scoped, tag = 'internal scratch']
  %s0 = inlined_call_operand.vmem [shape: bf16[32,128], index: 0, kind: input, shape index: {}]
  %s1 = inlined_call_operand.vmem [shape: bf16[32,128], index: 1, kind: input, shape index: {}]
  %s2 = inlined_call_operand.vmem [shape: f32[1,128], index: 2, kind: input, shape index: {}]
  %s3 = inlined_call_operand.vmem [shape: bf16[128,128], index: 3, kind: input, shape index: {}]
  %s4 = inlined_call_operand.vmem [shape: f32[32,128], index: 4, kind: output, shape index: {}]
  %s5 = sld [smem:[#allocation0]]
  $region26: #{block_forward.17} parent=0
    _
  %s7 = ssub.s32 1, %s5
  %s8 = scalar_select 0, %s7, %s5
  // Predicated region
  $region2: #{block_forward.17} parent=0 // pred_check
    _
  $region3: #{block_forward.17} parent=0 // pred_check_branch
    %10 = sbr.rel (0) target = $region5
  $region4: #{block_forward.17} parent=0 // pred_region
    _
  $region5: #{block_forward.17} parent=0 // pred_fallthru
    _
  // Predicated region
  $region6: #{block_forward.17} parent=0 // pred_check
    _
  $region7: #{block_forward.17} parent=0 // pred_check_branch
    %12 = sbr.rel (0) target = $region9
  $region8: #{block_forward.17} parent=0 // pred_region
    _
  $region9: #{block_forward.17} parent=0 // pred_fallthru
    _
  // Predicated region
  $region10: #{block_forward.17} parent=0 // pred_check
    _
  $region11: #{block_forward.17} parent=0 // pred_check_branch
    %14 = sbr.rel (0) target = $region13
  $region12: #{block_forward.17} parent=0 // pred_region
    _
  $region13: #{block_forward.17} parent=0 // pred_fallthru
    _
  // Predicated region
  $region14: #{block_forward.17} parent=0 // pred_check
    _
  $region15: #{block_forward.17} parent=0 // pred_check_branch
    %16 = sbr.rel (0) target = $region17
  $region16: #{block_forward.17} parent=0 // pred_region
    _
  $region17: #{block_forward.17} parent=0 // pred_fallthru
    _
  %v18 = vld [vmem:[%s0] sm:$0xf]
  %v19 = vld [vmem:[%s0 + $0x4] sm:$0xf]
  %v20 = vld [vmem:[%s0 + $0x8] sm:$0xf]
  %v21 = vld [vmem:[%s0 + $0xc] sm:$0xf]
  %v22 = vunpack.c.l.bf16 %v18
  %v23 = vunpack.c.l.bf16 %v19
  %v24 = vunpack.c.l.bf16 %v20
  %v25 = vunpack.c.l.bf16 %v21
  %v26 = vld [vmem:[%s1] sm:$0xf]
  %v27 = vld [vmem:[%s1 + $0x4] sm:$0xf]
  %v28 = vld [vmem:[%s1 + $0x8] sm:$0xf]
  %v29 = vld [vmem:[%s1 + $0xc] sm:$0xf]
  %v30 = vunpack.c.l.bf16 %v26
  %v31 = vunpack.c.l.bf16 %v27
  %v32 = vunpack.c.l.bf16 %v28
  %v33 = vunpack.c.l.bf16 %v29
  %v34 = vld [vmem:[%s2] sm:$0x1]
  %v36 = vlaneseq
  %v37 = vshrl.u32 %v36, 7
  %v38 = vsub.s32 0, %v37
  %v39 = vrot.slane %v34, %v38
  %v41 = vmul.f32 %v30, %v39
  %v42 = vmul.f32 %v31, %v39
  %v43 = vmul.f32 %v32, %v39
  %v44 = vmul.f32 %v33, %v39
  %v45 = vadd.f32 %v22, %v41
  %v46 = vadd.f32 %v23, %v42
  %v47 = vadd.f32 %v24, %v43
  %v48 = vadd.f32 %v25, %v44
  %v49 = vpack.c.bf16 %v46, %v45
  %v50 = vpack.c.bf16 %v48, %v47
  %v51 = vld [vmem:[%s3] sm:$0xf]
  %v52 = vld [vmem:[%s3 + $0x4] sm:$0xf]
  %v53 = vld [vmem:[%s3 + $0x8] sm:$0xf]
  %v54 = vld [vmem:[%s3 + $0xc] sm:$0xf]
  %v55 = vld [vmem:[%s3 + $0x10] sm:$0xf]
  %v56 = vld [vmem:[%s3 + $0x14] sm:$0xf]
  %v57 = vld [vmem:[%s3 + $0x18] sm:$0xf]
  %v58 = vld [vmem:[%s3 + $0x1c] sm:$0xf]
  %v59 = vld [vmem:[%s3 + $0x20] sm:$0xf]
  %v60 = vld [vmem:[%s3 + $0x24] sm:$0xf]
  %v61 = vld [vmem:[%s3 + $0x28] sm:$0xf]
  %v62 = vld [vmem:[%s3 + $0x2c] sm:$0xf]
  %v63 = vld [vmem:[%s3 + $0x30] sm:$0xf]
  %v64 = vld [vmem:[%s3 + $0x34] sm:$0xf]
  %v65 = vld [vmem:[%s3 + $0x38] sm:$0xf]
  %v66 = vld [vmem:[%s3 + $0x3c] sm:$0xf]
  %v83 = vunpack.c.l.b16 %v51
  %v84 = vunpack.c.l.b16 %v52
  %v85 = vunpack.c.l.b16 %v53
  %v86 = vunpack.c.l.b16 %v54
  %v87 = vunpack.c.l.b16 %v55
  %v88 = vunpack.c.l.b16 %v56
  %v89 = vunpack.c.l.b16 %v57
  %v90 = vunpack.c.l.b16 %v58
  %v91 = vunpack.c.l.b16 %v59
  %v92 = vunpack.c.l.b16 %v60
  %v93 = vunpack.c.l.b16 %v61
  %v94 = vunpack.c.l.b16 %v62
  %v95 = vunpack.c.l.b16 %v63
  %v96 = vunpack.c.l.b16 %v64
  %v97 = vunpack.c.l.b16 %v65
  %v98 = vunpack.c.l.b16 %v66
  %v99 = vpack.c.b16 %v84, %v83
  %v100 = vpack.c.b16 %v86, %v85
  %v101 = vpack.c.b16 %v88, %v87
  %v102 = vpack.c.b16 %v90, %v89
  %v103 = vpack.c.b16 %v92, %v91
  %v104 = vpack.c.b16 %v94, %v93
  %v105 = vpack.c.b16 %v96, %v95
  %v106 = vpack.c.b16 %v98, %v97
  %115 = vmatprep.subr.bf16.mxu0 0
  %116 = vmatpush1.bf16.msra.mxu0 %v99
  %117 = vmatprep.subr.bf16.mxu0 0
  %118 = vmatpush1.bf16.msra.mxu0 %v100
  %119 = vmatprep.subr.bf16.mxu0 0
  %120 = vmatpush1.bf16.msra.mxu0 %v101
  %121 = vmatprep.subr.bf16.mxu0 0
  %122 = vmatpush1.bf16.msra.mxu0 %v102
  %123 = vmatprep.subr.bf16.mxu0 0
  %124 = vmatpush1.bf16.msra.mxu0 %v103
  %125 = vmatprep.subr.bf16.mxu0 0
  %126 = vmatpush1.bf16.msra.mxu0 %v104
  %127 = vmatprep.subr.bf16.mxu0 0
  %128 = vmatpush1.bf16.msra.mxu0 %v105
  %129 = vmatprep.subr.bf16.mxu0 0
  %130 = vmatpush1.bf16.msra.mxu0 %v106
  %131 = vmatprep.subr.bf16.mxu0 0
  %132 = vmatpush1.bf16.msra.mxu0 0
  %133 = vmatprep.subr.bf16.mxu0 0
  %134 = vmatpush1.bf16.msra.mxu0 0
  %135 = vmatprep.subr.bf16.mxu0 0
  %136 = vmatpush1.bf16.msra.mxu0 0
  %137 = vmatprep.subr.bf16.mxu0 0
  %138 = vmatpush1.bf16.msra.mxu0 0
  %139 = vmatprep.subr.bf16.mxu0 0
  %140 = vmatpush1.bf16.msra.mxu0 0
  %141 = vmatprep.subr.bf16.mxu0 0
  %142 = vmatpush1.bf16.msra.mxu0 0
  %143 = vmatprep.subr.bf16.mxu0 0
  %144 = vmatpush1.bf16.msra.mxu0 0
  %145 = vmatprep.subr.bf16.mxu0 0
  %146 = vmatpush1.bf16.msra.mxu0 0
  %147 = vmatprep.mubr.bf16.mxu0 0
  %148 = vmatmul.mubr.bf16.gmra.mrb[0].mxu0 %v49
  %v149 = vpop.f32.mrb[0].mxu0
  %v150 = vadd.f32 0.0, %v149
  %v151 = vpop.f32.mrb[0].mxu0
  %v152 = vpop.f32.mrb[0].mxu0
  %v153 = vadd.f32 0.0, %v152
  %v154 = vpop.f32.mrb[0].mxu0
  %155 = vmatprep.mubr.bf16.mxu0 0
  %156 = vmatmul.mubr.bf16.gmra.mrb[0].mxu0 %v50
  %v157 = vpop.f32.mrb[0].mxu0
  %v158 = vadd.f32 0.0, %v157
  %v159 = vpop.f32.mrb[0].mxu0
  %v160 = vpop.f32.mrb[0].mxu0
  %v161 = vadd.f32 0.0, %v160
  %v162 = vpop.f32.mrb[0].mxu0
  %163 = vdwg.mxu0
  %164 = vst [vmem:[%s4] sm:$0xff] %v150
  %165 = vst [vmem:[%s4 + $0x8] sm:$0xff] %v153
  %166 = vst [vmem:[%s4 + $0x10] sm:$0xff] %v158
  %167 = vst [vmem:[%s4 + $0x18] sm:$0xff] %v161
  // Predicated region
  $region18: #{block_forward.17} parent=0 // pred_check
    _
  $region19: #{block_forward.17} parent=0 // pred_check_branch
    %169 = sbr.rel (0) target = $region21
  $region20: #{block_forward.17} parent=0 // pred_region
    _
  $region21: #{block_forward.17} parent=0 // pred_fallthru
    _
  // Predicated region
  $region22: #{block_forward.17} parent=0 // pred_check
    _
  $region23: #{block_forward.17} parent=0 // pred_check_branch
    %171 = sbr.rel (0) target = $region25
  $region24: #{block_forward.17} parent=0 // pred_region
    _
  $region25: #{block_forward.17} parent=0 // pred_fallthru
    _

// kernel: block_forward.19
$region0: #{block_forward.19}
  #allocation0 [shape = 'u32[]', space=smem, size = 0x4, offset = 0x4, fixed_abs, tag = 'smem constant byte address 0x4 - core index']
  #allocation1 [shape = 'u32[144,128]{1,0:T(1,128)}', space=vmem, size = 0x12000, scoped, tag = 'internal scratch']
  %s0 = inlined_call_operand.vmem [shape: bf16[32,128], index: 0, kind: input, shape index: {}]
  %s1 = inlined_call_operand.vmem [shape: bf16[32,128], index: 1, kind: input, shape index: {}]
  %s2 = inlined_call_operand.vmem [shape: f32[1,128], index: 2, kind: input, shape index: {}]
  %s3 = inlined_call_operand.vmem [shape: bf16[128,32], index: 3, kind: input, shape index: {}]
  %s4 = inlined_call_operand.vmem [shape: bf16[32,128], index: 4, kind: input, shape index: {}]
  %s5 = inlined_call_operand.vmem [shape: f32[1,128], index: 5, kind: input, shape index: {}]
  %s6 = inlined_call_operand.vmem [shape: f32[32,128], index: 6, kind: output, shape index: {}]
  %s7 = sld [smem:[#allocation0]]
  $region34: #{block_forward.19} parent=0
    _
  %s9 = ssub.s32 1, %s7
  %s10 = scalar_select 0, %s9, %s7
  // Predicated region
  $region2: #{block_forward.19} parent=0 // pred_check
    _
  $region3: #{block_forward.19} parent=0 // pred_check_branch
    %12 = sbr.rel (0) target = $region5
  $region4: #{block_forward.19} parent=0 // pred_region
    _
  $region5: #{block_forward.19} parent=0 // pred_fallthru
    _
  // Predicated region
  $region6: #{block_forward.19} parent=0 // pred_check
    _
  $region7: #{block_forward.19} parent=0 // pred_check_branch
    %14 = sbr.rel (0) target = $region9
  $region8: #{block_forward.19} parent=0 // pred_region
    _
  $region9: #{block_forward.19} parent=0 // pred_fallthru
    _
  // Predicated region
  $region10: #{block_forward.19} parent=0 // pred_check
    _
  $region11: #{block_forward.19} parent=0 // pred_check_branch
    %16 = sbr.rel (0) target = $region13
  $region12: #{block_forward.19} parent=0 // pred_region
    _
  $region13: #{block_forward.19} parent=0 // pred_fallthru
    _
  // Predicated region
  $region14: #{block_forward.19} parent=0 // pred_check
    _
  $region15: #{block_forward.19} parent=0 // pred_check_branch
    %18 = sbr.rel (0) target = $region17
  $region16: #{block_forward.19} parent=0 // pred_region
    _
  $region17: #{block_forward.19} parent=0 // pred_fallthru
    _
  // Predicated region
  $region18: #{block_forward.19} parent=0 // pred_check
    _
  $region19: #{block_forward.19} parent=0 // pred_check_branch
    %20 = sbr.rel (0) target = $region21
  $region20: #{block_forward.19} parent=0 // pred_region
    _
  $region21: #{block_forward.19} parent=0 // pred_fallthru
    _
  // Predicated region
  $region22: #{block_forward.19} parent=0 // pred_check
    _
  $region23: #{block_forward.19} parent=0 // pred_check_branch
    %22 = sbr.rel (0) target = $region25
  $region24: #{block_forward.19} parent=0 // pred_region
    _
  $region25: #{block_forward.19} parent=0 // pred_fallthru
    _
  %v24 = vld [vmem:[%s0] sm:$0xf]
  %v25 = vld [vmem:[%s0 + $0x4] sm:$0xf]
  %v26 = vld [vmem:[%s0 + $0x8] sm:$0xf]
  %v27 = vld [vmem:[%s0 + $0xc] sm:$0xf]
  %v28 = vunpack.c.l.bf16 %v24
  %v29 = vunpack.c.l.bf16 %v25
  %v30 = vunpack.c.l.bf16 %v26
  %v31 = vunpack.c.l.bf16 %v27
  %v32 = vld [vmem:[%s1] sm:$0xf]
  %v33 = vld [vmem:[%s1 + $0x4] sm:$0xf]
  %v34 = vld [vmem:[%s1 + $0x8] sm:$0xf]
  %v35 = vld [vmem:[%s1 + $0xc] sm:$0xf]
  %v36 = vunpack.c.l.bf16 %v32
  %v37 = vunpack.c.l.bf16 %v33
  %v38 = vunpack.c.l.bf16 %v34
  %v39 = vunpack.c.l.bf16 %v35
  %v40 = vld [vmem:[%s2] sm:$0x1]
  %v42 = vlaneseq
  %v43 = vshrl.u32 %v42, 7
  %v44 = vsub.s32 0, %v43
  %v45 = vrot.slane %v40, %v44
  %v47 = vmul.f32 %v36, %v45
  %v48 = vmul.f32 %v37, %v45
  %v49 = vmul.f32 %v38, %v45
  %v50 = vmul.f32 %v39, %v45
  %v51 = vadd.f32 %v28, %v47
  %v52 = vadd.f32 %v29, %v48
  %v53 = vadd.f32 %v30, %v49
  %v54 = vadd.f32 %v31, %v50
  %v55 = vpack.c.bf16 %v52, %v51
  %v56 = vpack.c.bf16 %v54, %v53
  %v57 = vld [vmem:[%s3] sm:$0xf]
  %v58 = vld [vmem:[%s3 + $0x4] sm:$0xf]
  %v59 = vld [vmem:[%s3 + $0x8] sm:$0xf]
  %v60 = vld [vmem:[%s3 + $0xc] sm:$0xf]
  %v61 = vld [vmem:[%s3 + $0x10] sm:$0xf]
  %v62 = vld [vmem:[%s3 + $0x14] sm:$0xf]
  %v63 = vld [vmem:[%s3 + $0x18] sm:$0xf]
  %v64 = vld [vmem:[%s3 + $0x1c] sm:$0xf]
  %v65 = vld [vmem:[%s3 + $0x20] sm:$0xf]
  %v66 = vld [vmem:[%s3 + $0x24] sm:$0xf]
  %v67 = vld [vmem:[%s3 + $0x28] sm:$0xf]
  %v68 = vld [vmem:[%s3 + $0x2c] sm:$0xf]
  %v69 = vld [vmem:[%s3 + $0x30] sm:$0xf]
  %v70 = vld [vmem:[%s3 + $0x34] sm:$0xf]
  %v71 = vld [vmem:[%s3 + $0x38] sm:$0xf]
  %v72 = vld [vmem:[%s3 + $0x3c] sm:$0xf]
  %v89 = vunpack.c.l.b16 %v57
  %v90 = vunpack.c.l.b16 %v58
  %v91 = vunpack.c.l.b16 %v59
  %v92 = vunpack.c.l.b16 %v60
  %v93 = vunpack.c.l.b16 %v61
  %v94 = vunpack.c.l.b16 %v62
  %v95 = vunpack.c.l.b16 %v63
  %v96 = vunpack.c.l.b16 %v64
  %v97 = vunpack.c.l.b16 %v65
  %v98 = vunpack.c.l.b16 %v66
  %v99 = vunpack.c.l.b16 %v67
  %v100 = vunpack.c.l.b16 %v68
  %v101 = vunpack.c.l.b16 %v69
  %v102 = vunpack.c.l.b16 %v70
  %v103 = vunpack.c.l.b16 %v71
  %v104 = vunpack.c.l.b16 %v72
  %v105 = vpack.c.b16 %v90, %v89
  %v106 = vpack.c.b16 %v92, %v91
  %v107 = vpack.c.b16 %v94, %v93
  %v108 = vpack.c.b16 %v96, %v95
  %v109 = vpack.c.b16 %v98, %v97
  %v110 = vpack.c.b16 %v100, %v99
  %v111 = vpack.c.b16 %v102, %v101
  %v112 = vpack.c.b16 %v104, %v103
  %121 = vmatprep.subr.bf16.mxu0 0
  %122 = vmatpush1.bf16.msra.mxu0 %v105
  %123 = vmatprep.subr.bf16.mxu0 0
  %124 = vmatpush1.bf16.msra.mxu0 %v106
  %125 = vmatprep.subr.bf16.mxu0 0
  %126 = vmatpush1.bf16.msra.mxu0 %v107
  %127 = vmatprep.subr.bf16.mxu0 0
  %128 = vmatpush1.bf16.msra.mxu0 %v108
  %129 = vmatprep.subr.bf16.mxu0 0
  %130 = vmatpush1.bf16.msra.mxu0 %v109
  %131 = vmatprep.subr.bf16.mxu0 0
  %132 = vmatpush1.bf16.msra.mxu0 %v110
  %133 = vmatprep.subr.bf16.mxu0 0
  %134 = vmatpush1.bf16.msra.mxu0 %v111
  %135 = vmatprep.subr.bf16.mxu0 0
  %136 = vmatpush1.bf16.msra.mxu0 %v112
  %137 = vmatprep.subr.bf16.mxu0 0
  %138 = vmatpush1.bf16.msra.mxu0 0
  %139 = vmatprep.subr.bf16.mxu0 0
  %140 = vmatpush1.bf16.msra.mxu0 0
  %141 = vmatprep.subr.bf16.mxu0 0
  %142 = vmatpush1.bf16.msra.mxu0 0
  %143 = vmatprep.subr.bf16.mxu0 0
  %144 = vmatpush1.bf16.msra.mxu0 0
  %145 = vmatprep.subr.bf16.mxu0 0
  %146 = vmatpush1.bf16.msra.mxu0 0
  %147 = vmatprep.subr.bf16.mxu0 0
  %148 = vmatpush1.bf16.msra.mxu0 0
  %149 = vmatprep.subr.bf16.mxu0 0
  %150 = vmatpush1.bf16.msra.mxu0 0
  %151 = vmatprep.subr.bf16.mxu0 0
  %152 = vmatpush1.bf16.msra.mxu0 0
  %153 = vmatprep.mubr.bf16.mxu0 0
  %154 = vmatmul.mubr.bf16.gmra.mrb[0].mxu0 %v55
  %v155 = vpop.f32.mrb[0].mxu0
  %v156 = vadd.f32 0.0, %v155
  %v157 = vpop.f32.mrb[0].mxu0
  %v158 = vpop.f32.mrb[0].mxu0
  %v159 = vadd.f32 0.0, %v158
  %v160 = vpop.f32.mrb[0].mxu0
  %161 = vmatprep.mubr.bf16.mxu0 0
  %162 = vmatmul.mubr.bf16.gmra.mrb[0].mxu0 %v56
  %v163 = vpop.f32.mrb[0].mxu0
  %v164 = vadd.f32 0.0, %v163
  %v165 = vpop.f32.mrb[0].mxu0
  %v166 = vpop.f32.mrb[0].mxu0
  %v167 = vadd.f32 0.0, %v166
  %v168 = vpop.f32.mrb[0].mxu0
  %169 = vdwg.mxu0
  %v170 = vpack.c.bf16 %v159, %v156
  %v171 = vpack.c.bf16 %v167, %v164
  %v172 = vld [vmem:[%s4] sm:$0xf]
  %v173 = vld [vmem:[%s4 + $0x4] sm:$0xf]
  %v174 = vld [vmem:[%s4 + $0x8] sm:$0xf]
  %v175 = vld [vmem:[%s4 + $0xc] sm:$0xf]
  %v176 = vld [vmem:[%s5] sm:$0x1]
  %v178 = vlaneseq
  %v179 = vshrl.u32 %v178, 7
  %v180 = vsub.s32 0, %v179
  %v181 = vrot.slane %v176, %v180
  %v187 = vunpack.c.l.b16 %v172
  %v188 = vunpack.c.l.b16 %v173
  %v189 = vunpack.c.l.b16 %v174
  %v190 = vunpack.c.l.b16 %v175
  %v191 = vpack.c.b16 %v188, %v187
  %v192 = vpack.c.b16 %v190, %v189
  %vm195 = vcmask 261120
  %v197 = vsel %vm195, %v170, 0
  %v200 = vsel %vm195, %v171, 0
  %202 = vmatprep.subr.bf16.mxu0 0
  %203 = vmatpush1.bf16.msra.mxu0 %v191
  %204 = vmatprep.subr.bf16.mxu0 0
  %205 = vmatpush1.bf16.msra.mxu0 %v192
  %206 = vmatprep.subr.bf16.mxu0 0
  %207 = vmatpush1.bf16.msra.mxu0 0
  %208 = vmatprep.subr.bf16.mxu0 0
  %209 = vmatpush1.bf16.msra.mxu0 0
  %210 = vmatprep.subr.bf16.mxu0 0
  %211 = vmatpush1.bf16.msra.mxu0 0
  %212 = vmatprep.subr.bf16.mxu0 0
  %213 = vmatpush1.bf16.msra.mxu0 0
  %214 = vmatprep.subr.bf16.mxu0 0
  %215 = vmatpush1.bf16.msra.mxu0 0
  %216 = vmatprep.subr.bf16.mxu0 0
  %217 = vmatpush1.bf16.msra.mxu0 0
  %218 = vmatprep.subr.bf16.mxu0 0
  %219 = vmatpush1.bf16.msra.mxu0 0
  %220 = vmatprep.subr.bf16.mxu0 0
  %221 = vmatpush1.bf16.msra.mxu0 0
  %222 = vmatprep.subr.bf16.mxu0 0
  %223 = vmatpush1.bf16.msra.mxu0 0
  %224 = vmatprep.subr.bf16.mxu0 0
  %225 = vmatpush1.bf16.msra.mxu0 0
  %226 = vmatprep.subr.bf16.mxu0 0
  %227 = vmatpush1.bf16.msra.mxu0 0
  %228 = vmatprep.subr.bf16.mxu0 0
  %229 = vmatpush1.bf16.msra.mxu0 0
  %230 = vmatprep.subr.bf16.mxu0 0
  %231 = vmatpush1.bf16.msra.mxu0 0
  %232 = vmatprep.subr.bf16.mxu0 0
  %233 = vmatpush1.bf16.msra.mxu0 0
  %234 = vmatprep.mubr.bf16.mxu0 0
  %235 = vmatmul.mubr.bf16.gmra.mrb[0].mxu0 %v197
  %v236 = vpop.f32.mrb[0].mxu0
  %v237 = vadd.f32 %v181, %v236
  %v238 = vpop.f32.mrb[0].mxu0
  %v239 = vpop.f32.mrb[0].mxu0
  %v240 = vadd.f32 %v181, %v239
  %v241 = vpop.f32.mrb[0].mxu0
  %242 = vmatprep.mubr.bf16.mxu0 0
  %243 = vmatmul.mubr.bf16.gmra.mrb[0].mxu0 %v200
  %v244 = vpop.f32.mrb[0].mxu0
  %v245 = vadd.f32 %v181, %v244
  %v246 = vpop.f32.mrb[0].mxu0
  %v247 = vpop.f32.mrb[0].mxu0
  %v248 = vadd.f32 %v181, %v247
  %v249 = vpop.f32.mrb[0].mxu0
  %250 = vdwg.mxu0
  %v251 = vsub.f32 0.0, %v237
  %v252 = vsub.f32 0.0, %v240
  %v253 = vsub.f32 0.0, %v245
  %v254 = vsub.f32 0.0, %v248
  %v255 = vmul.f32 %v251, 1.442695
  %v256 = vpow.pop %v255
  %v257 = vmul.f32 %v252, 1.442695
  %v258 = vpow.pop %v257
  %v259 = vmul.f32 %v253, 1.442695
  %v260 = vpow.pop %v259
  %v261 = vmul.f32 %v254, 1.442695
  %v262 = vpow.pop %v261
  %v263 = vadd.f32 %v256, 1.0
  %v264 = vadd.f32 %v258, 1.0
  %v265 = vadd.f32 %v260, 1.0
  %v266 = vadd.f32 %v262, 1.0
  %v267 = vrcp.pop %v263
  %v268 = vmul.f32 1.0, %v267
  %v269 = vrcp.pop %v264
  %v270 = vmul.f32 1.0, %v269
  %v271 = vrcp.pop %v265
  %v272 = vmul.f32 1.0, %v271
  %v273 = vrcp.pop %v266
  %v274 = vmul.f32 1.0, %v273
  %275 = vst [vmem:[%s6] sm:$0xff] %v268
  %276 = vst [vmem:[%s6 + $0x8] sm:$0xff] %v270
  %277 = vst [vmem:[%s6 + $0x10] sm:$0xff] %v272
  %278 = vst [vmem:[%s6 + $0x18] sm:$0xff] %v274
  // Predicated region
  $region26: #{block_forward.19} parent=0 // pred_check
    _
  $region27: #{block_forward.19} parent=0 // pred_check_branch
    %280 = sbr.rel (0) target = $region29
  $region28: #{block_forward.19} parent=0 // pred_region
    _
  $region29: #{block_forward.19} parent=0 // pred_fallthru
    _
  // Predicated region
  $region30: #{block_forward.19} parent=0 // pred_check
    _
  $region31: #{block_forward.19} parent=0 // pred_check_branch
    %282 = sbr.rel (0) target = $region33
  $region32: #{block_forward.19} parent=0 // pred_region
    _
  $region33: #{block_forward.19} parent=0 // pred_fallthru
    _

// kernel: block_forward.18
$region0: #{block_forward.18}
  #allocation0 [shape = 'u32[]', space=smem, size = 0x4, offset = 0x4, fixed_abs, tag = 'smem constant byte address 0x4 - core index']
  #allocation1 [shape = 'u32[144,128]{1,0:T(1,128)}', space=vmem, size = 0x12000, scoped, tag = 'internal scratch']
  %s0 = inlined_call_operand.vmem [shape: bf16[32,128], index: 0, kind: input, shape index: {}]
  %s1 = inlined_call_operand.vmem [shape: bf16[32,128], index: 1, kind: input, shape index: {}]
  %s2 = inlined_call_operand.vmem [shape: f32[1,128], index: 2, kind: input, shape index: {}]
  %s3 = inlined_call_operand.vmem [shape: bf16[128,32], index: 3, kind: input, shape index: {}]
  %s4 = inlined_call_operand.vmem [shape: bf16[32,128], index: 4, kind: input, shape index: {}]
  %s5 = inlined_call_operand.vmem [shape: f32[1,128], index: 5, kind: input, shape index: {}]
  %s6 = inlined_call_operand.vmem [shape: bf16[32,128], index: 6, kind: output, shape index: {}]
  %s7 = sld [smem:[#allocation0]]
  $region34: #{block_forward.18} parent=0
    _
  %s9 = ssub.s32 1, %s7
  %s10 = scalar_select 0, %s9, %s7
  // Predicated region
  $region2: #{block_forward.18} parent=0 // pred_check
    _
  $region3: #{block_forward.18} parent=0 // pred_check_branch
    %12 = sbr.rel (0) target = $region5
  $region4: #{block_forward.18} parent=0 // pred_region
    _
  $region5: #{block_forward.18} parent=0 // pred_fallthru
    _
  // Predicated region
  $region6: #{block_forward.18} parent=0 // pred_check
    _
  $region7: #{block_forward.18} parent=0 // pred_check_branch
    %14 = sbr.rel (0) target = $region9
  $region8: #{block_forward.18} parent=0 // pred_region
    _
  $region9: #{block_forward.18} parent=0 // pred_fallthru
    _
  // Predicated region
  $region10: #{block_forward.18} parent=0 // pred_check
    _
  $region11: #{block_forward.18} parent=0 // pred_check_branch
    %16 = sbr.rel (0) target = $region13
  $region12: #{block_forward.18} parent=0 // pred_region
    _
  $region13: #{block_forward.18} parent=0 // pred_fallthru
    _
  // Predicated region
  $region14: #{block_forward.18} parent=0 // pred_check
    _
  $region15: #{block_forward.18} parent=0 // pred_check_branch
    %18 = sbr.rel (0) target = $region17
  $region16: #{block_forward.18} parent=0 // pred_region
    _
  $region17: #{block_forward.18} parent=0 // pred_fallthru
    _
  // Predicated region
  $region18: #{block_forward.18} parent=0 // pred_check
    _
  $region19: #{block_forward.18} parent=0 // pred_check_branch
    %20 = sbr.rel (0) target = $region21
  $region20: #{block_forward.18} parent=0 // pred_region
    _
  $region21: #{block_forward.18} parent=0 // pred_fallthru
    _
  // Predicated region
  $region22: #{block_forward.18} parent=0 // pred_check
    _
  $region23: #{block_forward.18} parent=0 // pred_check_branch
    %22 = sbr.rel (0) target = $region25
  $region24: #{block_forward.18} parent=0 // pred_region
    _
  $region25: #{block_forward.18} parent=0 // pred_fallthru
    _
  %v24 = vld [vmem:[%s0] sm:$0xf]
  %v25 = vld [vmem:[%s0 + $0x4] sm:$0xf]
  %v26 = vld [vmem:[%s0 + $0x8] sm:$0xf]
  %v27 = vld [vmem:[%s0 + $0xc] sm:$0xf]
  %v28 = vunpack.c.l.bf16 %v24
  %v29 = vunpack.c.l.bf16 %v25
  %v30 = vunpack.c.l.bf16 %v26
  %v31 = vunpack.c.l.bf16 %v27
  %v32 = vld [vmem:[%s1] sm:$0xf]
  %v33 = vld [vmem:[%s1 + $0x4] sm:$0xf]
  %v34 = vld [vmem:[%s1 + $0x8] sm:$0xf]
  %v35 = vld [vmem:[%s1 + $0xc] sm:$0xf]
  %v36 = vunpack.c.l.bf16 %v32
  %v37 = vunpack.c.l.bf16 %v33
  %v38 = vunpack.c.l.bf16 %v34
  %v39 = vunpack.c.l.bf16 %v35
  %v40 = vld [vmem:[%s2] sm:$0x1]
  %v42 = vlaneseq
  %v43 = vshrl.u32 %v42, 7
  %v44 = vsub.s32 0, %v43
  %v45 = vrot.slane %v40, %v44
  %v47 = vmul.f32 %v36, %v45
  %v48 = vmul.f32 %v37, %v45
  %v49 = vmul.f32 %v38, %v45
  %v50 = vmul.f32 %v39, %v45
  %v51 = vadd.f32 %v28, %v47
  %v52 = vadd.f32 %v29, %v48
  %v53 = vadd.f32 %v30, %v49
  %v54 = vadd.f32 %v31, %v50
  %v55 = vpack.c.bf16 %v52, %v51
  %v56 = vpack.c.bf16 %v54, %v53
  %v57 = vld [vmem:[%s3] sm:$0xf]
  %v58 = vld [vmem:[%s3 + $0x4] sm:$0xf]
  %v59 = vld [vmem:[%s3 + $0x8] sm:$0xf]
  %v60 = vld [vmem:[%s3 + $0xc] sm:$0xf]
  %v61 = vld [vmem:[%s3 + $0x10] sm:$0xf]
  %v62 = vld [vmem:[%s3 + $0x14] sm:$0xf]
  %v63 = vld [vmem:[%s3 + $0x18] sm:$0xf]
  %v64 = vld [vmem:[%s3 + $0x1c] sm:$0xf]
  %v65 = vld [vmem:[%s3 + $0x20] sm:$0xf]
  %v66 = vld [vmem:[%s3 + $0x24] sm:$0xf]
  %v67 = vld [vmem:[%s3 + $0x28] sm:$0xf]
  %v68 = vld [vmem:[%s3 + $0x2c] sm:$0xf]
  %v69 = vld [vmem:[%s3 + $0x30] sm:$0xf]
  %v70 = vld [vmem:[%s3 + $0x34] sm:$0xf]
  %v71 = vld [vmem:[%s3 + $0x38] sm:$0xf]
  %v72 = vld [vmem:[%s3 + $0x3c] sm:$0xf]
  %v89 = vunpack.c.l.b16 %v57
  %v90 = vunpack.c.l.b16 %v58
  %v91 = vunpack.c.l.b16 %v59
  %v92 = vunpack.c.l.b16 %v60
  %v93 = vunpack.c.l.b16 %v61
  %v94 = vunpack.c.l.b16 %v62
  %v95 = vunpack.c.l.b16 %v63
  %v96 = vunpack.c.l.b16 %v64
  %v97 = vunpack.c.l.b16 %v65
  %v98 = vunpack.c.l.b16 %v66
  %v99 = vunpack.c.l.b16 %v67
  %v100 = vunpack.c.l.b16 %v68
  %v101 = vunpack.c.l.b16 %v69
  %v102 = vunpack.c.l.b16 %v70
  %v103 = vunpack.c.l.b16 %v71
  %v104 = vunpack.c.l.b16 %v72
  %v105 = vpack.c.b16 %v90, %v89
  %v106 = vpack.c.b16 %v92, %v91
  %v107 = vpack.c.b16 %v94, %v93
  %v108 = vpack.c.b16 %v96, %v95
  %v109 = vpack.c.b16 %v98, %v97
  %v110 = vpack.c.b16 %v100, %v99
  %v111 = vpack.c.b16 %v102, %v101
  %v112 = vpack.c.b16 %v104, %v103
  %121 = vmatprep.subr.bf16.mxu0 0
  %122 = vmatpush1.bf16.msra.mxu0 %v105
  %123 = vmatprep.subr.bf16.mxu0 0
  %124 = vmatpush1.bf16.msra.mxu0 %v106
  %125 = vmatprep.subr.bf16.mxu0 0
  %126 = vmatpush1.bf16.msra.mxu0 %v107
  %127 = vmatprep.subr.bf16.mxu0 0
  %128 = vmatpush1.bf16.msra.mxu0 %v108
  %129 = vmatprep.subr.bf16.mxu0 0
  %130 = vmatpush1.bf16.msra.mxu0 %v109
  %131 = vmatprep.subr.bf16.mxu0 0
  %132 = vmatpush1.bf16.msra.mxu0 %v110
  %133 = vmatprep.subr.bf16.mxu0 0
  %134 = vmatpush1.bf16.msra.mxu0 %v111
  %135 = vmatprep.subr.bf16.mxu0 0
  %136 = vmatpush1.bf16.msra.mxu0 %v112
  %137 = vmatprep.subr.bf16.mxu0 0
  %138 = vmatpush1.bf16.msra.mxu0 0
  %139 = vmatprep.subr.bf16.mxu0 0
  %140 = vmatpush1.bf16.msra.mxu0 0
  %141 = vmatprep.subr.bf16.mxu0 0
  %142 = vmatpush1.bf16.msra.mxu0 0
  %143 = vmatprep.subr.bf16.mxu0 0
  %144 = vmatpush1.bf16.msra.mxu0 0
  %145 = vmatprep.subr.bf16.mxu0 0
  %146 = vmatpush1.bf16.msra.mxu0 0
  %147 = vmatprep.subr.bf16.mxu0 0
  %148 = vmatpush1.bf16.msra.mxu0 0
  %149 = vmatprep.subr.bf16.mxu0 0
  %150 = vmatpush1.bf16.msra.mxu0 0
  %151 = vmatprep.subr.bf16.mxu0 0
  %152 = vmatpush1.bf16.msra.mxu0 0
  %153 = vmatprep.mubr.bf16.mxu0 0
  %154 = vmatmul.mubr.bf16.gmra.mrb[0].mxu0 %v55
  %v155 = vpop.f32.mrb[0].mxu0
  %v156 = vadd.f32 0.0, %v155
  %v157 = vpop.f32.mrb[0].mxu0
  %v158 = vpop.f32.mrb[0].mxu0
  %v159 = vadd.f32 0.0, %v158
  %v160 = vpop.f32.mrb[0].mxu0
  %161 = vmatprep.mubr.bf16.mxu0 0
  %162 = vmatmul.mubr.bf16.gmra.mrb[0].mxu0 %v56
  %v163 = vpop.f32.mrb[0].mxu0
  %v164 = vadd.f32 0.0, %v163
  %v165 = vpop.f32.mrb[0].mxu0
  %v166 = vpop.f32.mrb[0].mxu0
  %v167 = vadd.f32 0.0, %v166
  %v168 = vpop.f32.mrb[0].mxu0
  %169 = vdwg.mxu0
  %v170 = vtanh.pop %v156
  %v171 = vtanh.pop %v159
  %v172 = vtanh.pop %v164
  %v173 = vtanh.pop %v167
  %v174 = vpack.c.bf16 %v171, %v170
  %v175 = vpack.c.bf16 %v173, %v172
  %v176 = vld [vmem:[%s4] sm:$0xf]
  %v177 = vld [vmem:[%s4 + $0x4] sm:$0xf]
  %v178 = vld [vmem:[%s4 + $0x8] sm:$0xf]
  %v179 = vld [vmem:[%s4 + $0xc] sm:$0xf]
  %v180 = vld [vmem:[%s5] sm:$0x1]
  %v182 = vlaneseq
  %v183 = vshrl.u32 %v182, 7
  %v184 = vsub.s32 0, %v183
  %v185 = vrot.slane %v180, %v184
  %v191 = vunpack.c.l.b16 %v176
  %v192 = vunpack.c.l.b16 %v177
  %v193 = vunpack.c.l.b16 %v178
  %v194 = vunpack.c.l.b16 %v179
  %v195 = vpack.c.b16 %v192, %v191
  %v196 = vpack.c.b16 %v194, %v193
  %vm199 = vcmask 261120
  %v201 = vsel %vm199, %v174, 0
  %v204 = vsel %vm199, %v175, 0
  %206 = vmatprep.subr.bf16.mxu0 0
  %207 = vmatpush1.bf16.msra.mxu0 %v195
  %208 = vmatprep.subr.bf16.mxu0 0
  %209 = vmatpush1.bf16.msra.mxu0 %v196
  %210 = vmatprep.subr.bf16.mxu0 0
  %211 = vmatpush1.bf16.msra.mxu0 0
  %212 = vmatprep.subr.bf16.mxu0 0
  %213 = vmatpush1.bf16.msra.mxu0 0
  %214 = vmatprep.subr.bf16.mxu0 0
  %215 = vmatpush1.bf16.msra.mxu0 0
  %216 = vmatprep.subr.bf16.mxu0 0
  %217 = vmatpush1.bf16.msra.mxu0 0
  %218 = vmatprep.subr.bf16.mxu0 0
  %219 = vmatpush1.bf16.msra.mxu0 0
  %220 = vmatprep.subr.bf16.mxu0 0
  %221 = vmatpush1.bf16.msra.mxu0 0
  %222 = vmatprep.subr.bf16.mxu0 0
  %223 = vmatpush1.bf16.msra.mxu0 0
  %224 = vmatprep.subr.bf16.mxu0 0
  %225 = vmatpush1.bf16.msra.mxu0 0
  %226 = vmatprep.subr.bf16.mxu0 0
  %227 = vmatpush1.bf16.msra.mxu0 0
  %228 = vmatprep.subr.bf16.mxu0 0
  %229 = vmatpush1.bf16.msra.mxu0 0
  %230 = vmatprep.subr.bf16.mxu0 0
  %231 = vmatpush1.bf16.msra.mxu0 0
  %232 = vmatprep.subr.bf16.mxu0 0
  %233 = vmatpush1.bf16.msra.mxu0 0
  %234 = vmatprep.subr.bf16.mxu0 0
  %235 = vmatpush1.bf16.msra.mxu0 0
  %236 = vmatprep.subr.bf16.mxu0 0
  %237 = vmatpush1.bf16.msra.mxu0 0
  %238 = vmatprep.mubr.bf16.mxu0 0
  %239 = vmatmul.mubr.bf16.gmra.mrb[0].mxu0 %v201
  %v240 = vpop.f32.mrb[0].mxu0
  %v241 = vadd.f32 %v185, %v240
  %v242 = vpop.f32.mrb[0].mxu0
  %v243 = vpop.f32.mrb[0].mxu0
  %v244 = vadd.f32 %v185, %v243
  %v245 = vpop.f32.mrb[0].mxu0
  %246 = vmatprep.mubr.bf16.mxu0 0
  %247 = vmatmul.mubr.bf16.gmra.mrb[0].mxu0 %v204
  %v248 = vpop.f32.mrb[0].mxu0
  %v249 = vadd.f32 %v185, %v248
  %v250 = vpop.f32.mrb[0].mxu0
  %v251 = vpop.f32.mrb[0].mxu0
  %v252 = vadd.f32 %v185, %v251
  %v253 = vpop.f32.mrb[0].mxu0
  %254 = vdwg.mxu0
  %v255 = vsub.f32 0.0, %v241
  %v256 = vsub.f32 0.0, %v244
  %v257 = vsub.f32 0.0, %v249
  %v258 = vsub.f32 0.0, %v252
  %v259 = vmax.f32 %v255, 0.0
  %v260 = vmax.f32 %v256, 0.0
  %v261 = vmax.f32 %v257, 0.0
  %v262 = vmax.f32 %v258, 0.0
  %v263 = vand.u32 2147483647, %v241
  %v264 = vand.u32 2147483647, %v244
  %v265 = vand.u32 2147483647, %v249
  %v266 = vand.u32 2147483647, %v252
  %v267 = vsub.f32 0.0, %v263
  %v268 = vsub.f32 0.0, %v264
  %v269 = vsub.f32 0.0, %v265
  %v270 = vsub.f32 0.0, %v266
  %v271 = vmul.f32 %v267, 1.442695
  %v272 = vpow.pop %v271
  %v273 = vmul.f32 %v268, 1.442695
  %v274 = vpow.pop %v273
  %v275 = vmul.f32 %v269, 1.442695
  %v276 = vpow.pop %v275
  %v277 = vmul.f32 %v270, 1.442695
  %v278 = vpow.pop %v277
  %v279 = vadd.f32 %v272, 1.0
  %v280 = vadd.f32 %v274, 1.0
  %v281 = vadd.f32 %v276, 1.0
  %v282 = vadd.f32 %v278, 1.0
  %v283 = vlog2.pop %v279
  %v284 = vmul.f32 %v283, 0.6931472
  %v285 = vlog2.pop %v280
  %v286 = vmul.f32 %v285, 0.6931472
  %v287 = vlog2.pop %v281
  %v288 = vmul.f32 %v287, 0.6931472
  %v289 = vlog2.pop %v282
  %v290 = vmul.f32 %v289, 0.6931472
  %v291 = vadd.f32 %v259, %v284
  %v292 = vadd.f32 %v260, %v286
  %v293 = vadd.f32 %v261, %v288
  %v294 = vadd.f32 %v262, %v290
  %v295 = vsub.f32 0.0, %v291
  %v296 = vsub.f32 0.0, %v292
  %v297 = vsub.f32 0.0, %v293
  %v298 = vsub.f32 0.0, %v294
  %v299 = vsub.f32 %v295, 0.5
  %v300 = vsub.f32 %v296, 0.5
  %v301 = vsub.f32 %v297, 0.5
  %v302 = vsub.f32 %v298, 0.5
  %v303 = vpack.c.bf16 %v300, %v299
  %v304 = vpack.c.bf16 %v302, %v301
  %v307 = vunpack.c.l.b16 %v303
  %v308 = vunpack.c.h.b16 %v303
  %v309 = vunpack.c.l.b16 %v304
  %v310 = vunpack.c.h.b16 %v304
  %v311 = vpack.c.b16 %v307, %v307
  %v312 = vpack.c.b16 %v308, %v308
  %v313 = vpack.c.b16 %v309, %v309
  %v314 = vpack.c.b16 %v310, %v310
  %319 = vst [vmem:[%s6] sm:$0xf] %v311
  %320 = vst [vmem:[%s6 + $0x4] sm:$0xf] %v312
  %321 = vst [vmem:[%s6 + $0x8] sm:$0xf] %v313
  %322 = vst [vmem:[%s6 + $0xc] sm:$0xf] %v314
  // Predicated region
  $region26: #{block_forward.18} parent=0 // pred_check
    _
  $region27: #{block_forward.18} parent=0 // pred_check_branch
    %324 = sbr.rel (0) target = $region29
  $region28: #{block_forward.18} parent=0 // pred_region
    _
  $region29: #{block_forward.18} parent=0 // pred_fallthru
    _
  // Predicated region
  $region30: #{block_forward.18} parent=0 // pred_check
    _
  $region31: #{block_forward.18} parent=0 // pred_check_branch
    %326 = sbr.rel (0) target = $region33
  $region32: #{block_forward.18} parent=0 // pred_region
    _
  $region33: #{block_forward.18} parent=0 // pred_fallthru
    _

// kernel: block_forward.22
$region0: #{block_forward.22}
  #allocation0 [shape = 'u32[]', space=smem, size = 0x4, offset = 0x4, fixed_abs, tag = 'smem constant byte address 0x4 - core index']
  #allocation1 [shape = 'u32[144,128]{1,0:T(1,128)}', space=vmem, size = 0x12000, scoped, tag = 'internal scratch']
  %s0 = inlined_call_operand.vmem [shape: bf16[32,128], index: 0, kind: input, shape index: {}]
  %s1 = inlined_call_operand.vmem [shape: f32[128,2], index: 1, kind: input, shape index: {}]
  %s2 = inlined_call_operand.vmem [shape: f32[2,128], index: 2, kind: input, shape index: {}]
  %s3 = inlined_call_operand.vmem [shape: f32[1,128], index: 3, kind: input, shape index: {}]
  %s4 = inlined_call_operand.vmem [shape: f32[1,128], index: 4, kind: input, shape index: {}]
  %s5 = inlined_call_operand.vmem [shape: f32[32,128], index: 5, kind: output, shape index: {}]
  %s6 = sld [smem:[#allocation0]]
  $region30: #{block_forward.22} parent=0
    _
  %s8 = ssub.s32 1, %s6
  %s9 = scalar_select 0, %s8, %s6
  // Predicated region
  $region2: #{block_forward.22} parent=0 // pred_check
    _
  $region3: #{block_forward.22} parent=0 // pred_check_branch
    %11 = sbr.rel (0) target = $region5
  $region4: #{block_forward.22} parent=0 // pred_region
    _
  $region5: #{block_forward.22} parent=0 // pred_fallthru
    _
  // Predicated region
  $region6: #{block_forward.22} parent=0 // pred_check
    _
  $region7: #{block_forward.22} parent=0 // pred_check_branch
    %13 = sbr.rel (0) target = $region9
  $region8: #{block_forward.22} parent=0 // pred_region
    _
  $region9: #{block_forward.22} parent=0 // pred_fallthru
    _
  // Predicated region
  $region10: #{block_forward.22} parent=0 // pred_check
    _
  $region11: #{block_forward.22} parent=0 // pred_check_branch
    %15 = sbr.rel (0) target = $region13
  $region12: #{block_forward.22} parent=0 // pred_region
    _
  $region13: #{block_forward.22} parent=0 // pred_fallthru
    _
  // Predicated region
  $region14: #{block_forward.22} parent=0 // pred_check
    _
  $region15: #{block_forward.22} parent=0 // pred_check_branch
    %17 = sbr.rel (0) target = $region17
  $region16: #{block_forward.22} parent=0 // pred_region
    _
  $region17: #{block_forward.22} parent=0 // pred_fallthru
    _
  // Predicated region
  $region18: #{block_forward.22} parent=0 // pred_check
    _
  $region19: #{block_forward.22} parent=0 // pred_check_branch
    %19 = sbr.rel (0) target = $region21
  $region20: #{block_forward.22} parent=0 // pred_region
    _
  $region21: #{block_forward.22} parent=0 // pred_fallthru
    _
  %v20 = vld [vmem:[%s0] sm:$0xf]
  %v21 = vld [vmem:[%s0 + $0x4] sm:$0xf]
  %v22 = vld [vmem:[%s0 + $0x8] sm:$0xf]
  %v23 = vld [vmem:[%s0 + $0xc] sm:$0xf]
  %v24 = vunpack.c.l.bf16 %v20
  %v25 = vunpack.c.l.bf16 %v21
  %v26 = vunpack.c.l.bf16 %v22
  %v27 = vunpack.c.l.bf16 %v23
  %v28 = vld [vmem:[%s1] sm:$0xff]
  %v29 = vld [vmem:[%s1 + $0x8] sm:$0xff]
  %v30 = vld [vmem:[%s1 + $0x10] sm:$0xff]
  %v31 = vld [vmem:[%s1 + $0x18] sm:$0xff]
  %v32 = vld [vmem:[%s1 + $0x20] sm:$0xff]
  %v33 = vld [vmem:[%s1 + $0x28] sm:$0xff]
  %v34 = vld [vmem:[%s1 + $0x30] sm:$0xff]
  %v35 = vld [vmem:[%s1 + $0x38] sm:$0xff]
  %v36 = vld [vmem:[%s1 + $0x40] sm:$0xff]
  %v37 = vld [vmem:[%s1 + $0x48] sm:$0xff]
  %v38 = vld [vmem:[%s1 + $0x50] sm:$0xff]
  %v39 = vld [vmem:[%s1 + $0x58] sm:$0xff]
  %v40 = vld [vmem:[%s1 + $0x60] sm:$0xff]
  %v41 = vld [vmem:[%s1 + $0x68] sm:$0xff]
  %v42 = vld [vmem:[%s1 + $0x70] sm:$0xff]
  %v43 = vld [vmem:[%s1 + $0x78] sm:$0xff]
  %v44 = vld [vmem:[%s2] sm:$0x3]
  %45 = vmatprep.subr.mxu0 0.0
  %46 = vmatpush1.msra.mxu0 %v28
  %47 = vmatprep.subr.mxu0 0.0
  %48 = vmatpush1.msra.mxu0 %v29
  %49 = vmatprep.subr.mxu0 0.0
  %50 = vmatpush1.msra.mxu0 %v30
  %51 = vmatprep.subr.mxu0 0.0
  %52 = vmatpush1.msra.mxu0 %v31
  %53 = vmatprep.subr.mxu0 0.0
  %54 = vmatpush1.msra.mxu0 %v32
  %55 = vmatprep.subr.mxu0 0.0
  %56 = vmatpush1.msra.mxu0 %v33
  %57 = vmatprep.subr.mxu0 0.0
  %58 = vmatpush1.msra.mxu0 %v34
  %59 = vmatprep.subr.mxu0 0.0
  %60 = vmatpush1.msra.mxu0 %v35
  %61 = vmatprep.subr.mxu0 0.0
  %62 = vmatpush1.msra.mxu0 %v36
  %63 = vmatprep.subr.mxu0 0.0
  %64 = vmatpush1.msra.mxu0 %v37
  %65 = vmatprep.subr.mxu0 0.0
  %66 = vmatpush1.msra.mxu0 %v38
  %67 = vmatprep.subr.mxu0 0.0
  %68 = vmatpush1.msra.mxu0 %v39
  %69 = vmatprep.subr.mxu0 0.0
  %70 = vmatpush1.msra.mxu0 %v40
  %71 = vmatprep.subr.mxu0 0.0
  %72 = vmatpush1.msra.mxu0 %v41
  %73 = vmatprep.subr.mxu0 0.0
  %74 = vmatpush1.msra.mxu0 %v42
  %75 = vmatprep.subr.mxu0 0.0
  %76 = vmatpush1.msra.mxu0 %v43
  %77 = vmatprep.subr.mxu0 0.0
  %78 = vmatpush1.msra.mxu0 0.0
  %79 = vmatprep.subr.mxu0 0.0
  %80 = vmatpush1.msra.mxu0 0.0
  %81 = vmatprep.subr.mxu0 0.0
  %82 = vmatpush1.msra.mxu0 0.0
  %83 = vmatprep.subr.mxu0 0.0
  %84 = vmatpush1.msra.mxu0 0.0
  %85 = vmatprep.subr.mxu0 0.0
  %86 = vmatpush1.msra.mxu0 0.0
  %87 = vmatprep.subr.mxu0 0.0
  %88 = vmatpush1.msra.mxu0 0.0
  %89 = vmatprep.subr.mxu0 0.0
  %90 = vmatpush1.msra.mxu0 0.0
  %91 = vmatprep.subr.mxu0 0.0
  %92 = vmatpush1.msra.mxu0 0.0
  %93 = vmatprep.subr.mxu0 0.0
  %94 = vmatpush1.msra.mxu0 0.0
  %95 = vmatprep.subr.mxu0 0.0
  %96 = vmatpush1.msra.mxu0 0.0
  %97 = vmatprep.subr.mxu0 0.0
  %98 = vmatpush1.msra.mxu0 0.0
  %99 = vmatprep.subr.mxu0 0.0
  %100 = vmatpush1.msra.mxu0 0.0
  %101 = vmatprep.subr.mxu0 0.0
  %102 = vmatpush1.msra.mxu0 0.0
  %103 = vmatprep.subr.mxu0 0.0
  %104 = vmatpush1.msra.mxu0 0.0
  %105 = vmatprep.subr.mxu0 0.0
  %106 = vmatpush1.msra.mxu0 0.0
  %107 = vmatprep.subr.mxu0 0.0
  %108 = vmatpush1.msra.mxu0 0.0
  %109 = vmatprep.mubr.f32.mxu0 0.0
  %110 = vmatmul.mubr.f32.gmra.mrb[0].mxu0 %v24
  %v111 = vpop.f32.mrb[0].mxu0
  %v112 = vadd.f32 0.0, %v111
  %v113 = vpop.f32.mrb[0].mxu0
  %114 = vmatprep.mubr.f32.mxu0 0.0
  %115 = vmatmul.mubr.f32.gmra.mrb[0].mxu0 %v25
  %v116 = vpop.f32.mrb[0].mxu0
  %v117 = vadd.f32 0.0, %v116
  %v118 = vpop.f32.mrb[0].mxu0
  %119 = vmatprep.mubr.f32.mxu0 0.0
  %120 = vmatmul.mubr.f32.gmra.mrb[0].mxu0 %v26
  %v121 = vpop.f32.mrb[0].mxu0
  %v122 = vadd.f32 0.0, %v121
  %v123 = vpop.f32.mrb[0].mxu0
  %124 = vmatprep.mubr.f32.mxu0 0.0
  %125 = vmatmul.mubr.f32.gmra.mrb[0].mxu0 %v27
  %v126 = vpop.f32.mrb[0].mxu0
  %v127 = vadd.f32 0.0, %v126
  %v128 = vpop.f32.mrb[0].mxu0
  %129 = vdwg.mxu0
  %v130 = vmul.f32 %v24, %v24
  %v131 = vmul.f32 %v25, %v25
  %v132 = vmul.f32 %v26, %v26
  %v133 = vmul.f32 %v27, %v27
  %134 = vmatprep.subr.mxu0 0.0
  %135 = vmatpush1.msra.mxu0 %v28
  %136 = vmatprep.subr.mxu0 0.0
  %137 = vmatpush1.msra.mxu0 %v29
  %138 = vmatprep.subr.mxu0 0.0
  %139 = vmatpush1.msra.mxu0 %v30
  %140 = vmatprep.subr.mxu0 0.0
  %141 = vmatpush1.msra.mxu0 %v31
  %142 = vmatprep.subr.mxu0 0.0
  %143 = vmatpush1.msra.mxu0 %v32
  %144 = vmatprep.subr.mxu0 0.0
  %145 = vmatpush1.msra.mxu0 %v33
  %146 = vmatprep.subr.mxu0 0.0
  %147 = vmatpush1.msra.mxu0 %v34
  %148 = vmatprep.subr.mxu0 0.0
  %149 = vmatpush1.msra.mxu0 %v35
  %150 = vmatprep.subr.mxu0 0.0
  %151 = vmatpush1.msra.mxu0 %v36
  %152 = vmatprep.subr.mxu0 0.0
  %153 = vmatpush1.msra.mxu0 %v37
  %154 = vmatprep.subr.mxu0 0.0
  %155 = vmatpush1.msra.mxu0 %v38
  %156 = vmatprep.subr.mxu0 0.0
  %157 = vmatpush1.msra.mxu0 %v39
  %158 = vmatprep.subr.mxu0 0.0
  %159 = vmatpush1.msra.mxu0 %v40
  %160 = vmatprep.subr.mxu0 0.0
  %161 = vmatpush1.msra.mxu0 %v41
  %162 = vmatprep.subr.mxu0 0.0
  %163 = vmatpush1.msra.mxu0 %v42
  %164 = vmatprep.subr.mxu0 0.0
  %165 = vmatpush1.msra.mxu0 %v43
  %166 = vmatprep.subr.mxu0 0.0
  %167 = vmatpush1.msra.mxu0 0.0
  %168 = vmatprep.subr.mxu0 0.0
  %169 = vmatpush1.msra.mxu0 0.0
  %170 = vmatprep.subr.mxu0 0.0
  %171 = vmatpush1.msra.mxu0 0.0
  %172 = vmatprep.subr.mxu0 0.0
  %173 = vmatpush1.msra.mxu0 0.0
  %174 = vmatprep.subr.mxu0 0.0
  %175 = vmatpush1.msra.mxu0 0.0
  %176 = vmatprep.subr.mxu0 0.0
  %177 = vmatpush1.msra.mxu0 0.0
  %178 = vmatprep.subr.mxu0 0.0
  %179 = vmatpush1.msra.mxu0 0.0
  %180 = vmatprep.subr.mxu0 0.0
  %181 = vmatpush1.msra.mxu0 0.0
  %182 = vmatprep.subr.mxu0 0.0
  %183 = vmatpush1.msra.mxu0 0.0
  %184 = vmatprep.subr.mxu0 0.0
  %185 = vmatpush1.msra.mxu0 0.0
  %186 = vmatprep.subr.mxu0 0.0
  %187 = vmatpush1.msra.mxu0 0.0
  %188 = vmatprep.subr.mxu0 0.0
  %189 = vmatpush1.msra.mxu0 0.0
  %190 = vmatprep.subr.mxu0 0.0
  %191 = vmatpush1.msra.mxu0 0.0
  %192 = vmatprep.subr.mxu0 0.0
  %193 = vmatpush1.msra.mxu0 0.0
  %194 = vmatprep.subr.mxu0 0.0
  %195 = vmatpush1.msra.mxu0 0.0
  %196 = vmatprep.subr.mxu0 0.0
  %197 = vmatpush1.msra.mxu0 0.0
  %198 = vmatprep.mubr.f32.mxu0 0.0
  %199 = vmatmul.mubr.f32.gmra.mrb[0].mxu0 %v130
  %v200 = vpop.f32.mrb[0].mxu0
  %v201 = vadd.f32 0.0, %v200
  %v202 = vpop.f32.mrb[0].mxu0
  %203 = vmatprep.mubr.f32.mxu0 0.0
  %204 = vmatmul.mubr.f32.gmra.mrb[0].mxu0 %v131
  %v205 = vpop.f32.mrb[0].mxu0
  %v206 = vadd.f32 0.0, %v205
  %v207 = vpop.f32.mrb[0].mxu0
  %208 = vmatprep.mubr.f32.mxu0 0.0
  %209 = vmatmul.mubr.f32.gmra.mrb[0].mxu0 %v132
  %v210 = vpop.f32.mrb[0].mxu0
  %v211 = vadd.f32 0.0, %v210
  %v212 = vpop.f32.mrb[0].mxu0
  %213 = vmatprep.mubr.f32.mxu0 0.0
  %214 = vmatmul.mubr.f32.gmra.mrb[0].mxu0 %v133
  %v215 = vpop.f32.mrb[0].mxu0
  %v216 = vadd.f32 0.0, %v215
  %v217 = vpop.f32.mrb[0].mxu0
  %218 = vdwg.mxu0
  %vm219 = vcmask 15360
  %v221 = vsel %vm219, %v112, 0
  %v224 = vsel %vm219, %v117, 0
  %v227 = vsel %vm219, %v122, 0
  %v230 = vsel %vm219, %v127, 0
  %vm232 = vcmask 1041408
  %v234 = vsel %vm232, %v44, 0
  %236 = vmatprep.subr.mxu0 0.0
  %237 = vmatpush1.msra.mxu0 %v234
  %238 = vmatprep.subr.mxu0 0.0
  %239 = vmatpush1.msra.mxu0 0.0
  %240 = vmatprep.subr.mxu0 0.0
  %241 = vmatpush1.msra.mxu0 0.0
  %242 = vmatprep.subr.mxu0 0.0
  %243 = vmatpush1.msra.mxu0 0.0
  %244 = vmatprep.subr.mxu0 0.0
  %245 = vmatpush1.msra.mxu0 0.0
  %246 = vmatprep.subr.mxu0 0.0
  %247 = vmatpush1.msra.mxu0 0.0
  %248 = vmatprep.subr.mxu0 0.0
  %249 = vmatpush1.msra.mxu0 0.0
  %250 = vmatprep.subr.mxu0 0.0
  %251 = vmatpush1.msra.mxu0 0.0
  %252 = vmatprep.subr.mxu0 0.0
  %253 = vmatpush1.msra.mxu0 0.0
  %254 = vmatprep.subr.mxu0 0.0
  %255 = vmatpush1.msra.mxu0 0.0
  %256 = vmatprep.subr.mxu0 0.0
  %257 = vmatpush1.msra.mxu0 0.0
  %258 = vmatprep.subr.mxu0 0.0
  %259 = vmatpush1.msra.mxu0 0.0
  %260 = vmatprep.subr.mxu0 0.0
  %261 = vmatpush1.msra.mxu0 0.0
  %262 = vmatprep.subr.mxu0 0.0
  %263 = vmatpush1.msra.mxu0 0.0
  %264 = vmatprep.subr.mxu0 0.0
  %265 = vmatpush1.msra.mxu0 0.0
  %266 = vmatprep.subr.mxu0 0.0
  %267 = vmatpush1.msra.mxu0 0.0
  %268 = vmatprep.subr.mxu0 0.0
  %269 = vmatpush1.msra.mxu0 0.0
  %270 = vmatprep.subr.mxu0 0.0
  %271 = vmatpush1.msra.mxu0 0.0
  %272 = vmatprep.subr.mxu0 0.0
  %273 = vmatpush1.msra.mxu0 0.0
  %274 = vmatprep.subr.mxu0 0.0
  %275 = vmatpush1.msra.mxu0 0.0
  %276 = vmatprep.subr.mxu0 0.0
  %277 = vmatpush1.msra.mxu0 0.0
  %278 = vmatprep.subr.mxu0 0.0
  %279 = vmatpush1.msra.mxu0 0.0
  %280 = vmatprep.subr.mxu0 0.0
  %281 = vmatpush1.msra.mxu0 0.0
  %282 = vmatprep.subr.mxu0 0.0
  %283 = vmatpush1.msra.mxu0 0.0
  %284 = vmatprep.subr.mxu0 0.0
  %285 = vmatpush1.msra.mxu0 0.0
  %286 = vmatprep.subr.mxu0 0.0
  %287 = vmatpush1.msra.mxu0 0.0
  %288 = vmatprep.subr.mxu0 0.0
  %289 = vmatpush1.msra.mxu0 0.0
  %290 = vmatprep.subr.mxu0 0.0
  %291 = vmatpush1.msra.mxu0 0.0
  %292 = vmatprep.subr.mxu0 0.0
  %293 = vmatpush1.msra.mxu0 0.0
  %294 = vmatprep.subr.mxu0 0.0
  %295 = vmatpush1.msra.mxu0 0.0
  %296 = vmatprep.subr.mxu0 0.0
  %297 = vmatpush1.msra.mxu0 0.0
  %298 = vmatprep.subr.mxu0 0.0
  %299 = vmatpush1.msra.mxu0 0.0
  %300 = vmatprep.mubr.f32.mxu0 0.0
  %301 = vmatmul.mubr.f32.gmra.mrb[0].mxu0 %v221
  %v302 = vpop.f32.mrb[0].mxu0
  %v303 = vadd.f32 0.0, %v302
  %v304 = vpop.f32.mrb[0].mxu0
  %305 = vmatprep.mubr.f32.mxu0 0.0
  %306 = vmatmul.mubr.f32.gmra.mrb[0].mxu0 %v224
  %v307 = vpop.f32.mrb[0].mxu0
  %v308 = vadd.f32 0.0, %v307
  %v309 = vpop.f32.mrb[0].mxu0
  %310 = vmatprep.mubr.f32.mxu0 0.0
  %311 = vmatmul.mubr.f32.gmra.mrb[0].mxu0 %v227
  %v312 = vpop.f32.mrb[0].mxu0
  %v313 = vadd.f32 0.0, %v312
  %v314 = vpop.f32.mrb[0].mxu0
  %315 = vmatprep.mubr.f32.mxu0 0.0
  %316 = vmatmul.mubr.f32.gmra.mrb[0].mxu0 %v230
  %v317 = vpop.f32.mrb[0].mxu0
  %v318 = vadd.f32 0.0, %v317
  %v319 = vpop.f32.mrb[0].mxu0
  %320 = vdwg.mxu0
  %v322 = vsel %vm219, %v201, 0
  %v325 = vsel %vm219, %v206, 0
  %v328 = vsel %vm219, %v211, 0
  %v331 = vsel %vm219, %v216, 0
  %333 = vmatprep.subr.mxu0 0.0
  %334 = vmatpush1.msra.mxu0 %v234
  %335 = vmatprep.subr.mxu0 0.0
  %336 = vmatpush1.msra.mxu0 0.0
  %337 = vmatprep.subr.mxu0 0.0
  %338 = vmatpush1.msra.mxu0 0.0
  %339 = vmatprep.subr.mxu0 0.0
  %340 = vmatpush1.msra.mxu0 0.0
  %341 = vmatprep.subr.mxu0 0.0
  %342 = vmatpush1.msra.mxu0 0.0
  %343 = vmatprep.subr.mxu0 0.0
  %344 = vmatpush1.msra.mxu0 0.0
  %345 = vmatprep.subr.mxu0 0.0
  %346 = vmatpush1.msra.mxu0 0.0
  %347 = vmatprep.subr.mxu0 0.0
  %348 = vmatpush1.msra.mxu0 0.0
  %349 = vmatprep.subr.mxu0 0.0
  %350 = vmatpush1.msra.mxu0 0.0
  %351 = vmatprep.subr.mxu0 0.0
  %352 = vmatpush1.msra.mxu0 0.0
  %353 = vmatprep.subr.mxu0 0.0
  %354 = vmatpush1.msra.mxu0 0.0
  %355 = vmatprep.subr.mxu0 0.0
  %356 = vmatpush1.msra.mxu0 0.0
  %357 = vmatprep.subr.mxu0 0.0
  %358 = vmatpush1.msra.mxu0 0.0
  %359 = vmatprep.subr.mxu0 0.0
  %360 = vmatpush1.msra.mxu0 0.0
  %361 = vmatprep.subr.mxu0 0.0
  %362 = vmatpush1.msra.mxu0 0.0
  %363 = vmatprep.subr.mxu0 0.0
  %364 = vmatpush1.msra.mxu0 0.0
  %365 = vmatprep.subr.mxu0 0.0
  %366 = vmatpush1.msra.mxu0 0.0
  %367 = vmatprep.subr.mxu0 0.0
  %368 = vmatpush1.msra.mxu0 0.0
  %369 = vmatprep.subr.mxu0 0.0
  %370 = vmatpush1.msra.mxu0 0.0
  %371 = vmatprep.subr.mxu0 0.0
  %372 = vmatpush1.msra.mxu0 0.0
  %373 = vmatprep.subr.mxu0 0.0
  %374 = vmatpush1.msra.mxu0 0.0
  %375 = vmatprep.subr.mxu0 0.0
  %376 = vmatpush1.msra.mxu0 0.0
  %377 = vmatprep.subr.mxu0 0.0
  %378 = vmatpush1.msra.mxu0 0.0
  %379 = vmatprep.subr.mxu0 0.0
  %380 = vmatpush1.msra.mxu0 0.0
  %381 = vmatprep.subr.mxu0 0.0
  %382 = vmatpush1.msra.mxu0 0.0
  %383 = vmatprep.subr.mxu0 0.0
  %384 = vmatpush1.msra.mxu0 0.0
  %385 = vmatprep.subr.mxu0 0.0
  %386 = vmatpush1.msra.mxu0 0.0
  %387 = vmatprep.subr.mxu0 0.0
  %388 = vmatpush1.msra.mxu0 0.0
  %389 = vmatprep.subr.mxu0 0.0
  %390 = vmatpush1.msra.mxu0 0.0
  %391 = vmatprep.subr.mxu0 0.0
  %392 = vmatpush1.msra.mxu0 0.0
  %393 = vmatprep.subr.mxu0 0.0
  %394 = vmatpush1.msra.mxu0 0.0
  %395 = vmatprep.subr.mxu0 0.0
  %396 = vmatpush1.msra.mxu0 0.0
  %397 = vmatprep.mubr.f32.mxu0 0.0
  %398 = vmatmul.mubr.f32.gmra.mrb[0].mxu0 %v322
  %v399 = vpop.f32.mrb[0].mxu0
  %v400 = vadd.f32 0.0, %v399
  %v401 = vpop.f32.mrb[0].mxu0
  %402 = vmatprep.mubr.f32.mxu0 0.0
  %403 = vmatmul.mubr.f32.gmra.mrb[0].mxu0 %v325
  %v404 = vpop.f32.mrb[0].mxu0
  %v405 = vadd.f32 0.0, %v404
  %v406 = vpop.f32.mrb[0].mxu0
  %407 = vmatprep.mubr.f32.mxu0 0.0
  %408 = vmatmul.mubr.f32.gmra.mrb[0].mxu0 %v328
  %v409 = vpop.f32.mrb[0].mxu0
  %v410 = vadd.f32 0.0, %v409
  %v411 = vpop.f32.mrb[0].mxu0
  %412 = vmatprep.mubr.f32.mxu0 0.0
  %413 = vmatmul.mubr.f32.gmra.mrb[0].mxu0 %v331
  %v414 = vpop.f32.mrb[0].mxu0
  %v415 = vadd.f32 0.0, %v414
  %v416 = vpop.f32.mrb[0].mxu0
  %417 = vdwg.mxu0
  %v418 = vmul.f32 %v303, %v303
  %v419 = vmul.f32 %v308, %v308
  %v420 = vmul.f32 %v313, %v313
  %v421 = vmul.f32 %v318, %v318
  %v422 = vsub.f32 %v400, %v418
  %v423 = vsub.f32 %v405, %v419
  %v424 = vsub.f32 %v410, %v420
  %v425 = vsub.f32 %v415, %v421
  %v426 = vmax.f32 %v422, 0.0
  %v427 = vmax.f32 %v423, 0.0
  %v428 = vmax.f32 %v424, 0.0
  %v429 = vmax.f32 %v425, 0.0
  %v430 = vsub.f32 %v24, %v303
  %v431 = vsub.f32 %v25, %v308
  %v432 = vsub.f32 %v26, %v313
  %v433 = vsub.f32 %v27, %v318
  %v434 = vadd.f32 %v426, 0.00064
  %v435 = vadd.f32 %v427, 0.00064
  %v436 = vadd.f32 %v428, 0.00064
  %v437 = vadd.f32 %v429, 0.00064
  %v438 = vrsqrt.pop %v434
  %v439 = vrsqrt.pop %v435
  %v440 = vrsqrt.pop %v436
  %v441 = vrsqrt.pop %v437
  %v442 = vmul.f32 %v430, %v438
  %v443 = vmul.f32 %v431, %v439
  %v444 = vmul.f32 %v432, %v440
  %v445 = vmul.f32 %v433, %v441
  %v446 = vld [vmem:[%s3] sm:$0x1]
  %v448 = vlaneseq
  %v449 = vshrl.u32 %v448, 7
  %v450 = vsub.s32 0, %v449
  %v451 = vrot.slane %v446, %v450
  %v453 = vmul.f32 %v442, %v451
  %v454 = vmul.f32 %v443, %v451
  %v455 = vmul.f32 %v444, %v451
  %v456 = vmul.f32 %v445, %v451
  %v457 = vld [vmem:[%s4] sm:$0x1]
  %v459 = vlaneseq
  %v460 = vshrl.u32 %v459, 7
  %v461 = vsub.s32 0, %v460
  %v462 = vrot.slane %v457, %v461
  %v464 = vadd.f32 %v453, %v462
  %v465 = vadd.f32 %v454, %v462
  %v466 = vadd.f32 %v455, %v462
  %v467 = vadd.f32 %v456, %v462
  %468 = vst [vmem:[%s5] sm:$0xff] %v464
  %469 = vst [vmem:[%s5 + $0x8] sm:$0xff] %v465
  %470 = vst [vmem:[%s5 + $0x10] sm:$0xff] %v466
  %471 = vst [vmem:[%s5 + $0x18] sm:$0xff] %v467
  // Predicated region
  $region22: #{block_forward.22} parent=0 // pred_check
    _
  $region23: #{block_forward.22} parent=0 // pred_check_branch
    %473 = sbr.rel (0) target = $region25
  $region24: #{block_forward.22} parent=0 // pred_region
    _
  $region25: #{block_forward.22} parent=0 // pred_fallthru
    _
  // Predicated region
  $region26: #{block_forward.22} parent=0 // pred_check
    _
  $region27: #{block_forward.22} parent=0 // pred_check_branch
    %475 = sbr.rel (0) target = $region29
  $region28: #{block_forward.22} parent=0 // pred_region
    _
  $region29: #{block_forward.22} parent=0 // pred_fallthru
    _

// kernel: block_forward.20
$region0: #{block_forward.20}
  #allocation0 [shape = 'u32[]', space=smem, size = 0x4, offset = 0x4, fixed_abs, tag = 'smem constant byte address 0x4 - core index']
  #allocation1 [shape = 'u32[144,128]{1,0:T(1,128)}', space=vmem, size = 0x12000, scoped, tag = 'internal scratch']
  %s0 = inlined_call_operand.vmem [shape: bf16[32,128], index: 0, kind: input, shape index: {}]
  %s1 = inlined_call_operand.vmem [shape: bf16[32,128], index: 1, kind: input, shape index: {}]
  %s2 = inlined_call_operand.vmem [shape: f32[1,128], index: 2, kind: input, shape index: {}]
  %s3 = inlined_call_operand.vmem [shape: bf16[128,32], index: 3, kind: input, shape index: {}]
  %s4 = inlined_call_operand.vmem [shape: bf16[32,128], index: 4, kind: input, shape index: {}]
  %s5 = inlined_call_operand.vmem [shape: f32[1,128], index: 5, kind: input, shape index: {}]
  %s6 = inlined_call_operand.vmem [shape: bf16[32,128], index: 6, kind: output, shape index: {}]
  %s7 = sld [smem:[#allocation0]]
  $region34: #{block_forward.20} parent=0
    _
  %s9 = ssub.s32 1, %s7
  %s10 = scalar_select 0, %s9, %s7
  // Predicated region
  $region2: #{block_forward.20} parent=0 // pred_check
    _
  $region3: #{block_forward.20} parent=0 // pred_check_branch
    %12 = sbr.rel (0) target = $region5
  $region4: #{block_forward.20} parent=0 // pred_region
    _
  $region5: #{block_forward.20} parent=0 // pred_fallthru
    _
  // Predicated region
  $region6: #{block_forward.20} parent=0 // pred_check
    _
  $region7: #{block_forward.20} parent=0 // pred_check_branch
    %14 = sbr.rel (0) target = $region9
  $region8: #{block_forward.20} parent=0 // pred_region
    _
  $region9: #{block_forward.20} parent=0 // pred_fallthru
    _
  // Predicated region
  $region10: #{block_forward.20} parent=0 // pred_check
    _
  $region11: #{block_forward.20} parent=0 // pred_check_branch
    %16 = sbr.rel (0) target = $region13
  $region12: #{block_forward.20} parent=0 // pred_region
    _
  $region13: #{block_forward.20} parent=0 // pred_fallthru
    _
  // Predicated region
  $region14: #{block_forward.20} parent=0 // pred_check
    _
  $region15: #{block_forward.20} parent=0 // pred_check_branch
    %18 = sbr.rel (0) target = $region17
  $region16: #{block_forward.20} parent=0 // pred_region
    _
  $region17: #{block_forward.20} parent=0 // pred_fallthru
    _
  // Predicated region
  $region18: #{block_forward.20} parent=0 // pred_check
    _
  $region19: #{block_forward.20} parent=0 // pred_check_branch
    %20 = sbr.rel (0) target = $region21
  $region20: #{block_forward.20} parent=0 // pred_region
    _
  $region21: #{block_forward.20} parent=0 // pred_fallthru
    _
  // Predicated region
  $region22: #{block_forward.20} parent=0 // pred_check
    _
  $region23: #{block_forward.20} parent=0 // pred_check_branch
    %22 = sbr.rel (0) target = $region25
  $region24: #{block_forward.20} parent=0 // pred_region
    _
  $region25: #{block_forward.20} parent=0 // pred_fallthru
    _
  %v24 = vld [vmem:[%s0] sm:$0xf]
  %v25 = vld [vmem:[%s0 + $0x4] sm:$0xf]
  %v26 = vld [vmem:[%s0 + $0x8] sm:$0xf]
  %v27 = vld [vmem:[%s0 + $0xc] sm:$0xf]
  %v28 = vunpack.c.l.bf16 %v24
  %v29 = vunpack.c.l.bf16 %v25
  %v30 = vunpack.c.l.bf16 %v26
  %v31 = vunpack.c.l.bf16 %v27
  %v32 = vld [vmem:[%s1] sm:$0xf]
  %v33 = vld [vmem:[%s1 + $0x4] sm:$0xf]
  %v34 = vld [vmem:[%s1 + $0x8] sm:$0xf]
  %v35 = vld [vmem:[%s1 + $0xc] sm:$0xf]
  %v36 = vunpack.c.l.bf16 %v32
  %v37 = vunpack.c.l.bf16 %v33
  %v38 = vunpack.c.l.bf16 %v34
  %v39 = vunpack.c.l.bf16 %v35
  %v40 = vld [vmem:[%s2] sm:$0x1]
  %v42 = vlaneseq
  %v43 = vshrl.u32 %v42, 7
  %v44 = vsub.s32 0, %v43
  %v45 = vrot.slane %v40, %v44
  %v47 = vmul.f32 %v36, %v45
  %v48 = vmul.f32 %v37, %v45
  %v49 = vmul.f32 %v38, %v45
  %v50 = vmul.f32 %v39, %v45
  %v51 = vadd.f32 %v28, %v47
  %v52 = vadd.f32 %v29, %v48
  %v53 = vadd.f32 %v30, %v49
  %v54 = vadd.f32 %v31, %v50
  %v55 = vpack.c.bf16 %v52, %v51
  %v56 = vpack.c.bf16 %v54, %v53
  %v57 = vld [vmem:[%s3] sm:$0xf]
  %v58 = vld [vmem:[%s3 + $0x4] sm:$0xf]
  %v59 = vld [vmem:[%s3 + $0x8] sm:$0xf]
  %v60 = vld [vmem:[%s3 + $0xc] sm:$0xf]
  %v61 = vld [vmem:[%s3 + $0x10] sm:$0xf]
  %v62 = vld [vmem:[%s3 + $0x14] sm:$0xf]
  %v63 = vld [vmem:[%s3 + $0x18] sm:$0xf]
  %v64 = vld [vmem:[%s3 + $0x1c] sm:$0xf]
  %v65 = vld [vmem:[%s3 + $0x20] sm:$0xf]
  %v66 = vld [vmem:[%s3 + $0x24] sm:$0xf]
  %v67 = vld [vmem:[%s3 + $0x28] sm:$0xf]
  %v68 = vld [vmem:[%s3 + $0x2c] sm:$0xf]
  %v69 = vld [vmem:[%s3 + $0x30] sm:$0xf]
  %v70 = vld [vmem:[%s3 + $0x34] sm:$0xf]
  %v71 = vld [vmem:[%s3 + $0x38] sm:$0xf]
  %v72 = vld [vmem:[%s3 + $0x3c] sm:$0xf]
  %v89 = vunpack.c.l.b16 %v57
  %v90 = vunpack.c.l.b16 %v58
  %v91 = vunpack.c.l.b16 %v59
  %v92 = vunpack.c.l.b16 %v60
  %v93 = vunpack.c.l.b16 %v61
  %v94 = vunpack.c.l.b16 %v62
  %v95 = vunpack.c.l.b16 %v63
  %v96 = vunpack.c.l.b16 %v64
  %v97 = vunpack.c.l.b16 %v65
  %v98 = vunpack.c.l.b16 %v66
  %v99 = vunpack.c.l.b16 %v67
  %v100 = vunpack.c.l.b16 %v68
  %v101 = vunpack.c.l.b16 %v69
  %v102 = vunpack.c.l.b16 %v70
  %v103 = vunpack.c.l.b16 %v71
  %v104 = vunpack.c.l.b16 %v72
  %v105 = vpack.c.b16 %v90, %v89
  %v106 = vpack.c.b16 %v92, %v91
  %v107 = vpack.c.b16 %v94, %v93
  %v108 = vpack.c.b16 %v96, %v95
  %v109 = vpack.c.b16 %v98, %v97
  %v110 = vpack.c.b16 %v100, %v99
  %v111 = vpack.c.b16 %v102, %v101
  %v112 = vpack.c.b16 %v104, %v103
  %121 = vmatprep.subr.bf16.mxu0 0
  %122 = vmatpush1.bf16.msra.mxu0 %v105
  %123 = vmatprep.subr.bf16.mxu0 0
  %124 = vmatpush1.bf16.msra.mxu0 %v106
  %125 = vmatprep.subr.bf16.mxu0 0
  %126 = vmatpush1.bf16.msra.mxu0 %v107
  %127 = vmatprep.subr.bf16.mxu0 0
  %128 = vmatpush1.bf16.msra.mxu0 %v108
  %129 = vmatprep.subr.bf16.mxu0 0
  %130 = vmatpush1.bf16.msra.mxu0 %v109
  %131 = vmatprep.subr.bf16.mxu0 0
  %132 = vmatpush1.bf16.msra.mxu0 %v110
  %133 = vmatprep.subr.bf16.mxu0 0
  %134 = vmatpush1.bf16.msra.mxu0 %v111
  %135 = vmatprep.subr.bf16.mxu0 0
  %136 = vmatpush1.bf16.msra.mxu0 %v112
  %137 = vmatprep.subr.bf16.mxu0 0
  %138 = vmatpush1.bf16.msra.mxu0 0
  %139 = vmatprep.subr.bf16.mxu0 0
  %140 = vmatpush1.bf16.msra.mxu0 0
  %141 = vmatprep.subr.bf16.mxu0 0
  %142 = vmatpush1.bf16.msra.mxu0 0
  %143 = vmatprep.subr.bf16.mxu0 0
  %144 = vmatpush1.bf16.msra.mxu0 0
  %145 = vmatprep.subr.bf16.mxu0 0
  %146 = vmatpush1.bf16.msra.mxu0 0
  %147 = vmatprep.subr.bf16.mxu0 0
  %148 = vmatpush1.bf16.msra.mxu0 0
  %149 = vmatprep.subr.bf16.mxu0 0
  %150 = vmatpush1.bf16.msra.mxu0 0
  %151 = vmatprep.subr.bf16.mxu0 0
  %152 = vmatpush1.bf16.msra.mxu0 0
  %153 = vmatprep.mubr.bf16.mxu0 0
  %154 = vmatmul.mubr.bf16.gmra.mrb[0].mxu0 %v55
  %v155 = vpop.f32.mrb[0].mxu0
  %v156 = vadd.f32 0.0, %v155
  %v157 = vpop.f32.mrb[0].mxu0
  %v158 = vpop.f32.mrb[0].mxu0
  %v159 = vadd.f32 0.0, %v158
  %v160 = vpop.f32.mrb[0].mxu0
  %161 = vmatprep.mubr.bf16.mxu0 0
  %162 = vmatmul.mubr.bf16.gmra.mrb[0].mxu0 %v56
  %v163 = vpop.f32.mrb[0].mxu0
  %v164 = vadd.f32 0.0, %v163
  %v165 = vpop.f32.mrb[0].mxu0
  %v166 = vpop.f32.mrb[0].mxu0
  %v167 = vadd.f32 0.0, %v166
  %v168 = vpop.f32.mrb[0].mxu0
  %169 = vdwg.mxu0
  %v170 = vsub.f32 0.0, %v156
  %v171 = vsub.f32 0.0, %v159
  %v172 = vsub.f32 0.0, %v164
  %v173 = vsub.f32 0.0, %v167
  %v174 = vmul.f32 %v170, 1.442695
  %v175 = vpow.pop %v174
  %v176 = vmul.f32 %v171, 1.442695
  %v177 = vpow.pop %v176
  %v178 = vmul.f32 %v172, 1.442695
  %v179 = vpow.pop %v178
  %v180 = vmul.f32 %v173, 1.442695
  %v181 = vpow.pop %v180
  %v182 = vadd.f32 %v175, 1.0
  %v183 = vadd.f32 %v177, 1.0
  %v184 = vadd.f32 %v179, 1.0
  %v185 = vadd.f32 %v181, 1.0
  %v186 = vrcp.pop %v182
  %v187 = vmul.f32 1.0, %v186
  %v188 = vrcp.pop %v183
  %v189 = vmul.f32 1.0, %v188
  %v190 = vrcp.pop %v184
  %v191 = vmul.f32 1.0, %v190
  %v192 = vrcp.pop %v185
  %v193 = vmul.f32 1.0, %v192
  %v194 = vpack.c.bf16 %v189, %v187
  %v195 = vpack.c.bf16 %v193, %v191
  %v196 = vld [vmem:[%s4] sm:$0xf]
  %v197 = vld [vmem:[%s4 + $0x4] sm:$0xf]
  %v198 = vld [vmem:[%s4 + $0x8] sm:$0xf]
  %v199 = vld [vmem:[%s4 + $0xc] sm:$0xf]
  %v200 = vld [vmem:[%s5] sm:$0x1]
  %v202 = vlaneseq
  %v203 = vshrl.u32 %v202, 7
  %v204 = vsub.s32 0, %v203
  %v205 = vrot.slane %v200, %v204
  %v211 = vunpack.c.l.b16 %v196
  %v212 = vunpack.c.l.b16 %v197
  %v213 = vunpack.c.l.b16 %v198
  %v214 = vunpack.c.l.b16 %v199
  %v215 = vpack.c.b16 %v212, %v211
  %v216 = vpack.c.b16 %v214, %v213
  %vm219 = vcmask 261120
  %v221 = vsel %vm219, %v194, 0
  %v224 = vsel %vm219, %v195, 0
  %226 = vmatprep.subr.bf16.mxu0 0
  %227 = vmatpush1.bf16.msra.mxu0 %v215
  %228 = vmatprep.subr.bf16.mxu0 0
  %229 = vmatpush1.bf16.msra.mxu0 %v216
  %230 = vmatprep.subr.bf16.mxu0 0
  %231 = vmatpush1.bf16.msra.mxu0 0
  %232 = vmatprep.subr.bf16.mxu0 0
  %233 = vmatpush1.bf16.msra.mxu0 0
  %234 = vmatprep.subr.bf16.mxu0 0
  %235 = vmatpush1.bf16.msra.mxu0 0
  %236 = vmatprep.subr.bf16.mxu0 0
  %237 = vmatpush1.bf16.msra.mxu0 0
  %238 = vmatprep.subr.bf16.mxu0 0
  %239 = vmatpush1.bf16.msra.mxu0 0
  %240 = vmatprep.subr.bf16.mxu0 0
  %241 = vmatpush1.bf16.msra.mxu0 0
  %242 = vmatprep.subr.bf16.mxu0 0
  %243 = vmatpush1.bf16.msra.mxu0 0
  %244 = vmatprep.subr.bf16.mxu0 0
  %245 = vmatpush1.bf16.msra.mxu0 0
  %246 = vmatprep.subr.bf16.mxu0 0
  %247 = vmatpush1.bf16.msra.mxu0 0
  %248 = vmatprep.subr.bf16.mxu0 0
  %249 = vmatpush1.bf16.msra.mxu0 0
  %250 = vmatprep.subr.bf16.mxu0 0
  %251 = vmatpush1.bf16.msra.mxu0 0
  %252 = vmatprep.subr.bf16.mxu0 0
  %253 = vmatpush1.bf16.msra.mxu0 0
  %254 = vmatprep.subr.bf16.mxu0 0
  %255 = vmatpush1.bf16.msra.mxu0 0
  %256 = vmatprep.subr.bf16.mxu0 0
  %257 = vmatpush1.bf16.msra.mxu0 0
  %258 = vmatprep.mubr.bf16.mxu0 0
  %259 = vmatmul.mubr.bf16.gmra.mrb[0].mxu0 %v221
  %v260 = vpop.f32.mrb[0].mxu0
  %v261 = vadd.f32 %v205, %v260
  %v262 = vpop.f32.mrb[0].mxu0
  %v263 = vpop.f32.mrb[0].mxu0
  %v264 = vadd.f32 %v205, %v263
  %v265 = vpop.f32.mrb[0].mxu0
  %266 = vmatprep.mubr.bf16.mxu0 0
  %267 = vmatmul.mubr.bf16.gmra.mrb[0].mxu0 %v224
  %v268 = vpop.f32.mrb[0].mxu0
  %v269 = vadd.f32 %v205, %v268
  %v270 = vpop.f32.mrb[0].mxu0
  %v271 = vpop.f32.mrb[0].mxu0
  %v272 = vadd.f32 %v205, %v271
  %v273 = vpop.f32.mrb[0].mxu0
  %274 = vdwg.mxu0
  %v275 = vpack.c.bf16 %v264, %v261
  %v276 = vpack.c.bf16 %v272, %v269
  %v279 = vunpack.c.l.b16 %v275
  %v280 = vunpack.c.h.b16 %v275
  %v281 = vunpack.c.l.b16 %v276
  %v282 = vunpack.c.h.b16 %v276
  %v283 = vpack.c.b16 %v279, %v279
  %v284 = vpack.c.b16 %v280, %v280
  %v285 = vpack.c.b16 %v281, %v281
  %v286 = vpack.c.b16 %v282, %v282
  %291 = vst [vmem:[%s6] sm:$0xf] %v283
  %292 = vst [vmem:[%s6 + $0x4] sm:$0xf] %v284
  %293 = vst [vmem:[%s6 + $0x8] sm:$0xf] %v285
  %294 = vst [vmem:[%s6 + $0xc] sm:$0xf] %v286
  // Predicated region
  $region26: #{block_forward.20} parent=0 // pred_check
    _
  $region27: #{block_forward.20} parent=0 // pred_check_branch
    %296 = sbr.rel (0) target = $region29
  $region28: #{block_forward.20} parent=0 // pred_region
    _
  $region29: #{block_forward.20} parent=0 // pred_fallthru
    _
  // Predicated region
  $region30: #{block_forward.20} parent=0 // pred_check
    _
  $region31: #{block_forward.20} parent=0 // pred_check_branch
    %298 = sbr.rel (0) target = $region33
  $region32: #{block_forward.20} parent=0 // pred_region
    _
  $region33: #{block_forward.20} parent=0 // pred_fallthru
    _

// kernel: block_forward.23
$region0: #{block_forward.23}
  #allocation0 [shape = 'u32[]', space=smem, size = 0x4, offset = 0x4, fixed_abs, tag = 'smem constant byte address 0x4 - core index']
  #allocation1 [shape = 'u32[144,128]{1,0:T(1,128)}', space=vmem, size = 0x12000, scoped, tag = 'internal scratch']
  %s0 = inlined_call_operand.vmem [shape: f32[32,128], index: 0, kind: input, shape index: {}]
  %s1 = inlined_call_operand.vmem [shape: bf16[32,128], index: 1, kind: input, shape index: {}]
  %s2 = inlined_call_operand.vmem [shape: bf16[128,128], index: 2, kind: input, shape index: {}]
  %s3 = inlined_call_operand.vmem [shape: f32[32,128], index: 3, kind: output, shape index: {}]
  %s4 = sld [smem:[#allocation0]]
  $region22: #{block_forward.23} parent=0
    _
  %s6 = ssub.s32 1, %s4
  %s7 = scalar_select 0, %s6, %s4
  // Predicated region
  $region2: #{block_forward.23} parent=0 // pred_check
    _
  $region3: #{block_forward.23} parent=0 // pred_check_branch
    %9 = sbr.rel (0) target = $region5
  $region4: #{block_forward.23} parent=0 // pred_region
    _
  $region5: #{block_forward.23} parent=0 // pred_fallthru
    _
  // Predicated region
  $region6: #{block_forward.23} parent=0 // pred_check
    _
  $region7: #{block_forward.23} parent=0 // pred_check_branch
    %11 = sbr.rel (0) target = $region9
  $region8: #{block_forward.23} parent=0 // pred_region
    _
  $region9: #{block_forward.23} parent=0 // pred_fallthru
    _
  // Predicated region
  $region10: #{block_forward.23} parent=0 // pred_check
    _
  $region11: #{block_forward.23} parent=0 // pred_check_branch
    %13 = sbr.rel (0) target = $region13
  $region12: #{block_forward.23} parent=0 // pred_region
    _
  $region13: #{block_forward.23} parent=0 // pred_fallthru
    _
  %v15 = vld [vmem:[%s0] sm:$0xff]
  %v16 = vld [vmem:[%s0 + $0x8] sm:$0xff]
  %v17 = vld [vmem:[%s0 + $0x10] sm:$0xff]
  %v18 = vld [vmem:[%s0 + $0x18] sm:$0xff]
  %v19 = vld [vmem:[%s1] sm:$0xf]
  %v20 = vld [vmem:[%s1 + $0x4] sm:$0xf]
  %v21 = vld [vmem:[%s1 + $0x8] sm:$0xf]
  %v22 = vld [vmem:[%s1 + $0xc] sm:$0xf]
  %v23 = vunpack.c.l.bf16 %v19
  %v24 = vunpack.c.l.bf16 %v20
  %v25 = vunpack.c.l.bf16 %v21
  %v26 = vunpack.c.l.bf16 %v22
  %v27 = vmul.f32 %v15, %v23
  %v28 = vmul.f32 %v16, %v24
  %v29 = vmul.f32 %v17, %v25
  %v30 = vmul.f32 %v18, %v26
  %v31 = vpack.c.bf16 %v28, %v27
  %v32 = vpack.c.bf16 %v30, %v29
  %v33 = vld [vmem:[%s2] sm:$0xf]
  %v34 = vld [vmem:[%s2 + $0x4] sm:$0xf]
  %v35 = vld [vmem:[%s2 + $0x8] sm:$0xf]
  %v36 = vld [vmem:[%s2 + $0xc] sm:$0xf]
  %v37 = vld [vmem:[%s2 + $0x10] sm:$0xf]
  %v38 = vld [vmem:[%s2 + $0x14] sm:$0xf]
  %v39 = vld [vmem:[%s2 + $0x18] sm:$0xf]
  %v40 = vld [vmem:[%s2 + $0x1c] sm:$0xf]
  %v41 = vld [vmem:[%s2 + $0x20] sm:$0xf]
  %v42 = vld [vmem:[%s2 + $0x24] sm:$0xf]
  %v43 = vld [vmem:[%s2 + $0x28] sm:$0xf]
  %v44 = vld [vmem:[%s2 + $0x2c] sm:$0xf]
  %v45 = vld [vmem:[%s2 + $0x30] sm:$0xf]
  %v46 = vld [vmem:[%s2 + $0x34] sm:$0xf]
  %v47 = vld [vmem:[%s2 + $0x38] sm:$0xf]
  %v48 = vld [vmem:[%s2 + $0x3c] sm:$0xf]
  %v65 = vunpack.c.l.b16 %v33
  %v66 = vunpack.c.l.b16 %v34
  %v67 = vunpack.c.l.b16 %v35
  %v68 = vunpack.c.l.b16 %v36
  %v69 = vunpack.c.l.b16 %v37
  %v70 = vunpack.c.l.b16 %v38
  %v71 = vunpack.c.l.b16 %v39
  %v72 = vunpack.c.l.b16 %v40
  %v73 = vunpack.c.l.b16 %v41
  %v74 = vunpack.c.l.b16 %v42
  %v75 = vunpack.c.l.b16 %v43
  %v76 = vunpack.c.l.b16 %v44
  %v77 = vunpack.c.l.b16 %v45
  %v78 = vunpack.c.l.b16 %v46
  %v79 = vunpack.c.l.b16 %v47
  %v80 = vunpack.c.l.b16 %v48
  %v81 = vpack.c.b16 %v66, %v65
  %v82 = vpack.c.b16 %v68, %v67
  %v83 = vpack.c.b16 %v70, %v69
  %v84 = vpack.c.b16 %v72, %v71
  %v85 = vpack.c.b16 %v74, %v73
  %v86 = vpack.c.b16 %v76, %v75
  %v87 = vpack.c.b16 %v78, %v77
  %v88 = vpack.c.b16 %v80, %v79
  %97 = vmatprep.subr.bf16.mxu0 0
  %98 = vmatpush1.bf16.msra.mxu0 %v81
  %99 = vmatprep.subr.bf16.mxu0 0
  %100 = vmatpush1.bf16.msra.mxu0 %v82
  %101 = vmatprep.subr.bf16.mxu0 0
  %102 = vmatpush1.bf16.msra.mxu0 %v83
  %103 = vmatprep.subr.bf16.mxu0 0
  %104 = vmatpush1.bf16.msra.mxu0 %v84
  %105 = vmatprep.subr.bf16.mxu0 0
  %106 = vmatpush1.bf16.msra.mxu0 %v85
  %107 = vmatprep.subr.bf16.mxu0 0
  %108 = vmatpush1.bf16.msra.mxu0 %v86
  %109 = vmatprep.subr.bf16.mxu0 0
  %110 = vmatpush1.bf16.msra.mxu0 %v87
  %111 = vmatprep.subr.bf16.mxu0 0
  %112 = vmatpush1.bf16.msra.mxu0 %v88
  %113 = vmatprep.subr.bf16.mxu0 0
  %114 = vmatpush1.bf16.msra.mxu0 0
  %115 = vmatprep.subr.bf16.mxu0 0
  %116 = vmatpush1.bf16.msra.mxu0 0
  %117 = vmatprep.subr.bf16.mxu0 0
  %118 = vmatpush1.bf16.msra.mxu0 0
  %119 = vmatprep.subr.bf16.mxu0 0
  %120 = vmatpush1.bf16.msra.mxu0 0
  %121 = vmatprep.subr.bf16.mxu0 0
  %122 = vmatpush1.bf16.msra.mxu0 0
  %123 = vmatprep.subr.bf16.mxu0 0
  %124 = vmatpush1.bf16.msra.mxu0 0
  %125 = vmatprep.subr.bf16.mxu0 0
  %126 = vmatpush1.bf16.msra.mxu0 0
  %127 = vmatprep.subr.bf16.mxu0 0
  %128 = vmatpush1.bf16.msra.mxu0 0
  %129 = vmatprep.mubr.bf16.mxu0 0
  %130 = vmatmul.mubr.bf16.gmra.mrb[0].mxu0 %v31
  %v131 = vpop.f32.mrb[0].mxu0
  %v132 = vadd.f32 0.0, %v131
  %v133 = vpop.f32.mrb[0].mxu0
  %v134 = vpop.f32.mrb[0].mxu0
  %v135 = vadd.f32 0.0, %v134
  %v136 = vpop.f32.mrb[0].mxu0
  %137 = vmatprep.mubr.bf16.mxu0 0
  %138 = vmatmul.mubr.bf16.gmra.mrb[0].mxu0 %v32
  %v139 = vpop.f32.mrb[0].mxu0
  %v140 = vadd.f32 0.0, %v139
  %v141 = vpop.f32.mrb[0].mxu0
  %v142 = vpop.f32.mrb[0].mxu0
  %v143 = vadd.f32 0.0, %v142
  %v144 = vpop.f32.mrb[0].mxu0
  %145 = vdwg.mxu0
  %146 = vst [vmem:[%s3] sm:$0xff] %v132
  %147 = vst [vmem:[%s3 + $0x8] sm:$0xff] %v135
  %148 = vst [vmem:[%s3 + $0x10] sm:$0xff] %v140
  %149 = vst [vmem:[%s3 + $0x18] sm:$0xff] %v143
  // Predicated region
  $region14: #{block_forward.23} parent=0 // pred_check
    _
  $region15: #{block_forward.23} parent=0 // pred_check_branch
    %151 = sbr.rel (0) target = $region17
  $region16: #{block_forward.23} parent=0 // pred_region
    _
  $region17: #{block_forward.23} parent=0 // pred_fallthru
    _
  // Predicated region
  $region18: #{block_forward.23} parent=0 // pred_check
    _
  $region19: #{block_forward.23} parent=0 // pred_check_branch
    %153 = sbr.rel (0) target = $region21
  $region20: #{block_forward.23} parent=0 // pred_region
    _
  $region21: #{block_forward.23} parent=0 // pred_fallthru
    _

// kernel: block_forward.25
$region0: #{block_forward.25}
  #allocation0 [shape = 'u32[]', space=smem, size = 0x4, offset = 0x4, fixed_abs, tag = 'smem constant byte address 0x4 - core index']
  #allocation1 [shape = 'u32[144,128]{1,0:T(1,128)}', space=vmem, size = 0x12000, scoped, tag = 'internal scratch']
  #allocation2 [shape = 'f32[32,128]{1,0:T(8,128)}', space=vmem, size = 0x4000, scoped, tag = 'scratch operand']
  %s0 = inlined_call_operand.vmem [shape: bf16[32,128], index: 0, kind: input, shape index: {}]
  %s1 = inlined_call_operand.vmem [shape: bf16[32,128], index: 1, kind: input, shape index: {}]
  %s2 = inlined_call_operand.vmem [shape: f32[1,128], index: 2, kind: input, shape index: {}]
  %s3 = inlined_call_operand.vmem [shape: bf16[128,512], index: 3, kind: input, shape index: {}]
  %s4 = inlined_call_operand.vmem [shape: bf16[512,128], index: 4, kind: input, shape index: {}]
  %s5 = inlined_call_operand.vmem [shape: f32[32,128], index: 5, kind: output, shape index: {}]
  %s6 = sld [smem:[#allocation0]]
  $region38: #{block_forward.25} parent=0
    _
  %s8 = ssub.s32 1, %s6
  %s9 = scalar_select 0, %s8, %s6
  // Predicated region
  $region2: #{block_forward.25} parent=0 // pred_check
    _
  $region3: #{block_forward.25} parent=0 // pred_check_branch
    %11 = sbr.rel (0) target = $region5
  $region4: #{block_forward.25} parent=0 // pred_region
    _
  $region5: #{block_forward.25} parent=0 // pred_fallthru
    _
  // Predicated region
  $region6: #{block_forward.25} parent=0 // pred_check
    _
  $region7: #{block_forward.25} parent=0 // pred_check_branch
    %13 = sbr.rel (0) target = $region9
  $region8: #{block_forward.25} parent=0 // pred_region
    _
  $region9: #{block_forward.25} parent=0 // pred_fallthru
    _
  // Predicated region
  $region10: #{block_forward.25} parent=0 // pred_check
    _
  $region11: #{block_forward.25} parent=0 // pred_check_branch
    %15 = sbr.rel (0) target = $region13
  $region12: #{block_forward.25} parent=0 // pred_region
    _
  $region13: #{block_forward.25} parent=0 // pred_fallthru
    _
  // Predicated region
  $region14: #{block_forward.25} parent=0 // pred_check
    _
  $region15: #{block_forward.25} parent=0 // pred_check_branch
    %17 = sbr.rel (0) target = $region17
  $region16: #{block_forward.25} parent=0 // pred_region
    _
  $region17: #{block_forward.25} parent=0 // pred_fallthru
    _
  // Predicated region
  $region18: #{block_forward.25} parent=0 // pred_check
    _
  $region19: #{block_forward.25} parent=0 // pred_check_branch
    %19 = sbr.rel (0) target = $region21
  $region20: #{block_forward.25} parent=0 // pred_region
    _
  $region21: #{block_forward.25} parent=0 // pred_fallthru
    _
  %p21 = scmp.eq.s32.totalorder 0, 0
  // Predicated region
  $region22: #{block_forward.25} parent=0 // pred_check
    %p22 = pneg %p21
  $region23: #{block_forward.25} parent=0 // pred_check_branch
    %24 = sbr.rel (%p22) target = $region25
  $region24: #{block_forward.25} parent=0 // pred_region
    %25 = vst [vmem:[#allocation2] sm:$0xff] 0.0
    %26 = vst [vmem:[#allocation2 + $0x8] sm:$0xff] 0.0
    %27 = vst [vmem:[#allocation2 + $0x10] sm:$0xff] 0.0
    %28 = vst [vmem:[#allocation2 + $0x18] sm:$0xff] 0.0
  $region25: #{block_forward.25} parent=0 // pred_fallthru
    _
  %v29 = vld [vmem:[%s0] sm:$0xf]
  %v30 = vld [vmem:[%s0 + $0x4] sm:$0xf]
  %v31 = vld [vmem:[%s0 + $0x8] sm:$0xf]
  %v32 = vld [vmem:[%s0 + $0xc] sm:$0xf]
  %v33 = vunpack.c.l.bf16 %v29
  %v34 = vunpack.c.l.bf16 %v30
  %v35 = vunpack.c.l.bf16 %v31
  %v36 = vunpack.c.l.bf16 %v32
  %v37 = vld [vmem:[%s1] sm:$0xf]
  %v38 = vld [vmem:[%s1 + $0x4] sm:$0xf]
  %v39 = vld [vmem:[%s1 + $0x8] sm:$0xf]
  %v40 = vld [vmem:[%s1 + $0xc] sm:$0xf]
  %v41 = vunpack.c.l.bf16 %v37
  %v42 = vunpack.c.l.bf16 %v38
  %v43 = vunpack.c.l.bf16 %v39
  %v44 = vunpack.c.l.bf16 %v40
  %v45 = vld [vmem:[%s2] sm:$0x1]
  %v47 = vlaneseq
  %v48 = vshrl.u32 %v47, 7
  %v49 = vsub.s32 0, %v48
  %v50 = vrot.slane %v45, %v49
  %v52 = vmul.f32 %v41, %v50
  %v53 = vmul.f32 %v42, %v50
  %v54 = vmul.f32 %v43, %v50
  %v55 = vmul.f32 %v44, %v50
  %v56 = vadd.f32 %v33, %v52
  %v57 = vadd.f32 %v34, %v53
  %v58 = vadd.f32 %v35, %v54
  %v59 = vadd.f32 %v36, %v55
  %v60 = vpack.c.bf16 %v57, %v56
  %v61 = vpack.c.bf16 %v59, %v58
  %v62 = vld [vmem:[%s3] sm:$0xff]
  %v63 = vld [vmem:[%s3 + $0x8] sm:$0xff]
  %v64 = vld [vmem:[%s3 + $0x10] sm:$0xff]
  %v65 = vld [vmem:[%s3 + $0x18] sm:$0xff]
  %v66 = vld [vmem:[%s3 + $0x20] sm:$0xff]
  %v67 = vld [vmem:[%s3 + $0x28] sm:$0xff]
  %v68 = vld [vmem:[%s3 + $0x30] sm:$0xff]
  %v69 = vld [vmem:[%s3 + $0x38] sm:$0xff]
  %v70 = vld [vmem:[%s3 + $0x40] sm:$0xff]
  %v71 = vld [vmem:[%s3 + $0x48] sm:$0xff]
  %v72 = vld [vmem:[%s3 + $0x50] sm:$0xff]
  %v73 = vld [vmem:[%s3 + $0x58] sm:$0xff]
  %v74 = vld [vmem:[%s3 + $0x60] sm:$0xff]
  %v75 = vld [vmem:[%s3 + $0x68] sm:$0xff]
  %v76 = vld [vmem:[%s3 + $0x70] sm:$0xff]
  %v77 = vld [vmem:[%s3 + $0x78] sm:$0xff]
  %v78 = vld [vmem:[%s3 + $0x80] sm:$0xff]
  %v79 = vld [vmem:[%s3 + $0x88] sm:$0xff]
  %v80 = vld [vmem:[%s3 + $0x90] sm:$0xff]
  %v81 = vld [vmem:[%s3 + $0x98] sm:$0xff]
  %v82 = vld [vmem:[%s3 + $0xa0] sm:$0xff]
  %v83 = vld [vmem:[%s3 + $0xa8] sm:$0xff]
  %v84 = vld [vmem:[%s3 + $0xb0] sm:$0xff]
  %v85 = vld [vmem:[%s3 + $0xb8] sm:$0xff]
  %v86 = vld [vmem:[%s3 + $0xc0] sm:$0xff]
  %v87 = vld [vmem:[%s3 + $0xc8] sm:$0xff]
  %v88 = vld [vmem:[%s3 + $0xd0] sm:$0xff]
  %v89 = vld [vmem:[%s3 + $0xd8] sm:$0xff]
  %v90 = vld [vmem:[%s3 + $0xe0] sm:$0xff]
  %v91 = vld [vmem:[%s3 + $0xe8] sm:$0xff]
  %v92 = vld [vmem:[%s3 + $0xf0] sm:$0xff]
  %v93 = vld [vmem:[%s3 + $0xf8] sm:$0xff]
  %v126 = vunpack.c.l.b16 %v62
  %v127 = vunpack.c.h.b16 %v62
  %v128 = vunpack.c.l.b16 %v63
  %v129 = vunpack.c.h.b16 %v63
  %v130 = vunpack.c.l.b16 %v64
  %v131 = vunpack.c.h.b16 %v64
  %v132 = vunpack.c.l.b16 %v65
  %v133 = vunpack.c.h.b16 %v65
  %v134 = vunpack.c.l.b16 %v66
  %v135 = vunpack.c.h.b16 %v66
  %v136 = vunpack.c.l.b16 %v67
  %v137 = vunpack.c.h.b16 %v67
  %v138 = vunpack.c.l.b16 %v68
  %v139 = vunpack.c.h.b16 %v68
  %v140 = vunpack.c.l.b16 %v69
  %v141 = vunpack.c.h.b16 %v69
  %v142 = vunpack.c.l.b16 %v70
  %v143 = vunpack.c.h.b16 %v70
  %v144 = vunpack.c.l.b16 %v71
  %v145 = vunpack.c.h.b16 %v71
  %v146 = vunpack.c.l.b16 %v72
  %v147 = vunpack.c.h.b16 %v72
  %v148 = vunpack.c.l.b16 %v73
  %v149 = vunpack.c.h.b16 %v73
  %v150 = vunpack.c.l.b16 %v74
  %v151 = vunpack.c.h.b16 %v74
  %v152 = vunpack.c.l.b16 %v75
  %v153 = vunpack.c.h.b16 %v75
  %v154 = vunpack.c.l.b16 %v76
  %v155 = vunpack.c.h.b16 %v76
  %v156 = vunpack.c.l.b16 %v77
  %v157 = vunpack.c.h.b16 %v77
  %v158 = vunpack.c.l.b16 %v78
  %v159 = vunpack.c.h.b16 %v78
  %v160 = vunpack.c.l.b16 %v79
  %v161 = vunpack.c.h.b16 %v79
  %v162 = vunpack.c.l.b16 %v80
  %v163 = vunpack.c.h.b16 %v80
  %v164 = vunpack.c.l.b16 %v81
  %v165 = vunpack.c.h.b16 %v81
  %v166 = vunpack.c.l.b16 %v82
  %v167 = vunpack.c.h.b16 %v82
  %v168 = vunpack.c.l.b16 %v83
  %v169 = vunpack.c.h.b16 %v83
  %v170 = vunpack.c.l.b16 %v84
  %v171 = vunpack.c.h.b16 %v84
  %v172 = vunpack.c.l.b16 %v85
  %v173 = vunpack.c.h.b16 %v85
  %v174 = vunpack.c.l.b16 %v86
  %v175 = vunpack.c.h.b16 %v86
  %v176 = vunpack.c.l.b16 %v87
  %v177 = vunpack.c.h.b16 %v87
  %v178 = vunpack.c.l.b16 %v88
  %v179 = vunpack.c.h.b16 %v88
  %v180 = vunpack.c.l.b16 %v89
  %v181 = vunpack.c.h.b16 %v89
  %v182 = vunpack.c.l.b16 %v90
  %v183 = vunpack.c.h.b16 %v90
  %v184 = vunpack.c.l.b16 %v91
  %v185 = vunpack.c.h.b16 %v91
  %v186 = vunpack.c.l.b16 %v92
  %v187 = vunpack.c.h.b16 %v92
  %v188 = vunpack.c.l.b16 %v93
  %v189 = vunpack.c.h.b16 %v93
  %v190 = vpack.c.b16 %v130, %v126
  %v191 = vpack.c.b16 %v131, %v127
  %v192 = vpack.c.b16 %v132, %v128
  %v193 = vpack.c.b16 %v133, %v129
  %v194 = vpack.c.b16 %v138, %v134
  %v195 = vpack.c.b16 %v139, %v135
  %v196 = vpack.c.b16 %v140, %v136
  %v197 = vpack.c.b16 %v141, %v137
  %v198 = vpack.c.b16 %v146, %v142
  %v199 = vpack.c.b16 %v147, %v143
  %v200 = vpack.c.b16 %v148, %v144
  %v201 = vpack.c.b16 %v149, %v145
  %v202 = vpack.c.b16 %v154, %v150
  %v203 = vpack.c.b16 %v155, %v151
  %v204 = vpack.c.b16 %v156, %v152
  %v205 = vpack.c.b16 %v157, %v153
  %v206 = vpack.c.b16 %v162, %v158
  %v207 = vpack.c.b16 %v163, %v159
  %v208 = vpack.c.b16 %v164, %v160
  %v209 = vpack.c.b16 %v165, %v161
  %v210 = vpack.c.b16 %v170, %v166
  %v211 = vpack.c.b16 %v171, %v167
  %v212 = vpack.c.b16 %v172, %v168
  %v213 = vpack.c.b16 %v173, %v169
  %v214 = vpack.c.b16 %v178, %v174
  %v215 = vpack.c.b16 %v179, %v175
  %v216 = vpack.c.b16 %v180, %v176
  %v217 = vpack.c.b16 %v181, %v177
  %v218 = vpack.c.b16 %v186, %v182
  %v219 = vpack.c.b16 %v187, %v183
  %v220 = vpack.c.b16 %v188, %v184
  %v221 = vpack.c.b16 %v189, %v185
  %254 = vmatprep.subr.bf16.mxu0 %v191
  %255 = vmatpush1.bf16.msra.mxu0 %v190
  %256 = vmatprep.subr.bf16.mxu0 %v195
  %257 = vmatpush1.bf16.msra.mxu0 %v194
  %258 = vmatprep.subr.bf16.mxu0 %v199
  %259 = vmatpush1.bf16.msra.mxu0 %v198
  %260 = vmatprep.subr.bf16.mxu0 %v203
  %261 = vmatpush1.bf16.msra.mxu0 %v202
  %262 = vmatprep.subr.bf16.mxu0 %v207
  %263 = vmatpush1.bf16.msra.mxu0 %v206
  %264 = vmatprep.subr.bf16.mxu0 %v211
  %265 = vmatpush1.bf16.msra.mxu0 %v210
  %266 = vmatprep.subr.bf16.mxu0 %v215
  %267 = vmatpush1.bf16.msra.mxu0 %v214
  %268 = vmatprep.subr.bf16.mxu0 %v219
  %269 = vmatpush1.bf16.msra.mxu0 %v218
  %270 = vmatprep.subr.bf16.mxu0 0
  %271 = vmatpush1.bf16.msra.mxu0 0
  %272 = vmatprep.subr.bf16.mxu0 0
  %273 = vmatpush1.bf16.msra.mxu0 0
  %274 = vmatprep.subr.bf16.mxu0 0
  %275 = vmatpush1.bf16.msra.mxu0 0
  %276 = vmatprep.subr.bf16.mxu0 0
  %277 = vmatpush1.bf16.msra.mxu0 0
  %278 = vmatprep.subr.bf16.mxu0 0
  %279 = vmatpush1.bf16.msra.mxu0 0
  %280 = vmatprep.subr.bf16.mxu0 0
  %281 = vmatpush1.bf16.msra.mxu0 0
  %282 = vmatprep.subr.bf16.mxu0 0
  %283 = vmatpush1.bf16.msra.mxu0 0
  %284 = vmatprep.subr.bf16.mxu0 0
  %285 = vmatpush1.bf16.msra.mxu0 0
  %286 = vmatprep.mubr.bf16.mxu0 0
  %287 = vmatmul.mubr.bf16.gmra.mrb[0].mxu0 %v60
  %v288 = vpop.f32.mrb[0].mxu0
  %v289 = vadd.f32 0.0, %v288
  %v290 = vpop.f32.mrb[0].mxu0
  %v291 = vadd.f32 0.0, %v290
  %v292 = vpop.f32.mrb[0].mxu0
  %v293 = vadd.f32 0.0, %v292
  %v294 = vpop.f32.mrb[0].mxu0
  %v295 = vadd.f32 0.0, %v294
  %296 = vmatprep.mubr.bf16.mxu0 0
  %297 = vmatmul.mubr.bf16.gmra.mrb[0].mxu0 %v61
  %v298 = vpop.f32.mrb[0].mxu0
  %v299 = vadd.f32 0.0, %v298
  %v300 = vpop.f32.mrb[0].mxu0
  %v301 = vadd.f32 0.0, %v300
  %v302 = vpop.f32.mrb[0].mxu0
  %v303 = vadd.f32 0.0, %v302
  %v304 = vpop.f32.mrb[0].mxu0
  %v305 = vadd.f32 0.0, %v304
  %306 = vdwg.mxu0
  %307 = vmatprep.subr.bf16.mxu0 %v193
  %308 = vmatpush1.bf16.msra.mxu0 %v192
  %309 = vmatprep.subr.bf16.mxu0 %v197
  %310 = vmatpush1.bf16.msra.mxu0 %v196
  %311 = vmatprep.subr.bf16.mxu0 %v201
  %312 = vmatpush1.bf16.msra.mxu0 %v200
  %313 = vmatprep.subr.bf16.mxu0 %v205
  %314 = vmatpush1.bf16.msra.mxu0 %v204
  %315 = vmatprep.subr.bf16.mxu0 %v209
  %316 = vmatpush1.bf16.msra.mxu0 %v208
  %317 = vmatprep.subr.bf16.mxu0 %v213
  %318 = vmatpush1.bf16.msra.mxu0 %v212
  %319 = vmatprep.subr.bf16.mxu0 %v217
  %320 = vmatpush1.bf16.msra.mxu0 %v216
  %321 = vmatprep.subr.bf16.mxu0 %v221
  %322 = vmatpush1.bf16.msra.mxu0 %v220
  %323 = vmatprep.subr.bf16.mxu0 0
  %324 = vmatpush1.bf16.msra.mxu0 0
  %325 = vmatprep.subr.bf16.mxu0 0
  %326 = vmatpush1.bf16.msra.mxu0 0
  %327 = vmatprep.subr.bf16.mxu0 0
  %328 = vmatpush1.bf16.msra.mxu0 0
  %329 = vmatprep.subr.bf16.mxu0 0
  %330 = vmatpush1.bf16.msra.mxu0 0
  %331 = vmatprep.subr.bf16.mxu0 0
  %332 = vmatpush1.bf16.msra.mxu0 0
  %333 = vmatprep.subr.bf16.mxu0 0
  %334 = vmatpush1.bf16.msra.mxu0 0
  %335 = vmatprep.subr.bf16.mxu0 0
  %336 = vmatpush1.bf16.msra.mxu0 0
  %337 = vmatprep.subr.bf16.mxu0 0
  %338 = vmatpush1.bf16.msra.mxu0 0
  %339 = vmatprep.mubr.bf16.mxu0 0
  %340 = vmatmul.mubr.bf16.gmra.mrb[0].mxu0 %v60
  %v341 = vpop.f32.mrb[0].mxu0
  %v342 = vadd.f32 0.0, %v341
  %v343 = vpop.f32.mrb[0].mxu0
  %v344 = vadd.f32 0.0, %v343
  %v345 = vpop.f32.mrb[0].mxu0
  %v346 = vadd.f32 0.0, %v345
  %v347 = vpop.f32.mrb[0].mxu0
  %v348 = vadd.f32 0.0, %v347
  %349 = vmatprep.mubr.bf16.mxu0 0
  %350 = vmatmul.mubr.bf16.gmra.mrb[0].mxu0 %v61
  %v351 = vpop.f32.mrb[0].mxu0
  %v352 = vadd.f32 0.0, %v351
  %v353 = vpop.f32.mrb[0].mxu0
  %v354 = vadd.f32 0.0, %v353
  %v355 = vpop.f32.mrb[0].mxu0
  %v356 = vadd.f32 0.0, %v355
  %v357 = vpop.f32.mrb[0].mxu0
  %v358 = vadd.f32 0.0, %v357
  %359 = vdwg.mxu0
  %v360 = vmax.f32 %v289, 0.0
  %v361 = vmax.f32 %v291, 0.0
  %v362 = vmax.f32 %v342, 0.0
  %v363 = vmax.f32 %v344, 0.0
  %v364 = vmax.f32 %v293, 0.0
  %v365 = vmax.f32 %v295, 0.0
  %v366 = vmax.f32 %v346, 0.0
  %v367 = vmax.f32 %v348, 0.0
  %v368 = vmax.f32 %v299, 0.0
  %v369 = vmax.f32 %v301, 0.0
  %v370 = vmax.f32 %v352, 0.0
  %v371 = vmax.f32 %v354, 0.0
  %v372 = vmax.f32 %v303, 0.0
  %v373 = vmax.f32 %v305, 0.0
  %v374 = vmax.f32 %v356, 0.0
  %v375 = vmax.f32 %v358, 0.0
  %v376 = vmul.f32 %v360, %v360
  %v377 = vmul.f32 %v361, %v361
  %v378 = vmul.f32 %v362, %v362
  %v379 = vmul.f32 %v363, %v363
  %v380 = vmul.f32 %v364, %v364
  %v381 = vmul.f32 %v365, %v365
  %v382 = vmul.f32 %v366, %v366
  %v383 = vmul.f32 %v367, %v367
  %v384 = vmul.f32 %v368, %v368
  %v385 = vmul.f32 %v369, %v369
  %v386 = vmul.f32 %v370, %v370
  %v387 = vmul.f32 %v371, %v371
  %v388 = vmul.f32 %v372, %v372
  %v389 = vmul.f32 %v373, %v373
  %v390 = vmul.f32 %v374, %v374
  %v391 = vmul.f32 %v375, %v375
  %v392 = vld [vmem:[#allocation2] sm:$0xff]
  %v393 = vld [vmem:[#allocation2 + $0x8] sm:$0xff]
  %v394 = vld [vmem:[#allocation2 + $0x10] sm:$0xff]
  %v395 = vld [vmem:[#allocation2 + $0x18] sm:$0xff]
  %v396 = vpack.c.bf16 %v380, %v376
  %v397 = vpack.c.bf16 %v381, %v377
  %v398 = vpack.c.bf16 %v382, %v378
  %v399 = vpack.c.bf16 %v383, %v379
  %v400 = vpack.c.bf16 %v388, %v384
  %v401 = vpack.c.bf16 %v389, %v385
  %v402 = vpack.c.bf16 %v390, %v386
  %v403 = vpack.c.bf16 %v391, %v387
  %v404 = vld [vmem:[%s4] sm:$0xf]
  %v405 = vld [vmem:[%s4 + $0x4] sm:$0xf]
  %v406 = vld [vmem:[%s4 + $0x8] sm:$0xf]
  %v407 = vld [vmem:[%s4 + $0xc] sm:$0xf]
  %v408 = vld [vmem:[%s4 + $0x10] sm:$0xf]
  %v409 = vld [vmem:[%s4 + $0x14] sm:$0xf]
  %v410 = vld [vmem:[%s4 + $0x18] sm:$0xf]
  %v411 = vld [vmem:[%s4 + $0x1c] sm:$0xf]
  %v412 = vld [vmem:[%s4 + $0x20] sm:$0xf]
  %v413 = vld [vmem:[%s4 + $0x24] sm:$0xf]
  %v414 = vld [vmem:[%s4 + $0x28] sm:$0xf]
  %v415 = vld [vmem:[%s4 + $0x2c] sm:$0xf]
  %v416 = vld [vmem:[%s4 + $0x30] sm:$0xf]
  %v417 = vld [vmem:[%s4 + $0x34] sm:$0xf]
  %v418 = vld [vmem:[%s4 + $0x38] sm:$0xf]
  %v419 = vld [vmem:[%s4 + $0x3c] sm:$0xf]
  %v420 = vld [vmem:[%s4 + $0x40] sm:$0xf]
  %v421 = vld [vmem:[%s4 + $0x44] sm:$0xf]
  %v422 = vld [vmem:[%s4 + $0x48] sm:$0xf]
  %v423 = vld [vmem:[%s4 + $0x4c] sm:$0xf]
  %v424 = vld [vmem:[%s4 + $0x50] sm:$0xf]
  %v425 = vld [vmem:[%s4 + $0x54] sm:$0xf]
  %v426 = vld [vmem:[%s4 + $0x58] sm:$0xf]
  %v427 = vld [vmem:[%s4 + $0x5c] sm:$0xf]
  %v428 = vld [vmem:[%s4 + $0x60] sm:$0xf]
  %v429 = vld [vmem:[%s4 + $0x64] sm:$0xf]
  %v430 = vld [vmem:[%s4 + $0x68] sm:$0xf]
  %v431 = vld [vmem:[%s4 + $0x6c] sm:$0xf]
  %v432 = vld [vmem:[%s4 + $0x70] sm:$0xf]
  %v433 = vld [vmem:[%s4 + $0x74] sm:$0xf]
  %v434 = vld [vmem:[%s4 + $0x78] sm:$0xf]
  %v435 = vld [vmem:[%s4 + $0x7c] sm:$0xf]
  %v436 = vld [vmem:[%s4 + $0x80] sm:$0xf]
  %v437 = vld [vmem:[%s4 + $0x84] sm:$0xf]
  %v438 = vld [vmem:[%s4 + $0x88] sm:$0xf]
  %v439 = vld [vmem:[%s4 + $0x8c] sm:$0xf]
  %v440 = vld [vmem:[%s4 + $0x90] sm:$0xf]
  %v441 = vld [vmem:[%s4 + $0x94] sm:$0xf]
  %v442 = vld [vmem:[%s4 + $0x98] sm:$0xf]
  %v443 = vld [vmem:[%s4 + $0x9c] sm:$0xf]
  %v444 = vld [vmem:[%s4 + $0xa0] sm:$0xf]
  %v445 = vld [vmem:[%s4 + $0xa4] sm:$0xf]
  %v446 = vld [vmem:[%s4 + $0xa8] sm:$0xf]
  %v447 = vld [vmem:[%s4 + $0xac] sm:$0xf]
  %v448 = vld [vmem:[%s4 + $0xb0] sm:$0xf]
  %v449 = vld [vmem:[%s4 + $0xb4] sm:$0xf]
  %v450 = vld [vmem:[%s4 + $0xb8] sm:$0xf]
  %v451 = vld [vmem:[%s4 + $0xbc] sm:$0xf]
  %v452 = vld [vmem:[%s4 + $0xc0] sm:$0xf]
  %v453 = vld [vmem:[%s4 + $0xc4] sm:$0xf]
  %v454 = vld [vmem:[%s4 + $0xc8] sm:$0xf]
  %v455 = vld [vmem:[%s4 + $0xcc] sm:$0xf]
  %v456 = vld [vmem:[%s4 + $0xd0] sm:$0xf]
  %v457 = vld [vmem:[%s4 + $0xd4] sm:$0xf]
  %v458 = vld [vmem:[%s4 + $0xd8] sm:$0xf]
  %v459 = vld [vmem:[%s4 + $0xdc] sm:$0xf]
  %v460 = vld [vmem:[%s4 + $0xe0] sm:$0xf]
  %v461 = vld [vmem:[%s4 + $0xe4] sm:$0xf]
  %v462 = vld [vmem:[%s4 + $0xe8] sm:$0xf]
  %v463 = vld [vmem:[%s4 + $0xec] sm:$0xf]
  %v464 = vld [vmem:[%s4 + $0xf0] sm:$0xf]
  %v465 = vld [vmem:[%s4 + $0xf4] sm:$0xf]
  %v466 = vld [vmem:[%s4 + $0xf8] sm:$0xf]
  %v467 = vld [vmem:[%s4 + $0xfc] sm:$0xf]
  %v532 = vunpack.c.l.b16 %v404
  %v533 = vunpack.c.l.b16 %v405
  %v534 = vunpack.c.l.b16 %v406
  %v535 = vunpack.c.l.b16 %v407
  %v536 = vunpack.c.l.b16 %v408
  %v537 = vunpack.c.l.b16 %v409
  %v538 = vunpack.c.l.b16 %v410
  %v539 = vunpack.c.l.b16 %v411
  %v540 = vunpack.c.l.b16 %v412
  %v541 = vunpack.c.l.b16 %v413
  %v542 = vunpack.c.l.b16 %v414
  %v543 = vunpack.c.l.b16 %v415
  %v544 = vunpack.c.l.b16 %v416
  %v545 = vunpack.c.l.b16 %v417
  %v546 = vunpack.c.l.b16 %v418
  %v547 = vunpack.c.l.b16 %v419
  %v548 = vunpack.c.l.b16 %v420
  %v549 = vunpack.c.l.b16 %v421
  %v550 = vunpack.c.l.b16 %v422
  %v551 = vunpack.c.l.b16 %v423
  %v552 = vunpack.c.l.b16 %v424
  %v553 = vunpack.c.l.b16 %v425
  %v554 = vunpack.c.l.b16 %v426
  %v555 = vunpack.c.l.b16 %v427
  %v556 = vunpack.c.l.b16 %v428
  %v557 = vunpack.c.l.b16 %v429
  %v558 = vunpack.c.l.b16 %v430
  %v559 = vunpack.c.l.b16 %v431
  %v560 = vunpack.c.l.b16 %v432
  %v561 = vunpack.c.l.b16 %v433
  %v562 = vunpack.c.l.b16 %v434
  %v563 = vunpack.c.l.b16 %v435
  %v564 = vunpack.c.l.b16 %v436
  %v565 = vunpack.c.l.b16 %v437
  %v566 = vunpack.c.l.b16 %v438
  %v567 = vunpack.c.l.b16 %v439
  %v568 = vunpack.c.l.b16 %v440
  %v569 = vunpack.c.l.b16 %v441
  %v570 = vunpack.c.l.b16 %v442
  %v571 = vunpack.c.l.b16 %v443
  %v572 = vunpack.c.l.b16 %v444
  %v573 = vunpack.c.l.b16 %v445
  %v574 = vunpack.c.l.b16 %v446
  %v575 = vunpack.c.l.b16 %v447
  %v576 = vunpack.c.l.b16 %v448
  %v577 = vunpack.c.l.b16 %v449
  %v578 = vunpack.c.l.b16 %v450
  %v579 = vunpack.c.l.b16 %v451
  %v580 = vunpack.c.l.b16 %v452
  %v581 = vunpack.c.l.b16 %v453
  %v582 = vunpack.c.l.b16 %v454
  %v583 = vunpack.c.l.b16 %v455
  %v584 = vunpack.c.l.b16 %v456
  %v585 = vunpack.c.l.b16 %v457
  %v586 = vunpack.c.l.b16 %v458
  %v587 = vunpack.c.l.b16 %v459
  %v588 = vunpack.c.l.b16 %v460
  %v589 = vunpack.c.l.b16 %v461
  %v590 = vunpack.c.l.b16 %v462
  %v591 = vunpack.c.l.b16 %v463
  %v592 = vunpack.c.l.b16 %v464
  %v593 = vunpack.c.l.b16 %v465
  %v594 = vunpack.c.l.b16 %v466
  %v595 = vunpack.c.l.b16 %v467
  %v596 = vpack.c.b16 %v533, %v532
  %v597 = vpack.c.b16 %v535, %v534
  %v598 = vpack.c.b16 %v537, %v536
  %v599 = vpack.c.b16 %v539, %v538
  %v600 = vpack.c.b16 %v541, %v540
  %v601 = vpack.c.b16 %v543, %v542
  %v602 = vpack.c.b16 %v545, %v544
  %v603 = vpack.c.b16 %v547, %v546
  %v604 = vpack.c.b16 %v549, %v548
  %v605 = vpack.c.b16 %v551, %v550
  %v606 = vpack.c.b16 %v553, %v552
  %v607 = vpack.c.b16 %v555, %v554
  %v608 = vpack.c.b16 %v557, %v556
  %v609 = vpack.c.b16 %v559, %v558
  %v610 = vpack.c.b16 %v561, %v560
  %v611 = vpack.c.b16 %v563, %v562
  %v612 = vpack.c.b16 %v565, %v564
  %v613 = vpack.c.b16 %v567, %v566
  %v614 = vpack.c.b16 %v569, %v568
  %v615 = vpack.c.b16 %v571, %v570
  %v616 = vpack.c.b16 %v573, %v572
  %v617 = vpack.c.b16 %v575, %v574
  %v618 = vpack.c.b16 %v577, %v576
  %v619 = vpack.c.b16 %v579, %v578
  %v620 = vpack.c.b16 %v581, %v580
  %v621 = vpack.c.b16 %v583, %v582
  %v622 = vpack.c.b16 %v585, %v584
  %v623 = vpack.c.b16 %v587, %v586
  %v624 = vpack.c.b16 %v589, %v588
  %v625 = vpack.c.b16 %v591, %v590
  %v626 = vpack.c.b16 %v593, %v592
  %v627 = vpack.c.b16 %v595, %v594
  %660 = vmatprep.subr.bf16.mxu0 0
  %661 = vmatpush1.bf16.msra.mxu0 %v596
  %662 = vmatprep.subr.bf16.mxu0 0
  %663 = vmatpush1.bf16.msra.mxu0 %v597
  %664 = vmatprep.subr.bf16.mxu0 0
  %665 = vmatpush1.bf16.msra.mxu0 %v598
  %666 = vmatprep.subr.bf16.mxu0 0
  %667 = vmatpush1.bf16.msra.mxu0 %v599
  %668 = vmatprep.subr.bf16.mxu0 0
  %669 = vmatpush1.bf16.msra.mxu0 %v600
  %670 = vmatprep.subr.bf16.mxu0 0
  %671 = vmatpush1.bf16.msra.mxu0 %v601
  %672 = vmatprep.subr.bf16.mxu0 0
  %673 = vmatpush1.bf16.msra.mxu0 %v602
  %674 = vmatprep.subr.bf16.mxu0 0
  %675 = vmatpush1.bf16.msra.mxu0 %v603
  %676 = vmatprep.subr.bf16.mxu0 0
  %677 = vmatpush1.bf16.msra.mxu0 %v604
  %678 = vmatprep.subr.bf16.mxu0 0
  %679 = vmatpush1.bf16.msra.mxu0 %v605
  %680 = vmatprep.subr.bf16.mxu0 0
  %681 = vmatpush1.bf16.msra.mxu0 %v606
  %682 = vmatprep.subr.bf16.mxu0 0
  %683 = vmatpush1.bf16.msra.mxu0 %v607
  %684 = vmatprep.subr.bf16.mxu0 0
  %685 = vmatpush1.bf16.msra.mxu0 %v608
  %686 = vmatprep.subr.bf16.mxu0 0
  %687 = vmatpush1.bf16.msra.mxu0 %v609
  %688 = vmatprep.subr.bf16.mxu0 0
  %689 = vmatpush1.bf16.msra.mxu0 %v610
  %690 = vmatprep.subr.bf16.mxu0 0
  %691 = vmatpush1.bf16.msra.mxu0 %v611
  %692 = vmatprep.mubr.bf16.mxu0 %v397
  %693 = vmatmul.mubr.bf16.gmra.mrb[0].mxu0 %v396
  %v694 = vpop.f32.mrb[0].mxu0
  %v695 = vadd.f32 0.0, %v694
  %v696 = vpop.f32.mrb[0].mxu0
  %v697 = vpop.f32.mrb[0].mxu0
  %v698 = vadd.f32 0.0, %v697
  %v699 = vpop.f32.mrb[0].mxu0
  %700 = vmatprep.mubr.bf16.mxu0 %v401
  %701 = vmatmul.mubr.bf16.gmra.mrb[0].mxu0 %v400
  %v702 = vpop.f32.mrb[0].mxu0
  %v703 = vadd.f32 0.0, %v702
  %v704 = vpop.f32.mrb[0].mxu0
  %v705 = vpop.f32.mrb[0].mxu0
  %v706 = vadd.f32 0.0, %v705
  %v707 = vpop.f32.mrb[0].mxu0
  %708 = vdwg.mxu0
  %709 = vmatprep.subr.bf16.mxu0 0
  %710 = vmatpush1.bf16.msra.mxu0 %v612
  %711 = vmatprep.subr.bf16.mxu0 0
  %712 = vmatpush1.bf16.msra.mxu0 %v613
  %713 = vmatprep.subr.bf16.mxu0 0
  %714 = vmatpush1.bf16.msra.mxu0 %v614
  %715 = vmatprep.subr.bf16.mxu0 0
  %716 = vmatpush1.bf16.msra.mxu0 %v615
  %717 = vmatprep.subr.bf16.mxu0 0
  %718 = vmatpush1.bf16.msra.mxu0 %v616
  %719 = vmatprep.subr.bf16.mxu0 0
  %720 = vmatpush1.bf16.msra.mxu0 %v617
  %721 = vmatprep.subr.bf16.mxu0 0
  %722 = vmatpush1.bf16.msra.mxu0 %v618
  %723 = vmatprep.subr.bf16.mxu0 0
  %724 = vmatpush1.bf16.msra.mxu0 %v619
  %725 = vmatprep.subr.bf16.mxu0 0
  %726 = vmatpush1.bf16.msra.mxu0 %v620
  %727 = vmatprep.subr.bf16.mxu0 0
  %728 = vmatpush1.bf16.msra.mxu0 %v621
  %729 = vmatprep.subr.bf16.mxu0 0
  %730 = vmatpush1.bf16.msra.mxu0 %v622
  %731 = vmatprep.subr.bf16.mxu0 0
  %732 = vmatpush1.bf16.msra.mxu0 %v623
  %733 = vmatprep.subr.bf16.mxu0 0
  %734 = vmatpush1.bf16.msra.mxu0 %v624
  %735 = vmatprep.subr.bf16.mxu0 0
  %736 = vmatpush1.bf16.msra.mxu0 %v625
  %737 = vmatprep.subr.bf16.mxu0 0
  %738 = vmatpush1.bf16.msra.mxu0 %v626
  %739 = vmatprep.subr.bf16.mxu0 0
  %740 = vmatpush1.bf16.msra.mxu0 %v627
  %741 = vmatprep.mubr.bf16.mxu0 %v399
  %742 = vmatmul.mubr.bf16.gmra.mrb[0].mxu0 %v398
  %v743 = vpop.f32.mrb[0].mxu0
  %v744 = vadd.f32 %v695, %v743
  %v745 = vpop.f32.mrb[0].mxu0
  %v746 = vpop.f32.mrb[0].mxu0
  %v747 = vadd.f32 %v698, %v746
  %v748 = vpop.f32.mrb[0].mxu0
  %749 = vmatprep.mubr.bf16.mxu0 %v403
  %750 = vmatmul.mubr.bf16.gmra.mrb[0].mxu0 %v402
  %v751 = vpop.f32.mrb[0].mxu0
  %v752 = vadd.f32 %v703, %v751
  %v753 = vpop.f32.mrb[0].mxu0
  %v754 = vpop.f32.mrb[0].mxu0
  %v755 = vadd.f32 %v706, %v754
  %v756 = vpop.f32.mrb[0].mxu0
  %757 = vdwg.mxu0
  %v758 = vadd.f32 %v392, %v744
  %v759 = vadd.f32 %v393, %v747
  %v760 = vadd.f32 %v394, %v752
  %v761 = vadd.f32 %v395, %v755
  %762 = vst [vmem:[#allocation2] sm:$0xff] %v758
  %763 = vst [vmem:[#allocation2 + $0x8] sm:$0xff] %v759
  %764 = vst [vmem:[#allocation2 + $0x10] sm:$0xff] %v760
  %765 = vst [vmem:[#allocation2 + $0x18] sm:$0xff] %v761
  // Predicated region
  $region26: #{block_forward.25} parent=0 // pred_check
    %p766 = pneg %p21
  $region27: #{block_forward.25} parent=0 // pred_check_branch
    %768 = sbr.rel (%p766) target = $region29
  $region28: #{block_forward.25} parent=0 // pred_region
    %v769 = vld [vmem:[#allocation2] sm:$0xff]
    %v770 = vld [vmem:[#allocation2 + $0x8] sm:$0xff]
    %v771 = vld [vmem:[#allocation2 + $0x10] sm:$0xff]
    %v772 = vld [vmem:[#allocation2 + $0x18] sm:$0xff]
    %773 = vst [vmem:[%s5] sm:$0xff] %v769
    %774 = vst [vmem:[%s5 + $0x8] sm:$0xff] %v770
    %775 = vst [vmem:[%s5 + $0x10] sm:$0xff] %v771
    %776 = vst [vmem:[%s5 + $0x18] sm:$0xff] %v772
  $region29: #{block_forward.25} parent=0 // pred_fallthru
    _
  // Predicated region
  $region30: #{block_forward.25} parent=0 // pred_check
    _
  $region31: #{block_forward.25} parent=0 // pred_check_branch
    %778 = sbr.rel (0) target = $region33
  $region32: #{block_forward.25} parent=0 // pred_region
    _
  $region33: #{block_forward.25} parent=0 // pred_fallthru
    _
  // Predicated region
  $region34: #{block_forward.25} parent=0 // pred_check
    _
  $region35: #{block_forward.25} parent=0 // pred_check_branch
    %780 = sbr.rel (0) target = $region37
  $region36: #{block_forward.25} parent=0 // pred_region
    _
  $region37: #{block_forward.25} parent=0 // pred_fallthru
    _

// kernel: block_forward.21
$region0: #{block_forward.21}
  #allocation0 [shape = 'u32[]', space=smem, size = 0x4, offset = 0x4, fixed_abs, tag = 'smem constant byte address 0x4 - core index']
  #allocation1 [shape = 'u32[144,128]{1,0:T(1,128)}', space=vmem, size = 0x12000, scoped, tag = 'internal scratch']
  %s0 = inlined_call_operand.vmem [shape: bf16[2,16,128], index: 0, kind: input, shape index: {}]
  %s1 = inlined_call_operand.vmem [shape: bf16[2,16,128], index: 1, kind: input, shape index: {}]
  %s2 = inlined_call_operand.vmem [shape: bf16[2,16,128], index: 2, kind: input, shape index: {}]
  %s3 = inlined_call_operand.vmem [shape: bf16[2,16,128], index: 3, kind: input, shape index: {}]
  %s4 = inlined_call_operand.vmem [shape: bf16[2,16,128], index: 4, kind: input, shape index: {}]
  %s5 = inlined_call_operand.vmem [shape: bf16[2,16,128], index: 5, kind: input, shape index: {}]
  %s6 = inlined_call_operand.vmem [shape: bf16[2,16,128], index: 6, kind: output, shape index: {}]
  %s7 = sld [smem:[#allocation0]]
  $region57: #{block_forward.21} parent=0
    _
  %s9 = ssub.s32 1, %s7
  %s10 = scalar_select 0, %s9, %s7
  loop: start=0, step=1, limit=4
  $region2: #{block_forward.21} parent=0 // loop_pre_header
    _
  $region3: #{block_forward.21} parent=0 // loop_header
    %s12 = sphi 0, %s16
    %p13 = scmp.ge.s32.totalorder %s12, 4
    %s19 = sphi 0, %s31
    %s20 = sphi 0, %s27
    %s21 = sphi 0, %s19
    %s22 = sphi 0, %s20
    %s23 = sphi 0, %s21
    %s24 = sphi 0, %s22
    %s36 = sphi 0, %s38
    %s39 = sphi 0, %s36
    %s40 = sphi 0, %s39
    %s56 = sphi 0, %s40
    %s64 = sphi 0, %s66
    %s67 = sphi 0, %s64
    %s68 = sphi 0, %s67
    %s84 = sphi 0, %s68
    %s92 = sphi 0, %s94
    %s95 = sphi 0, %s92
    %s96 = sphi 0, %s95
    %s112 = sphi 0, %s96
    %s120 = sphi 0, %s122
    %s123 = sphi 0, %s120
    %s124 = sphi 0, %s123
    %s140 = sphi 0, %s124
    %s148 = sphi 0, %s150
    %s151 = sphi 0, %s148
    %s152 = sphi 0, %s151
    %s168 = sphi 0, %s152
    %s176 = sphi 0, %s178
    %s179 = sphi 0, %s176
    %s180 = sphi 0, %s179
    %s196 = sphi 0, %s180
    %s204 = sphi 0, %s206
    %s207 = sphi 0, %s204
    %s208 = sphi 0, %s207
    %s224 = sphi 0, %s208
  $region4: #{block_forward.21} parent=0 // loop_header_branch
    %15 = sbr.rel (%p13) target = $region8
  $region5: #{block_forward.21} parent=0 // loop_body
    %s17 = ssub.s32 %s12, 1
    %s18 = ssub.s32 %s12, 2
    %s25 = sadd.s32 1, %s20
    %p26 = scmp.ge.s32.totalorder %s25, 1
    %s27 = scalar_select %p26, 0, %s25
    %s28 = sadd.s32 1, %s19
    %s29 = scalar_select %p26, %s28, %s19
    %p30 = scmp.ge.s32.totalorder %s29, 2
    %s31 = scalar_select %p30, 0, %s29
    %s32 = ssub.s32 %s19, %s31
    %s33 = ssub.s32 %s20, %s27
    %s34 = sor.u32 %s32, %s33
    %p35 = scmp.eq.s32.totalorder %s34, 0
    %s37 = sadd.s32 %s36, 1
    %s38 = scalar_select %p35, %s36, %s37
    %p41 = pneg %p35
    %p42 = scmp.eq.s32.totalorder %s12, 1
    %p43 = por %p41, %p42
    %p44 = scmp.ne.s32.totalorder %s36, %s39
    %p45 = scmp.eq.s32.totalorder %s12, 0
    %p46 = por %p44, %p45
    %p47 = scmp.ne.s32.totalorder %s36, %s39
    %p48 = scmp.eq.s32.totalorder %s17, 1
    %p49 = por %p47, %p48
    %p50 = scmp.ne.s32.totalorder %s39, %s40
    %p51 = scmp.eq.s32.totalorder %s17, 0
    %p52 = por %p50, %p51
    %p53 = scmp.ne.s32.totalorder %s39, %s40
    %p54 = scmp.eq.s32.totalorder %s18, 1
    %p55 = por %p53, %p54
    %p57 = scmp.ne.s32.totalorder %s40, %s56
    %p58 = scmp.eq.s32.totalorder %s18, 0
    %p59 = por %p57, %p58
    %s60 = ssub.s32 %s19, %s31
    %s61 = ssub.s32 %s20, %s27
    %s62 = sor.u32 %s60, %s61
    %p63 = scmp.eq.s32.totalorder %s62, 0
    %s65 = sadd.s32 %s64, 1
    %s66 = scalar_select %p63, %s64, %s65
    %p69 = pneg %p63
    %p70 = scmp.eq.s32.totalorder %s12, 1
    %p71 = por %p69, %p70
    %p72 = scmp.ne.s32.totalorder %s64, %s67
    %p73 = scmp.eq.s32.totalorder %s12, 0
    %p74 = por %p72, %p73
    %p75 = scmp.ne.s32.totalorder %s64, %s67
    %p76 = scmp.eq.s32.totalorder %s17, 1
    %p77 = por %p75, %p76
    %p78 = scmp.ne.s32.totalorder %s67, %s68
    %p79 = scmp.eq.s32.totalorder %s17, 0
    %p80 = por %p78, %p79
    %p81 = scmp.ne.s32.totalorder %s67, %s68
    %p82 = scmp.eq.s32.totalorder %s18, 1
    %p83 = por %p81, %p82
    %p85 = scmp.ne.s32.totalorder %s68, %s84
    %p86 = scmp.eq.s32.totalorder %s18, 0
    %p87 = por %p85, %p86
    %s88 = ssub.s32 %s19, %s31
    %s89 = ssub.s32 %s20, %s27
    %s90 = sor.u32 %s88, %s89
    %p91 = scmp.eq.s32.totalorder %s90, 0
    %s93 = sadd.s32 %s92, 1
    %s94 = scalar_select %p91, %s92, %s93
    %p97 = pneg %p91
    %p98 = scmp.eq.s32.totalorder %s12, 1
    %p99 = por %p97, %p98
    %p100 = scmp.ne.s32.totalorder %s92, %s95
    %p101 = scmp.eq.s32.totalorder %s12, 0
    %p102 = por %p100, %p101
    %p103 = scmp.ne.s32.totalorder %s92, %s95
    %p104 = scmp.eq.s32.totalorder %s17, 1
    %p105 = por %p103, %p104
    %p106 = scmp.ne.s32.totalorder %s95, %s96
    %p107 = scmp.eq.s32.totalorder %s17, 0
    %p108 = por %p106, %p107
    %p109 = scmp.ne.s32.totalorder %s95, %s96
    %p110 = scmp.eq.s32.totalorder %s18, 1
    %p111 = por %p109, %p110
    %p113 = scmp.ne.s32.totalorder %s96, %s112
    %p114 = scmp.eq.s32.totalorder %s18, 0
    %p115 = por %p113, %p114
    %s116 = ssub.s32 %s19, %s31
    %s117 = ssub.s32 %s20, %s27
    %s118 = sor.u32 %s116, %s117
    %p119 = scmp.eq.s32.totalorder %s118, 0
    %s121 = sadd.s32 %s120, 1
    %s122 = scalar_select %p119, %s120, %s121
    %p125 = pneg %p119
    %p126 = scmp.eq.s32.totalorder %s12, 1
    %p127 = por %p125, %p126
    %p128 = scmp.ne.s32.totalorder %s120, %s123
    %p129 = scmp.eq.s32.totalorder %s12, 0
    %p130 = por %p128, %p129
    %p131 = scmp.ne.s32.totalorder %s120, %s123
    %p132 = scmp.eq.s32.totalorder %s17, 1
    %p133 = por %p131, %p132
    %p134 = scmp.ne.s32.totalorder %s123, %s124
    %p135 = scmp.eq.s32.totalorder %s17, 0
    %p136 = por %p134, %p135
    %p137 = scmp.ne.s32.totalorder %s123, %s124
    %p138 = scmp.eq.s32.totalorder %s18, 1
    %p139 = por %p137, %p138
    %p141 = scmp.ne.s32.totalorder %s124, %s140
    %p142 = scmp.eq.s32.totalorder %s18, 0
    %p143 = por %p141, %p142
    %s144 = ssub.s32 %s19, %s31
    %s145 = ssub.s32 %s20, %s27
    %s146 = sor.u32 %s144, %s145
    %p147 = scmp.eq.s32.totalorder %s146, 0
    %s149 = sadd.s32 %s148, 1
    %s150 = scalar_select %p147, %s148, %s149
    %p153 = pneg %p147
    %p154 = scmp.eq.s32.totalorder %s12, 1
    %p155 = por %p153, %p154
    %p156 = scmp.ne.s32.totalorder %s148, %s151
    %p157 = scmp.eq.s32.totalorder %s12, 0
    %p158 = por %p156, %p157
    %p159 = scmp.ne.s32.totalorder %s148, %s151
    %p160 = scmp.eq.s32.totalorder %s17, 1
    %p161 = por %p159, %p160
    %p162 = scmp.ne.s32.totalorder %s151, %s152
    %p163 = scmp.eq.s32.totalorder %s17, 0
    %p164 = por %p162, %p163
    %p165 = scmp.ne.s32.totalorder %s151, %s152
    %p166 = scmp.eq.s32.totalorder %s18, 1
    %p167 = por %p165, %p166
    %p169 = scmp.ne.s32.totalorder %s152, %s168
    %p170 = scmp.eq.s32.totalorder %s18, 0
    %p171 = por %p169, %p170
    %s172 = ssub.s32 %s19, %s31
    %s173 = ssub.s32 %s20, %s27
    %s174 = sor.u32 %s172, %s173
    %p175 = scmp.eq.s32.totalorder %s174, 0
    %s177 = sadd.s32 %s176, 1
    %s178 = scalar_select %p175, %s176, %s177
    %p181 = pneg %p175
    %p182 = scmp.eq.s32.totalorder %s12, 1
    %p183 = por %p181, %p182
    %p184 = scmp.ne.s32.totalorder %s176, %s179
    %p185 = scmp.eq.s32.totalorder %s12, 0
    %p186 = por %p184, %p185
    %p187 = scmp.ne.s32.totalorder %s176, %s179
    %p188 = scmp.eq.s32.totalorder %s17, 1
    %p189 = por %p187, %p188
    %p190 = scmp.ne.s32.totalorder %s179, %s180
    %p191 = scmp.eq.s32.totalorder %s17, 0
    %p192 = por %p190, %p191
    %p193 = scmp.ne.s32.totalorder %s179, %s180
    %p194 = scmp.eq.s32.totalorder %s18, 1
    %p195 = por %p193, %p194
    %p197 = scmp.ne.s32.totalorder %s180, %s196
    %p198 = scmp.eq.s32.totalorder %s18, 0
    %p199 = por %p197, %p198
    %s200 = ssub.s32 %s19, %s31
    %s201 = ssub.s32 %s20, %s27
    %s202 = sor.u32 %s200, %s201
    %p203 = scmp.eq.s32.totalorder %s202, 0
    %s205 = sadd.s32 %s204, 1
    %s206 = scalar_select %p203, %s204, %s205
    %p209 = pneg %p203
    %p210 = scmp.eq.s32.totalorder %s12, 1
    %p211 = por %p209, %p210
    %p212 = scmp.ne.s32.totalorder %s204, %s207
    %p213 = scmp.eq.s32.totalorder %s12, 0
    %p214 = por %p212, %p213
    %p215 = scmp.ne.s32.totalorder %s204, %s207
    %p216 = scmp.eq.s32.totalorder %s17, 1
    %p217 = por %p215, %p216
    %p218 = scmp.ne.s32.totalorder %s207, %s208
    %p219 = scmp.eq.s32.totalorder %s17, 0
    %p220 = por %p218, %p219
    %p221 = scmp.ne.s32.totalorder %s207, %s208
    %p222 = scmp.eq.s32.totalorder %s18, 1
    %p223 = por %p221, %p222
    %p225 = scmp.ne.s32.totalorder %s208, %s224
    %p226 = scmp.eq.s32.totalorder %s18, 0
    %p227 = por %p225, %p226
    %p228 = scmp.le.s32.totalorder 1, %s12
    %p229 = scmp.lt.s32.totalorder %s12, 3
    %p230 = pnand %p228, %p229
    %p231 = pneg %p230
    // Predicated region
    $region9: #{block_forward.21} parent=5 // pred_check
      _
    $region10: #{block_forward.21} parent=5 // pred_check_branch
      %233 = sbr.rel (%p230) target = $region12
    $region11: #{block_forward.21} parent=5 // pred_region
      %s234 = ssub.s32 %s12, 1
    $region12: #{block_forward.21} parent=5 // pred_fallthru
      _
    %p235 = scmp.lt.s32.totalorder %s12, 2
    // Predicated region
    $region13: #{block_forward.21} parent=5 // pred_check
      %p236 = pneg %p235
    $region14: #{block_forward.21} parent=5 // pred_check_branch
      %238 = sbr.rel (%p236) target = $region16
    $region15: #{block_forward.21} parent=5 // pred_region
      // Predicated region
      $region17: #{block_forward.21} parent=15 // pred_check
        %p239 = pneg %p46
      $region18: #{block_forward.21} parent=15 // pred_check_branch
        %241 = sbr.rel (%p239) target = $region20
      $region19: #{block_forward.21} parent=15 // pred_region
        %p242 = scmp.lt.s32.totalorder %s19, 1
        %s243 = scalar_select %p242, %s19, 1
        %p244 = scmp.lt.s32.totalorder %s20, 0
        %s245 = scalar_select %p244, %s20, 0
        %s246 = smul.addr %s243, 2
        %s247 = sadd.s32 %s245, %s246
        %s248 = smul.addr %s247, 4
        %s249 = scalar_lea.vmem %s0, %s248
      $region20: #{block_forward.21} parent=15 // pred_fallthru
        _
      // Predicated region
      $region21: #{block_forward.21} parent=15 // pred_check
        %p250 = pneg %p74
      $region22: #{block_forward.21} parent=15 // pred_check_branch
        %252 = sbr.rel (%p250) target = $region24
      $region23: #{block_forward.21} parent=15 // pred_region
        %p253 = scmp.lt.s32.totalorder %s19, 1
        %s254 = scalar_select %p253, %s19, 1
        %p255 = scmp.lt.s32.totalorder %s20, 0
        %s256 = scalar_select %p255, %s20, 0
        %s257 = smul.addr %s254, 2
        %s258 = sadd.s32 %s256, %s257
        %s259 = smul.addr %s258, 4
        %s260 = scalar_lea.vmem %s1, %s259
      $region24: #{block_forward.21} parent=15 // pred_fallthru
        _
      // Predicated region
      $region25: #{block_forward.21} parent=15 // pred_check
        %p261 = pneg %p102
      $region26: #{block_forward.21} parent=15 // pred_check_branch
        %263 = sbr.rel (%p261) target = $region28
      $region27: #{block_forward.21} parent=15 // pred_region
        %p264 = scmp.lt.s32.totalorder %s19, 1
        %s265 = scalar_select %p264, %s19, 1
        %p266 = scmp.lt.s32.totalorder %s20, 0
        %s267 = scalar_select %p266, %s20, 0
        %s268 = smul.addr %s265, 2
        %s269 = sadd.s32 %s267, %s268
        %s270 = smul.addr %s269, 4
        %s271 = scalar_lea.vmem %s2, %s270
      $region28: #{block_forward.21} parent=15 // pred_fallthru
        _
      // Predicated region
      $region29: #{block_forward.21} parent=15 // pred_check
        %p272 = pneg %p130
      $region30: #{block_forward.21} parent=15 // pred_check_branch
        %274 = sbr.rel (%p272) target = $region32
      $region31: #{block_forward.21} parent=15 // pred_region
        %p275 = scmp.lt.s32.totalorder %s19, 1
        %s276 = scalar_select %p275, %s19, 1
        %p277 = scmp.lt.s32.totalorder %s20, 0
        %s278 = scalar_select %p277, %s20, 0
        %s279 = smul.addr %s276, 2
        %s280 = sadd.s32 %s278, %s279
        %s281 = smul.addr %s280, 4
        %s282 = scalar_lea.vmem %s3, %s281
      $region32: #{block_forward.21} parent=15 // pred_fallthru
        _
      // Predicated region
      $region33: #{block_forward.21} parent=15 // pred_check
        %p283 = pneg %p158
      $region34: #{block_forward.21} parent=15 // pred_check_branch
        %285 = sbr.rel (%p283) target = $region36
      $region35: #{block_forward.21} parent=15 // pred_region
        %p286 = scmp.lt.s32.totalorder %s19, 1
        %s287 = scalar_select %p286, %s19, 1
        %p288 = scmp.lt.s32.totalorder %s20, 0
        %s289 = scalar_select %p288, %s20, 0
        %s290 = smul.addr %s287, 2
        %s291 = sadd.s32 %s289, %s290
        %s292 = smul.addr %s291, 4
        %s293 = scalar_lea.vmem %s4, %s292
      $region36: #{block_forward.21} parent=15 // pred_fallthru
        _
      // Predicated region
      $region37: #{block_forward.21} parent=15 // pred_check
        %p294 = pneg %p186
      $region38: #{block_forward.21} parent=15 // pred_check_branch
        %296 = sbr.rel (%p294) target = $region40
      $region39: #{block_forward.21} parent=15 // pred_region
        %p297 = scmp.lt.s32.totalorder %s19, 1
        %s298 = scalar_select %p297, %s19, 1
        %p299 = scmp.lt.s32.totalorder %s20, 0
        %s300 = scalar_select %p299, %s20, 0
        %s301 = smul.addr %s298, 2
        %s302 = sadd.s32 %s300, %s301
        %s303 = smul.addr %s302, 4
        %s304 = scalar_lea.vmem %s5, %s303
      $region40: #{block_forward.21} parent=15 // pred_fallthru
        _
    $region16: #{block_forward.21} parent=5 // pred_fallthru
      _
    %p305 = scmp.le.s32.totalorder 1, %s12
    %p306 = scmp.lt.s32.totalorder %s12, 3
    %p307 = pnand %p305, %p306
    %p308 = pneg %p307
    // Predicated region
    $region41: #{block_forward.21} parent=5 // pred_check
      _
    $region42: #{block_forward.21} parent=5 // pred_check_branch
      %310 = sbr.rel (%p307) target = $region44
    $region43: #{block_forward.21} parent=5 // pred_region
      %s311 = ssub.s32 %s12, 1
      %p312 = scmp.lt.s32.totalorder %s21, 1
      %s313 = scalar_select %p312, %s21, 1
      %p314 = scmp.lt.s32.totalorder %s22, 0
      %s315 = scalar_select %p314, %s22, 0
      %s316 = smul.addr %s313, 2
      %s317 = sadd.s32 %s315, %s316
      %s318 = smul.addr %s317, 4
      %s319 = scalar_lea.vmem %s0, %s318
      %p320 = pneg %p52
      %p321 = pneg %p49
      %p322 = scmp.lt.s32.totalorder %s21, 1
      %s323 = scalar_select %p322, %s21, 1
      %p324 = scmp.lt.s32.totalorder %s22, 0
      %s325 = scalar_select %p324, %s22, 0
      %s326 = smul.addr %s323, 2
      %s327 = sadd.s32 %s325, %s326
      %s328 = smul.addr %s327, 4
      %s329 = scalar_lea.vmem %s1, %s328
      %p330 = pneg %p80
      %p331 = pneg %p77
      %p332 = scmp.lt.s32.totalorder %s21, 1
      %s333 = scalar_select %p332, %s21, 1
      %p334 = scmp.lt.s32.totalorder %s22, 0
      %s335 = scalar_select %p334, %s22, 0
      %s336 = smul.addr %s333, 2
      %s337 = sadd.s32 %s335, %s336
      %s338 = smul.addr %s337, 4
      %s339 = scalar_lea.vmem %s2, %s338
      %p340 = pneg %p108
      %p341 = pneg %p105
      %p342 = scmp.lt.s32.totalorder %s21, 1
      %s343 = scalar_select %p342, %s21, 1
      %p344 = scmp.lt.s32.totalorder %s22, 0
      %s345 = scalar_select %p344, %s22, 0
      %s346 = smul.addr %s343, 2
      %s347 = sadd.s32 %s345, %s346
      %s348 = smul.addr %s347, 4
      %s349 = scalar_lea.vmem %s3, %s348
      %p350 = pneg %p136
      %p351 = pneg %p133
      %p352 = scmp.lt.s32.totalorder %s21, 1
      %s353 = scalar_select %p352, %s21, 1
      %p354 = scmp.lt.s32.totalorder %s22, 0
      %s355 = scalar_select %p354, %s22, 0
      %s356 = smul.addr %s353, 2
      %s357 = sadd.s32 %s355, %s356
      %s358 = smul.addr %s357, 4
      %s359 = scalar_lea.vmem %s4, %s358
      %p360 = pneg %p164
      %p361 = pneg %p161
      %p362 = scmp.lt.s32.totalorder %s21, 1
      %s363 = scalar_select %p362, %s21, 1
      %p364 = scmp.lt.s32.totalorder %s22, 0
      %s365 = scalar_select %p364, %s22, 0
      %s366 = smul.addr %s363, 2
      %s367 = sadd.s32 %s365, %s366
      %s368 = smul.addr %s367, 4
      %s369 = scalar_lea.vmem %s5, %s368
      %p370 = pneg %p192
      %p371 = pneg %p189
      %p372 = pneg %p220
      %p373 = pneg %p217
      %p374 = scmp.lt.s32.totalorder %s21, 1
      %s375 = scalar_select %p374, %s21, 1
      %p376 = scmp.lt.s32.totalorder %s22, 0
      %s377 = scalar_select %p376, %s22, 0
      %s378 = smul.addr %s375, 2
      %s379 = sadd.s32 %s377, %s378
      %s380 = smul.addr %s379, 4
      %s381 = scalar_lea.vmem %s6, %s380
      %p382 = scmp.lt.s32.totalorder %s21, 1
      %s383 = scalar_select %p382, %s21, 1
      %p384 = scmp.lt.s32.totalorder %s22, 0
      %s385 = scalar_select %p384, %s22, 0
      %s386 = smul.addr %s383, 2
      %s387 = sadd.s32 %s385, %s386
      %s388 = smul.addr %s387, 4
      %s389 = scalar_lea.vmem %s0, %s388
      %p390 = scmp.lt.s32.totalorder %s21, 1
      %s391 = scalar_select %p390, %s21, 1
      %p392 = scmp.lt.s32.totalorder %s22, 0
      %s393 = scalar_select %p392, %s22, 0
      %s394 = smul.addr %s391, 2
      %s395 = sadd.s32 %s393, %s394
      %s396 = smul.addr %s395, 4
      %s397 = scalar_lea.vmem %s1, %s396
      %p398 = scmp.lt.s32.totalorder %s21, 1
      %s399 = scalar_select %p398, %s21, 1
      %p400 = scmp.lt.s32.totalorder %s22, 0
      %s401 = scalar_select %p400, %s22, 0
      %s402 = smul.addr %s399, 2
      %s403 = sadd.s32 %s401, %s402
      %s404 = smul.addr %s403, 4
      %s405 = scalar_lea.vmem %s2, %s404
      %p406 = scmp.lt.s32.totalorder %s21, 1
      %s407 = scalar_select %p406, %s21, 1
      %p408 = scmp.lt.s32.totalorder %s22, 0
      %s409 = scalar_select %p408, %s22, 0
      %s410 = smul.addr %s407, 2
      %s411 = sadd.s32 %s409, %s410
      %s412 = smul.addr %s411, 4
      %s413 = scalar_lea.vmem %s3, %s412
      %p414 = scmp.lt.s32.totalorder %s21, 1
      %s415 = scalar_select %p414, %s21, 1
      %p416 = scmp.lt.s32.totalorder %s22, 0
      %s417 = scalar_select %p416, %s22, 0
      %s418 = smul.addr %s415, 2
      %s419 = sadd.s32 %s417, %s418
      %s420 = smul.addr %s419, 4
      %s421 = scalar_lea.vmem %s4, %s420
      %p422 = scmp.lt.s32.totalorder %s21, 1
      %s423 = scalar_select %p422, %s21, 1
      %p424 = scmp.lt.s32.totalorder %s22, 0
      %s425 = scalar_select %p424, %s22, 0
      %s426 = smul.addr %s423, 2
      %s427 = sadd.s32 %s425, %s426
      %s428 = smul.addr %s427, 4
      %s429 = scalar_lea.vmem %s5, %s428
      %p430 = scmp.lt.s32.totalorder %s21, 1
      %s431 = scalar_select %p430, %s21, 1
      %p432 = scmp.lt.s32.totalorder %s22, 0
      %s433 = scalar_select %p432, %s22, 0
      %s434 = smul.addr %s431, 2
      %s435 = sadd.s32 %s433, %s434
      %s436 = smul.addr %s435, 4
      %s437 = scalar_lea.vmem %s6, %s436
      %v438 = vlaneseq
      %v439 = vand.u32 %v438, 127
      %vm440 = vcmp.lt.s32.totalorder %v439, 64
      %v441 = vld [vmem:[%s389] sm:$0xf]
      %v442 = vld [vmem:[%s389 + $0x4] sm:$0xf]
      %v443 = vunpack.c.l.bf16 %v441
      %v444 = vunpack.c.l.bf16 %v442
      %v445 = vmul.f32 %v443, 1.442695
      %v446 = vpow.pop %v445
      %v447 = vmul.f32 %v444, 1.442695
      %v448 = vpow.pop %v447
      %v449 = vsub.f32 0.0, %v446
      %v450 = vsub.f32 0.0, %v448
      %v451 = vmul.f32 %v449, 1.442695
      %v452 = vpow.pop %v451
      %v453 = vmul.f32 %v450, 1.442695
      %v454 = vpow.pop %v453
      %v455 = vld [vmem:[%s397] sm:$0xf]
      %v456 = vld [vmem:[%s397 + $0x4] sm:$0xf]
      %v457 = vunpack.c.l.bf16 %v455
      %v458 = vunpack.c.l.bf16 %v456
      %v459 = vld [vmem:[%s405] sm:$0xf]
      %v460 = vld [vmem:[%s405 + $0x4] sm:$0xf]
      %v461 = vunpack.c.l.bf16 %v459
      %v462 = vunpack.c.l.bf16 %v460
      %v463 = vld [vmem:[%s413] sm:$0xf]
      %v464 = vld [vmem:[%s413 + $0x4] sm:$0xf]
      %v465 = vunpack.c.l.bf16 %v463
      %v466 = vunpack.c.l.bf16 %v464
      %v467 = vld [vmem:[%s421] sm:$0xf]
      %v468 = vld [vmem:[%s421 + $0x4] sm:$0xf]
      %v469 = vunpack.c.l.bf16 %v467
      %v470 = vunpack.c.l.bf16 %v468
      %v471 = vld [vmem:[%s429] sm:$0xf]
      %v472 = vld [vmem:[%s429 + $0x4] sm:$0xf]
      %v473 = vunpack.c.l.bf16 %v471
      %v474 = vunpack.c.l.bf16 %v472
      %475 = vxpose.xlu0.b32.start [1/16] %v465, 128
      %476 = vxpose.xlu0.b32.cont [2/16] 0.0, 128
      %477 = vxpose.xlu0.b32.cont [3/16] 0.0, 128
      %478 = vxpose.xlu0.b32.cont [4/16] 0.0, 128
      %479 = vxpose.xlu0.b32.cont [5/16] 0.0, 128
      %480 = vxpose.xlu0.b32.cont [6/16] 0.0, 128
      %481 = vxpose.xlu0.b32.cont [7/16] 0.0, 128
      %482 = vxpose.xlu0.b32.cont [8/16] 0.0, 128
      %483 = vxpose.xlu0.b32.cont [9/16] 0.0, 128
      %484 = vxpose.xlu0.b32.cont [10/16] 0.0, 128
      %485 = vxpose.xlu0.b32.cont [11/16] 0.0, 128
      %486 = vxpose.xlu0.b32.cont [12/16] 0.0, 128
      %487 = vxpose.xlu0.b32.cont [13/16] 0.0, 128
      %488 = vxpose.xlu0.b32.cont [14/16] 0.0, 128
      %489 = vxpose.xlu0.b32.cont [15/16] 0.0, 128
      %490 = vxpose.xlu0.b32.end [16/16] 0.0, 128
      %v491 = vpop.trf.xlu0
      %v492 = vpop.trf.xlu0
      %v493 = vpop.trf.xlu0
      %v494 = vpop.trf.xlu0
      %v495 = vpop.trf.xlu0
      %v496 = vpop.trf.xlu0
      %v497 = vpop.trf.xlu0
      %v498 = vpop.trf.xlu0
      %v499 = vpop.trf.xlu0
      %v500 = vpop.trf.xlu0
      %v501 = vpop.trf.xlu0
      %v502 = vpop.trf.xlu0
      %v503 = vpop.trf.xlu0
      %v504 = vpop.trf.xlu0
      %v505 = vpop.trf.xlu0
      %v506 = vpop.trf.xlu0
      %v507 = vsel %vm440, 1, 0
      %vm508 = vcmp.eq.s32.totalorder %v507, 1
      %510 = vset.pattern.permute.xlu0 0
      %511 = vperm.xlu0 %510, %v491
      %v512 = vpop.permute.xlu0 %511
      %515 = vset.pattern.permute.xlu0 0
      %516 = vperm.xlu0 %515, %v492
      %v517 = vpop.permute.xlu0 %516
      %520 = vset.pattern.permute.xlu0 0
      %521 = vperm.xlu0 %520, %v493
      %v522 = vpop.permute.xlu0 %521
      %525 = vset.pattern.permute.xlu0 0
      %526 = vperm.xlu0 %525, %v494
      %v527 = vpop.permute.xlu0 %526
      %530 = vset.pattern.permute.xlu0 0
      %531 = vperm.xlu0 %530, %v495
      %v532 = vpop.permute.xlu0 %531
      %535 = vset.pattern.permute.xlu0 0
      %536 = vperm.xlu0 %535, %v496
      %v537 = vpop.permute.xlu0 %536
      %540 = vset.pattern.permute.xlu0 0
      %541 = vperm.xlu0 %540, %v497
      %v542 = vpop.permute.xlu0 %541
      %545 = vset.pattern.permute.xlu0 0
      %546 = vperm.xlu0 %545, %v498
      %v547 = vpop.permute.xlu0 %546
      %550 = vset.pattern.permute.xlu0 0
      %551 = vperm.xlu0 %550, %v499
      %v552 = vpop.permute.xlu0 %551
      %555 = vset.pattern.permute.xlu0 0
      %556 = vperm.xlu0 %555, %v500
      %v557 = vpop.permute.xlu0 %556
      %560 = vset.pattern.permute.xlu0 0
      %561 = vperm.xlu0 %560, %v501
      %v562 = vpop.permute.xlu0 %561
      %565 = vset.pattern.permute.xlu0 0
      %566 = vperm.xlu0 %565, %v502
      %v567 = vpop.permute.xlu0 %566
      %570 = vset.pattern.permute.xlu0 0
      %571 = vperm.xlu0 %570, %v503
      %v572 = vpop.permute.xlu0 %571
      %575 = vset.pattern.permute.xlu0 0
      %576 = vperm.xlu0 %575, %v504
      %v577 = vpop.permute.xlu0 %576
      %580 = vset.pattern.permute.xlu0 0
      %581 = vperm.xlu0 %580, %v505
      %v582 = vpop.permute.xlu0 %581
      %585 = vset.pattern.permute.xlu0 0
      %586 = vperm.xlu0 %585, %v506
      %v587 = vpop.permute.xlu0 %586
      %v589 = vsel %vm508, %v512, %v552
      %v590 = vsel %vm508, %v517, %v557
      %v591 = vsel %vm508, %v522, %v562
      %v592 = vsel %vm508, %v527, %v567
      %v593 = vsel %vm508, %v532, %v572
      %v594 = vsel %vm508, %v537, %v577
      %v595 = vsel %vm508, %v542, %v582
      %v596 = vsel %vm508, %v547, %v587
      %v597 = vlaneseq
      %v598 = vshrl.u32 %v597, 7
      %v599 = vsub.s32 0, %v598
      %v600 = vrot.slane %v469, %v599
      %v601 = vmul.f32 %v600, 0.0
      %v602 = vsel %vm508, %v601, 0.0
      %603 = vadd.xlane.f32.xlu0 %v602
      %v604 = vpop.xlane.xlu0 %603
      %605 = vadd.xlane.f32.xlu0 %v601
      %v606 = vpop.xlane.xlu0 %605
      %v607 = vsub.f32 %v606, %v604
      %v608 = vsel %vm508, %v604, %v607
      %v609 = vlaneseq
      %v610 = vshrl.u32 %v609, 7
      %v611 = vsub.s32 0, %v610
      %v612 = vrot.slane %v452, %v611
      %v613 = vmul.f32 %v612, 0.0
      %v614 = vlaneseq
      %v615 = vshrl.u32 %v614, 7
      %v616 = vsub.s32 0, %v615
      %v617 = vrot.slane %v461, %v616
      %v618 = vmul.f32 %v589, %v617
      %v619 = vmul.f32 %v590, %v617
      %v620 = vmul.f32 %v591, %v617
      %v621 = vmul.f32 %v592, %v617
      %v622 = vmul.f32 %v593, %v617
      %v623 = vmul.f32 %v594, %v617
      %v624 = vmul.f32 %v595, %v617
      %v625 = vmul.f32 %v596, %v617
      %v626 = vadd.f32 %v613, %v618
      %v627 = vadd.f32 %v613, %v619
      %v628 = vadd.f32 %v613, %v620
      %v629 = vadd.f32 %v613, %v621
      %v630 = vadd.f32 %v613, %v622
      %v631 = vadd.f32 %v613, %v623
      %v632 = vadd.f32 %v613, %v624
      %v633 = vadd.f32 %v613, %v625
      %v634 = vlaneseq
      %v635 = vshrl.u32 %v634, 7
      %v636 = vsub.s32 0, %v635
      %v637 = vrot.slane %v473, %v636
      %v638 = vmul.f32 %v608, %v637
      %v639 = vadd.f32 %v626, %v638
      %v640 = vadd.f32 %v627, %v638
      %v641 = vadd.f32 %v628, %v638
      %v642 = vadd.f32 %v629, %v638
      %v643 = vadd.f32 %v630, %v638
      %v644 = vadd.f32 %v631, %v638
      %v645 = vadd.f32 %v632, %v638
      %v646 = vadd.f32 %v633, %v638
      %v647 = vlaneseq
      %v648 = vshrl.u32 %v647, 7
      %v649 = vsub.s32 0, %v648
      %v650 = vrot.slane %v457, %v649
      %v651 = vmul.f32 %v639, %v650
      %v652 = vmul.f32 %v640, %v650
      %v653 = vmul.f32 %v641, %v650
      %v654 = vmul.f32 %v642, %v650
      %v655 = vmul.f32 %v643, %v650
      %v656 = vmul.f32 %v644, %v650
      %v657 = vmul.f32 %v645, %v650
      %v658 = vmul.f32 %v646, %v650
      %v659 = vsel %vm508, %v651, 0.0
      %v660 = vsel %vm508, %v652, 0.0
      %v661 = vsel %vm508, %v653, 0.0
      %v662 = vsel %vm508, %v654, 0.0
      %v663 = vsel %vm508, %v655, 0.0
      %v664 = vsel %vm508, %v656, 0.0
      %v665 = vsel %vm508, %v657, 0.0
      %v666 = vsel %vm508, %v658, 0.0
      %667 = vadd.xlane.f32.xlu0 %v659
      %v668 = vpop.xlane.xlu0 %667
      %669 = vadd.xlane.f32.xlu0 %v660
      %v670 = vpop.xlane.xlu0 %669
      %671 = vadd.xlane.f32.xlu0 %v661
      %v672 = vpop.xlane.xlu0 %671
      %673 = vadd.xlane.f32.xlu0 %v662
      %v674 = vpop.xlane.xlu0 %673
      %675 = vadd.xlane.f32.xlu0 %v663
      %v676 = vpop.xlane.xlu0 %675
      %677 = vadd.xlane.f32.xlu0 %v664
      %v678 = vpop.xlane.xlu0 %677
      %679 = vadd.xlane.f32.xlu0 %v665
      %v680 = vpop.xlane.xlu0 %679
      %681 = vadd.xlane.f32.xlu0 %v666
      %v682 = vpop.xlane.xlu0 %681
      %683 = vadd.xlane.f32.xlu0 %v651
      %v684 = vpop.xlane.xlu0 %683
      %685 = vadd.xlane.f32.xlu0 %v652
      %v686 = vpop.xlane.xlu0 %685
      %687 = vadd.xlane.f32.xlu0 %v653
      %v688 = vpop.xlane.xlu0 %687
      %689 = vadd.xlane.f32.xlu0 %v654
      %v690 = vpop.xlane.xlu0 %689
      %691 = vadd.xlane.f32.xlu0 %v655
      %v692 = vpop.xlane.xlu0 %691
      %693 = vadd.xlane.f32.xlu0 %v656
      %v694 = vpop.xlane.xlu0 %693
      %695 = vadd.xlane.f32.xlu0 %v657
      %v696 = vpop.xlane.xlu0 %695
      %697 = vadd.xlane.f32.xlu0 %v658
      %v698 = vpop.xlane.xlu0 %697
      %v699 = vsub.f32 %v684, %v668
      %v700 = vsub.f32 %v686, %v670
      %v701 = vsub.f32 %v688, %v672
      %v702 = vsub.f32 %v690, %v674
      %v703 = vsub.f32 %v692, %v676
      %v704 = vsub.f32 %v694, %v678
      %v705 = vsub.f32 %v696, %v680
      %v706 = vsub.f32 %v698, %v682
      %707 = vxpose.xlu0.b32.start [1/16] %v668, 128
      %708 = vxpose.xlu0.b32.cont [2/16] %v670, 128
      %709 = vxpose.xlu0.b32.cont [3/16] %v672, 128
      %710 = vxpose.xlu0.b32.cont [4/16] %v674, 128
      %711 = vxpose.xlu0.b32.cont [5/16] %v676, 128
      %712 = vxpose.xlu0.b32.cont [6/16] %v678, 128
      %713 = vxpose.xlu0.b32.cont [7/16] %v680, 128
      %714 = vxpose.xlu0.b32.cont [8/16] %v682, 128
      %715 = vxpose.xlu0.b32.cont [9/16] %v699, 128
      %716 = vxpose.xlu0.b32.cont [10/16] %v700, 128
      %717 = vxpose.xlu0.b32.cont [11/16] %v701, 128
      %718 = vxpose.xlu0.b32.cont [12/16] %v702, 128
      %719 = vxpose.xlu0.b32.cont [13/16] %v703, 128
      %720 = vxpose.xlu0.b32.cont [14/16] %v704, 128
      %721 = vxpose.xlu0.b32.cont [15/16] %v705, 128
      %722 = vxpose.xlu0.b32.end [16/16] %v706, 128
      %v723 = vpop.trf.xlu0
      %v724 = vpop.trf.xlu0
      %v725 = vpop.trf.xlu0
      %v726 = vpop.trf.xlu0
      %v727 = vpop.trf.xlu0
      %v728 = vpop.trf.xlu0
      %v729 = vpop.trf.xlu0
      %v730 = vpop.trf.xlu0
      %v731 = vpop.trf.xlu0
      %v732 = vpop.trf.xlu0
      %v733 = vpop.trf.xlu0
      %v734 = vpop.trf.xlu0
      %v735 = vpop.trf.xlu0
      %v736 = vpop.trf.xlu0
      %v737 = vpop.trf.xlu0
      %v738 = vpop.trf.xlu0
      %v740 = vrot.slane %v465, 1
      %742 = vxpose.xlu0.b32.start [1/16] %v740, 128
      %743 = vxpose.xlu0.b32.cont [2/16] 0.0, 128
      %744 = vxpose.xlu0.b32.cont [3/16] 0.0, 128
      %745 = vxpose.xlu0.b32.cont [4/16] 0.0, 128
      %746 = vxpose.xlu0.b32.cont [5/16] 0.0, 128
      %747 = vxpose.xlu0.b32.cont [6/16] 0.0, 128
      %748 = vxpose.xlu0.b32.cont [7/16] 0.0, 128
      %749 = vxpose.xlu0.b32.cont [8/16] 0.0, 128
      %750 = vxpose.xlu0.b32.cont [9/16] 0.0, 128
      %751 = vxpose.xlu0.b32.cont [10/16] 0.0, 128
      %752 = vxpose.xlu0.b32.cont [11/16] 0.0, 128
      %753 = vxpose.xlu0.b32.cont [12/16] 0.0, 128
      %754 = vxpose.xlu0.b32.cont [13/16] 0.0, 128
      %755 = vxpose.xlu0.b32.cont [14/16] 0.0, 128
      %756 = vxpose.xlu0.b32.cont [15/16] 0.0, 128
      %757 = vxpose.xlu0.b32.end [16/16] 0.0, 128
      %v758 = vpop.trf.xlu0
      %v759 = vpop.trf.xlu0
      %v760 = vpop.trf.xlu0
      %v761 = vpop.trf.xlu0
      %v762 = vpop.trf.xlu0
      %v763 = vpop.trf.xlu0
      %v764 = vpop.trf.xlu0
      %v765 = vpop.trf.xlu0
      %v766 = vpop.trf.xlu0
      %v767 = vpop.trf.xlu0
      %v768 = vpop.trf.xlu0
      %v769 = vpop.trf.xlu0
      %v770 = vpop.trf.xlu0
      %v771 = vpop.trf.xlu0
      %v772 = vpop.trf.xlu0
      %v773 = vpop.trf.xlu0
      %775 = vset.pattern.permute.xlu0 0
      %776 = vperm.xlu0 %775, %v758
      %v777 = vpop.permute.xlu0 %776
      %780 = vset.pattern.permute.xlu0 0
      %781 = vperm.xlu0 %780, %v759
      %v782 = vpop.permute.xlu0 %781
      %785 = vset.pattern.permute.xlu0 0
      %786 = vperm.xlu0 %785, %v760
      %v787 = vpop.permute.xlu0 %786
      %790 = vset.pattern.permute.xlu0 0
      %791 = vperm.xlu0 %790, %v761
      %v792 = vpop.permute.xlu0 %791
      %795 = vset.pattern.permute.xlu0 0
      %796 = vperm.xlu0 %795, %v762
      %v797 = vpop.permute.xlu0 %796
      %800 = vset.pattern.permute.xlu0 0
      %801 = vperm.xlu0 %800, %v763
      %v802 = vpop.permute.xlu0 %801
      %805 = vset.pattern.permute.xlu0 0
      %806 = vperm.xlu0 %805, %v764
      %v807 = vpop.permute.xlu0 %806
      %810 = vset.pattern.permute.xlu0 0
      %811 = vperm.xlu0 %810, %v765
      %v812 = vpop.permute.xlu0 %811
      %815 = vset.pattern.permute.xlu0 0
      %816 = vperm.xlu0 %815, %v766
      %v817 = vpop.permute.xlu0 %816
      %820 = vset.pattern.permute.xlu0 0
      %821 = vperm.xlu0 %820, %v767
      %v822 = vpop.permute.xlu0 %821
      %825 = vset.pattern.permute.xlu0 0
      %826 = vperm.xlu0 %825, %v768
      %v827 = vpop.permute.xlu0 %826
      %830 = vset.pattern.permute.xlu0 0
      %831 = vperm.xlu0 %830, %v769
      %v832 = vpop.permute.xlu0 %831
      %835 = vset.pattern.permute.xlu0 0
      %836 = vperm.xlu0 %835, %v770
      %v837 = vpop.permute.xlu0 %836
      %840 = vset.pattern.permute.xlu0 0
      %841 = vperm.xlu0 %840, %v771
      %v842 = vpop.permute.xlu0 %841
      %845 = vset.pattern.permute.xlu0 0
      %846 = vperm.xlu0 %845, %v772
      %v847 = vpop.permute.xlu0 %846
      %850 = vset.pattern.permute.xlu0 0
      %851 = vperm.xlu0 %850, %v773
      %v852 = vpop.permute.xlu0 %851
      %v854 = vsel %vm508, %v777, %v817
      %v855 = vsel %vm508, %v782, %v822
      %v856 = vsel %vm508, %v787, %v827
      %v857 = vsel %vm508, %v792, %v832
      %v858 = vsel %vm508, %v797, %v837
      %v859 = vsel %vm508, %v802, %v842
      %v860 = vsel %vm508, %v807, %v847
      %v861 = vsel %vm508, %v812, %v852
      %v862 = vlaneseq
      %v863 = vshrl.u32 %v862, 7
      %v864 = vsub.s32 1, %v863
      %v865 = vrot.slane %v469, %v864
      %v866 = vmul.f32 %v639, %v865
      %v867 = vmul.f32 %v640, %v865
      %v868 = vmul.f32 %v641, %v865
      %v869 = vmul.f32 %v642, %v865
      %v870 = vmul.f32 %v643, %v865
      %v871 = vmul.f32 %v644, %v865
      %v872 = vmul.f32 %v645, %v865
      %v873 = vmul.f32 %v646, %v865
      %v874 = vsel %vm508, %v866, 0.0
      %v875 = vsel %vm508, %v867, 0.0
      %v876 = vsel %vm508, %v868, 0.0
      %v877 = vsel %vm508, %v869, 0.0
      %v878 = vsel %vm508, %v870, 0.0
      %v879 = vsel %vm508, %v871, 0.0
      %v880 = vsel %vm508, %v872, 0.0
      %v881 = vsel %vm508, %v873, 0.0
      %882 = vadd.xlane.f32.xlu0 %v874
      %v883 = vpop.xlane.xlu0 %882
      %884 = vadd.xlane.f32.xlu0 %v875
      %v885 = vpop.xlane.xlu0 %884
      %886 = vadd.xlane.f32.xlu0 %v876
      %v887 = vpop.xlane.xlu0 %886
      %888 = vadd.xlane.f32.xlu0 %v877
      %v889 = vpop.xlane.xlu0 %888
      %890 = vadd.xlane.f32.xlu0 %v878
      %v891 = vpop.xlane.xlu0 %890
      %892 = vadd.xlane.f32.xlu0 %v879
      %v893 = vpop.xlane.xlu0 %892
      %894 = vadd.xlane.f32.xlu0 %v880
      %v895 = vpop.xlane.xlu0 %894
      %896 = vadd.xlane.f32.xlu0 %v881
      %v897 = vpop.xlane.xlu0 %896
      %898 = vadd.xlane.f32.xlu0 %v866
      %v899 = vpop.xlane.xlu0 %898
      %900 = vadd.xlane.f32.xlu0 %v867
      %v901 = vpop.xlane.xlu0 %900
      %902 = vadd.xlane.f32.xlu0 %v868
      %v903 = vpop.xlane.xlu0 %902
      %904 = vadd.xlane.f32.xlu0 %v869
      %v905 = vpop.xlane.xlu0 %904
      %906 = vadd.xlane.f32.xlu0 %v870
      %v907 = vpop.xlane.xlu0 %906
      %908 = vadd.xlane.f32.xlu0 %v871
      %v909 = vpop.xlane.xlu0 %908
      %910 = vadd.xlane.f32.xlu0 %v872
      %v911 = vpop.xlane.xlu0 %910
      %912 = vadd.xlane.f32.xlu0 %v873
      %v913 = vpop.xlane.xlu0 %912
      %v914 = vsub.f32 %v899, %v883
      %v915 = vsub.f32 %v901, %v885
      %v916 = vsub.f32 %v903, %v887
      %v917 = vsub.f32 %v905, %v889
      %v918 = vsub.f32 %v907, %v891
      %v919 = vsub.f32 %v909, %v893
      %v920 = vsub.f32 %v911, %v895
      %v921 = vsub.f32 %v913, %v897
      %v922 = vsel %vm508, %v883, %v914
      %v923 = vsel %vm508, %v885, %v915
      %v924 = vsel %vm508, %v887, %v916
      %v925 = vsel %vm508, %v889, %v917
      %v926 = vsel %vm508, %v891, %v918
      %v927 = vsel %vm508, %v893, %v919
      %v928 = vsel %vm508, %v895, %v920
      %v929 = vsel %vm508, %v897, %v921
      %v930 = vlaneseq
      %v931 = vshrl.u32 %v930, 7
      %v932 = vsub.s32 1, %v931
      %v933 = vrot.slane %v452, %v932
      %v934 = vmul.f32 %v639, %v933
      %v935 = vmul.f32 %v640, %v933
      %v936 = vmul.f32 %v641, %v933
      %v937 = vmul.f32 %v642, %v933
      %v938 = vmul.f32 %v643, %v933
      %v939 = vmul.f32 %v644, %v933
      %v940 = vmul.f32 %v645, %v933
      %v941 = vmul.f32 %v646, %v933
      %v942 = vlaneseq
      %v943 = vshrl.u32 %v942, 7
      %v944 = vsub.s32 1, %v943
      %v945 = vrot.slane %v461, %v944
      %v946 = vmul.f32 %v854, %v945
      %v947 = vmul.f32 %v855, %v945
      %v948 = vmul.f32 %v856, %v945
      %v949 = vmul.f32 %v857, %v945
      %v950 = vmul.f32 %v858, %v945
      %v951 = vmul.f32 %v859, %v945
      %v952 = vmul.f32 %v860, %v945
      %v953 = vmul.f32 %v861, %v945
      %v954 = vadd.f32 %v934, %v946
      %v955 = vadd.f32 %v935, %v947
      %v956 = vadd.f32 %v936, %v948
      %v957 = vadd.f32 %v937, %v949
      %v958 = vadd.f32 %v938, %v950
      %v959 = vadd.f32 %v939, %v951
      %v960 = vadd.f32 %v940, %v952
      %v961 = vadd.f32 %v941, %v953
      %v962 = vlaneseq
      %v963 = vshrl.u32 %v962, 7
      %v964 = vsub.s32 1, %v963
      %v965 = vrot.slane %v473, %v964
      %v966 = vmul.f32 %v922, %v965
      %v967 = vmul.f32 %v923, %v965
      %v968 = vmul.f32 %v924, %v965
      %v969 = vmul.f32 %v925, %v965
      %v970 = vmul.f32 %v926, %v965
      %v971 = vmul.f32 %v927, %v965
      %v972 = vmul.f32 %v928, %v965
      %v973 = vmul.f32 %v929, %v965
      %v974 = vadd.f32 %v954, %v966
      %v975 = vadd.f32 %v955, %v967
      %v976 = vadd.f32 %v956, %v968
      %v977 = vadd.f32 %v957, %v969
      %v978 = vadd.f32 %v958, %v970
      %v979 = vadd.f32 %v959, %v971
      %v980 = vadd.f32 %v960, %v972
      %v981 = vadd.f32 %v961, %v973
      %v982 = vlaneseq
      %v983 = vshrl.u32 %v982, 7
      %v984 = vsub.s32 1, %v983
      %v985 = vrot.slane %v457, %v984
      %v986 = vmul.f32 %v974, %v985
      %v987 = vmul.f32 %v975, %v985
      %v988 = vmul.f32 %v976, %v985
      %v989 = vmul.f32 %v977, %v985
      %v990 = vmul.f32 %v978, %v985
      %v991 = vmul.f32 %v979, %v985
      %v992 = vmul.f32 %v980, %v985
      %v993 = vmul.f32 %v981, %v985
      %v994 = vsel %vm508, %v986, 0.0
      %v995 = vsel %vm508, %v987, 0.0
      %v996 = vsel %vm508, %v988, 0.0
      %v997 = vsel %vm508, %v989, 0.0
      %v998 = vsel %vm508, %v990, 0.0
      %v999 = vsel %vm508, %v991, 0.0
      %v1000 = vsel %vm508, %v992, 0.0
      %v1001 = vsel %vm508, %v993, 0.0
      %1002 = vadd.xlane.f32.xlu0 %v994
      %v1003 = vpop.xlane.xlu0 %1002
      %1004 = vadd.xlane.f32.xlu0 %v995
      %v1005 = vpop.xlane.xlu0 %1004
      %1006 = vadd.xlane.f32.xlu0 %v996
      %v1007 = vpop.xlane.xlu0 %1006
      %1008 = vadd.xlane.f32.xlu0 %v997
      %v1009 = vpop.xlane.xlu0 %1008
      %1010 = vadd.xlane.f32.xlu0 %v998
      %v1011 = vpop.xlane.xlu0 %1010
      %1012 = vadd.xlane.f32.xlu0 %v999
      %v1013 = vpop.xlane.xlu0 %1012
      %1014 = vadd.xlane.f32.xlu0 %v1000
      %v1015 = vpop.xlane.xlu0 %1014
      %1016 = vadd.xlane.f32.xlu0 %v1001
      %v1017 = vpop.xlane.xlu0 %1016
      %1018 = vadd.xlane.f32.xlu0 %v986
      %v1019 = vpop.xlane.xlu0 %1018
      %1020 = vadd.xlane.f32.xlu0 %v987
      %v1021 = vpop.xlane.xlu0 %1020
      %1022 = vadd.xlane.f32.xlu0 %v988
      %v1023 = vpop.xlane.xlu0 %1022
      %1024 = vadd.xlane.f32.xlu0 %v989
      %v1025 = vpop.xlane.xlu0 %1024
      %1026 = vadd.xlane.f32.xlu0 %v990
      %v1027 = vpop.xlane.xlu0 %1026
      %1028 = vadd.xlane.f32.xlu0 %v991
      %v1029 = vpop.xlane.xlu0 %1028
      %1030 = vadd.xlane.f32.xlu0 %v992
      %v1031 = vpop.xlane.xlu0 %1030
      %1032 = vadd.xlane.f32.xlu0 %v993
      %v1033 = vpop.xlane.xlu0 %1032
      %v1034 = vsub.f32 %v1019, %v1003
      %v1035 = vsub.f32 %v1021, %v1005
      %v1036 = vsub.f32 %v1023, %v1007
      %v1037 = vsub.f32 %v1025, %v1009
      %v1038 = vsub.f32 %v1027, %v1011
      %v1039 = vsub.f32 %v1029, %v1013
      %v1040 = vsub.f32 %v1031, %v1015
      %v1041 = vsub.f32 %v1033, %v1017
      %1042 = vxpose.xlu0.b32.start [1/16] %v1003, 128
      %1043 = vxpose.xlu0.b32.cont [2/16] %v1005, 128
      %1044 = vxpose.xlu0.b32.cont [3/16] %v1007, 128
      %1045 = vxpose.xlu0.b32.cont [4/16] %v1009, 128
      %1046 = vxpose.xlu0.b32.cont [5/16] %v1011, 128
      %1047 = vxpose.xlu0.b32.cont [6/16] %v1013, 128
      %1048 = vxpose.xlu0.b32.cont [7/16] %v1015, 128
      %1049 = vxpose.xlu0.b32.cont [8/16] %v1017, 128
      %1050 = vxpose.xlu0.b32.cont [9/16] %v1034, 128
      %1051 = vxpose.xlu0.b32.cont [10/16] %v1035, 128
      %1052 = vxpose.xlu0.b32.cont [11/16] %v1036, 128
      %1053 = vxpose.xlu0.b32.cont [12/16] %v1037, 128
      %1054 = vxpose.xlu0.b32.cont [13/16] %v1038, 128
      %1055 = vxpose.xlu0.b32.cont [14/16] %v1039, 128
      %1056 = vxpose.xlu0.b32.cont [15/16] %v1040, 128
      %1057 = vxpose.xlu0.b32.end [16/16] %v1041, 128
      %v1058 = vpop.trf.xlu0
      %v1059 = vpop.trf.xlu0
      %v1060 = vpop.trf.xlu0
      %v1061 = vpop.trf.xlu0
      %v1062 = vpop.trf.xlu0
      %v1063 = vpop.trf.xlu0
      %v1064 = vpop.trf.xlu0
      %v1065 = vpop.trf.xlu0
      %v1066 = vpop.trf.xlu0
      %v1067 = vpop.trf.xlu0
      %v1068 = vpop.trf.xlu0
      %v1069 = vpop.trf.xlu0
      %v1070 = vpop.trf.xlu0
      %v1071 = vpop.trf.xlu0
      %v1072 = vpop.trf.xlu0
      %v1073 = vpop.trf.xlu0
      %v1074 = vrot.slane %v465, 2
      %1076 = vxpose.xlu0.b32.start [1/16] %v1074, 128
      %1077 = vxpose.xlu0.b32.cont [2/16] 0.0, 128
      %1078 = vxpose.xlu0.b32.cont [3/16] 0.0, 128
      %1079 = vxpose.xlu0.b32.cont [4/16] 0.0, 128
      %1080 = vxpose.xlu0.b32.cont [5/16] 0.0, 128
      %1081 = vxpose.xlu0.b32.cont [6/16] 0.0, 128
      %1082 = vxpose.xlu0.b32.cont [7/16] 0.0, 128
      %1083 = vxpose.xlu0.b32.cont [8/16] 0.0, 128
      %1084 = vxpose.xlu0.b32.cont [9/16] 0.0, 128
      %1085 = vxpose.xlu0.b32.cont [10/16] 0.0, 128
      %1086 = vxpose.xlu0.b32.cont [11/16] 0.0, 128
      %1087 = vxpose.xlu0.b32.cont [12/16] 0.0, 128
      %1088 = vxpose.xlu0.b32.cont [13/16] 0.0, 128
      %1089 = vxpose.xlu0.b32.cont [14/16] 0.0, 128
      %1090 = vxpose.xlu0.b32.cont [15/16] 0.0, 128
      %1091 = vxpose.xlu0.b32.end [16/16] 0.0, 128
      %v1092 = vpop.trf.xlu0
      %v1093 = vpop.trf.xlu0
      %v1094 = vpop.trf.xlu0
      %v1095 = vpop.trf.xlu0
      %v1096 = vpop.trf.xlu0
      %v1097 = vpop.trf.xlu0
      %v1098 = vpop.trf.xlu0
      %v1099 = vpop.trf.xlu0
      %v1100 = vpop.trf.xlu0
      %v1101 = vpop.trf.xlu0
      %v1102 = vpop.trf.xlu0
      %v1103 = vpop.trf.xlu0
      %v1104 = vpop.trf.xlu0
      %v1105 = vpop.trf.xlu0
      %v1106 = vpop.trf.xlu0
      %v1107 = vpop.trf.xlu0
      %1109 = vset.pattern.permute.xlu0 0
      %1110 = vperm.xlu0 %1109, %v1092
      %v1111 = vpop.permute.xlu0 %1110
      %1114 = vset.pattern.permute.xlu0 0
      %1115 = vperm.xlu0 %1114, %v1093
      %v1116 = vpop.permute.xlu0 %1115
      %1119 = vset.pattern.permute.xlu0 0
      %1120 = vperm.xlu0 %1119, %v1094
      %v1121 = vpop.permute.xlu0 %1120
      %1124 = vset.pattern.permute.xlu0 0
      %1125 = vperm.xlu0 %1124, %v1095
      %v1126 = vpop.permute.xlu0 %1125
      %1129 = vset.pattern.permute.xlu0 0
      %1130 = vperm.xlu0 %1129, %v1096
      %v1131 = vpop.permute.xlu0 %1130
      %1134 = vset.pattern.permute.xlu0 0
      %1135 = vperm.xlu0 %1134, %v1097
      %v1136 = vpop.permute.xlu0 %1135
      %1139 = vset.pattern.permute.xlu0 0
      %1140 = vperm.xlu0 %1139, %v1098
      %v1141 = vpop.permute.xlu0 %1140
      %1144 = vset.pattern.permute.xlu0 0
      %1145 = vperm.xlu0 %1144, %v1099
      %v1146 = vpop.permute.xlu0 %1145
      %1149 = vset.pattern.permute.xlu0 0
      %1150 = vperm.xlu0 %1149, %v1100
      %v1151 = vpop.permute.xlu0 %1150
      %1154 = vset.pattern.permute.xlu0 0
      %1155 = vperm.xlu0 %1154, %v1101
      %v1156 = vpop.permute.xlu0 %1155
      %1159 = vset.pattern.permute.xlu0 0
      %1160 = vperm.xlu0 %1159, %v1102
      %v1161 = vpop.permute.xlu0 %1160
      %1164 = vset.pattern.permute.xlu0 0
      %1165 = vperm.xlu0 %1164, %v1103
      %v1166 = vpop.permute.xlu0 %1165
      %1169 = vset.pattern.permute.xlu0 0
      %1170 = vperm.xlu0 %1169, %v1104
      %v1171 = vpop.permute.xlu0 %1170
      %1174 = vset.pattern.permute.xlu0 0
      %1175 = vperm.xlu0 %1174, %v1105
      %v1176 = vpop.permute.xlu0 %1175
      %1179 = vset.pattern.permute.xlu0 0
      %1180 = vperm.xlu0 %1179, %v1106
      %v1181 = vpop.permute.xlu0 %1180
      %1184 = vset.pattern.permute.xlu0 0
      %1185 = vperm.xlu0 %1184, %v1107
      %v1186 = vpop.permute.xlu0 %1185
      %v1188 = vsel %vm508, %v1111, %v1151
      %v1189 = vsel %vm508, %v1116, %v1156
      %v1190 = vsel %vm508, %v1121, %v1161
      %v1191 = vsel %vm508, %v1126, %v1166
      %v1192 = vsel %vm508, %v1131, %v1171
      %v1193 = vsel %vm508, %v1136, %v1176
      %v1194 = vsel %vm508, %v1141, %v1181
      %v1195 = vsel %vm508, %v1146, %v1186
      %v1196 = vlaneseq
      %v1197 = vshrl.u32 %v1196, 7
      %v1198 = vsub.s32 2, %v1197
      %v1199 = vrot.slane %v469, %v1198
      %v1200 = vmul.f32 %v974, %v1199
      %v1201 = vmul.f32 %v975, %v1199
      %v1202 = vmul.f32 %v976, %v1199
      %v1203 = vmul.f32 %v977, %v1199
      %v1204 = vmul.f32 %v978, %v1199
      %v1205 = vmul.f32 %v979, %v1199
      %v1206 = vmul.f32 %v980, %v1199
      %v1207 = vmul.f32 %v981, %v1199
      %v1208 = vsel %vm508, %v1200, 0.0
      %v1209 = vsel %vm508, %v1201, 0.0
      %v1210 = vsel %vm508, %v1202, 0.0
      %v1211 = vsel %vm508, %v1203, 0.0
      %v1212 = vsel %vm508, %v1204, 0.0
      %v1213 = vsel %vm508, %v1205, 0.0
      %v1214 = vsel %vm508, %v1206, 0.0
      %v1215 = vsel %vm508, %v1207, 0.0
      %1216 = vadd.xlane.f32.xlu0 %v1208
      %v1217 = vpop.xlane.xlu0 %1216
      %1218 = vadd.xlane.f32.xlu0 %v1209
      %v1219 = vpop.xlane.xlu0 %1218
      %1220 = vadd.xlane.f32.xlu0 %v1210
      %v1221 = vpop.xlane.xlu0 %1220
      %1222 = vadd.xlane.f32.xlu0 %v1211
      %v1223 = vpop.xlane.xlu0 %1222
      %1224 = vadd.xlane.f32.xlu0 %v1212
      %v1225 = vpop.xlane.xlu0 %1224
      %1226 = vadd.xlane.f32.xlu0 %v1213
      %v1227 = vpop.xlane.xlu0 %1226
      %1228 = vadd.xlane.f32.xlu0 %v1214
      %v1229 = vpop.xlane.xlu0 %1228
      %1230 = vadd.xlane.f32.xlu0 %v1215
      %v1231 = vpop.xlane.xlu0 %1230
      %1232 = vadd.xlane.f32.xlu0 %v1200
      %v1233 = vpop.xlane.xlu0 %1232
      %1234 = vadd.xlane.f32.xlu0 %v1201
      %v1235 = vpop.xlane.xlu0 %1234
      %1236 = vadd.xlane.f32.xlu0 %v1202
      %v1237 = vpop.xlane.xlu0 %1236
      %1238 = vadd.xlane.f32.xlu0 %v1203
      %v1239 = vpop.xlane.xlu0 %1238
      %1240 = vadd.xlane.f32.xlu0 %v1204
      %v1241 = vpop.xlane.xlu0 %1240
      %1242 = vadd.xlane.f32.xlu0 %v1205
      %v1243 = vpop.xlane.xlu0 %1242
      %1244 = vadd.xlane.f32.xlu0 %v1206
      %v1245 = vpop.xlane.xlu0 %1244
      %1246 = vadd.xlane.f32.xlu0 %v1207
      %v1247 = vpop.xlane.xlu0 %1246
      %v1248 = vsub.f32 %v1233, %v1217
      %v1249 = vsub.f32 %v1235, %v1219
      %v1250 = vsub.f32 %v1237, %v1221
      %v1251 = vsub.f32 %v1239, %v1223
      %v1252 = vsub.f32 %v1241, %v1225
      %v1253 = vsub.f32 %v1243, %v1227
      %v1254 = vsub.f32 %v1245, %v1229
      %v1255 = vsub.f32 %v1247, %v1231
      %v1256 = vsel %vm508, %v1217, %v1248
      %v1257 = vsel %vm508, %v1219, %v1249
      %v1258 = vsel %vm508, %v1221, %v1250
      %v1259 = vsel %vm508, %v1223, %v1251
      %v1260 = vsel %vm508, %v1225, %v1252
      %v1261 = vsel %vm508, %v1227, %v1253
      %v1262 = vsel %vm508, %v1229, %v1254
      %v1263 = vsel %vm508, %v1231, %v1255
      %v1264 = vlaneseq
      %v1265 = vshrl.u32 %v1264, 7
      %v1266 = vsub.s32 2, %v1265
      %v1267 = vrot.slane %v452, %v1266
      %v1268 = vmul.f32 %v974, %v1267
      %v1269 = vmul.f32 %v975, %v1267
      %v1270 = vmul.f32 %v976, %v1267
      %v1271 = vmul.f32 %v977, %v1267
      %v1272 = vmul.f32 %v978, %v1267
      %v1273 = vmul.f32 %v979, %v1267
      %v1274 = vmul.f32 %v980, %v1267
      %v1275 = vmul.f32 %v981, %v1267
      %v1276 = vlaneseq
      %v1277 = vshrl.u32 %v1276, 7
      %v1278 = vsub.s32 2, %v1277
      %v1279 = vrot.slane %v461, %v1278
      %v1280 = vmul.f32 %v1188, %v1279
      %v1281 = vmul.f32 %v1189, %v1279
      %v1282 = vmul.f32 %v1190, %v1279
      %v1283 = vmul.f32 %v1191, %v1279
      %v1284 = vmul.f32 %v1192, %v1279
      %v1285 = vmul.f32 %v1193, %v1279
      %v1286 = vmul.f32 %v1194, %v1279
      %v1287 = vmul.f32 %v1195, %v1279
      %v1288 = vadd.f32 %v1268, %v1280
      %v1289 = vadd.f32 %v1269, %v1281
      %v1290 = vadd.f32 %v1270, %v1282
      %v1291 = vadd.f32 %v1271, %v1283
      %v1292 = vadd.f32 %v1272, %v1284
      %v1293 = vadd.f32 %v1273, %v1285
      %v1294 = vadd.f32 %v1274, %v1286
      %v1295 = vadd.f32 %v1275, %v1287
      %v1296 = vlaneseq
      %v1297 = vshrl.u32 %v1296, 7
      %v1298 = vsub.s32 2, %v1297
      %v1299 = vrot.slane %v473, %v1298
      %v1300 = vmul.f32 %v1256, %v1299
      %v1301 = vmul.f32 %v1257, %v1299
      %v1302 = vmul.f32 %v1258, %v1299
      %v1303 = vmul.f32 %v1259, %v1299
      %v1304 = vmul.f32 %v1260, %v1299
      %v1305 = vmul.f32 %v1261, %v1299
      %v1306 = vmul.f32 %v1262, %v1299
      %v1307 = vmul.f32 %v1263, %v1299
      %v1308 = vadd.f32 %v1288, %v1300
      %v1309 = vadd.f32 %v1289, %v1301
      %v1310 = vadd.f32 %v1290, %v1302
      %v1311 = vadd.f32 %v1291, %v1303
      %v1312 = vadd.f32 %v1292, %v1304
      %v1313 = vadd.f32 %v1293, %v1305
      %v1314 = vadd.f32 %v1294, %v1306
      %v1315 = vadd.f32 %v1295, %v1307
      %v1316 = vlaneseq
      %v1317 = vshrl.u32 %v1316, 7
      %v1318 = vsub.s32 2, %v1317
      %v1319 = vrot.slane %v457, %v1318
      %v1320 = vmul.f32 %v1308, %v1319
      %v1321 = vmul.f32 %v1309, %v1319
      %v1322 = vmul.f32 %v1310, %v1319
      %v1323 = vmul.f32 %v1311, %v1319
      %v1324 = vmul.f32 %v1312, %v1319
      %v1325 = vmul.f32 %v1313, %v1319
      %v1326 = vmul.f32 %v1314, %v1319
      %v1327 = vmul.f32 %v1315, %v1319
      %v1328 = vsel %vm508, %v1320, 0.0
      %v1329 = vsel %vm508, %v1321, 0.0
      %v1330 = vsel %vm508, %v1322, 0.0
      %v1331 = vsel %vm508, %v1323, 0.0
      %v1332 = vsel %vm508, %v1324, 0.0
      %v1333 = vsel %vm508, %v1325, 0.0
      %v1334 = vsel %vm508, %v1326, 0.0
      %v1335 = vsel %vm508, %v1327, 0.0
      %1336 = vadd.xlane.f32.xlu0 %v1328
      %v1337 = vpop.xlane.xlu0 %1336
      %1338 = vadd.xlane.f32.xlu0 %v1329
      %v1339 = vpop.xlane.xlu0 %1338
      %1340 = vadd.xlane.f32.xlu0 %v1330
      %v1341 = vpop.xlane.xlu0 %1340
      %1342 = vadd.xlane.f32.xlu0 %v1331
      %v1343 = vpop.xlane.xlu0 %1342
      %1344 = vadd.xlane.f32.xlu0 %v1332
      %v1345 = vpop.xlane.xlu0 %1344
      %1346 = vadd.xlane.f32.xlu0 %v1333
      %v1347 = vpop.xlane.xlu0 %1346
      %1348 = vadd.xlane.f32.xlu0 %v1334
      %v1349 = vpop.xlane.xlu0 %1348
      %1350 = vadd.xlane.f32.xlu0 %v1335
      %v1351 = vpop.xlane.xlu0 %1350
      %1352 = vadd.xlane.f32.xlu0 %v1320
      %v1353 = vpop.xlane.xlu0 %1352
      %1354 = vadd.xlane.f32.xlu0 %v1321
      %v1355 = vpop.xlane.xlu0 %1354
      %1356 = vadd.xlane.f32.xlu0 %v1322
      %v1357 = vpop.xlane.xlu0 %1356
      %1358 = vadd.xlane.f32.xlu0 %v1323
      %v1359 = vpop.xlane.xlu0 %1358
      %1360 = vadd.xlane.f32.xlu0 %v1324
      %v1361 = vpop.xlane.xlu0 %1360
      %1362 = vadd.xlane.f32.xlu0 %v1325
      %v1363 = vpop.xlane.xlu0 %1362
      %1364 = vadd.xlane.f32.xlu0 %v1326
      %v1365 = vpop.xlane.xlu0 %1364
      %1366 = vadd.xlane.f32.xlu0 %v1327
      %v1367 = vpop.xlane.xlu0 %1366
      %v1368 = vsub.f32 %v1353, %v1337
      %v1369 = vsub.f32 %v1355, %v1339
      %v1370 = vsub.f32 %v1357, %v1341
      %v1371 = vsub.f32 %v1359, %v1343
      %v1372 = vsub.f32 %v1361, %v1345
      %v1373 = vsub.f32 %v1363, %v1347
      %v1374 = vsub.f32 %v1365, %v1349
      %v1375 = vsub.f32 %v1367, %v1351
      %1376 = vxpose.xlu0.b32.start [1/16] %v1337, 128
      %1377 = vxpose.xlu0.b32.cont [2/16] %v1339, 128
      %1378 = vxpose.xlu0.b32.cont [3/16] %v1341, 128
      %1379 = vxpose.xlu0.b32.cont [4/16] %v1343, 128
      %1380 = vxpose.xlu0.b32.cont [5/16] %v1345, 128
      %1381 = vxpose.xlu0.b32.cont [6/16] %v1347, 128
      %1382 = vxpose.xlu0.b32.cont [7/16] %v1349, 128
      %1383 = vxpose.xlu0.b32.cont [8/16] %v1351, 128
      %1384 = vxpose.xlu0.b32.cont [9/16] %v1368, 128
      %1385 = vxpose.xlu0.b32.cont [10/16] %v1369, 128
      %1386 = vxpose.xlu0.b32.cont [11/16] %v1370, 128
      %1387 = vxpose.xlu0.b32.cont [12/16] %v1371, 128
      %1388 = vxpose.xlu0.b32.cont [13/16] %v1372, 128
      %1389 = vxpose.xlu0.b32.cont [14/16] %v1373, 128
      %1390 = vxpose.xlu0.b32.cont [15/16] %v1374, 128
      %1391 = vxpose.xlu0.b32.end [16/16] %v1375, 128
      %v1392 = vpop.trf.xlu0
      %v1393 = vpop.trf.xlu0
      %v1394 = vpop.trf.xlu0
      %v1395 = vpop.trf.xlu0
      %v1396 = vpop.trf.xlu0
      %v1397 = vpop.trf.xlu0
      %v1398 = vpop.trf.xlu0
      %v1399 = vpop.trf.xlu0
      %v1400 = vpop.trf.xlu0
      %v1401 = vpop.trf.xlu0
      %v1402 = vpop.trf.xlu0
      %v1403 = vpop.trf.xlu0
      %v1404 = vpop.trf.xlu0
      %v1405 = vpop.trf.xlu0
      %v1406 = vpop.trf.xlu0
      %v1407 = vpop.trf.xlu0
      %v1408 = vrot.slane %v465, 3
      %1410 = vxpose.xlu0.b32.start [1/16] %v1408, 128
      %1411 = vxpose.xlu0.b32.cont [2/16] 0.0, 128
      %1412 = vxpose.xlu0.b32.cont [3/16] 0.0, 128
      %1413 = vxpose.xlu0.b32.cont [4/16] 0.0, 128
      %1414 = vxpose.xlu0.b32.cont [5/16] 0.0, 128
      %1415 = vxpose.xlu0.b32.cont [6/16] 0.0, 128
      %1416 = vxpose.xlu0.b32.cont [7/16] 0.0, 128
      %1417 = vxpose.xlu0.b32.cont [8/16] 0.0, 128
      %1418 = vxpose.xlu0.b32.cont [9/16] 0.0, 128
      %1419 = vxpose.xlu0.b32.cont [10/16] 0.0, 128
      %1420 = vxpose.xlu0.b32.cont [11/16] 0.0, 128
      %1421 = vxpose.xlu0.b32.cont [12/16] 0.0, 128
      %1422 = vxpose.xlu0.b32.cont [13/16] 0.0, 128
      %1423 = vxpose.xlu0.b32.cont [14/16] 0.0, 128
      %1424 = vxpose.xlu0.b32.cont [15/16] 0.0, 128
      %1425 = vxpose.xlu0.b32.end [16/16] 0.0, 128
      %v1426 = vpop.trf.xlu0
      %v1427 = vpop.trf.xlu0
      %v1428 = vpop.trf.xlu0
      %v1429 = vpop.trf.xlu0
      %v1430 = vpop.trf.xlu0
      %v1431 = vpop.trf.xlu0
      %v1432 = vpop.trf.xlu0
      %v1433 = vpop.trf.xlu0
      %v1434 = vpop.trf.xlu0
      %v1435 = vpop.trf.xlu0
      %v1436 = vpop.trf.xlu0
      %v1437 = vpop.trf.xlu0
      %v1438 = vpop.trf.xlu0
      %v1439 = vpop.trf.xlu0
      %v1440 = vpop.trf.xlu0
      %v1441 = vpop.trf.xlu0
      %1443 = vset.pattern.permute.xlu0 0
      %1444 = vperm.xlu0 %1443, %v1426
      %v1445 = vpop.permute.xlu0 %1444
      %1448 = vset.pattern.permute.xlu0 0
      %1449 = vperm.xlu0 %1448, %v1427
      %v1450 = vpop.permute.xlu0 %1449
      %1453 = vset.pattern.permute.xlu0 0
      %1454 = vperm.xlu0 %1453, %v1428
      %v1455 = vpop.permute.xlu0 %1454
      %1458 = vset.pattern.permute.xlu0 0
      %1459 = vperm.xlu0 %1458, %v1429
      %v1460 = vpop.permute.xlu0 %1459
      %1463 = vset.pattern.permute.xlu0 0
      %1464 = vperm.xlu0 %1463, %v1430
      %v1465 = vpop.permute.xlu0 %1464
      %1468 = vset.pattern.permute.xlu0 0
      %1469 = vperm.xlu0 %1468, %v1431
      %v1470 = vpop.permute.xlu0 %1469
      %1473 = vset.pattern.permute.xlu0 0
      %1474 = vperm.xlu0 %1473, %v1432
      %v1475 = vpop.permute.xlu0 %1474
      %1478 = vset.pattern.permute.xlu0 0
      %1479 = vperm.xlu0 %1478, %v1433
      %v1480 = vpop.permute.xlu0 %1479
      %1483 = vset.pattern.permute.xlu0 0
      %1484 = vperm.xlu0 %1483, %v1434
      %v1485 = vpop.permute.xlu0 %1484
      %1488 = vset.pattern.permute.xlu0 0
      %1489 = vperm.xlu0 %1488, %v1435
      %v1490 = vpop.permute.xlu0 %1489
      %1493 = vset.pattern.permute.xlu0 0
      %1494 = vperm.xlu0 %1493, %v1436
      %v1495 = vpop.permute.xlu0 %1494
      %1498 = vset.pattern.permute.xlu0 0
      %1499 = vperm.xlu0 %1498, %v1437
      %v1500 = vpop.permute.xlu0 %1499
      %1503 = vset.pattern.permute.xlu0 0
      %1504 = vperm.xlu0 %1503, %v1438
      %v1505 = vpop.permute.xlu0 %1504
      %1508 = vset.pattern.permute.xlu0 0
      %1509 = vperm.xlu0 %1508, %v1439
      %v1510 = vpop.permute.xlu0 %1509
      %1513 = vset.pattern.permute.xlu0 0
      %1514 = vperm.xlu0 %1513, %v1440
      %v1515 = vpop.permute.xlu0 %1514
      %1518 = vset.pattern.permute.xlu0 0
      %1519 = vperm.xlu0 %1518, %v1441
      %v1520 = vpop.permute.xlu0 %1519
      %v1522 = vsel %vm508, %v1445, %v1485
      %v1523 = vsel %vm508, %v1450, %v1490
      %v1524 = vsel %vm508, %v1455, %v1495
      %v1525 = vsel %vm508, %v1460, %v1500
      %v1526 = vsel %vm508, %v1465, %v1505
      %v1527 = vsel %vm508, %v1470, %v1510
      %v1528 = vsel %vm508, %v1475, %v1515
      %v1529 = vsel %vm508, %v1480, %v1520
      %v1530 = vlaneseq
      %v1531 = vshrl.u32 %v1530, 7
      %v1532 = vsub.s32 3, %v1531
      %v1533 = vrot.slane %v469, %v1532
      %v1534 = vmul.f32 %v1308, %v1533
      %v1535 = vmul.f32 %v1309, %v1533
      %v1536 = vmul.f32 %v1310, %v1533
      %v1537 = vmul.f32 %v1311, %v1533
      %v1538 = vmul.f32 %v1312, %v1533
      %v1539 = vmul.f32 %v1313, %v1533
      %v1540 = vmul.f32 %v1314, %v1533
      %v1541 = vmul.f32 %v1315, %v1533
      %v1542 = vsel %vm508, %v1534, 0.0
      %v1543 = vsel %vm508, %v1535, 0.0
      %v1544 = vsel %vm508, %v1536, 0.0
      %v1545 = vsel %vm508, %v1537, 0.0
      %v1546 = vsel %vm508, %v1538, 0.0
      %v1547 = vsel %vm508, %v1539, 0.0
      %v1548 = vsel %vm508, %v1540, 0.0
      %v1549 = vsel %vm508, %v1541, 0.0
      %1550 = vadd.xlane.f32.xlu0 %v1542
      %v1551 = vpop.xlane.xlu0 %1550
      %1552 = vadd.xlane.f32.xlu0 %v1543
      %v1553 = vpop.xlane.xlu0 %1552
      %1554 = vadd.xlane.f32.xlu0 %v1544
      %v1555 = vpop.xlane.xlu0 %1554
      %1556 = vadd.xlane.f32.xlu0 %v1545
      %v1557 = vpop.xlane.xlu0 %1556
      %1558 = vadd.xlane.f32.xlu0 %v1546
      %v1559 = vpop.xlane.xlu0 %1558
      %1560 = vadd.xlane.f32.xlu0 %v1547
      %v1561 = vpop.xlane.xlu0 %1560
      %1562 = vadd.xlane.f32.xlu0 %v1548
      %v1563 = vpop.xlane.xlu0 %1562
      %1564 = vadd.xlane.f32.xlu0 %v1549
      %v1565 = vpop.xlane.xlu0 %1564
      %1566 = vadd.xlane.f32.xlu0 %v1534
      %v1567 = vpop.xlane.xlu0 %1566
      %1568 = vadd.xlane.f32.xlu0 %v1535
      %v1569 = vpop.xlane.xlu0 %1568
      %1570 = vadd.xlane.f32.xlu0 %v1536
      %v1571 = vpop.xlane.xlu0 %1570
      %1572 = vadd.xlane.f32.xlu0 %v1537
      %v1573 = vpop.xlane.xlu0 %1572
      %1574 = vadd.xlane.f32.xlu0 %v1538
      %v1575 = vpop.xlane.xlu0 %1574
      %1576 = vadd.xlane.f32.xlu0 %v1539
      %v1577 = vpop.xlane.xlu0 %1576
      %1578 = vadd.xlane.f32.xlu0 %v1540
      %v1579 = vpop.xlane.xlu0 %1578
      %1580 = vadd.xlane.f32.xlu0 %v1541
      %v1581 = vpop.xlane.xlu0 %1580
      %v1582 = vsub.f32 %v1567, %v1551
      %v1583 = vsub.f32 %v1569, %v1553
      %v1584 = vsub.f32 %v1571, %v1555
      %v1585 = vsub.f32 %v1573, %v1557
      %v1586 = vsub.f32 %v1575, %v1559
      %v1587 = vsub.f32 %v1577, %v1561
      %v1588 = vsub.f32 %v1579, %v1563
      %v1589 = vsub.f32 %v1581, %v1565
      %v1590 = vsel %vm508, %v1551, %v1582
      %v1591 = vsel %vm508, %v1553, %v1583
      %v1592 = vsel %vm508, %v1555, %v1584
      %v1593 = vsel %vm508, %v1557, %v1585
      %v1594 = vsel %vm508, %v1559, %v1586
      %v1595 = vsel %vm508, %v1561, %v1587
      %v1596 = vsel %vm508, %v1563, %v1588
      %v1597 = vsel %vm508, %v1565, %v1589
      %v1598 = vlaneseq
      %v1599 = vshrl.u32 %v1598, 7
      %v1600 = vsub.s32 3, %v1599
      %v1601 = vrot.slane %v452, %v1600
      %v1602 = vmul.f32 %v1308, %v1601
      %v1603 = vmul.f32 %v1309, %v1601
      %v1604 = vmul.f32 %v1310, %v1601
      %v1605 = vmul.f32 %v1311, %v1601
      %v1606 = vmul.f32 %v1312, %v1601
      %v1607 = vmul.f32 %v1313, %v1601
      %v1608 = vmul.f32 %v1314, %v1601
      %v1609 = vmul.f32 %v1315, %v1601
      %v1610 = vlaneseq
      %v1611 = vshrl.u32 %v1610, 7
      %v1612 = vsub.s32 3, %v1611
      %v1613 = vrot.slane %v461, %v1612
      %v1614 = vmul.f32 %v1522, %v1613
      %v1615 = vmul.f32 %v1523, %v1613
      %v1616 = vmul.f32 %v1524, %v1613
      %v1617 = vmul.f32 %v1525, %v1613
      %v1618 = vmul.f32 %v1526, %v1613
      %v1619 = vmul.f32 %v1527, %v1613
      %v1620 = vmul.f32 %v1528, %v1613
      %v1621 = vmul.f32 %v1529, %v1613
      %v1622 = vadd.f32 %v1602, %v1614
      %v1623 = vadd.f32 %v1603, %v1615
      %v1624 = vadd.f32 %v1604, %v1616
      %v1625 = vadd.f32 %v1605, %v1617
      %v1626 = vadd.f32 %v1606, %v1618
      %v1627 = vadd.f32 %v1607, %v1619
      %v1628 = vadd.f32 %v1608, %v1620
      %v1629 = vadd.f32 %v1609, %v1621
      %v1630 = vlaneseq
      %v1631 = vshrl.u32 %v1630, 7
      %v1632 = vsub.s32 3, %v1631
      %v1633 = vrot.slane %v473, %v1632
      %v1634 = vmul.f32 %v1590, %v1633
      %v1635 = vmul.f32 %v1591, %v1633
      %v1636 = vmul.f32 %v1592, %v1633
      %v1637 = vmul.f32 %v1593, %v1633
      %v1638 = vmul.f32 %v1594, %v1633
      %v1639 = vmul.f32 %v1595, %v1633
      %v1640 = vmul.f32 %v1596, %v1633
      %v1641 = vmul.f32 %v1597, %v1633
      %v1642 = vadd.f32 %v1622, %v1634
      %v1643 = vadd.f32 %v1623, %v1635
      %v1644 = vadd.f32 %v1624, %v1636
      %v1645 = vadd.f32 %v1625, %v1637
      %v1646 = vadd.f32 %v1626, %v1638
      %v1647 = vadd.f32 %v1627, %v1639
      %v1648 = vadd.f32 %v1628, %v1640
      %v1649 = vadd.f32 %v1629, %v1641
      %v1650 = vlaneseq
      %v1651 = vshrl.u32 %v1650, 7
      %v1652 = vsub.s32 3, %v1651
      %v1653 = vrot.slane %v457, %v1652
      %v1654 = vmul.f32 %v1642, %v1653
      %v1655 = vmul.f32 %v1643, %v1653
      %v1656 = vmul.f32 %v1644, %v1653
      %v1657 = vmul.f32 %v1645, %v1653
      %v1658 = vmul.f32 %v1646, %v1653
      %v1659 = vmul.f32 %v1647, %v1653
      %v1660 = vmul.f32 %v1648, %v1653
      %v1661 = vmul.f32 %v1649, %v1653
      %v1662 = vsel %vm508, %v1654, 0.0
      %v1663 = vsel %vm508, %v1655, 0.0
      %v1664 = vsel %vm508, %v1656, 0.0
      %v1665 = vsel %vm508, %v1657, 0.0
      %v1666 = vsel %vm508, %v1658, 0.0
      %v1667 = vsel %vm508, %v1659, 0.0
      %v1668 = vsel %vm508, %v1660, 0.0
      %v1669 = vsel %vm508, %v1661, 0.0
      %1670 = vadd.xlane.f32.xlu0 %v1662
      %v1671 = vpop.xlane.xlu0 %1670
      %1672 = vadd.xlane.f32.xlu0 %v1663
      %v1673 = vpop.xlane.xlu0 %1672
      %1674 = vadd.xlane.f32.xlu0 %v1664
      %v1675 = vpop.xlane.xlu0 %1674
      %1676 = vadd.xlane.f32.xlu0 %v1665
      %v1677 = vpop.xlane.xlu0 %1676
      %1678 = vadd.xlane.f32.xlu0 %v1666
      %v1679 = vpop.xlane.xlu0 %1678
      %1680 = vadd.xlane.f32.xlu0 %v1667
      %v1681 = vpop.xlane.xlu0 %1680
      %1682 = vadd.xlane.f32.xlu0 %v1668
      %v1683 = vpop.xlane.xlu0 %1682
      %1684 = vadd.xlane.f32.xlu0 %v1669
      %v1685 = vpop.xlane.xlu0 %1684
      %1686 = vadd.xlane.f32.xlu0 %v1654
      %v1687 = vpop.xlane.xlu0 %1686
      %1688 = vadd.xlane.f32.xlu0 %v1655
      %v1689 = vpop.xlane.xlu0 %1688
      %1690 = vadd.xlane.f32.xlu0 %v1656
      %v1691 = vpop.xlane.xlu0 %1690
      %1692 = vadd.xlane.f32.xlu0 %v1657
      %v1693 = vpop.xlane.xlu0 %1692
      %1694 = vadd.xlane.f32.xlu0 %v1658
      %v1695 = vpop.xlane.xlu0 %1694
      %1696 = vadd.xlane.f32.xlu0 %v1659
      %v1697 = vpop.xlane.xlu0 %1696
      %1698 = vadd.xlane.f32.xlu0 %v1660
      %v1699 = vpop.xlane.xlu0 %1698
      %1700 = vadd.xlane.f32.xlu0 %v1661
      %v1701 = vpop.xlane.xlu0 %1700
      %v1702 = vsub.f32 %v1687, %v1671
      %v1703 = vsub.f32 %v1689, %v1673
      %v1704 = vsub.f32 %v1691, %v1675
      %v1705 = vsub.f32 %v1693, %v1677
      %v1706 = vsub.f32 %v1695, %v1679
      %v1707 = vsub.f32 %v1697, %v1681
      %v1708 = vsub.f32 %v1699, %v1683
      %v1709 = vsub.f32 %v1701, %v1685
      %1710 = vxpose.xlu0.b32.start [1/16] %v1671, 128
      %1711 = vxpose.xlu0.b32.cont [2/16] %v1673, 128
      %1712 = vxpose.xlu0.b32.cont [3/16] %v1675, 128
      %1713 = vxpose.xlu0.b32.cont [4/16] %v1677, 128
      %1714 = vxpose.xlu0.b32.cont [5/16] %v1679, 128
      %1715 = vxpose.xlu0.b32.cont [6/16] %v1681, 128
      %1716 = vxpose.xlu0.b32.cont [7/16] %v1683, 128
      %1717 = vxpose.xlu0.b32.cont [8/16] %v1685, 128
      %1718 = vxpose.xlu0.b32.cont [9/16] %v1702, 128
      %1719 = vxpose.xlu0.b32.cont [10/16] %v1703, 128
      %1720 = vxpose.xlu0.b32.cont [11/16] %v1704, 128
      %1721 = vxpose.xlu0.b32.cont [12/16] %v1705, 128
      %1722 = vxpose.xlu0.b32.cont [13/16] %v1706, 128
      %1723 = vxpose.xlu0.b32.cont [14/16] %v1707, 128
      %1724 = vxpose.xlu0.b32.cont [15/16] %v1708, 128
      %1725 = vxpose.xlu0.b32.end [16/16] %v1709, 128
      %v1726 = vpop.trf.xlu0
      %v1727 = vpop.trf.xlu0
      %v1728 = vpop.trf.xlu0
      %v1729 = vpop.trf.xlu0
      %v1730 = vpop.trf.xlu0
      %v1731 = vpop.trf.xlu0
      %v1732 = vpop.trf.xlu0
      %v1733 = vpop.trf.xlu0
      %v1734 = vpop.trf.xlu0
      %v1735 = vpop.trf.xlu0
      %v1736 = vpop.trf.xlu0
      %v1737 = vpop.trf.xlu0
      %v1738 = vpop.trf.xlu0
      %v1739 = vpop.trf.xlu0
      %v1740 = vpop.trf.xlu0
      %v1741 = vpop.trf.xlu0
      %v1742 = vrot.slane %v465, 4
      %1744 = vxpose.xlu0.b32.start [1/16] %v1742, 128
      %1745 = vxpose.xlu0.b32.cont [2/16] 0.0, 128
      %1746 = vxpose.xlu0.b32.cont [3/16] 0.0, 128
      %1747 = vxpose.xlu0.b32.cont [4/16] 0.0, 128
      %1748 = vxpose.xlu0.b32.cont [5/16] 0.0, 128
      %1749 = vxpose.xlu0.b32.cont [6/16] 0.0, 128
      %1750 = vxpose.xlu0.b32.cont [7/16] 0.0, 128
      %1751 = vxpose.xlu0.b32.cont [8/16] 0.0, 128
      %1752 = vxpose.xlu0.b32.cont [9/16] 0.0, 128
      %1753 = vxpose.xlu0.b32.cont [10/16] 0.0, 128
      %1754 = vxpose.xlu0.b32.cont [11/16] 0.0, 128
      %1755 = vxpose.xlu0.b32.cont [12/16] 0.0, 128
      %1756 = vxpose.xlu0.b32.cont [13/16] 0.0, 128
      %1757 = vxpose.xlu0.b32.cont [14/16] 0.0, 128
      %1758 = vxpose.xlu0.b32.cont [15/16] 0.0, 128
      %1759 = vxpose.xlu0.b32.end [16/16] 0.0, 128
      %v1760 = vpop.trf.xlu0
      %v1761 = vpop.trf.xlu0
      %v1762 = vpop.trf.xlu0
      %v1763 = vpop.trf.xlu0
      %v1764 = vpop.trf.xlu0
      %v1765 = vpop.trf.xlu0
      %v1766 = vpop.trf.xlu0
      %v1767 = vpop.trf.xlu0
      %v1768 = vpop.trf.xlu0
      %v1769 = vpop.trf.xlu0
      %v1770 = vpop.trf.xlu0
      %v1771 = vpop.trf.xlu0
      %v1772 = vpop.trf.xlu0
      %v1773 = vpop.trf.xlu0
      %v1774 = vpop.trf.xlu0
      %v1775 = vpop.trf.xlu0
      %1777 = vset.pattern.permute.xlu0 0
      %1778 = vperm.xlu0 %1777, %v1760
      %v1779 = vpop.permute.xlu0 %1778
      %1782 = vset.pattern.permute.xlu0 0
      %1783 = vperm.xlu0 %1782, %v1761
      %v1784 = vpop.permute.xlu0 %1783
      %1787 = vset.pattern.permute.xlu0 0
      %1788 = vperm.xlu0 %1787, %v1762
      %v1789 = vpop.permute.xlu0 %1788
      %1792 = vset.pattern.permute.xlu0 0
      %1793 = vperm.xlu0 %1792, %v1763
      %v1794 = vpop.permute.xlu0 %1793
      %1797 = vset.pattern.permute.xlu0 0
      %1798 = vperm.xlu0 %1797, %v1764
      %v1799 = vpop.permute.xlu0 %1798
      %1802 = vset.pattern.permute.xlu0 0
      %1803 = vperm.xlu0 %1802, %v1765
      %v1804 = vpop.permute.xlu0 %1803
      %1807 = vset.pattern.permute.xlu0 0
      %1808 = vperm.xlu0 %1807, %v1766
      %v1809 = vpop.permute.xlu0 %1808
      %1812 = vset.pattern.permute.xlu0 0
      %1813 = vperm.xlu0 %1812, %v1767
      %v1814 = vpop.permute.xlu0 %1813
      %1817 = vset.pattern.permute.xlu0 0
      %1818 = vperm.xlu0 %1817, %v1768
      %v1819 = vpop.permute.xlu0 %1818
      %1822 = vset.pattern.permute.xlu0 0
      %1823 = vperm.xlu0 %1822, %v1769
      %v1824 = vpop.permute.xlu0 %1823
      %1827 = vset.pattern.permute.xlu0 0
      %1828 = vperm.xlu0 %1827, %v1770
      %v1829 = vpop.permute.xlu0 %1828
      %1832 = vset.pattern.permute.xlu0 0
      %1833 = vperm.xlu0 %1832, %v1771
      %v1834 = vpop.permute.xlu0 %1833
      %1837 = vset.pattern.permute.xlu0 0
      %1838 = vperm.xlu0 %1837, %v1772
      %v1839 = vpop.permute.xlu0 %1838
      %1842 = vset.pattern.permute.xlu0 0
      %1843 = vperm.xlu0 %1842, %v1773
      %v1844 = vpop.permute.xlu0 %1843
      %1847 = vset.pattern.permute.xlu0 0
      %1848 = vperm.xlu0 %1847, %v1774
      %v1849 = vpop.permute.xlu0 %1848
      %1852 = vset.pattern.permute.xlu0 0
      %1853 = vperm.xlu0 %1852, %v1775
      %v1854 = vpop.permute.xlu0 %1853
      %v1856 = vsel %vm508, %v1779, %v1819
      %v1857 = vsel %vm508, %v1784, %v1824
      %v1858 = vsel %vm508, %v1789, %v1829
      %v1859 = vsel %vm508, %v1794, %v1834
      %v1860 = vsel %vm508, %v1799, %v1839
      %v1861 = vsel %vm508, %v1804, %v1844
      %v1862 = vsel %vm508, %v1809, %v1849
      %v1863 = vsel %vm508, %v1814, %v1854
      %v1864 = vlaneseq
      %v1865 = vshrl.u32 %v1864, 7
      %v1866 = vsub.s32 4, %v1865
      %v1867 = vrot.slane %v469, %v1866
      %v1868 = vmul.f32 %v1642, %v1867
      %v1869 = vmul.f32 %v1643, %v1867
      %v1870 = vmul.f32 %v1644, %v1867
      %v1871 = vmul.f32 %v1645, %v1867
      %v1872 = vmul.f32 %v1646, %v1867
      %v1873 = vmul.f32 %v1647, %v1867
      %v1874 = vmul.f32 %v1648, %v1867
      %v1875 = vmul.f32 %v1649, %v1867
      %v1876 = vsel %vm508, %v1868, 0.0
      %v1877 = vsel %vm508, %v1869, 0.0
      %v1878 = vsel %vm508, %v1870, 0.0
      %v1879 = vsel %vm508, %v1871, 0.0
      %v1880 = vsel %vm508, %v1872, 0.0
      %v1881 = vsel %vm508, %v1873, 0.0
      %v1882 = vsel %vm508, %v1874, 0.0
      %v1883 = vsel %vm508, %v1875, 0.0
      %1884 = vadd.xlane.f32.xlu0 %v1876
      %v1885 = vpop.xlane.xlu0 %1884
      %1886 = vadd.xlane.f32.xlu0 %v1877
      %v1887 = vpop.xlane.xlu0 %1886
      %1888 = vadd.xlane.f32.xlu0 %v1878
      %v1889 = vpop.xlane.xlu0 %1888
      %1890 = vadd.xlane.f32.xlu0 %v1879
      %v1891 = vpop.xlane.xlu0 %1890
      %1892 = vadd.xlane.f32.xlu0 %v1880
      %v1893 = vpop.xlane.xlu0 %1892
      %1894 = vadd.xlane.f32.xlu0 %v1881
      %v1895 = vpop.xlane.xlu0 %1894
      %1896 = vadd.xlane.f32.xlu0 %v1882
      %v1897 = vpop.xlane.xlu0 %1896
      %1898 = vadd.xlane.f32.xlu0 %v1883
      %v1899 = vpop.xlane.xlu0 %1898
      %1900 = vadd.xlane.f32.xlu0 %v1868
      %v1901 = vpop.xlane.xlu0 %1900
      %1902 = vadd.xlane.f32.xlu0 %v1869
      %v1903 = vpop.xlane.xlu0 %1902
      %1904 = vadd.xlane.f32.xlu0 %v1870
      %v1905 = vpop.xlane.xlu0 %1904
      %1906 = vadd.xlane.f32.xlu0 %v1871
      %v1907 = vpop.xlane.xlu0 %1906
      %1908 = vadd.xlane.f32.xlu0 %v1872
      %v1909 = vpop.xlane.xlu0 %1908
      %1910 = vadd.xlane.f32.xlu0 %v1873
      %v1911 = vpop.xlane.xlu0 %1910
      %1912 = vadd.xlane.f32.xlu0 %v1874
      %v1913 = vpop.xlane.xlu0 %1912
      %1914 = vadd.xlane.f32.xlu0 %v1875
      %v1915 = vpop.xlane.xlu0 %1914
      %v1916 = vsub.f32 %v1901, %v1885
      %v1917 = vsub.f32 %v1903, %v1887
      %v1918 = vsub.f32 %v1905, %v1889
      %v1919 = vsub.f32 %v1907, %v1891
      %v1920 = vsub.f32 %v1909, %v1893
      %v1921 = vsub.f32 %v1911, %v1895
      %v1922 = vsub.f32 %v1913, %v1897
      %v1923 = vsub.f32 %v1915, %v1899
      %v1924 = vsel %vm508, %v1885, %v1916
      %v1925 = vsel %vm508, %v1887, %v1917
      %v1926 = vsel %vm508, %v1889, %v1918
      %v1927 = vsel %vm508, %v1891, %v1919
      %v1928 = vsel %vm508, %v1893, %v1920
      %v1929 = vsel %vm508, %v1895, %v1921
      %v1930 = vsel %vm508, %v1897, %v1922
      %v1931 = vsel %vm508, %v1899, %v1923
      %v1932 = vlaneseq
      %v1933 = vshrl.u32 %v1932, 7
      %v1934 = vsub.s32 4, %v1933
      %v1935 = vrot.slane %v452, %v1934
      %v1936 = vmul.f32 %v1642, %v1935
      %v1937 = vmul.f32 %v1643, %v1935
      %v1938 = vmul.f32 %v1644, %v1935
      %v1939 = vmul.f32 %v1645, %v1935
      %v1940 = vmul.f32 %v1646, %v1935
      %v1941 = vmul.f32 %v1647, %v1935
      %v1942 = vmul.f32 %v1648, %v1935
      %v1943 = vmul.f32 %v1649, %v1935
      %v1944 = vlaneseq
      %v1945 = vshrl.u32 %v1944, 7
      %v1946 = vsub.s32 4, %v1945
      %v1947 = vrot.slane %v461, %v1946
      %v1948 = vmul.f32 %v1856, %v1947
      %v1949 = vmul.f32 %v1857, %v1947
      %v1950 = vmul.f32 %v1858, %v1947
      %v1951 = vmul.f32 %v1859, %v1947
      %v1952 = vmul.f32 %v1860, %v1947
      %v1953 = vmul.f32 %v1861, %v1947
      %v1954 = vmul.f32 %v1862, %v1947
      %v1955 = vmul.f32 %v1863, %v1947
      %v1956 = vadd.f32 %v1936, %v1948
      %v1957 = vadd.f32 %v1937, %v1949
      %v1958 = vadd.f32 %v1938, %v1950
      %v1959 = vadd.f32 %v1939, %v1951
      %v1960 = vadd.f32 %v1940, %v1952
      %v1961 = vadd.f32 %v1941, %v1953
      %v1962 = vadd.f32 %v1942, %v1954
      %v1963 = vadd.f32 %v1943, %v1955
      %v1964 = vlaneseq
      %v1965 = vshrl.u32 %v1964, 7
      %v1966 = vsub.s32 4, %v1965
      %v1967 = vrot.slane %v473, %v1966
      %v1968 = vmul.f32 %v1924, %v1967
      %v1969 = vmul.f32 %v1925, %v1967
      %v1970 = vmul.f32 %v1926, %v1967
      %v1971 = vmul.f32 %v1927, %v1967
      %v1972 = vmul.f32 %v1928, %v1967
      %v1973 = vmul.f32 %v1929, %v1967
      %v1974 = vmul.f32 %v1930, %v1967
      %v1975 = vmul.f32 %v1931, %v1967
      %v1976 = vadd.f32 %v1956, %v1968
      %v1977 = vadd.f32 %v1957, %v1969
      %v1978 = vadd.f32 %v1958, %v1970
      %v1979 = vadd.f32 %v1959, %v1971
      %v1980 = vadd.f32 %v1960, %v1972
      %v1981 = vadd.f32 %v1961, %v1973
      %v1982 = vadd.f32 %v1962, %v1974
      %v1983 = vadd.f32 %v1963, %v1975
      %v1984 = vlaneseq
      %v1985 = vshrl.u32 %v1984, 7
      %v1986 = vsub.s32 4, %v1985
      %v1987 = vrot.slane %v457, %v1986
      %v1988 = vmul.f32 %v1976, %v1987
      %v1989 = vmul.f32 %v1977, %v1987
      %v1990 = vmul.f32 %v1978, %v1987
      %v1991 = vmul.f32 %v1979, %v1987
      %v1992 = vmul.f32 %v1980, %v1987
      %v1993 = vmul.f32 %v1981, %v1987
      %v1994 = vmul.f32 %v1982, %v1987
      %v1995 = vmul.f32 %v1983, %v1987
      %v1996 = vsel %vm508, %v1988, 0.0
      %v1997 = vsel %vm508, %v1989, 0.0
      %v1998 = vsel %vm508, %v1990, 0.0
      %v1999 = vsel %vm508, %v1991, 0.0
      %v2000 = vsel %vm508, %v1992, 0.0
      %v2001 = vsel %vm508, %v1993, 0.0
      %v2002 = vsel %vm508, %v1994, 0.0
      %v2003 = vsel %vm508, %v1995, 0.0
      %2004 = vadd.xlane.f32.xlu0 %v1996
      %v2005 = vpop.xlane.xlu0 %2004
      %2006 = vadd.xlane.f32.xlu0 %v1997
      %v2007 = vpop.xlane.xlu0 %2006
      %2008 = vadd.xlane.f32.xlu0 %v1998
      %v2009 = vpop.xlane.xlu0 %2008
      %2010 = vadd.xlane.f32.xlu0 %v1999
      %v2011 = vpop.xlane.xlu0 %2010
      %2012 = vadd.xlane.f32.xlu0 %v2000
      %v2013 = vpop.xlane.xlu0 %2012
      %2014 = vadd.xlane.f32.xlu0 %v2001
      %v2015 = vpop.xlane.xlu0 %2014
      %2016 = vadd.xlane.f32.xlu0 %v2002
      %v2017 = vpop.xlane.xlu0 %2016
      %2018 = vadd.xlane.f32.xlu0 %v2003
      %v2019 = vpop.xlane.xlu0 %2018
      %2020 = vadd.xlane.f32.xlu0 %v1988
      %v2021 = vpop.xlane.xlu0 %2020
      %2022 = vadd.xlane.f32.xlu0 %v1989
      %v2023 = vpop.xlane.xlu0 %2022
      %2024 = vadd.xlane.f32.xlu0 %v1990
      %v2025 = vpop.xlane.xlu0 %2024
      %2026 = vadd.xlane.f32.xlu0 %v1991
      %v2027 = vpop.xlane.xlu0 %2026
      %2028 = vadd.xlane.f32.xlu0 %v1992
      %v2029 = vpop.xlane.xlu0 %2028
      %2030 = vadd.xlane.f32.xlu0 %v1993
      %v2031 = vpop.xlane.xlu0 %2030
      %2032 = vadd.xlane.f32.xlu0 %v1994
      %v2033 = vpop.xlane.xlu0 %2032
      %2034 = vadd.xlane.f32.xlu0 %v1995
      %v2035 = vpop.xlane.xlu0 %2034
      %v2036 = vsub.f32 %v2021, %v2005
      %v2037 = vsub.f32 %v2023, %v2007
      %v2038 = vsub.f32 %v2025, %v2009
      %v2039 = vsub.f32 %v2027, %v2011
      %v2040 = vsub.f32 %v2029, %v2013
      %v2041 = vsub.f32 %v2031, %v2015
      %v2042 = vsub.f32 %v2033, %v2017
      %v2043 = vsub.f32 %v2035, %v2019
      %2044 = vxpose.xlu0.b32.start [1/16] %v2005, 128
      %2045 = vxpose.xlu0.b32.cont [2/16] %v2007, 128
      %2046 = vxpose.xlu0.b32.cont [3/16] %v2009, 128
      %2047 = vxpose.xlu0.b32.cont [4/16] %v2011, 128
      %2048 = vxpose.xlu0.b32.cont [5/16] %v2013, 128
      %2049 = vxpose.xlu0.b32.cont [6/16] %v2015, 128
      %2050 = vxpose.xlu0.b32.cont [7/16] %v2017, 128
      %2051 = vxpose.xlu0.b32.cont [8/16] %v2019, 128
      %2052 = vxpose.xlu0.b32.cont [9/16] %v2036, 128
      %2053 = vxpose.xlu0.b32.cont [10/16] %v2037, 128
      %2054 = vxpose.xlu0.b32.cont [11/16] %v2038, 128
      %2055 = vxpose.xlu0.b32.cont [12/16] %v2039, 128
      %2056 = vxpose.xlu0.b32.cont [13/16] %v2040, 128
      %2057 = vxpose.xlu0.b32.cont [14/16] %v2041, 128
      %2058 = vxpose.xlu0.b32.cont [15/16] %v2042, 128
      %2059 = vxpose.xlu0.b32.end [16/16] %v2043, 128
      %v2060 = vpop.trf.xlu0
      %v2061 = vpop.trf.xlu0
      %v2062 = vpop.trf.xlu0
      %v2063 = vpop.trf.xlu0
      %v2064 = vpop.trf.xlu0
      %v2065 = vpop.trf.xlu0
      %v2066 = vpop.trf.xlu0
      %v2067 = vpop.trf.xlu0
      %v2068 = vpop.trf.xlu0
      %v2069 = vpop.trf.xlu0
      %v2070 = vpop.trf.xlu0
      %v2071 = vpop.trf.xlu0
      %v2072 = vpop.trf.xlu0
      %v2073 = vpop.trf.xlu0
      %v2074 = vpop.trf.xlu0
      %v2075 = vpop.trf.xlu0
      %v2076 = vrot.slane %v465, 5
      %2078 = vxpose.xlu0.b32.start [1/16] %v2076, 128
      %2079 = vxpose.xlu0.b32.cont [2/16] 0.0, 128
      %2080 = vxpose.xlu0.b32.cont [3/16] 0.0, 128
      %2081 = vxpose.xlu0.b32.cont [4/16] 0.0, 128
      %2082 = vxpose.xlu0.b32.cont [5/16] 0.0, 128
      %2083 = vxpose.xlu0.b32.cont [6/16] 0.0, 128
      %2084 = vxpose.xlu0.b32.cont [7/16] 0.0, 128
      %2085 = vxpose.xlu0.b32.cont [8/16] 0.0, 128
      %2086 = vxpose.xlu0.b32.cont [9/16] 0.0, 128
      %2087 = vxpose.xlu0.b32.cont [10/16] 0.0, 128
      %2088 = vxpose.xlu0.b32.cont [11/16] 0.0, 128
      %2089 = vxpose.xlu0.b32.cont [12/16] 0.0, 128
      %2090 = vxpose.xlu0.b32.cont [13/16] 0.0, 128
      %2091 = vxpose.xlu0.b32.cont [14/16] 0.0, 128
      %2092 = vxpose.xlu0.b32.cont [15/16] 0.0, 128
      %2093 = vxpose.xlu0.b32.end [16/16] 0.0, 128
      %v2094 = vpop.trf.xlu0
      %v2095 = vpop.trf.xlu0
      %v2096 = vpop.trf.xlu0
      %v2097 = vpop.trf.xlu0
      %v2098 = vpop.trf.xlu0
      %v2099 = vpop.trf.xlu0
      %v2100 = vpop.trf.xlu0
      %v2101 = vpop.trf.xlu0
      %v2102 = vpop.trf.xlu0
      %v2103 = vpop.trf.xlu0
      %v2104 = vpop.trf.xlu0
      %v2105 = vpop.trf.xlu0
      %v2106 = vpop.trf.xlu0
      %v2107 = vpop.trf.xlu0
      %v2108 = vpop.trf.xlu0
      %v2109 = vpop.trf.xlu0
      %2111 = vset.pattern.permute.xlu0 0
      %2112 = vperm.xlu0 %2111, %v2094
      %v2113 = vpop.permute.xlu0 %2112
      %2116 = vset.pattern.permute.xlu0 0
      %2117 = vperm.xlu0 %2116, %v2095
      %v2118 = vpop.permute.xlu0 %2117
      %2121 = vset.pattern.permute.xlu0 0
      %2122 = vperm.xlu0 %2121, %v2096
      %v2123 = vpop.permute.xlu0 %2122
      %2126 = vset.pattern.permute.xlu0 0
      %2127 = vperm.xlu0 %2126, %v2097
      %v2128 = vpop.permute.xlu0 %2127
      %2131 = vset.pattern.permute.xlu0 0
      %2132 = vperm.xlu0 %2131, %v2098
      %v2133 = vpop.permute.xlu0 %2132
      %2136 = vset.pattern.permute.xlu0 0
      %2137 = vperm.xlu0 %2136, %v2099
      %v2138 = vpop.permute.xlu0 %2137
      %2141 = vset.pattern.permute.xlu0 0
      %2142 = vperm.xlu0 %2141, %v2100
      %v2143 = vpop.permute.xlu0 %2142
      %2146 = vset.pattern.permute.xlu0 0
      %2147 = vperm.xlu0 %2146, %v2101
      %v2148 = vpop.permute.xlu0 %2147
      %2151 = vset.pattern.permute.xlu0 0
      %2152 = vperm.xlu0 %2151, %v2102
      %v2153 = vpop.permute.xlu0 %2152
      %2156 = vset.pattern.permute.xlu0 0
      %2157 = vperm.xlu0 %2156, %v2103
      %v2158 = vpop.permute.xlu0 %2157
      %2161 = vset.pattern.permute.xlu0 0
      %2162 = vperm.xlu0 %2161, %v2104
      %v2163 = vpop.permute.xlu0 %2162
      %2166 = vset.pattern.permute.xlu0 0
      %2167 = vperm.xlu0 %2166, %v2105
      %v2168 = vpop.permute.xlu0 %2167
      %2171 = vset.pattern.permute.xlu0 0
      %2172 = vperm.xlu0 %2171, %v2106
      %v2173 = vpop.permute.xlu0 %2172
      %2176 = vset.pattern.permute.xlu0 0
      %2177 = vperm.xlu0 %2176, %v2107
      %v2178 = vpop.permute.xlu0 %2177
      %2181 = vset.pattern.permute.xlu0 0
      %2182 = vperm.xlu0 %2181, %v2108
      %v2183 = vpop.permute.xlu0 %2182
      %2186 = vset.pattern.permute.xlu0 0
      %2187 = vperm.xlu0 %2186, %v2109
      %v2188 = vpop.permute.xlu0 %2187
      %v2190 = vsel %vm508, %v2113, %v2153
      %v2191 = vsel %vm508, %v2118, %v2158
      %v2192 = vsel %vm508, %v2123, %v2163
      %v2193 = vsel %vm508, %v2128, %v2168
      %v2194 = vsel %vm508, %v2133, %v2173
      %v2195 = vsel %vm508, %v2138, %v2178
      %v2196 = vsel %vm508, %v2143, %v2183
      %v2197 = vsel %vm508, %v2148, %v2188
      %v2198 = vlaneseq
      %v2199 = vshrl.u32 %v2198, 7
      %v2200 = vsub.s32 5, %v2199
      %v2201 = vrot.slane %v469, %v2200
      %v2202 = vmul.f32 %v1976, %v2201
      %v2203 = vmul.f32 %v1977, %v2201
      %v2204 = vmul.f32 %v1978, %v2201
      %v2205 = vmul.f32 %v1979, %v2201
      %v2206 = vmul.f32 %v1980, %v2201
      %v2207 = vmul.f32 %v1981, %v2201
      %v2208 = vmul.f32 %v1982, %v2201
      %v2209 = vmul.f32 %v1983, %v2201
      %v2210 = vsel %vm508, %v2202, 0.0
      %v2211 = vsel %vm508, %v2203, 0.0
      %v2212 = vsel %vm508, %v2204, 0.0
      %v2213 = vsel %vm508, %v2205, 0.0
      %v2214 = vsel %vm508, %v2206, 0.0
      %v2215 = vsel %vm508, %v2207, 0.0
      %v2216 = vsel %vm508, %v2208, 0.0
      %v2217 = vsel %vm508, %v2209, 0.0
      %2218 = vadd.xlane.f32.xlu0 %v2210
      %v2219 = vpop.xlane.xlu0 %2218
      %2220 = vadd.xlane.f32.xlu0 %v2211
      %v2221 = vpop.xlane.xlu0 %2220
      %2222 = vadd.xlane.f32.xlu0 %v2212
      %v2223 = vpop.xlane.xlu0 %2222
      %2224 = vadd.xlane.f32.xlu0 %v2213
      %v2225 = vpop.xlane.xlu0 %2224
      %2226 = vadd.xlane.f32.xlu0 %v2214
      %v2227 = vpop.xlane.xlu0 %2226
      %2228 = vadd.xlane.f32.xlu0 %v2215
      %v2229 = vpop.xlane.xlu0 %2228
      %2230 = vadd.xlane.f32.xlu0 %v2216
      %v2231 = vpop.xlane.xlu0 %2230
      %2232 = vadd.xlane.f32.xlu0 %v2217
      %v2233 = vpop.xlane.xlu0 %2232
      %2234 = vadd.xlane.f32.xlu0 %v2202
      %v2235 = vpop.xlane.xlu0 %2234
      %2236 = vadd.xlane.f32.xlu0 %v2203
      %v2237 = vpop.xlane.xlu0 %2236
      %2238 = vadd.xlane.f32.xlu0 %v2204
      %v2239 = vpop.xlane.xlu0 %2238
      %2240 = vadd.xlane.f32.xlu0 %v2205
      %v2241 = vpop.xlane.xlu0 %2240
      %2242 = vadd.xlane.f32.xlu0 %v2206
      %v2243 = vpop.xlane.xlu0 %2242
      %2244 = vadd.xlane.f32.xlu0 %v2207
      %v2245 = vpop.xlane.xlu0 %2244
      %2246 = vadd.xlane.f32.xlu0 %v2208
      %v2247 = vpop.xlane.xlu0 %2246
      %2248 = vadd.xlane.f32.xlu0 %v2209
      %v2249 = vpop.xlane.xlu0 %2248
      %v2250 = vsub.f32 %v2235, %v2219
      %v2251 = vsub.f32 %v2237, %v2221
      %v2252 = vsub.f32 %v2239, %v2223
      %v2253 = vsub.f32 %v2241, %v2225
      %v2254 = vsub.f32 %v2243, %v2227
      %v2255 = vsub.f32 %v2245, %v2229
      %v2256 = vsub.f32 %v2247, %v2231
      %v2257 = vsub.f32 %v2249, %v2233
      %v2258 = vsel %vm508, %v2219, %v2250
      %v2259 = vsel %vm508, %v2221, %v2251
      %v2260 = vsel %vm508, %v2223, %v2252
      %v2261 = vsel %vm508, %v2225, %v2253
      %v2262 = vsel %vm508, %v2227, %v2254
      %v2263 = vsel %vm508, %v2229, %v2255
      %v2264 = vsel %vm508, %v2231, %v2256
      %v2265 = vsel %vm508, %v2233, %v2257
      %v2266 = vlaneseq
      %v2267 = vshrl.u32 %v2266, 7
      %v2268 = vsub.s32 5, %v2267
      %v2269 = vrot.slane %v452, %v2268
      %v2270 = vmul.f32 %v1976, %v2269
      %v2271 = vmul.f32 %v1977, %v2269
      %v2272 = vmul.f32 %v1978, %v2269
      %v2273 = vmul.f32 %v1979, %v2269
      %v2274 = vmul.f32 %v1980, %v2269
      %v2275 = vmul.f32 %v1981, %v2269
      %v2276 = vmul.f32 %v1982, %v2269
      %v2277 = vmul.f32 %v1983, %v2269
      %v2278 = vlaneseq
      %v2279 = vshrl.u32 %v2278, 7
      %v2280 = vsub.s32 5, %v2279
      %v2281 = vrot.slane %v461, %v2280
      %v2282 = vmul.f32 %v2190, %v2281
      %v2283 = vmul.f32 %v2191, %v2281
      %v2284 = vmul.f32 %v2192, %v2281
      %v2285 = vmul.f32 %v2193, %v2281
      %v2286 = vmul.f32 %v2194, %v2281
      %v2287 = vmul.f32 %v2195, %v2281
      %v2288 = vmul.f32 %v2196, %v2281
      %v2289 = vmul.f32 %v2197, %v2281
      %v2290 = vadd.f32 %v2270, %v2282
      %v2291 = vadd.f32 %v2271, %v2283
      %v2292 = vadd.f32 %v2272, %v2284
      %v2293 = vadd.f32 %v2273, %v2285
      %v2294 = vadd.f32 %v2274, %v2286
      %v2295 = vadd.f32 %v2275, %v2287
      %v2296 = vadd.f32 %v2276, %v2288
      %v2297 = vadd.f32 %v2277, %v2289
      %v2298 = vlaneseq
      %v2299 = vshrl.u32 %v2298, 7
      %v2300 = vsub.s32 5, %v2299
      %v2301 = vrot.slane %v473, %v2300
      %v2302 = vmul.f32 %v2258, %v2301
      %v2303 = vmul.f32 %v2259, %v2301
      %v2304 = vmul.f32 %v2260, %v2301
      %v2305 = vmul.f32 %v2261, %v2301
      %v2306 = vmul.f32 %v2262, %v2301
      %v2307 = vmul.f32 %v2263, %v2301
      %v2308 = vmul.f32 %v2264, %v2301
      %v2309 = vmul.f32 %v2265, %v2301
      %v2310 = vadd.f32 %v2290, %v2302
      %v2311 = vadd.f32 %v2291, %v2303
      %v2312 = vadd.f32 %v2292, %v2304
      %v2313 = vadd.f32 %v2293, %v2305
      %v2314 = vadd.f32 %v2294, %v2306
      %v2315 = vadd.f32 %v2295, %v2307
      %v2316 = vadd.f32 %v2296, %v2308
      %v2317 = vadd.f32 %v2297, %v2309
      %v2318 = vlaneseq
      %v2319 = vshrl.u32 %v2318, 7
      %v2320 = vsub.s32 5, %v2319
      %v2321 = vrot.slane %v457, %v2320
      %v2322 = vmul.f32 %v2310, %v2321
      %v2323 = vmul.f32 %v2311, %v2321
      %v2324 = vmul.f32 %v2312, %v2321
      %v2325 = vmul.f32 %v2313, %v2321
      %v2326 = vmul.f32 %v2314, %v2321
      %v2327 = vmul.f32 %v2315, %v2321
      %v2328 = vmul.f32 %v2316, %v2321
      %v2329 = vmul.f32 %v2317, %v2321
      %v2330 = vsel %vm508, %v2322, 0.0
      %v2331 = vsel %vm508, %v2323, 0.0
      %v2332 = vsel %vm508, %v2324, 0.0
      %v2333 = vsel %vm508, %v2325, 0.0
      %v2334 = vsel %vm508, %v2326, 0.0
      %v2335 = vsel %vm508, %v2327, 0.0
      %v2336 = vsel %vm508, %v2328, 0.0
      %v2337 = vsel %vm508, %v2329, 0.0
      %2338 = vadd.xlane.f32.xlu0 %v2330
      %v2339 = vpop.xlane.xlu0 %2338
      %2340 = vadd.xlane.f32.xlu0 %v2331
      %v2341 = vpop.xlane.xlu0 %2340
      %2342 = vadd.xlane.f32.xlu0 %v2332
      %v2343 = vpop.xlane.xlu0 %2342
      %2344 = vadd.xlane.f32.xlu0 %v2333
      %v2345 = vpop.xlane.xlu0 %2344
      %2346 = vadd.xlane.f32.xlu0 %v2334
      %v2347 = vpop.xlane.xlu0 %2346
      %2348 = vadd.xlane.f32.xlu0 %v2335
      %v2349 = vpop.xlane.xlu0 %2348
      %2350 = vadd.xlane.f32.xlu0 %v2336
      %v2351 = vpop.xlane.xlu0 %2350
      %2352 = vadd.xlane.f32.xlu0 %v2337
      %v2353 = vpop.xlane.xlu0 %2352
      %2354 = vadd.xlane.f32.xlu0 %v2322
      %v2355 = vpop.xlane.xlu0 %2354
      %2356 = vadd.xlane.f32.xlu0 %v2323
      %v2357 = vpop.xlane.xlu0 %2356
      %2358 = vadd.xlane.f32.xlu0 %v2324
      %v2359 = vpop.xlane.xlu0 %2358
      %2360 = vadd.xlane.f32.xlu0 %v2325
      %v2361 = vpop.xlane.xlu0 %2360
      %2362 = vadd.xlane.f32.xlu0 %v2326
      %v2363 = vpop.xlane.xlu0 %2362
      %2364 = vadd.xlane.f32.xlu0 %v2327
      %v2365 = vpop.xlane.xlu0 %2364
      %2366 = vadd.xlane.f32.xlu0 %v2328
      %v2367 = vpop.xlane.xlu0 %2366
      %2368 = vadd.xlane.f32.xlu0 %v2329
      %v2369 = vpop.xlane.xlu0 %2368
      %v2370 = vsub.f32 %v2355, %v2339
      %v2371 = vsub.f32 %v2357, %v2341
      %v2372 = vsub.f32 %v2359, %v2343
      %v2373 = vsub.f32 %v2361, %v2345
      %v2374 = vsub.f32 %v2363, %v2347
      %v2375 = vsub.f32 %v2365, %v2349
      %v2376 = vsub.f32 %v2367, %v2351
      %v2377 = vsub.f32 %v2369, %v2353
      %2378 = vxpose.xlu0.b32.start [1/16] %v2339, 128
      %2379 = vxpose.xlu0.b32.cont [2/16] %v2341, 128
      %2380 = vxpose.xlu0.b32.cont [3/16] %v2343, 128
      %2381 = vxpose.xlu0.b32.cont [4/16] %v2345, 128
      %2382 = vxpose.xlu0.b32.cont [5/16] %v2347, 128
      %2383 = vxpose.xlu0.b32.cont [6/16] %v2349, 128
      %2384 = vxpose.xlu0.b32.cont [7/16] %v2351, 128
      %2385 = vxpose.xlu0.b32.cont [8/16] %v2353, 128
      %2386 = vxpose.xlu0.b32.cont [9/16] %v2370, 128
      %2387 = vxpose.xlu0.b32.cont [10/16] %v2371, 128
      %2388 = vxpose.xlu0.b32.cont [11/16] %v2372, 128
      %2389 = vxpose.xlu0.b32.cont [12/16] %v2373, 128
      %2390 = vxpose.xlu0.b32.cont [13/16] %v2374, 128
      %2391 = vxpose.xlu0.b32.cont [14/16] %v2375, 128
      %2392 = vxpose.xlu0.b32.cont [15/16] %v2376, 128
      %2393 = vxpose.xlu0.b32.end [16/16] %v2377, 128
      %v2394 = vpop.trf.xlu0
      %v2395 = vpop.trf.xlu0
      %v2396 = vpop.trf.xlu0
      %v2397 = vpop.trf.xlu0
      %v2398 = vpop.trf.xlu0
      %v2399 = vpop.trf.xlu0
      %v2400 = vpop.trf.xlu0
      %v2401 = vpop.trf.xlu0
      %v2402 = vpop.trf.xlu0
      %v2403 = vpop.trf.xlu0
      %v2404 = vpop.trf.xlu0
      %v2405 = vpop.trf.xlu0
      %v2406 = vpop.trf.xlu0
      %v2407 = vpop.trf.xlu0
      %v2408 = vpop.trf.xlu0
      %v2409 = vpop.trf.xlu0
      %v2410 = vrot.slane %v465, 6
      %2412 = vxpose.xlu0.b32.start [1/16] %v2410, 128
      %2413 = vxpose.xlu0.b32.cont [2/16] 0.0, 128
      %2414 = vxpose.xlu0.b32.cont [3/16] 0.0, 128
      %2415 = vxpose.xlu0.b32.cont [4/16] 0.0, 128
      %2416 = vxpose.xlu0.b32.cont [5/16] 0.0, 128
      %2417 = vxpose.xlu0.b32.cont [6/16] 0.0, 128
      %2418 = vxpose.xlu0.b32.cont [7/16] 0.0, 128
      %2419 = vxpose.xlu0.b32.cont [8/16] 0.0, 128
      %2420 = vxpose.xlu0.b32.cont [9/16] 0.0, 128
      %2421 = vxpose.xlu0.b32.cont [10/16] 0.0, 128
      %2422 = vxpose.xlu0.b32.cont [11/16] 0.0, 128
      %2423 = vxpose.xlu0.b32.cont [12/16] 0.0, 128
      %2424 = vxpose.xlu0.b32.cont [13/16] 0.0, 128
      %2425 = vxpose.xlu0.b32.cont [14/16] 0.0, 128
      %2426 = vxpose.xlu0.b32.cont [15/16] 0.0, 128
      %2427 = vxpose.xlu0.b32.end [16/16] 0.0, 128
      %v2428 = vpop.trf.xlu0
      %v2429 = vpop.trf.xlu0
      %v2430 = vpop.trf.xlu0
      %v2431 = vpop.trf.xlu0
      %v2432 = vpop.trf.xlu0
      %v2433 = vpop.trf.xlu0
      %v2434 = vpop.trf.xlu0
      %v2435 = vpop.trf.xlu0
      %v2436 = vpop.trf.xlu0
      %v2437 = vpop.trf.xlu0
      %v2438 = vpop.trf.xlu0
      %v2439 = vpop.trf.xlu0
      %v2440 = vpop.trf.xlu0
      %v2441 = vpop.trf.xlu0
      %v2442 = vpop.trf.xlu0
      %v2443 = vpop.trf.xlu0
      %2445 = vset.pattern.permute.xlu0 0
      %2446 = vperm.xlu0 %2445, %v2428
      %v2447 = vpop.permute.xlu0 %2446
      %2450 = vset.pattern.permute.xlu0 0
      %2451 = vperm.xlu0 %2450, %v2429
      %v2452 = vpop.permute.xlu0 %2451
      %2455 = vset.pattern.permute.xlu0 0
      %2456 = vperm.xlu0 %2455, %v2430
      %v2457 = vpop.permute.xlu0 %2456
      %2460 = vset.pattern.permute.xlu0 0
      %2461 = vperm.xlu0 %2460, %v2431
      %v2462 = vpop.permute.xlu0 %2461
      %2465 = vset.pattern.permute.xlu0 0
      %2466 = vperm.xlu0 %2465, %v2432
      %v2467 = vpop.permute.xlu0 %2466
      %2470 = vset.pattern.permute.xlu0 0
      %2471 = vperm.xlu0 %2470, %v2433
      %v2472 = vpop.permute.xlu0 %2471
      %2475 = vset.pattern.permute.xlu0 0
      %2476 = vperm.xlu0 %2475, %v2434
      %v2477 = vpop.permute.xlu0 %2476
      %2480 = vset.pattern.permute.xlu0 0
      %2481 = vperm.xlu0 %2480, %v2435
      %v2482 = vpop.permute.xlu0 %2481
      %2485 = vset.pattern.permute.xlu0 0
      %2486 = vperm.xlu0 %2485, %v2436
      %v2487 = vpop.permute.xlu0 %2486
      %2490 = vset.pattern.permute.xlu0 0
      %2491 = vperm.xlu0 %2490, %v2437
      %v2492 = vpop.permute.xlu0 %2491
      %2495 = vset.pattern.permute.xlu0 0
      %2496 = vperm.xlu0 %2495, %v2438
      %v2497 = vpop.permute.xlu0 %2496
      %2500 = vset.pattern.permute.xlu0 0
      %2501 = vperm.xlu0 %2500, %v2439
      %v2502 = vpop.permute.xlu0 %2501
      %2505 = vset.pattern.permute.xlu0 0
      %2506 = vperm.xlu0 %2505, %v2440
      %v2507 = vpop.permute.xlu0 %2506
      %2510 = vset.pattern.permute.xlu0 0
      %2511 = vperm.xlu0 %2510, %v2441
      %v2512 = vpop.permute.xlu0 %2511
      %2515 = vset.pattern.permute.xlu0 0
      %2516 = vperm.xlu0 %2515, %v2442
      %v2517 = vpop.permute.xlu0 %2516
      %2520 = vset.pattern.permute.xlu0 0
      %2521 = vperm.xlu0 %2520, %v2443
      %v2522 = vpop.permute.xlu0 %2521
      %v2524 = vsel %vm508, %v2447, %v2487
      %v2525 = vsel %vm508, %v2452, %v2492
      %v2526 = vsel %vm508, %v2457, %v2497
      %v2527 = vsel %vm508, %v2462, %v2502
      %v2528 = vsel %vm508, %v2467, %v2507
      %v2529 = vsel %vm508, %v2472, %v2512
      %v2530 = vsel %vm508, %v2477, %v2517
      %v2531 = vsel %vm508, %v2482, %v2522
      %v2532 = vlaneseq
      %v2533 = vshrl.u32 %v2532, 7
      %v2534 = vsub.s32 6, %v2533
      %v2535 = vrot.slane %v469, %v2534
      %v2536 = vmul.f32 %v2310, %v2535
      %v2537 = vmul.f32 %v2311, %v2535
      %v2538 = vmul.f32 %v2312, %v2535
      %v2539 = vmul.f32 %v2313, %v2535
      %v2540 = vmul.f32 %v2314, %v2535
      %v2541 = vmul.f32 %v2315, %v2535
      %v2542 = vmul.f32 %v2316, %v2535
      %v2543 = vmul.f32 %v2317, %v2535
      %v2544 = vsel %vm508, %v2536, 0.0
      %v2545 = vsel %vm508, %v2537, 0.0
      %v2546 = vsel %vm508, %v2538, 0.0
      %v2547 = vsel %vm508, %v2539, 0.0
      %v2548 = vsel %vm508, %v2540, 0.0
      %v2549 = vsel %vm508, %v2541, 0.0
      %v2550 = vsel %vm508, %v2542, 0.0
      %v2551 = vsel %vm508, %v2543, 0.0
      %2552 = vadd.xlane.f32.xlu0 %v2544
      %v2553 = vpop.xlane.xlu0 %2552
      %2554 = vadd.xlane.f32.xlu0 %v2545
      %v2555 = vpop.xlane.xlu0 %2554
      %2556 = vadd.xlane.f32.xlu0 %v2546
      %v2557 = vpop.xlane.xlu0 %2556
      %2558 = vadd.xlane.f32.xlu0 %v2547
      %v2559 = vpop.xlane.xlu0 %2558
      %2560 = vadd.xlane.f32.xlu0 %v2548
      %v2561 = vpop.xlane.xlu0 %2560
      %2562 = vadd.xlane.f32.xlu0 %v2549
      %v2563 = vpop.xlane.xlu0 %2562
      %2564 = vadd.xlane.f32.xlu0 %v2550
      %v2565 = vpop.xlane.xlu0 %2564
      %2566 = vadd.xlane.f32.xlu0 %v2551
      %v2567 = vpop.xlane.xlu0 %2566
      %2568 = vadd.xlane.f32.xlu0 %v2536
      %v2569 = vpop.xlane.xlu0 %2568
      %2570 = vadd.xlane.f32.xlu0 %v2537
      %v2571 = vpop.xlane.xlu0 %2570
      %2572 = vadd.xlane.f32.xlu0 %v2538
      %v2573 = vpop.xlane.xlu0 %2572
      %2574 = vadd.xlane.f32.xlu0 %v2539
      %v2575 = vpop.xlane.xlu0 %2574
      %2576 = vadd.xlane.f32.xlu0 %v2540
      %v2577 = vpop.xlane.xlu0 %2576
      %2578 = vadd.xlane.f32.xlu0 %v2541
      %v2579 = vpop.xlane.xlu0 %2578
      %2580 = vadd.xlane.f32.xlu0 %v2542
      %v2581 = vpop.xlane.xlu0 %2580
      %2582 = vadd.xlane.f32.xlu0 %v2543
      %v2583 = vpop.xlane.xlu0 %2582
      %v2584 = vsub.f32 %v2569, %v2553
      %v2585 = vsub.f32 %v2571, %v2555
      %v2586 = vsub.f32 %v2573, %v2557
      %v2587 = vsub.f32 %v2575, %v2559
      %v2588 = vsub.f32 %v2577, %v2561
      %v2589 = vsub.f32 %v2579, %v2563
      %v2590 = vsub.f32 %v2581, %v2565
      %v2591 = vsub.f32 %v2583, %v2567
      %v2592 = vsel %vm508, %v2553, %v2584
      %v2593 = vsel %vm508, %v2555, %v2585
      %v2594 = vsel %vm508, %v2557, %v2586
      %v2595 = vsel %vm508, %v2559, %v2587
      %v2596 = vsel %vm508, %v2561, %v2588
      %v2597 = vsel %vm508, %v2563, %v2589
      %v2598 = vsel %vm508, %v2565, %v2590
      %v2599 = vsel %vm508, %v2567, %v2591
      %v2600 = vlaneseq
      %v2601 = vshrl.u32 %v2600, 7
      %v2602 = vsub.s32 6, %v2601
      %v2603 = vrot.slane %v452, %v2602
      %v2604 = vmul.f32 %v2310, %v2603
      %v2605 = vmul.f32 %v2311, %v2603
      %v2606 = vmul.f32 %v2312, %v2603
      %v2607 = vmul.f32 %v2313, %v2603
      %v2608 = vmul.f32 %v2314, %v2603
      %v2609 = vmul.f32 %v2315, %v2603
      %v2610 = vmul.f32 %v2316, %v2603
      %v2611 = vmul.f32 %v2317, %v2603
      %v2612 = vlaneseq
      %v2613 = vshrl.u32 %v2612, 7
      %v2614 = vsub.s32 6, %v2613
      %v2615 = vrot.slane %v461, %v2614
      %v2616 = vmul.f32 %v2524, %v2615
      %v2617 = vmul.f32 %v2525, %v2615
      %v2618 = vmul.f32 %v2526, %v2615
      %v2619 = vmul.f32 %v2527, %v2615
      %v2620 = vmul.f32 %v2528, %v2615
      %v2621 = vmul.f32 %v2529, %v2615
      %v2622 = vmul.f32 %v2530, %v2615
      %v2623 = vmul.f32 %v2531, %v2615
      %v2624 = vadd.f32 %v2604, %v2616
      %v2625 = vadd.f32 %v2605, %v2617
      %v2626 = vadd.f32 %v2606, %v2618
      %v2627 = vadd.f32 %v2607, %v2619
      %v2628 = vadd.f32 %v2608, %v2620
      %v2629 = vadd.f32 %v2609, %v2621
      %v2630 = vadd.f32 %v2610, %v2622
      %v2631 = vadd.f32 %v2611, %v2623
      %v2632 = vlaneseq
      %v2633 = vshrl.u32 %v2632, 7
      %v2634 = vsub.s32 6, %v2633
      %v2635 = vrot.slane %v473, %v2634
      %v2636 = vmul.f32 %v2592, %v2635
      %v2637 = vmul.f32 %v2593, %v2635
      %v2638 = vmul.f32 %v2594, %v2635
      %v2639 = vmul.f32 %v2595, %v2635
      %v2640 = vmul.f32 %v2596, %v2635
      %v2641 = vmul.f32 %v2597, %v2635
      %v2642 = vmul.f32 %v2598, %v2635
      %v2643 = vmul.f32 %v2599, %v2635
      %v2644 = vadd.f32 %v2624, %v2636
      %v2645 = vadd.f32 %v2625, %v2637
      %v2646 = vadd.f32 %v2626, %v2638
      %v2647 = vadd.f32 %v2627, %v2639
      %v2648 = vadd.f32 %v2628, %v2640
      %v2649 = vadd.f32 %v2629, %v2641
      %v2650 = vadd.f32 %v2630, %v2642
      %v2651 = vadd.f32 %v2631, %v2643
      %v2652 = vlaneseq
      %v2653 = vshrl.u32 %v2652, 7
      %v2654 = vsub.s32 6, %v2653
      %v2655 = vrot.slane %v457, %v2654
      %v2656 = vmul.f32 %v2644, %v2655
      %v2657 = vmul.f32 %v2645, %v2655
      %v2658 = vmul.f32 %v2646, %v2655
      %v2659 = vmul.f32 %v2647, %v2655
      %v2660 = vmul.f32 %v2648, %v2655
      %v2661 = vmul.f32 %v2649, %v2655
      %v2662 = vmul.f32 %v2650, %v2655
      %v2663 = vmul.f32 %v2651, %v2655
      %v2664 = vsel %vm508, %v2656, 0.0
      %v2665 = vsel %vm508, %v2657, 0.0
      %v2666 = vsel %vm508, %v2658, 0.0
      %v2667 = vsel %vm508, %v2659, 0.0
      %v2668 = vsel %vm508, %v2660, 0.0
      %v2669 = vsel %vm508, %v2661, 0.0
      %v2670 = vsel %vm508, %v2662, 0.0
      %v2671 = vsel %vm508, %v2663, 0.0
      %2672 = vadd.xlane.f32.xlu0 %v2664
      %v2673 = vpop.xlane.xlu0 %2672
      %2674 = vadd.xlane.f32.xlu0 %v2665
      %v2675 = vpop.xlane.xlu0 %2674
      %2676 = vadd.xlane.f32.xlu0 %v2666
      %v2677 = vpop.xlane.xlu0 %2676
      %2678 = vadd.xlane.f32.xlu0 %v2667
      %v2679 = vpop.xlane.xlu0 %2678
      %2680 = vadd.xlane.f32.xlu0 %v2668
      %v2681 = vpop.xlane.xlu0 %2680
      %2682 = vadd.xlane.f32.xlu0 %v2669
      %v2683 = vpop.xlane.xlu0 %2682
      %2684 = vadd.xlane.f32.xlu0 %v2670
      %v2685 = vpop.xlane.xlu0 %2684
      %2686 = vadd.xlane.f32.xlu0 %v2671
      %v2687 = vpop.xlane.xlu0 %2686
      %2688 = vadd.xlane.f32.xlu0 %v2656
      %v2689 = vpop.xlane.xlu0 %2688
      %2690 = vadd.xlane.f32.xlu0 %v2657
      %v2691 = vpop.xlane.xlu0 %2690
      %2692 = vadd.xlane.f32.xlu0 %v2658
      %v2693 = vpop.xlane.xlu0 %2692
      %2694 = vadd.xlane.f32.xlu0 %v2659
      %v2695 = vpop.xlane.xlu0 %2694
      %2696 = vadd.xlane.f32.xlu0 %v2660
      %v2697 = vpop.xlane.xlu0 %2696
      %2698 = vadd.xlane.f32.xlu0 %v2661
      %v2699 = vpop.xlane.xlu0 %2698
      %2700 = vadd.xlane.f32.xlu0 %v2662
      %v2701 = vpop.xlane.xlu0 %2700
      %2702 = vadd.xlane.f32.xlu0 %v2663
      %v2703 = vpop.xlane.xlu0 %2702
      %v2704 = vsub.f32 %v2689, %v2673
      %v2705 = vsub.f32 %v2691, %v2675
      %v2706 = vsub.f32 %v2693, %v2677
      %v2707 = vsub.f32 %v2695, %v2679
      %v2708 = vsub.f32 %v2697, %v2681
      %v2709 = vsub.f32 %v2699, %v2683
      %v2710 = vsub.f32 %v2701, %v2685
      %v2711 = vsub.f32 %v2703, %v2687
      %2712 = vxpose.xlu0.b32.start [1/16] %v2673, 128
      %2713 = vxpose.xlu0.b32.cont [2/16] %v2675, 128
      %2714 = vxpose.xlu0.b32.cont [3/16] %v2677, 128
      %2715 = vxpose.xlu0.b32.cont [4/16] %v2679, 128
      %2716 = vxpose.xlu0.b32.cont [5/16] %v2681, 128
      %2717 = vxpose.xlu0.b32.cont [6/16] %v2683, 128
      %2718 = vxpose.xlu0.b32.cont [7/16] %v2685, 128
      %2719 = vxpose.xlu0.b32.cont [8/16] %v2687, 128
      %2720 = vxpose.xlu0.b32.cont [9/16] %v2704, 128
      %2721 = vxpose.xlu0.b32.cont [10/16] %v2705, 128
      %2722 = vxpose.xlu0.b32.cont [11/16] %v2706, 128
      %2723 = vxpose.xlu0.b32.cont [12/16] %v2707, 128
      %2724 = vxpose.xlu0.b32.cont [13/16] %v2708, 128
      %2725 = vxpose.xlu0.b32.cont [14/16] %v2709, 128
      %2726 = vxpose.xlu0.b32.cont [15/16] %v2710, 128
      %2727 = vxpose.xlu0.b32.end [16/16] %v2711, 128
      %v2728 = vpop.trf.xlu0
      %v2729 = vpop.trf.xlu0
      %v2730 = vpop.trf.xlu0
      %v2731 = vpop.trf.xlu0
      %v2732 = vpop.trf.xlu0
      %v2733 = vpop.trf.xlu0
      %v2734 = vpop.trf.xlu0
      %v2735 = vpop.trf.xlu0
      %v2736 = vpop.trf.xlu0
      %v2737 = vpop.trf.xlu0
      %v2738 = vpop.trf.xlu0
      %v2739 = vpop.trf.xlu0
      %v2740 = vpop.trf.xlu0
      %v2741 = vpop.trf.xlu0
      %v2742 = vpop.trf.xlu0
      %v2743 = vpop.trf.xlu0
      %v2744 = vrot.slane %v465, 7
      %2746 = vxpose.xlu0.b32.start [1/16] %v2744, 128
      %2747 = vxpose.xlu0.b32.cont [2/16] 0.0, 128
      %2748 = vxpose.xlu0.b32.cont [3/16] 0.0, 128
      %2749 = vxpose.xlu0.b32.cont [4/16] 0.0, 128
      %2750 = vxpose.xlu0.b32.cont [5/16] 0.0, 128
      %2751 = vxpose.xlu0.b32.cont [6/16] 0.0, 128
      %2752 = vxpose.xlu0.b32.cont [7/16] 0.0, 128
      %2753 = vxpose.xlu0.b32.cont [8/16] 0.0, 128
      %2754 = vxpose.xlu0.b32.cont [9/16] 0.0, 128
      %2755 = vxpose.xlu0.b32.cont [10/16] 0.0, 128
      %2756 = vxpose.xlu0.b32.cont [11/16] 0.0, 128
      %2757 = vxpose.xlu0.b32.cont [12/16] 0.0, 128
      %2758 = vxpose.xlu0.b32.cont [13/16] 0.0, 128
      %2759 = vxpose.xlu0.b32.cont [14/16] 0.0, 128
      %2760 = vxpose.xlu0.b32.cont [15/16] 0.0, 128
      %2761 = vxpose.xlu0.b32.end [16/16] 0.0, 128
      %v2762 = vpop.trf.xlu0
      %v2763 = vpop.trf.xlu0
      %v2764 = vpop.trf.xlu0
      %v2765 = vpop.trf.xlu0
      %v2766 = vpop.trf.xlu0
      %v2767 = vpop.trf.xlu0
      %v2768 = vpop.trf.xlu0
      %v2769 = vpop.trf.xlu0
      %v2770 = vpop.trf.xlu0
      %v2771 = vpop.trf.xlu0
      %v2772 = vpop.trf.xlu0
      %v2773 = vpop.trf.xlu0
      %v2774 = vpop.trf.xlu0
      %v2775 = vpop.trf.xlu0
      %v2776 = vpop.trf.xlu0
      %v2777 = vpop.trf.xlu0
      %2779 = vset.pattern.permute.xlu0 0
      %2780 = vperm.xlu0 %2779, %v2762
      %v2781 = vpop.permute.xlu0 %2780
      %2784 = vset.pattern.permute.xlu0 0
      %2785 = vperm.xlu0 %2784, %v2763
      %v2786 = vpop.permute.xlu0 %2785
      %2789 = vset.pattern.permute.xlu0 0
      %2790 = vperm.xlu0 %2789, %v2764
      %v2791 = vpop.permute.xlu0 %2790
      %2794 = vset.pattern.permute.xlu0 0
      %2795 = vperm.xlu0 %2794, %v2765
      %v2796 = vpop.permute.xlu0 %2795
      %2799 = vset.pattern.permute.xlu0 0
      %2800 = vperm.xlu0 %2799, %v2766
      %v2801 = vpop.permute.xlu0 %2800
      %2804 = vset.pattern.permute.xlu0 0
      %2805 = vperm.xlu0 %2804, %v2767
      %v2806 = vpop.permute.xlu0 %2805
      %2809 = vset.pattern.permute.xlu0 0
      %2810 = vperm.xlu0 %2809, %v2768
      %v2811 = vpop.permute.xlu0 %2810
      %2814 = vset.pattern.permute.xlu0 0
      %2815 = vperm.xlu0 %2814, %v2769
      %v2816 = vpop.permute.xlu0 %2815
      %2819 = vset.pattern.permute.xlu0 0
      %2820 = vperm.xlu0 %2819, %v2770
      %v2821 = vpop.permute.xlu0 %2820
      %2824 = vset.pattern.permute.xlu0 0
      %2825 = vperm.xlu0 %2824, %v2771
      %v2826 = vpop.permute.xlu0 %2825
      %2829 = vset.pattern.permute.xlu0 0
      %2830 = vperm.xlu0 %2829, %v2772
      %v2831 = vpop.permute.xlu0 %2830
      %2834 = vset.pattern.permute.xlu0 0
      %2835 = vperm.xlu0 %2834, %v2773
      %v2836 = vpop.permute.xlu0 %2835
      %2839 = vset.pattern.permute.xlu0 0
      %2840 = vperm.xlu0 %2839, %v2774
      %v2841 = vpop.permute.xlu0 %2840
      %2844 = vset.pattern.permute.xlu0 0
      %2845 = vperm.xlu0 %2844, %v2775
      %v2846 = vpop.permute.xlu0 %2845
      %2849 = vset.pattern.permute.xlu0 0
      %2850 = vperm.xlu0 %2849, %v2776
      %v2851 = vpop.permute.xlu0 %2850
      %2854 = vset.pattern.permute.xlu0 0
      %2855 = vperm.xlu0 %2854, %v2777
      %v2856 = vpop.permute.xlu0 %2855
      %v2858 = vsel %vm508, %v2781, %v2821
      %v2859 = vsel %vm508, %v2786, %v2826
      %v2860 = vsel %vm508, %v2791, %v2831
      %v2861 = vsel %vm508, %v2796, %v2836
      %v2862 = vsel %vm508, %v2801, %v2841
      %v2863 = vsel %vm508, %v2806, %v2846
      %v2864 = vsel %vm508, %v2811, %v2851
      %v2865 = vsel %vm508, %v2816, %v2856
      %v2866 = vlaneseq
      %v2867 = vshrl.u32 %v2866, 7
      %v2868 = vsub.s32 7, %v2867
      %v2869 = vrot.slane %v469, %v2868
      %v2870 = vmul.f32 %v2644, %v2869
      %v2871 = vmul.f32 %v2645, %v2869
      %v2872 = vmul.f32 %v2646, %v2869
      %v2873 = vmul.f32 %v2647, %v2869
      %v2874 = vmul.f32 %v2648, %v2869
      %v2875 = vmul.f32 %v2649, %v2869
      %v2876 = vmul.f32 %v2650, %v2869
      %v2877 = vmul.f32 %v2651, %v2869
      %v2878 = vsel %vm508, %v2870, 0.0
      %v2879 = vsel %vm508, %v2871, 0.0
      %v2880 = vsel %vm508, %v2872, 0.0
      %v2881 = vsel %vm508, %v2873, 0.0
      %v2882 = vsel %vm508, %v2874, 0.0
      %v2883 = vsel %vm508, %v2875, 0.0
      %v2884 = vsel %vm508, %v2876, 0.0
      %v2885 = vsel %vm508, %v2877, 0.0
      %2886 = vadd.xlane.f32.xlu0 %v2878
      %v2887 = vpop.xlane.xlu0 %2886
      %2888 = vadd.xlane.f32.xlu0 %v2879
      %v2889 = vpop.xlane.xlu0 %2888
      %2890 = vadd.xlane.f32.xlu0 %v2880
      %v2891 = vpop.xlane.xlu0 %2890
      %2892 = vadd.xlane.f32.xlu0 %v2881
      %v2893 = vpop.xlane.xlu0 %2892
      %2894 = vadd.xlane.f32.xlu0 %v2882
      %v2895 = vpop.xlane.xlu0 %2894
      %2896 = vadd.xlane.f32.xlu0 %v2883
      %v2897 = vpop.xlane.xlu0 %2896
      %2898 = vadd.xlane.f32.xlu0 %v2884
      %v2899 = vpop.xlane.xlu0 %2898
      %2900 = vadd.xlane.f32.xlu0 %v2885
      %v2901 = vpop.xlane.xlu0 %2900
      %2902 = vadd.xlane.f32.xlu0 %v2870
      %v2903 = vpop.xlane.xlu0 %2902
      %2904 = vadd.xlane.f32.xlu0 %v2871
      %v2905 = vpop.xlane.xlu0 %2904
      %2906 = vadd.xlane.f32.xlu0 %v2872
      %v2907 = vpop.xlane.xlu0 %2906
      %2908 = vadd.xlane.f32.xlu0 %v2873
      %v2909 = vpop.xlane.xlu0 %2908
      %2910 = vadd.xlane.f32.xlu0 %v2874
      %v2911 = vpop.xlane.xlu0 %2910
      %2912 = vadd.xlane.f32.xlu0 %v2875
      %v2913 = vpop.xlane.xlu0 %2912
      %2914 = vadd.xlane.f32.xlu0 %v2876
      %v2915 = vpop.xlane.xlu0 %2914
      %2916 = vadd.xlane.f32.xlu0 %v2877
      %v2917 = vpop.xlane.xlu0 %2916
      %v2918 = vsub.f32 %v2903, %v2887
      %v2919 = vsub.f32 %v2905, %v2889
      %v2920 = vsub.f32 %v2907, %v2891
      %v2921 = vsub.f32 %v2909, %v2893
      %v2922 = vsub.f32 %v2911, %v2895
      %v2923 = vsub.f32 %v2913, %v2897
      %v2924 = vsub.f32 %v2915, %v2899
      %v2925 = vsub.f32 %v2917, %v2901
      %v2926 = vsel %vm508, %v2887, %v2918
      %v2927 = vsel %vm508, %v2889, %v2919
      %v2928 = vsel %vm508, %v2891, %v2920
      %v2929 = vsel %vm508, %v2893, %v2921
      %v2930 = vsel %vm508, %v2895, %v2922
      %v2931 = vsel %vm508, %v2897, %v2923
      %v2932 = vsel %vm508, %v2899, %v2924
      %v2933 = vsel %vm508, %v2901, %v2925
      %v2934 = vlaneseq
      %v2935 = vshrl.u32 %v2934, 7
      %v2936 = vsub.s32 7, %v2935
      %v2937 = vrot.slane %v452, %v2936
      %v2938 = vmul.f32 %v2644, %v2937
      %v2939 = vmul.f32 %v2645, %v2937
      %v2940 = vmul.f32 %v2646, %v2937
      %v2941 = vmul.f32 %v2647, %v2937
      %v2942 = vmul.f32 %v2648, %v2937
      %v2943 = vmul.f32 %v2649, %v2937
      %v2944 = vmul.f32 %v2650, %v2937
      %v2945 = vmul.f32 %v2651, %v2937
      %v2946 = vlaneseq
      %v2947 = vshrl.u32 %v2946, 7
      %v2948 = vsub.s32 7, %v2947
      %v2949 = vrot.slane %v461, %v2948
      %v2950 = vmul.f32 %v2858, %v2949
      %v2951 = vmul.f32 %v2859, %v2949
      %v2952 = vmul.f32 %v2860, %v2949
      %v2953 = vmul.f32 %v2861, %v2949
      %v2954 = vmul.f32 %v2862, %v2949
      %v2955 = vmul.f32 %v2863, %v2949
      %v2956 = vmul.f32 %v2864, %v2949
      %v2957 = vmul.f32 %v2865, %v2949
      %v2958 = vadd.f32 %v2938, %v2950
      %v2959 = vadd.f32 %v2939, %v2951
      %v2960 = vadd.f32 %v2940, %v2952
      %v2961 = vadd.f32 %v2941, %v2953
      %v2962 = vadd.f32 %v2942, %v2954
      %v2963 = vadd.f32 %v2943, %v2955
      %v2964 = vadd.f32 %v2944, %v2956
      %v2965 = vadd.f32 %v2945, %v2957
      %v2966 = vlaneseq
      %v2967 = vshrl.u32 %v2966, 7
      %v2968 = vsub.s32 7, %v2967
      %v2969 = vrot.slane %v473, %v2968
      %v2970 = vmul.f32 %v2926, %v2969
      %v2971 = vmul.f32 %v2927, %v2969
      %v2972 = vmul.f32 %v2928, %v2969
      %v2973 = vmul.f32 %v2929, %v2969
      %v2974 = vmul.f32 %v2930, %v2969
      %v2975 = vmul.f32 %v2931, %v2969
      %v2976 = vmul.f32 %v2932, %v2969
      %v2977 = vmul.f32 %v2933, %v2969
      %v2978 = vadd.f32 %v2958, %v2970
      %v2979 = vadd.f32 %v2959, %v2971
      %v2980 = vadd.f32 %v2960, %v2972
      %v2981 = vadd.f32 %v2961, %v2973
      %v2982 = vadd.f32 %v2962, %v2974
      %v2983 = vadd.f32 %v2963, %v2975
      %v2984 = vadd.f32 %v2964, %v2976
      %v2985 = vadd.f32 %v2965, %v2977
      %v2986 = vlaneseq
      %v2987 = vshrl.u32 %v2986, 7
      %v2988 = vsub.s32 7, %v2987
      %v2989 = vrot.slane %v457, %v2988
      %v2990 = vmul.f32 %v2978, %v2989
      %v2991 = vmul.f32 %v2979, %v2989
      %v2992 = vmul.f32 %v2980, %v2989
      %v2993 = vmul.f32 %v2981, %v2989
      %v2994 = vmul.f32 %v2982, %v2989
      %v2995 = vmul.f32 %v2983, %v2989
      %v2996 = vmul.f32 %v2984, %v2989
      %v2997 = vmul.f32 %v2985, %v2989
      %v2998 = vsel %vm508, %v2990, 0.0
      %v2999 = vsel %vm508, %v2991, 0.0
      %v3000 = vsel %vm508, %v2992, 0.0
      %v3001 = vsel %vm508, %v2993, 0.0
      %v3002 = vsel %vm508, %v2994, 0.0
      %v3003 = vsel %vm508, %v2995, 0.0
      %v3004 = vsel %vm508, %v2996, 0.0
      %v3005 = vsel %vm508, %v2997, 0.0
      %3006 = vadd.xlane.f32.xlu0 %v2998
      %v3007 = vpop.xlane.xlu0 %3006
      %3008 = vadd.xlane.f32.xlu0 %v2999
      %v3009 = vpop.xlane.xlu0 %3008
      %3010 = vadd.xlane.f32.xlu0 %v3000
      %v3011 = vpop.xlane.xlu0 %3010
      %3012 = vadd.xlane.f32.xlu0 %v3001
      %v3013 = vpop.xlane.xlu0 %3012
      %3014 = vadd.xlane.f32.xlu0 %v3002
      %v3015 = vpop.xlane.xlu0 %3014
      %3016 = vadd.xlane.f32.xlu0 %v3003
      %v3017 = vpop.xlane.xlu0 %3016
      %3018 = vadd.xlane.f32.xlu0 %v3004
      %v3019 = vpop.xlane.xlu0 %3018
      %3020 = vadd.xlane.f32.xlu0 %v3005
      %v3021 = vpop.xlane.xlu0 %3020
      %3022 = vadd.xlane.f32.xlu0 %v2990
      %v3023 = vpop.xlane.xlu0 %3022
      %3024 = vadd.xlane.f32.xlu0 %v2991
      %v3025 = vpop.xlane.xlu0 %3024
      %3026 = vadd.xlane.f32.xlu0 %v2992
      %v3027 = vpop.xlane.xlu0 %3026
      %3028 = vadd.xlane.f32.xlu0 %v2993
      %v3029 = vpop.xlane.xlu0 %3028
      %3030 = vadd.xlane.f32.xlu0 %v2994
      %v3031 = vpop.xlane.xlu0 %3030
      %3032 = vadd.xlane.f32.xlu0 %v2995
      %v3033 = vpop.xlane.xlu0 %3032
      %3034 = vadd.xlane.f32.xlu0 %v2996
      %v3035 = vpop.xlane.xlu0 %3034
      %3036 = vadd.xlane.f32.xlu0 %v2997
      %v3037 = vpop.xlane.xlu0 %3036
      %v3038 = vsub.f32 %v3023, %v3007
      %v3039 = vsub.f32 %v3025, %v3009
      %v3040 = vsub.f32 %v3027, %v3011
      %v3041 = vsub.f32 %v3029, %v3013
      %v3042 = vsub.f32 %v3031, %v3015
      %v3043 = vsub.f32 %v3033, %v3017
      %v3044 = vsub.f32 %v3035, %v3019
      %v3045 = vsub.f32 %v3037, %v3021
      %3046 = vxpose.xlu0.b32.start [1/16] %v3007, 128
      %3047 = vxpose.xlu0.b32.cont [2/16] %v3009, 128
      %3048 = vxpose.xlu0.b32.cont [3/16] %v3011, 128
      %3049 = vxpose.xlu0.b32.cont [4/16] %v3013, 128
      %3050 = vxpose.xlu0.b32.cont [5/16] %v3015, 128
      %3051 = vxpose.xlu0.b32.cont [6/16] %v3017, 128
      %3052 = vxpose.xlu0.b32.cont [7/16] %v3019, 128
      %3053 = vxpose.xlu0.b32.cont [8/16] %v3021, 128
      %3054 = vxpose.xlu0.b32.cont [9/16] %v3038, 128
      %3055 = vxpose.xlu0.b32.cont [10/16] %v3039, 128
      %3056 = vxpose.xlu0.b32.cont [11/16] %v3040, 128
      %3057 = vxpose.xlu0.b32.cont [12/16] %v3041, 128
      %3058 = vxpose.xlu0.b32.cont [13/16] %v3042, 128
      %3059 = vxpose.xlu0.b32.cont [14/16] %v3043, 128
      %3060 = vxpose.xlu0.b32.cont [15/16] %v3044, 128
      %3061 = vxpose.xlu0.b32.end [16/16] %v3045, 128
      %v3062 = vpop.trf.xlu0
      %v3063 = vpop.trf.xlu0
      %v3064 = vpop.trf.xlu0
      %v3065 = vpop.trf.xlu0
      %v3066 = vpop.trf.xlu0
      %v3067 = vpop.trf.xlu0
      %v3068 = vpop.trf.xlu0
      %v3069 = vpop.trf.xlu0
      %v3070 = vpop.trf.xlu0
      %v3071 = vpop.trf.xlu0
      %v3072 = vpop.trf.xlu0
      %v3073 = vpop.trf.xlu0
      %v3074 = vpop.trf.xlu0
      %v3075 = vpop.trf.xlu0
      %v3076 = vpop.trf.xlu0
      %v3077 = vpop.trf.xlu0
      %3078 = vxpose.xlu0.b32.start [1/16] %v466, 128
      %3079 = vxpose.xlu0.b32.cont [2/16] 0.0, 128
      %3080 = vxpose.xlu0.b32.cont [3/16] 0.0, 128
      %3081 = vxpose.xlu0.b32.cont [4/16] 0.0, 128
      %3082 = vxpose.xlu0.b32.cont [5/16] 0.0, 128
      %3083 = vxpose.xlu0.b32.cont [6/16] 0.0, 128
      %3084 = vxpose.xlu0.b32.cont [7/16] 0.0, 128
      %3085 = vxpose.xlu0.b32.cont [8/16] 0.0, 128
      %3086 = vxpose.xlu0.b32.cont [9/16] 0.0, 128
      %3087 = vxpose.xlu0.b32.cont [10/16] 0.0, 128
      %3088 = vxpose.xlu0.b32.cont [11/16] 0.0, 128
      %3089 = vxpose.xlu0.b32.cont [12/16] 0.0, 128
      %3090 = vxpose.xlu0.b32.cont [13/16] 0.0, 128
      %3091 = vxpose.xlu0.b32.cont [14/16] 0.0, 128
      %3092 = vxpose.xlu0.b32.cont [15/16] 0.0, 128
      %3093 = vxpose.xlu0.b32.end [16/16] 0.0, 128
      %v3094 = vpop.trf.xlu0
      %v3095 = vpop.trf.xlu0
      %v3096 = vpop.trf.xlu0
      %v3097 = vpop.trf.xlu0
      %v3098 = vpop.trf.xlu0
      %v3099 = vpop.trf.xlu0
      %v3100 = vpop.trf.xlu0
      %v3101 = vpop.trf.xlu0
      %v3102 = vpop.trf.xlu0
      %v3103 = vpop.trf.xlu0
      %v3104 = vpop.trf.xlu0
      %v3105 = vpop.trf.xlu0
      %v3106 = vpop.trf.xlu0
      %v3107 = vpop.trf.xlu0
      %v3108 = vpop.trf.xlu0
      %v3109 = vpop.trf.xlu0
      %3111 = vset.pattern.permute.xlu0 0
      %3112 = vperm.xlu0 %3111, %v3094
      %v3113 = vpop.permute.xlu0 %3112
      %3116 = vset.pattern.permute.xlu0 0
      %3117 = vperm.xlu0 %3116, %v3095
      %v3118 = vpop.permute.xlu0 %3117
      %3121 = vset.pattern.permute.xlu0 0
      %3122 = vperm.xlu0 %3121, %v3096
      %v3123 = vpop.permute.xlu0 %3122
      %3126 = vset.pattern.permute.xlu0 0
      %3127 = vperm.xlu0 %3126, %v3097
      %v3128 = vpop.permute.xlu0 %3127
      %3131 = vset.pattern.permute.xlu0 0
      %3132 = vperm.xlu0 %3131, %v3098
      %v3133 = vpop.permute.xlu0 %3132
      %3136 = vset.pattern.permute.xlu0 0
      %3137 = vperm.xlu0 %3136, %v3099
      %v3138 = vpop.permute.xlu0 %3137
      %3141 = vset.pattern.permute.xlu0 0
      %3142 = vperm.xlu0 %3141, %v3100
      %v3143 = vpop.permute.xlu0 %3142
      %3146 = vset.pattern.permute.xlu0 0
      %3147 = vperm.xlu0 %3146, %v3101
      %v3148 = vpop.permute.xlu0 %3147
      %3151 = vset.pattern.permute.xlu0 0
      %3152 = vperm.xlu0 %3151, %v3102
      %v3153 = vpop.permute.xlu0 %3152
      %3156 = vset.pattern.permute.xlu0 0
      %3157 = vperm.xlu0 %3156, %v3103
      %v3158 = vpop.permute.xlu0 %3157
      %3161 = vset.pattern.permute.xlu0 0
      %3162 = vperm.xlu0 %3161, %v3104
      %v3163 = vpop.permute.xlu0 %3162
      %3166 = vset.pattern.permute.xlu0 0
      %3167 = vperm.xlu0 %3166, %v3105
      %v3168 = vpop.permute.xlu0 %3167
      %3171 = vset.pattern.permute.xlu0 0
      %3172 = vperm.xlu0 %3171, %v3106
      %v3173 = vpop.permute.xlu0 %3172
      %3176 = vset.pattern.permute.xlu0 0
      %3177 = vperm.xlu0 %3176, %v3107
      %v3178 = vpop.permute.xlu0 %3177
      %3181 = vset.pattern.permute.xlu0 0
      %3182 = vperm.xlu0 %3181, %v3108
      %v3183 = vpop.permute.xlu0 %3182
      %3186 = vset.pattern.permute.xlu0 0
      %3187 = vperm.xlu0 %3186, %v3109
      %v3188 = vpop.permute.xlu0 %3187
      %v3190 = vsel %vm508, %v3113, %v3153
      %v3191 = vsel %vm508, %v3118, %v3158
      %v3192 = vsel %vm508, %v3123, %v3163
      %v3193 = vsel %vm508, %v3128, %v3168
      %v3194 = vsel %vm508, %v3133, %v3173
      %v3195 = vsel %vm508, %v3138, %v3178
      %v3196 = vsel %vm508, %v3143, %v3183
      %v3197 = vsel %vm508, %v3148, %v3188
      %v3198 = vlaneseq
      %v3199 = vshrl.u32 %v3198, 7
      %v3200 = vsub.s32 0, %v3199
      %v3201 = vrot.slane %v470, %v3200
      %v3202 = vmul.f32 %v2978, %v3201
      %v3203 = vmul.f32 %v2979, %v3201
      %v3204 = vmul.f32 %v2980, %v3201
      %v3205 = vmul.f32 %v2981, %v3201
      %v3206 = vmul.f32 %v2982, %v3201
      %v3207 = vmul.f32 %v2983, %v3201
      %v3208 = vmul.f32 %v2984, %v3201
      %v3209 = vmul.f32 %v2985, %v3201
      %v3210 = vsel %vm508, %v3202, 0.0
      %v3211 = vsel %vm508, %v3203, 0.0
      %v3212 = vsel %vm508, %v3204, 0.0
      %v3213 = vsel %vm508, %v3205, 0.0
      %v3214 = vsel %vm508, %v3206, 0.0
      %v3215 = vsel %vm508, %v3207, 0.0
      %v3216 = vsel %vm508, %v3208, 0.0
      %v3217 = vsel %vm508, %v3209, 0.0
      %3218 = vadd.xlane.f32.xlu0 %v3210
      %v3219 = vpop.xlane.xlu0 %3218
      %3220 = vadd.xlane.f32.xlu0 %v3211
      %v3221 = vpop.xlane.xlu0 %3220
      %3222 = vadd.xlane.f32.xlu0 %v3212
      %v3223 = vpop.xlane.xlu0 %3222
      %3224 = vadd.xlane.f32.xlu0 %v3213
      %v3225 = vpop.xlane.xlu0 %3224
      %3226 = vadd.xlane.f32.xlu0 %v3214
      %v3227 = vpop.xlane.xlu0 %3226
      %3228 = vadd.xlane.f32.xlu0 %v3215
      %v3229 = vpop.xlane.xlu0 %3228
      %3230 = vadd.xlane.f32.xlu0 %v3216
      %v3231 = vpop.xlane.xlu0 %3230
      %3232 = vadd.xlane.f32.xlu0 %v3217
      %v3233 = vpop.xlane.xlu0 %3232
      %3234 = vadd.xlane.f32.xlu0 %v3202
      %v3235 = vpop.xlane.xlu0 %3234
      %3236 = vadd.xlane.f32.xlu0 %v3203
      %v3237 = vpop.xlane.xlu0 %3236
      %3238 = vadd.xlane.f32.xlu0 %v3204
      %v3239 = vpop.xlane.xlu0 %3238
      %3240 = vadd.xlane.f32.xlu0 %v3205
      %v3241 = vpop.xlane.xlu0 %3240
      %3242 = vadd.xlane.f32.xlu0 %v3206
      %v3243 = vpop.xlane.xlu0 %3242
      %3244 = vadd.xlane.f32.xlu0 %v3207
      %v3245 = vpop.xlane.xlu0 %3244
      %3246 = vadd.xlane.f32.xlu0 %v3208
      %v3247 = vpop.xlane.xlu0 %3246
      %3248 = vadd.xlane.f32.xlu0 %v3209
      %v3249 = vpop.xlane.xlu0 %3248
      %v3250 = vsub.f32 %v3235, %v3219
      %v3251 = vsub.f32 %v3237, %v3221
      %v3252 = vsub.f32 %v3239, %v3223
      %v3253 = vsub.f32 %v3241, %v3225
      %v3254 = vsub.f32 %v3243, %v3227
      %v3255 = vsub.f32 %v3245, %v3229
      %v3256 = vsub.f32 %v3247, %v3231
      %v3257 = vsub.f32 %v3249, %v3233
      %v3258 = vsel %vm508, %v3219, %v3250
      %v3259 = vsel %vm508, %v3221, %v3251
      %v3260 = vsel %vm508, %v3223, %v3252
      %v3261 = vsel %vm508, %v3225, %v3253
      %v3262 = vsel %vm508, %v3227, %v3254
      %v3263 = vsel %vm508, %v3229, %v3255
      %v3264 = vsel %vm508, %v3231, %v3256
      %v3265 = vsel %vm508, %v3233, %v3257
      %v3266 = vlaneseq
      %v3267 = vshrl.u32 %v3266, 7
      %v3268 = vsub.s32 0, %v3267
      %v3269 = vrot.slane %v454, %v3268
      %v3270 = vmul.f32 %v2978, %v3269
      %v3271 = vmul.f32 %v2979, %v3269
      %v3272 = vmul.f32 %v2980, %v3269
      %v3273 = vmul.f32 %v2981, %v3269
      %v3274 = vmul.f32 %v2982, %v3269
      %v3275 = vmul.f32 %v2983, %v3269
      %v3276 = vmul.f32 %v2984, %v3269
      %v3277 = vmul.f32 %v2985, %v3269
      %v3278 = vlaneseq
      %v3279 = vshrl.u32 %v3278, 7
      %v3280 = vsub.s32 0, %v3279
      %v3281 = vrot.slane %v462, %v3280
      %v3282 = vmul.f32 %v3190, %v3281
      %v3283 = vmul.f32 %v3191, %v3281
      %v3284 = vmul.f32 %v3192, %v3281
      %v3285 = vmul.f32 %v3193, %v3281
      %v3286 = vmul.f32 %v3194, %v3281
      %v3287 = vmul.f32 %v3195, %v3281
      %v3288 = vmul.f32 %v3196, %v3281
      %v3289 = vmul.f32 %v3197, %v3281
      %v3290 = vadd.f32 %v3270, %v3282
      %v3291 = vadd.f32 %v3271, %v3283
      %v3292 = vadd.f32 %v3272, %v3284
      %v3293 = vadd.f32 %v3273, %v3285
      %v3294 = vadd.f32 %v3274, %v3286
      %v3295 = vadd.f32 %v3275, %v3287
      %v3296 = vadd.f32 %v3276, %v3288
      %v3297 = vadd.f32 %v3277, %v3289
      %v3298 = vlaneseq
      %v3299 = vshrl.u32 %v3298, 7
      %v3300 = vsub.s32 0, %v3299
      %v3301 = vrot.slane %v474, %v3300
      %v3302 = vmul.f32 %v3258, %v3301
      %v3303 = vmul.f32 %v3259, %v3301
      %v3304 = vmul.f32 %v3260, %v3301
      %v3305 = vmul.f32 %v3261, %v3301
      %v3306 = vmul.f32 %v3262, %v3301
      %v3307 = vmul.f32 %v3263, %v3301
      %v3308 = vmul.f32 %v3264, %v3301
      %v3309 = vmul.f32 %v3265, %v3301
      %v3310 = vadd.f32 %v3290, %v3302
      %v3311 = vadd.f32 %v3291, %v3303
      %v3312 = vadd.f32 %v3292, %v3304
      %v3313 = vadd.f32 %v3293, %v3305
      %v3314 = vadd.f32 %v3294, %v3306
      %v3315 = vadd.f32 %v3295, %v3307
      %v3316 = vadd.f32 %v3296, %v3308
      %v3317 = vadd.f32 %v3297, %v3309
      %v3318 = vlaneseq
      %v3319 = vshrl.u32 %v3318, 7
      %v3320 = vsub.s32 0, %v3319
      %v3321 = vrot.slane %v458, %v3320
      %v3322 = vmul.f32 %v3310, %v3321
      %v3323 = vmul.f32 %v3311, %v3321
      %v3324 = vmul.f32 %v3312, %v3321
      %v3325 = vmul.f32 %v3313, %v3321
      %v3326 = vmul.f32 %v3314, %v3321
      %v3327 = vmul.f32 %v3315, %v3321
      %v3328 = vmul.f32 %v3316, %v3321
      %v3329 = vmul.f32 %v3317, %v3321
      %v3330 = vsel %vm508, %v3322, 0.0
      %v3331 = vsel %vm508, %v3323, 0.0
      %v3332 = vsel %vm508, %v3324, 0.0
      %v3333 = vsel %vm508, %v3325, 0.0
      %v3334 = vsel %vm508, %v3326, 0.0
      %v3335 = vsel %vm508, %v3327, 0.0
      %v3336 = vsel %vm508, %v3328, 0.0
      %v3337 = vsel %vm508, %v3329, 0.0
      %3338 = vadd.xlane.f32.xlu0 %v3330
      %v3339 = vpop.xlane.xlu0 %3338
      %3340 = vadd.xlane.f32.xlu0 %v3331
      %v3341 = vpop.xlane.xlu0 %3340
      %3342 = vadd.xlane.f32.xlu0 %v3332
      %v3343 = vpop.xlane.xlu0 %3342
      %3344 = vadd.xlane.f32.xlu0 %v3333
      %v3345 = vpop.xlane.xlu0 %3344
      %3346 = vadd.xlane.f32.xlu0 %v3334
      %v3347 = vpop.xlane.xlu0 %3346
      %3348 = vadd.xlane.f32.xlu0 %v3335
      %v3349 = vpop.xlane.xlu0 %3348
      %3350 = vadd.xlane.f32.xlu0 %v3336
      %v3351 = vpop.xlane.xlu0 %3350
      %3352 = vadd.xlane.f32.xlu0 %v3337
      %v3353 = vpop.xlane.xlu0 %3352
      %3354 = vadd.xlane.f32.xlu0 %v3322
      %v3355 = vpop.xlane.xlu0 %3354
      %3356 = vadd.xlane.f32.xlu0 %v3323
      %v3357 = vpop.xlane.xlu0 %3356
      %3358 = vadd.xlane.f32.xlu0 %v3324
      %v3359 = vpop.xlane.xlu0 %3358
      %3360 = vadd.xlane.f32.xlu0 %v3325
      %v3361 = vpop.xlane.xlu0 %3360
      %3362 = vadd.xlane.f32.xlu0 %v3326
      %v3363 = vpop.xlane.xlu0 %3362
      %3364 = vadd.xlane.f32.xlu0 %v3327
      %v3365 = vpop.xlane.xlu0 %3364
      %3366 = vadd.xlane.f32.xlu0 %v3328
      %v3367 = vpop.xlane.xlu0 %3366
      %3368 = vadd.xlane.f32.xlu0 %v3329
      %v3369 = vpop.xlane.xlu0 %3368
      %v3370 = vsub.f32 %v3355, %v3339
      %v3371 = vsub.f32 %v3357, %v3341
      %v3372 = vsub.f32 %v3359, %v3343
      %v3373 = vsub.f32 %v3361, %v3345
      %v3374 = vsub.f32 %v3363, %v3347
      %v3375 = vsub.f32 %v3365, %v3349
      %v3376 = vsub.f32 %v3367, %v3351
      %v3377 = vsub.f32 %v3369, %v3353
      %3378 = vxpose.xlu0.b32.start [1/16] %v3339, 128
      %3379 = vxpose.xlu0.b32.cont [2/16] %v3341, 128
      %3380 = vxpose.xlu0.b32.cont [3/16] %v3343, 128
      %3381 = vxpose.xlu0.b32.cont [4/16] %v3345, 128
      %3382 = vxpose.xlu0.b32.cont [5/16] %v3347, 128
      %3383 = vxpose.xlu0.b32.cont [6/16] %v3349, 128
      %3384 = vxpose.xlu0.b32.cont [7/16] %v3351, 128
      %3385 = vxpose.xlu0.b32.cont [8/16] %v3353, 128
      %3386 = vxpose.xlu0.b32.cont [9/16] %v3370, 128
      %3387 = vxpose.xlu0.b32.cont [10/16] %v3371, 128
      %3388 = vxpose.xlu0.b32.cont [11/16] %v3372, 128
      %3389 = vxpose.xlu0.b32.cont [12/16] %v3373, 128
      %3390 = vxpose.xlu0.b32.cont [13/16] %v3374, 128
      %3391 = vxpose.xlu0.b32.cont [14/16] %v3375, 128
      %3392 = vxpose.xlu0.b32.cont [15/16] %v3376, 128
      %3393 = vxpose.xlu0.b32.end [16/16] %v3377, 128
      %v3394 = vpop.trf.xlu0
      %v3395 = vpop.trf.xlu0
      %v3396 = vpop.trf.xlu0
      %v3397 = vpop.trf.xlu0
      %v3398 = vpop.trf.xlu0
      %v3399 = vpop.trf.xlu0
      %v3400 = vpop.trf.xlu0
      %v3401 = vpop.trf.xlu0
      %v3402 = vpop.trf.xlu0
      %v3403 = vpop.trf.xlu0
      %v3404 = vpop.trf.xlu0
      %v3405 = vpop.trf.xlu0
      %v3406 = vpop.trf.xlu0
      %v3407 = vpop.trf.xlu0
      %v3408 = vpop.trf.xlu0
      %v3409 = vpop.trf.xlu0
      %v3411 = vrot.slane %v466, 1
      %3413 = vxpose.xlu0.b32.start [1/16] %v3411, 128
      %3414 = vxpose.xlu0.b32.cont [2/16] 0.0, 128
      %3415 = vxpose.xlu0.b32.cont [3/16] 0.0, 128
      %3416 = vxpose.xlu0.b32.cont [4/16] 0.0, 128
      %3417 = vxpose.xlu0.b32.cont [5/16] 0.0, 128
      %3418 = vxpose.xlu0.b32.cont [6/16] 0.0, 128
      %3419 = vxpose.xlu0.b32.cont [7/16] 0.0, 128
      %3420 = vxpose.xlu0.b32.cont [8/16] 0.0, 128
      %3421 = vxpose.xlu0.b32.cont [9/16] 0.0, 128
      %3422 = vxpose.xlu0.b32.cont [10/16] 0.0, 128
      %3423 = vxpose.xlu0.b32.cont [11/16] 0.0, 128
      %3424 = vxpose.xlu0.b32.cont [12/16] 0.0, 128
      %3425 = vxpose.xlu0.b32.cont [13/16] 0.0, 128
      %3426 = vxpose.xlu0.b32.cont [14/16] 0.0, 128
      %3427 = vxpose.xlu0.b32.cont [15/16] 0.0, 128
      %3428 = vxpose.xlu0.b32.end [16/16] 0.0, 128
      %v3429 = vpop.trf.xlu0
      %v3430 = vpop.trf.xlu0
      %v3431 = vpop.trf.xlu0
      %v3432 = vpop.trf.xlu0
      %v3433 = vpop.trf.xlu0
      %v3434 = vpop.trf.xlu0
      %v3435 = vpop.trf.xlu0
      %v3436 = vpop.trf.xlu0
      %v3437 = vpop.trf.xlu0
      %v3438 = vpop.trf.xlu0
      %v3439 = vpop.trf.xlu0
      %v3440 = vpop.trf.xlu0
      %v3441 = vpop.trf.xlu0
      %v3442 = vpop.trf.xlu0
      %v3443 = vpop.trf.xlu0
      %v3444 = vpop.trf.xlu0
      %3446 = vset.pattern.permute.xlu0 0
      %3447 = vperm.xlu0 %3446, %v3429
      %v3448 = vpop.permute.xlu0 %3447
      %3451 = vset.pattern.permute.xlu0 0
      %3452 = vperm.xlu0 %3451, %v3430
      %v3453 = vpop.permute.xlu0 %3452
      %3456 = vset.pattern.permute.xlu0 0
      %3457 = vperm.xlu0 %3456, %v3431
      %v3458 = vpop.permute.xlu0 %3457
      %3461 = vset.pattern.permute.xlu0 0
      %3462 = vperm.xlu0 %3461, %v3432
      %v3463 = vpop.permute.xlu0 %3462
      %3466 = vset.pattern.permute.xlu0 0
      %3467 = vperm.xlu0 %3466, %v3433
      %v3468 = vpop.permute.xlu0 %3467
      %3471 = vset.pattern.permute.xlu0 0
      %3472 = vperm.xlu0 %3471, %v3434
      %v3473 = vpop.permute.xlu0 %3472
      %3476 = vset.pattern.permute.xlu0 0
      %3477 = vperm.xlu0 %3476, %v3435
      %v3478 = vpop.permute.xlu0 %3477
      %3481 = vset.pattern.permute.xlu0 0
      %3482 = vperm.xlu0 %3481, %v3436
      %v3483 = vpop.permute.xlu0 %3482
      %3486 = vset.pattern.permute.xlu0 0
      %3487 = vperm.xlu0 %3486, %v3437
      %v3488 = vpop.permute.xlu0 %3487
      %3491 = vset.pattern.permute.xlu0 0
      %3492 = vperm.xlu0 %3491, %v3438
      %v3493 = vpop.permute.xlu0 %3492
      %3496 = vset.pattern.permute.xlu0 0
      %3497 = vperm.xlu0 %3496, %v3439
      %v3498 = vpop.permute.xlu0 %3497
      %3501 = vset.pattern.permute.xlu0 0
      %3502 = vperm.xlu0 %3501, %v3440
      %v3503 = vpop.permute.xlu0 %3502
      %3506 = vset.pattern.permute.xlu0 0
      %3507 = vperm.xlu0 %3506, %v3441
      %v3508 = vpop.permute.xlu0 %3507
      %3511 = vset.pattern.permute.xlu0 0
      %3512 = vperm.xlu0 %3511, %v3442
      %v3513 = vpop.permute.xlu0 %3512
      %3516 = vset.pattern.permute.xlu0 0
      %3517 = vperm.xlu0 %3516, %v3443
      %v3518 = vpop.permute.xlu0 %3517
      %3521 = vset.pattern.permute.xlu0 0
      %3522 = vperm.xlu0 %3521, %v3444
      %v3523 = vpop.permute.xlu0 %3522
      %v3525 = vsel %vm508, %v3448, %v3488
      %v3526 = vsel %vm508, %v3453, %v3493
      %v3527 = vsel %vm508, %v3458, %v3498
      %v3528 = vsel %vm508, %v3463, %v3503
      %v3529 = vsel %vm508, %v3468, %v3508
      %v3530 = vsel %vm508, %v3473, %v3513
      %v3531 = vsel %vm508, %v3478, %v3518
      %v3532 = vsel %vm508, %v3483, %v3523
      %v3533 = vlaneseq
      %v3534 = vshrl.u32 %v3533, 7
      %v3535 = vsub.s32 1, %v3534
      %v3536 = vrot.slane %v470, %v3535
      %v3537 = vmul.f32 %v3310, %v3536
      %v3538 = vmul.f32 %v3311, %v3536
      %v3539 = vmul.f32 %v3312, %v3536
      %v3540 = vmul.f32 %v3313, %v3536
      %v3541 = vmul.f32 %v3314, %v3536
      %v3542 = vmul.f32 %v3315, %v3536
      %v3543 = vmul.f32 %v3316, %v3536
      %v3544 = vmul.f32 %v3317, %v3536
      %v3545 = vsel %vm508, %v3537, 0.0
      %v3546 = vsel %vm508, %v3538, 0.0
      %v3547 = vsel %vm508, %v3539, 0.0
      %v3548 = vsel %vm508, %v3540, 0.0
      %v3549 = vsel %vm508, %v3541, 0.0
      %v3550 = vsel %vm508, %v3542, 0.0
      %v3551 = vsel %vm508, %v3543, 0.0
      %v3552 = vsel %vm508, %v3544, 0.0
      %3553 = vadd.xlane.f32.xlu0 %v3545
      %v3554 = vpop.xlane.xlu0 %3553
      %3555 = vadd.xlane.f32.xlu0 %v3546
      %v3556 = vpop.xlane.xlu0 %3555
      %3557 = vadd.xlane.f32.xlu0 %v3547
      %v3558 = vpop.xlane.xlu0 %3557
      %3559 = vadd.xlane.f32.xlu0 %v3548
      %v3560 = vpop.xlane.xlu0 %3559
      %3561 = vadd.xlane.f32.xlu0 %v3549
      %v3562 = vpop.xlane.xlu0 %3561
      %3563 = vadd.xlane.f32.xlu0 %v3550
      %v3564 = vpop.xlane.xlu0 %3563
      %3565 = vadd.xlane.f32.xlu0 %v3551
      %v3566 = vpop.xlane.xlu0 %3565
      %3567 = vadd.xlane.f32.xlu0 %v3552
      %v3568 = vpop.xlane.xlu0 %3567
      %3569 = vadd.xlane.f32.xlu0 %v3537
      %v3570 = vpop.xlane.xlu0 %3569
      %3571 = vadd.xlane.f32.xlu0 %v3538
      %v3572 = vpop.xlane.xlu0 %3571
      %3573 = vadd.xlane.f32.xlu0 %v3539
      %v3574 = vpop.xlane.xlu0 %3573
      %3575 = vadd.xlane.f32.xlu0 %v3540
      %v3576 = vpop.xlane.xlu0 %3575
      %3577 = vadd.xlane.f32.xlu0 %v3541
      %v3578 = vpop.xlane.xlu0 %3577
      %3579 = vadd.xlane.f32.xlu0 %v3542
      %v3580 = vpop.xlane.xlu0 %3579
      %3581 = vadd.xlane.f32.xlu0 %v3543
      %v3582 = vpop.xlane.xlu0 %3581
      %3583 = vadd.xlane.f32.xlu0 %v3544
      %v3584 = vpop.xlane.xlu0 %3583
      %v3585 = vsub.f32 %v3570, %v3554
      %v3586 = vsub.f32 %v3572, %v3556
      %v3587 = vsub.f32 %v3574, %v3558
      %v3588 = vsub.f32 %v3576, %v3560
      %v3589 = vsub.f32 %v3578, %v3562
      %v3590 = vsub.f32 %v3580, %v3564
      %v3591 = vsub.f32 %v3582, %v3566
      %v3592 = vsub.f32 %v3584, %v3568
      %v3593 = vsel %vm508, %v3554, %v3585
      %v3594 = vsel %vm508, %v3556, %v3586
      %v3595 = vsel %vm508, %v3558, %v3587
      %v3596 = vsel %vm508, %v3560, %v3588
      %v3597 = vsel %vm508, %v3562, %v3589
      %v3598 = vsel %vm508, %v3564, %v3590
      %v3599 = vsel %vm508, %v3566, %v3591
      %v3600 = vsel %vm508, %v3568, %v3592
      %v3601 = vlaneseq
      %v3602 = vshrl.u32 %v3601, 7
      %v3603 = vsub.s32 1, %v3602
      %v3604 = vrot.slane %v454, %v3603
      %v3605 = vmul.f32 %v3310, %v3604
      %v3606 = vmul.f32 %v3311, %v3604
      %v3607 = vmul.f32 %v3312, %v3604
      %v3608 = vmul.f32 %v3313, %v3604
      %v3609 = vmul.f32 %v3314, %v3604
      %v3610 = vmul.f32 %v3315, %v3604
      %v3611 = vmul.f32 %v3316, %v3604
      %v3612 = vmul.f32 %v3317, %v3604
      %v3613 = vlaneseq
      %v3614 = vshrl.u32 %v3613, 7
      %v3615 = vsub.s32 1, %v3614
      %v3616 = vrot.slane %v462, %v3615
      %v3617 = vmul.f32 %v3525, %v3616
      %v3618 = vmul.f32 %v3526, %v3616
      %v3619 = vmul.f32 %v3527, %v3616
      %v3620 = vmul.f32 %v3528, %v3616
      %v3621 = vmul.f32 %v3529, %v3616
      %v3622 = vmul.f32 %v3530, %v3616
      %v3623 = vmul.f32 %v3531, %v3616
      %v3624 = vmul.f32 %v3532, %v3616
      %v3625 = vadd.f32 %v3605, %v3617
      %v3626 = vadd.f32 %v3606, %v3618
      %v3627 = vadd.f32 %v3607, %v3619
      %v3628 = vadd.f32 %v3608, %v3620
      %v3629 = vadd.f32 %v3609, %v3621
      %v3630 = vadd.f32 %v3610, %v3622
      %v3631 = vadd.f32 %v3611, %v3623
      %v3632 = vadd.f32 %v3612, %v3624
      %v3633 = vlaneseq
      %v3634 = vshrl.u32 %v3633, 7
      %v3635 = vsub.s32 1, %v3634
      %v3636 = vrot.slane %v474, %v3635
      %v3637 = vmul.f32 %v3593, %v3636
      %v3638 = vmul.f32 %v3594, %v3636
      %v3639 = vmul.f32 %v3595, %v3636
      %v3640 = vmul.f32 %v3596, %v3636
      %v3641 = vmul.f32 %v3597, %v3636
      %v3642 = vmul.f32 %v3598, %v3636
      %v3643 = vmul.f32 %v3599, %v3636
      %v3644 = vmul.f32 %v3600, %v3636
      %v3645 = vadd.f32 %v3625, %v3637
      %v3646 = vadd.f32 %v3626, %v3638
      %v3647 = vadd.f32 %v3627, %v3639
      %v3648 = vadd.f32 %v3628, %v3640
      %v3649 = vadd.f32 %v3629, %v3641
      %v3650 = vadd.f32 %v3630, %v3642
      %v3651 = vadd.f32 %v3631, %v3643
      %v3652 = vadd.f32 %v3632, %v3644
      %v3653 = vlaneseq
      %v3654 = vshrl.u32 %v3653, 7
      %v3655 = vsub.s32 1, %v3654
      %v3656 = vrot.slane %v458, %v3655
      %v3657 = vmul.f32 %v3645, %v3656
      %v3658 = vmul.f32 %v3646, %v3656
      %v3659 = vmul.f32 %v3647, %v3656
      %v3660 = vmul.f32 %v3648, %v3656
      %v3661 = vmul.f32 %v3649, %v3656
      %v3662 = vmul.f32 %v3650, %v3656
      %v3663 = vmul.f32 %v3651, %v3656
      %v3664 = vmul.f32 %v3652, %v3656
      %v3665 = vsel %vm508, %v3657, 0.0
      %v3666 = vsel %vm508, %v3658, 0.0
      %v3667 = vsel %vm508, %v3659, 0.0
      %v3668 = vsel %vm508, %v3660, 0.0
      %v3669 = vsel %vm508, %v3661, 0.0
      %v3670 = vsel %vm508, %v3662, 0.0
      %v3671 = vsel %vm508, %v3663, 0.0
      %v3672 = vsel %vm508, %v3664, 0.0
      %3673 = vadd.xlane.f32.xlu0 %v3665
      %v3674 = vpop.xlane.xlu0 %3673
      %3675 = vadd.xlane.f32.xlu0 %v3666
      %v3676 = vpop.xlane.xlu0 %3675
      %3677 = vadd.xlane.f32.xlu0 %v3667
      %v3678 = vpop.xlane.xlu0 %3677
      %3679 = vadd.xlane.f32.xlu0 %v3668
      %v3680 = vpop.xlane.xlu0 %3679
      %3681 = vadd.xlane.f32.xlu0 %v3669
      %v3682 = vpop.xlane.xlu0 %3681
      %3683 = vadd.xlane.f32.xlu0 %v3670
      %v3684 = vpop.xlane.xlu0 %3683
      %3685 = vadd.xlane.f32.xlu0 %v3671
      %v3686 = vpop.xlane.xlu0 %3685
      %3687 = vadd.xlane.f32.xlu0 %v3672
      %v3688 = vpop.xlane.xlu0 %3687
      %3689 = vadd.xlane.f32.xlu0 %v3657
      %v3690 = vpop.xlane.xlu0 %3689
      %3691 = vadd.xlane.f32.xlu0 %v3658
      %v3692 = vpop.xlane.xlu0 %3691
      %3693 = vadd.xlane.f32.xlu0 %v3659
      %v3694 = vpop.xlane.xlu0 %3693
      %3695 = vadd.xlane.f32.xlu0 %v3660
      %v3696 = vpop.xlane.xlu0 %3695
      %3697 = vadd.xlane.f32.xlu0 %v3661
      %v3698 = vpop.xlane.xlu0 %3697
      %3699 = vadd.xlane.f32.xlu0 %v3662
      %v3700 = vpop.xlane.xlu0 %3699
      %3701 = vadd.xlane.f32.xlu0 %v3663
      %v3702 = vpop.xlane.xlu0 %3701
      %3703 = vadd.xlane.f32.xlu0 %v3664
      %v3704 = vpop.xlane.xlu0 %3703
      %v3705 = vsub.f32 %v3690, %v3674
      %v3706 = vsub.f32 %v3692, %v3676
      %v3707 = vsub.f32 %v3694, %v3678
      %v3708 = vsub.f32 %v3696, %v3680
      %v3709 = vsub.f32 %v3698, %v3682
      %v3710 = vsub.f32 %v3700, %v3684
      %v3711 = vsub.f32 %v3702, %v3686
      %v3712 = vsub.f32 %v3704, %v3688
      %3713 = vxpose.xlu0.b32.start [1/16] %v3674, 128
      %3714 = vxpose.xlu0.b32.cont [2/16] %v3676, 128
      %3715 = vxpose.xlu0.b32.cont [3/16] %v3678, 128
      %3716 = vxpose.xlu0.b32.cont [4/16] %v3680, 128
      %3717 = vxpose.xlu0.b32.cont [5/16] %v3682, 128
      %3718 = vxpose.xlu0.b32.cont [6/16] %v3684, 128
      %3719 = vxpose.xlu0.b32.cont [7/16] %v3686, 128
      %3720 = vxpose.xlu0.b32.cont [8/16] %v3688, 128
      %3721 = vxpose.xlu0.b32.cont [9/16] %v3705, 128
      %3722 = vxpose.xlu0.b32.cont [10/16] %v3706, 128
      %3723 = vxpose.xlu0.b32.cont [11/16] %v3707, 128
      %3724 = vxpose.xlu0.b32.cont [12/16] %v3708, 128
      %3725 = vxpose.xlu0.b32.cont [13/16] %v3709, 128
      %3726 = vxpose.xlu0.b32.cont [14/16] %v3710, 128
      %3727 = vxpose.xlu0.b32.cont [15/16] %v3711, 128
      %3728 = vxpose.xlu0.b32.end [16/16] %v3712, 128
      %v3729 = vpop.trf.xlu0
      %v3730 = vpop.trf.xlu0
      %v3731 = vpop.trf.xlu0
      %v3732 = vpop.trf.xlu0
      %v3733 = vpop.trf.xlu0
      %v3734 = vpop.trf.xlu0
      %v3735 = vpop.trf.xlu0
      %v3736 = vpop.trf.xlu0
      %v3737 = vpop.trf.xlu0
      %v3738 = vpop.trf.xlu0
      %v3739 = vpop.trf.xlu0
      %v3740 = vpop.trf.xlu0
      %v3741 = vpop.trf.xlu0
      %v3742 = vpop.trf.xlu0
      %v3743 = vpop.trf.xlu0
      %v3744 = vpop.trf.xlu0
      %v3745 = vrot.slane %v466, 2
      %3747 = vxpose.xlu0.b32.start [1/16] %v3745, 128
      %3748 = vxpose.xlu0.b32.cont [2/16] 0.0, 128
      %3749 = vxpose.xlu0.b32.cont [3/16] 0.0, 128
      %3750 = vxpose.xlu0.b32.cont [4/16] 0.0, 128
      %3751 = vxpose.xlu0.b32.cont [5/16] 0.0, 128
      %3752 = vxpose.xlu0.b32.cont [6/16] 0.0, 128
      %3753 = vxpose.xlu0.b32.cont [7/16] 0.0, 128
      %3754 = vxpose.xlu0.b32.cont [8/16] 0.0, 128
      %3755 = vxpose.xlu0.b32.cont [9/16] 0.0, 128
      %3756 = vxpose.xlu0.b32.cont [10/16] 0.0, 128
      %3757 = vxpose.xlu0.b32.cont [11/16] 0.0, 128
      %3758 = vxpose.xlu0.b32.cont [12/16] 0.0, 128
      %3759 = vxpose.xlu0.b32.cont [13/16] 0.0, 128
      %3760 = vxpose.xlu0.b32.cont [14/16] 0.0, 128
      %3761 = vxpose.xlu0.b32.cont [15/16] 0.0, 128
      %3762 = vxpose.xlu0.b32.end [16/16] 0.0, 128
      %v3763 = vpop.trf.xlu0
      %v3764 = vpop.trf.xlu0
      %v3765 = vpop.trf.xlu0
      %v3766 = vpop.trf.xlu0
      %v3767 = vpop.trf.xlu0
      %v3768 = vpop.trf.xlu0
      %v3769 = vpop.trf.xlu0
      %v3770 = vpop.trf.xlu0
      %v3771 = vpop.trf.xlu0
      %v3772 = vpop.trf.xlu0
      %v3773 = vpop.trf.xlu0
      %v3774 = vpop.trf.xlu0
      %v3775 = vpop.trf.xlu0
      %v3776 = vpop.trf.xlu0
      %v3777 = vpop.trf.xlu0
      %v3778 = vpop.trf.xlu0
      %3780 = vset.pattern.permute.xlu0 0
      %3781 = vperm.xlu0 %3780, %v3763
      %v3782 = vpop.permute.xlu0 %3781
      %3785 = vset.pattern.permute.xlu0 0
      %3786 = vperm.xlu0 %3785, %v3764
      %v3787 = vpop.permute.xlu0 %3786
      %3790 = vset.pattern.permute.xlu0 0
      %3791 = vperm.xlu0 %3790, %v3765
      %v3792 = vpop.permute.xlu0 %3791
      %3795 = vset.pattern.permute.xlu0 0
      %3796 = vperm.xlu0 %3795, %v3766
      %v3797 = vpop.permute.xlu0 %3796
      %3800 = vset.pattern.permute.xlu0 0
      %3801 = vperm.xlu0 %3800, %v3767
      %v3802 = vpop.permute.xlu0 %3801
      %3805 = vset.pattern.permute.xlu0 0
      %3806 = vperm.xlu0 %3805, %v3768
      %v3807 = vpop.permute.xlu0 %3806
      %3810 = vset.pattern.permute.xlu0 0
      %3811 = vperm.xlu0 %3810, %v3769
      %v3812 = vpop.permute.xlu0 %3811
      %3815 = vset.pattern.permute.xlu0 0
      %3816 = vperm.xlu0 %3815, %v3770
      %v3817 = vpop.permute.xlu0 %3816
      %3820 = vset.pattern.permute.xlu0 0
      %3821 = vperm.xlu0 %3820, %v3771
      %v3822 = vpop.permute.xlu0 %3821
      %3825 = vset.pattern.permute.xlu0 0
      %3826 = vperm.xlu0 %3825, %v3772
      %v3827 = vpop.permute.xlu0 %3826
      %3830 = vset.pattern.permute.xlu0 0
      %3831 = vperm.xlu0 %3830, %v3773
      %v3832 = vpop.permute.xlu0 %3831
      %3835 = vset.pattern.permute.xlu0 0
      %3836 = vperm.xlu0 %3835, %v3774
      %v3837 = vpop.permute.xlu0 %3836
      %3840 = vset.pattern.permute.xlu0 0
      %3841 = vperm.xlu0 %3840, %v3775
      %v3842 = vpop.permute.xlu0 %3841
      %3845 = vset.pattern.permute.xlu0 0
      %3846 = vperm.xlu0 %3845, %v3776
      %v3847 = vpop.permute.xlu0 %3846
      %3850 = vset.pattern.permute.xlu0 0
      %3851 = vperm.xlu0 %3850, %v3777
      %v3852 = vpop.permute.xlu0 %3851
      %3855 = vset.pattern.permute.xlu0 0
      %3856 = vperm.xlu0 %3855, %v3778
      %v3857 = vpop.permute.xlu0 %3856
      %v3859 = vsel %vm508, %v3782, %v3822
      %v3860 = vsel %vm508, %v3787, %v3827
      %v3861 = vsel %vm508, %v3792, %v3832
      %v3862 = vsel %vm508, %v3797, %v3837
      %v3863 = vsel %vm508, %v3802, %v3842
      %v3864 = vsel %vm508, %v3807, %v3847
      %v3865 = vsel %vm508, %v3812, %v3852
      %v3866 = vsel %vm508, %v3817, %v3857
      %v3867 = vlaneseq
      %v3868 = vshrl.u32 %v3867, 7
      %v3869 = vsub.s32 2, %v3868
      %v3870 = vrot.slane %v470, %v3869
      %v3871 = vmul.f32 %v3645, %v3870
      %v3872 = vmul.f32 %v3646, %v3870
      %v3873 = vmul.f32 %v3647, %v3870
      %v3874 = vmul.f32 %v3648, %v3870
      %v3875 = vmul.f32 %v3649, %v3870
      %v3876 = vmul.f32 %v3650, %v3870
      %v3877 = vmul.f32 %v3651, %v3870
      %v3878 = vmul.f32 %v3652, %v3870
      %v3879 = vsel %vm508, %v3871, 0.0
      %v3880 = vsel %vm508, %v3872, 0.0
      %v3881 = vsel %vm508, %v3873, 0.0
      %v3882 = vsel %vm508, %v3874, 0.0
      %v3883 = vsel %vm508, %v3875, 0.0
      %v3884 = vsel %vm508, %v3876, 0.0
      %v3885 = vsel %vm508, %v3877, 0.0
      %v3886 = vsel %vm508, %v3878, 0.0
      %3887 = vadd.xlane.f32.xlu0 %v3879
      %v3888 = vpop.xlane.xlu0 %3887
      %3889 = vadd.xlane.f32.xlu0 %v3880
      %v3890 = vpop.xlane.xlu0 %3889
      %3891 = vadd.xlane.f32.xlu0 %v3881
      %v3892 = vpop.xlane.xlu0 %3891
      %3893 = vadd.xlane.f32.xlu0 %v3882
      %v3894 = vpop.xlane.xlu0 %3893
      %3895 = vadd.xlane.f32.xlu0 %v3883
      %v3896 = vpop.xlane.xlu0 %3895
      %3897 = vadd.xlane.f32.xlu0 %v3884
      %v3898 = vpop.xlane.xlu0 %3897
      %3899 = vadd.xlane.f32.xlu0 %v3885
      %v3900 = vpop.xlane.xlu0 %3899
      %3901 = vadd.xlane.f32.xlu0 %v3886
      %v3902 = vpop.xlane.xlu0 %3901
      %3903 = vadd.xlane.f32.xlu0 %v3871
      %v3904 = vpop.xlane.xlu0 %3903
      %3905 = vadd.xlane.f32.xlu0 %v3872
      %v3906 = vpop.xlane.xlu0 %3905
      %3907 = vadd.xlane.f32.xlu0 %v3873
      %v3908 = vpop.xlane.xlu0 %3907
      %3909 = vadd.xlane.f32.xlu0 %v3874
      %v3910 = vpop.xlane.xlu0 %3909
      %3911 = vadd.xlane.f32.xlu0 %v3875
      %v3912 = vpop.xlane.xlu0 %3911
      %3913 = vadd.xlane.f32.xlu0 %v3876
      %v3914 = vpop.xlane.xlu0 %3913
      %3915 = vadd.xlane.f32.xlu0 %v3877
      %v3916 = vpop.xlane.xlu0 %3915
      %3917 = vadd.xlane.f32.xlu0 %v3878
      %v3918 = vpop.xlane.xlu0 %3917
      %v3919 = vsub.f32 %v3904, %v3888
      %v3920 = vsub.f32 %v3906, %v3890
      %v3921 = vsub.f32 %v3908, %v3892
      %v3922 = vsub.f32 %v3910, %v3894
      %v3923 = vsub.f32 %v3912, %v3896
      %v3924 = vsub.f32 %v3914, %v3898
      %v3925 = vsub.f32 %v3916, %v3900
      %v3926 = vsub.f32 %v3918, %v3902
      %v3927 = vsel %vm508, %v3888, %v3919
      %v3928 = vsel %vm508, %v3890, %v3920
      %v3929 = vsel %vm508, %v3892, %v3921
      %v3930 = vsel %vm508, %v3894, %v3922
      %v3931 = vsel %vm508, %v3896, %v3923
      %v3932 = vsel %vm508, %v3898, %v3924
      %v3933 = vsel %vm508, %v3900, %v3925
      %v3934 = vsel %vm508, %v3902, %v3926
      %v3935 = vlaneseq
      %v3936 = vshrl.u32 %v3935, 7
      %v3937 = vsub.s32 2, %v3936
      %v3938 = vrot.slane %v454, %v3937
      %v3939 = vmul.f32 %v3645, %v3938
      %v3940 = vmul.f32 %v3646, %v3938
      %v3941 = vmul.f32 %v3647, %v3938
      %v3942 = vmul.f32 %v3648, %v3938
      %v3943 = vmul.f32 %v3649, %v3938
      %v3944 = vmul.f32 %v3650, %v3938
      %v3945 = vmul.f32 %v3651, %v3938
      %v3946 = vmul.f32 %v3652, %v3938
      %v3947 = vlaneseq
      %v3948 = vshrl.u32 %v3947, 7
      %v3949 = vsub.s32 2, %v3948
      %v3950 = vrot.slane %v462, %v3949
      %v3951 = vmul.f32 %v3859, %v3950
      %v3952 = vmul.f32 %v3860, %v3950
      %v3953 = vmul.f32 %v3861, %v3950
      %v3954 = vmul.f32 %v3862, %v3950
      %v3955 = vmul.f32 %v3863, %v3950
      %v3956 = vmul.f32 %v3864, %v3950
      %v3957 = vmul.f32 %v3865, %v3950
      %v3958 = vmul.f32 %v3866, %v3950
      %v3959 = vadd.f32 %v3939, %v3951
      %v3960 = vadd.f32 %v3940, %v3952
      %v3961 = vadd.f32 %v3941, %v3953
      %v3962 = vadd.f32 %v3942, %v3954
      %v3963 = vadd.f32 %v3943, %v3955
      %v3964 = vadd.f32 %v3944, %v3956
      %v3965 = vadd.f32 %v3945, %v3957
      %v3966 = vadd.f32 %v3946, %v3958
      %v3967 = vlaneseq
      %v3968 = vshrl.u32 %v3967, 7
      %v3969 = vsub.s32 2, %v3968
      %v3970 = vrot.slane %v474, %v3969
      %v3971 = vmul.f32 %v3927, %v3970
      %v3972 = vmul.f32 %v3928, %v3970
      %v3973 = vmul.f32 %v3929, %v3970
      %v3974 = vmul.f32 %v3930, %v3970
      %v3975 = vmul.f32 %v3931, %v3970
      %v3976 = vmul.f32 %v3932, %v3970
      %v3977 = vmul.f32 %v3933, %v3970
      %v3978 = vmul.f32 %v3934, %v3970
      %v3979 = vadd.f32 %v3959, %v3971
      %v3980 = vadd.f32 %v3960, %v3972
      %v3981 = vadd.f32 %v3961, %v3973
      %v3982 = vadd.f32 %v3962, %v3974
      %v3983 = vadd.f32 %v3963, %v3975
      %v3984 = vadd.f32 %v3964, %v3976
      %v3985 = vadd.f32 %v3965, %v3977
      %v3986 = vadd.f32 %v3966, %v3978
      %v3987 = vlaneseq
      %v3988 = vshrl.u32 %v3987, 7
      %v3989 = vsub.s32 2, %v3988
      %v3990 = vrot.slane %v458, %v3989
      %v3991 = vmul.f32 %v3979, %v3990
      %v3992 = vmul.f32 %v3980, %v3990
      %v3993 = vmul.f32 %v3981, %v3990
      %v3994 = vmul.f32 %v3982, %v3990
      %v3995 = vmul.f32 %v3983, %v3990
      %v3996 = vmul.f32 %v3984, %v3990
      %v3997 = vmul.f32 %v3985, %v3990
      %v3998 = vmul.f32 %v3986, %v3990
      %v3999 = vsel %vm508, %v3991, 0.0
      %v4000 = vsel %vm508, %v3992, 0.0
      %v4001 = vsel %vm508, %v3993, 0.0
      %v4002 = vsel %vm508, %v3994, 0.0
      %v4003 = vsel %vm508, %v3995, 0.0
      %v4004 = vsel %vm508, %v3996, 0.0
      %v4005 = vsel %vm508, %v3997, 0.0
      %v4006 = vsel %vm508, %v3998, 0.0
      %4007 = vadd.xlane.f32.xlu0 %v3999
      %v4008 = vpop.xlane.xlu0 %4007
      %4009 = vadd.xlane.f32.xlu0 %v4000
      %v4010 = vpop.xlane.xlu0 %4009
      %4011 = vadd.xlane.f32.xlu0 %v4001
      %v4012 = vpop.xlane.xlu0 %4011
      %4013 = vadd.xlane.f32.xlu0 %v4002
      %v4014 = vpop.xlane.xlu0 %4013
      %4015 = vadd.xlane.f32.xlu0 %v4003
      %v4016 = vpop.xlane.xlu0 %4015
      %4017 = vadd.xlane.f32.xlu0 %v4004
      %v4018 = vpop.xlane.xlu0 %4017
      %4019 = vadd.xlane.f32.xlu0 %v4005
      %v4020 = vpop.xlane.xlu0 %4019
      %4021 = vadd.xlane.f32.xlu0 %v4006
      %v4022 = vpop.xlane.xlu0 %4021
      %4023 = vadd.xlane.f32.xlu0 %v3991
      %v4024 = vpop.xlane.xlu0 %4023
      %4025 = vadd.xlane.f32.xlu0 %v3992
      %v4026 = vpop.xlane.xlu0 %4025
      %4027 = vadd.xlane.f32.xlu0 %v3993
      %v4028 = vpop.xlane.xlu0 %4027
      %4029 = vadd.xlane.f32.xlu0 %v3994
      %v4030 = vpop.xlane.xlu0 %4029
      %4031 = vadd.xlane.f32.xlu0 %v3995
      %v4032 = vpop.xlane.xlu0 %4031
      %4033 = vadd.xlane.f32.xlu0 %v3996
      %v4034 = vpop.xlane.xlu0 %4033
      %4035 = vadd.xlane.f32.xlu0 %v3997
      %v4036 = vpop.xlane.xlu0 %4035
      %4037 = vadd.xlane.f32.xlu0 %v3998
      %v4038 = vpop.xlane.xlu0 %4037
      %v4039 = vsub.f32 %v4024, %v4008
      %v4040 = vsub.f32 %v4026, %v4010
      %v4041 = vsub.f32 %v4028, %v4012
      %v4042 = vsub.f32 %v4030, %v4014
      %v4043 = vsub.f32 %v4032, %v4016
      %v4044 = vsub.f32 %v4034, %v4018
      %v4045 = vsub.f32 %v4036, %v4020
      %v4046 = vsub.f32 %v4038, %v4022
      %4047 = vxpose.xlu0.b32.start [1/16] %v4008, 128
      %4048 = vxpose.xlu0.b32.cont [2/16] %v4010, 128
      %4049 = vxpose.xlu0.b32.cont [3/16] %v4012, 128
      %4050 = vxpose.xlu0.b32.cont [4/16] %v4014, 128
      %4051 = vxpose.xlu0.b32.cont [5/16] %v4016, 128
      %4052 = vxpose.xlu0.b32.cont [6/16] %v4018, 128
      %4053 = vxpose.xlu0.b32.cont [7/16] %v4020, 128
      %4054 = vxpose.xlu0.b32.cont [8/16] %v4022, 128
      %4055 = vxpose.xlu0.b32.cont [9/16] %v4039, 128
      %4056 = vxpose.xlu0.b32.cont [10/16] %v4040, 128
      %4057 = vxpose.xlu0.b32.cont [11/16] %v4041, 128
      %4058 = vxpose.xlu0.b32.cont [12/16] %v4042, 128
      %4059 = vxpose.xlu0.b32.cont [13/16] %v4043, 128
      %4060 = vxpose.xlu0.b32.cont [14/16] %v4044, 128
      %4061 = vxpose.xlu0.b32.cont [15/16] %v4045, 128
      %4062 = vxpose.xlu0.b32.end [16/16] %v4046, 128
      %v4063 = vpop.trf.xlu0
      %v4064 = vpop.trf.xlu0
      %v4065 = vpop.trf.xlu0
      %v4066 = vpop.trf.xlu0
      %v4067 = vpop.trf.xlu0
      %v4068 = vpop.trf.xlu0
      %v4069 = vpop.trf.xlu0
      %v4070 = vpop.trf.xlu0
      %v4071 = vpop.trf.xlu0
      %v4072 = vpop.trf.xlu0
      %v4073 = vpop.trf.xlu0
      %v4074 = vpop.trf.xlu0
      %v4075 = vpop.trf.xlu0
      %v4076 = vpop.trf.xlu0
      %v4077 = vpop.trf.xlu0
      %v4078 = vpop.trf.xlu0
      %v4079 = vrot.slane %v466, 3
      %4081 = vxpose.xlu0.b32.start [1/16] %v4079, 128
      %4082 = vxpose.xlu0.b32.cont [2/16] 0.0, 128
      %4083 = vxpose.xlu0.b32.cont [3/16] 0.0, 128
      %4084 = vxpose.xlu0.b32.cont [4/16] 0.0, 128
      %4085 = vxpose.xlu0.b32.cont [5/16] 0.0, 128
      %4086 = vxpose.xlu0.b32.cont [6/16] 0.0, 128
      %4087 = vxpose.xlu0.b32.cont [7/16] 0.0, 128
      %4088 = vxpose.xlu0.b32.cont [8/16] 0.0, 128
      %4089 = vxpose.xlu0.b32.cont [9/16] 0.0, 128
      %4090 = vxpose.xlu0.b32.cont [10/16] 0.0, 128
      %4091 = vxpose.xlu0.b32.cont [11/16] 0.0, 128
      %4092 = vxpose.xlu0.b32.cont [12/16] 0.0, 128
      %4093 = vxpose.xlu0.b32.cont [13/16] 0.0, 128
      %4094 = vxpose.xlu0.b32.cont [14/16] 0.0, 128
      %4095 = vxpose.xlu0.b32.cont [15/16] 0.0, 128
      %4096 = vxpose.xlu0.b32.end [16/16] 0.0, 128
      %v4097 = vpop.trf.xlu0
      %v4098 = vpop.trf.xlu0
      %v4099 = vpop.trf.xlu0
      %v4100 = vpop.trf.xlu0
      %v4101 = vpop.trf.xlu0
      %v4102 = vpop.trf.xlu0
      %v4103 = vpop.trf.xlu0
      %v4104 = vpop.trf.xlu0
      %v4105 = vpop.trf.xlu0
      %v4106 = vpop.trf.xlu0
      %v4107 = vpop.trf.xlu0
      %v4108 = vpop.trf.xlu0
      %v4109 = vpop.trf.xlu0
      %v4110 = vpop.trf.xlu0
      %v4111 = vpop.trf.xlu0
      %v4112 = vpop.trf.xlu0
      %4114 = vset.pattern.permute.xlu0 0
      %4115 = vperm.xlu0 %4114, %v4097
      %v4116 = vpop.permute.xlu0 %4115
      %4119 = vset.pattern.permute.xlu0 0
      %4120 = vperm.xlu0 %4119, %v4098
      %v4121 = vpop.permute.xlu0 %4120
      %4124 = vset.pattern.permute.xlu0 0
      %4125 = vperm.xlu0 %4124, %v4099
      %v4126 = vpop.permute.xlu0 %4125
      %4129 = vset.pattern.permute.xlu0 0
      %4130 = vperm.xlu0 %4129, %v4100
      %v4131 = vpop.permute.xlu0 %4130
      %4134 = vset.pattern.permute.xlu0 0
      %4135 = vperm.xlu0 %4134, %v4101
      %v4136 = vpop.permute.xlu0 %4135
      %4139 = vset.pattern.permute.xlu0 0
      %4140 = vperm.xlu0 %4139, %v4102
      %v4141 = vpop.permute.xlu0 %4140
      %4144 = vset.pattern.permute.xlu0 0
      %4145 = vperm.xlu0 %4144, %v4103
      %v4146 = vpop.permute.xlu0 %4145
      %4149 = vset.pattern.permute.xlu0 0
      %4150 = vperm.xlu0 %4149, %v4104
      %v4151 = vpop.permute.xlu0 %4150
      %4154 = vset.pattern.permute.xlu0 0
      %4155 = vperm.xlu0 %4154, %v4105
      %v4156 = vpop.permute.xlu0 %4155
      %4159 = vset.pattern.permute.xlu0 0
      %4160 = vperm.xlu0 %4159, %v4106
      %v4161 = vpop.permute.xlu0 %4160
      %4164 = vset.pattern.permute.xlu0 0
      %4165 = vperm.xlu0 %4164, %v4107
      %v4166 = vpop.permute.xlu0 %4165
      %4169 = vset.pattern.permute.xlu0 0
      %4170 = vperm.xlu0 %4169, %v4108
      %v4171 = vpop.permute.xlu0 %4170
      %4174 = vset.pattern.permute.xlu0 0
      %4175 = vperm.xlu0 %4174, %v4109
      %v4176 = vpop.permute.xlu0 %4175
      %4179 = vset.pattern.permute.xlu0 0
      %4180 = vperm.xlu0 %4179, %v4110
      %v4181 = vpop.permute.xlu0 %4180
      %4184 = vset.pattern.permute.xlu0 0
      %4185 = vperm.xlu0 %4184, %v4111
      %v4186 = vpop.permute.xlu0 %4185
      %4189 = vset.pattern.permute.xlu0 0
      %4190 = vperm.xlu0 %4189, %v4112
      %v4191 = vpop.permute.xlu0 %4190
      %v4193 = vsel %vm508, %v4116, %v4156
      %v4194 = vsel %vm508, %v4121, %v4161
      %v4195 = vsel %vm508, %v4126, %v4166
      %v4196 = vsel %vm508, %v4131, %v4171
      %v4197 = vsel %vm508, %v4136, %v4176
      %v4198 = vsel %vm508, %v4141, %v4181
      %v4199 = vsel %vm508, %v4146, %v4186
      %v4200 = vsel %vm508, %v4151, %v4191
      %v4201 = vlaneseq
      %v4202 = vshrl.u32 %v4201, 7
      %v4203 = vsub.s32 3, %v4202
      %v4204 = vrot.slane %v470, %v4203
      %v4205 = vmul.f32 %v3979, %v4204
      %v4206 = vmul.f32 %v3980, %v4204
      %v4207 = vmul.f32 %v3981, %v4204
      %v4208 = vmul.f32 %v3982, %v4204
      %v4209 = vmul.f32 %v3983, %v4204
      %v4210 = vmul.f32 %v3984, %v4204
      %v4211 = vmul.f32 %v3985, %v4204
      %v4212 = vmul.f32 %v3986, %v4204
      %v4213 = vsel %vm508, %v4205, 0.0
      %v4214 = vsel %vm508, %v4206, 0.0
      %v4215 = vsel %vm508, %v4207, 0.0
      %v4216 = vsel %vm508, %v4208, 0.0
      %v4217 = vsel %vm508, %v4209, 0.0
      %v4218 = vsel %vm508, %v4210, 0.0
      %v4219 = vsel %vm508, %v4211, 0.0
      %v4220 = vsel %vm508, %v4212, 0.0
      %4221 = vadd.xlane.f32.xlu0 %v4213
      %v4222 = vpop.xlane.xlu0 %4221
      %4223 = vadd.xlane.f32.xlu0 %v4214
      %v4224 = vpop.xlane.xlu0 %4223
      %4225 = vadd.xlane.f32.xlu0 %v4215
      %v4226 = vpop.xlane.xlu0 %4225
      %4227 = vadd.xlane.f32.xlu0 %v4216
      %v4228 = vpop.xlane.xlu0 %4227
      %4229 = vadd.xlane.f32.xlu0 %v4217
      %v4230 = vpop.xlane.xlu0 %4229
      %4231 = vadd.xlane.f32.xlu0 %v4218
      %v4232 = vpop.xlane.xlu0 %4231
      %4233 = vadd.xlane.f32.xlu0 %v4219
      %v4234 = vpop.xlane.xlu0 %4233
      %4235 = vadd.xlane.f32.xlu0 %v4220
      %v4236 = vpop.xlane.xlu0 %4235
      %4237 = vadd.xlane.f32.xlu0 %v4205
      %v4238 = vpop.xlane.xlu0 %4237
      %4239 = vadd.xlane.f32.xlu0 %v4206
      %v4240 = vpop.xlane.xlu0 %4239
      %4241 = vadd.xlane.f32.xlu0 %v4207
      %v4242 = vpop.xlane.xlu0 %4241
      %4243 = vadd.xlane.f32.xlu0 %v4208
      %v4244 = vpop.xlane.xlu0 %4243
      %4245 = vadd.xlane.f32.xlu0 %v4209
      %v4246 = vpop.xlane.xlu0 %4245
      %4247 = vadd.xlane.f32.xlu0 %v4210
      %v4248 = vpop.xlane.xlu0 %4247
      %4249 = vadd.xlane.f32.xlu0 %v4211
      %v4250 = vpop.xlane.xlu0 %4249
      %4251 = vadd.xlane.f32.xlu0 %v4212
      %v4252 = vpop.xlane.xlu0 %4251
      %v4253 = vsub.f32 %v4238, %v4222
      %v4254 = vsub.f32 %v4240, %v4224
      %v4255 = vsub.f32 %v4242, %v4226
      %v4256 = vsub.f32 %v4244, %v4228
      %v4257 = vsub.f32 %v4246, %v4230
      %v4258 = vsub.f32 %v4248, %v4232
      %v4259 = vsub.f32 %v4250, %v4234
      %v4260 = vsub.f32 %v4252, %v4236
      %v4261 = vsel %vm508, %v4222, %v4253
      %v4262 = vsel %vm508, %v4224, %v4254
      %v4263 = vsel %vm508, %v4226, %v4255
      %v4264 = vsel %vm508, %v4228, %v4256
      %v4265 = vsel %vm508, %v4230, %v4257
      %v4266 = vsel %vm508, %v4232, %v4258
      %v4267 = vsel %vm508, %v4234, %v4259
      %v4268 = vsel %vm508, %v4236, %v4260
      %v4269 = vlaneseq
      %v4270 = vshrl.u32 %v4269, 7
      %v4271 = vsub.s32 3, %v4270
      %v4272 = vrot.slane %v454, %v4271
      %v4273 = vmul.f32 %v3979, %v4272
      %v4274 = vmul.f32 %v3980, %v4272
      %v4275 = vmul.f32 %v3981, %v4272
      %v4276 = vmul.f32 %v3982, %v4272
      %v4277 = vmul.f32 %v3983, %v4272
      %v4278 = vmul.f32 %v3984, %v4272
      %v4279 = vmul.f32 %v3985, %v4272
      %v4280 = vmul.f32 %v3986, %v4272
      %v4281 = vlaneseq
      %v4282 = vshrl.u32 %v4281, 7
      %v4283 = vsub.s32 3, %v4282
      %v4284 = vrot.slane %v462, %v4283
      %v4285 = vmul.f32 %v4193, %v4284
      %v4286 = vmul.f32 %v4194, %v4284
      %v4287 = vmul.f32 %v4195, %v4284
      %v4288 = vmul.f32 %v4196, %v4284
      %v4289 = vmul.f32 %v4197, %v4284
      %v4290 = vmul.f32 %v4198, %v4284
      %v4291 = vmul.f32 %v4199, %v4284
      %v4292 = vmul.f32 %v4200, %v4284
      %v4293 = vadd.f32 %v4273, %v4285
      %v4294 = vadd.f32 %v4274, %v4286
      %v4295 = vadd.f32 %v4275, %v4287
      %v4296 = vadd.f32 %v4276, %v4288
      %v4297 = vadd.f32 %v4277, %v4289
      %v4298 = vadd.f32 %v4278, %v4290
      %v4299 = vadd.f32 %v4279, %v4291
      %v4300 = vadd.f32 %v4280, %v4292
      %v4301 = vlaneseq
      %v4302 = vshrl.u32 %v4301, 7
      %v4303 = vsub.s32 3, %v4302
      %v4304 = vrot.slane %v474, %v4303
      %v4305 = vmul.f32 %v4261, %v4304
      %v4306 = vmul.f32 %v4262, %v4304
      %v4307 = vmul.f32 %v4263, %v4304
      %v4308 = vmul.f32 %v4264, %v4304
      %v4309 = vmul.f32 %v4265, %v4304
      %v4310 = vmul.f32 %v4266, %v4304
      %v4311 = vmul.f32 %v4267, %v4304
      %v4312 = vmul.f32 %v4268, %v4304
      %v4313 = vadd.f32 %v4293, %v4305
      %v4314 = vadd.f32 %v4294, %v4306
      %v4315 = vadd.f32 %v4295, %v4307
      %v4316 = vadd.f32 %v4296, %v4308
      %v4317 = vadd.f32 %v4297, %v4309
      %v4318 = vadd.f32 %v4298, %v4310
      %v4319 = vadd.f32 %v4299, %v4311
      %v4320 = vadd.f32 %v4300, %v4312
      %v4321 = vlaneseq
      %v4322 = vshrl.u32 %v4321, 7
      %v4323 = vsub.s32 3, %v4322
      %v4324 = vrot.slane %v458, %v4323
      %v4325 = vmul.f32 %v4313, %v4324
      %v4326 = vmul.f32 %v4314, %v4324
      %v4327 = vmul.f32 %v4315, %v4324
      %v4328 = vmul.f32 %v4316, %v4324
      %v4329 = vmul.f32 %v4317, %v4324
      %v4330 = vmul.f32 %v4318, %v4324
      %v4331 = vmul.f32 %v4319, %v4324
      %v4332 = vmul.f32 %v4320, %v4324
      %v4333 = vsel %vm508, %v4325, 0.0
      %v4334 = vsel %vm508, %v4326, 0.0
      %v4335 = vsel %vm508, %v4327, 0.0
      %v4336 = vsel %vm508, %v4328, 0.0
      %v4337 = vsel %vm508, %v4329, 0.0
      %v4338 = vsel %vm508, %v4330, 0.0
      %v4339 = vsel %vm508, %v4331, 0.0
      %v4340 = vsel %vm508, %v4332, 0.0
      %4341 = vadd.xlane.f32.xlu0 %v4333
      %v4342 = vpop.xlane.xlu0 %4341
      %4343 = vadd.xlane.f32.xlu0 %v4334
      %v4344 = vpop.xlane.xlu0 %4343
      %4345 = vadd.xlane.f32.xlu0 %v4335
      %v4346 = vpop.xlane.xlu0 %4345
      %4347 = vadd.xlane.f32.xlu0 %v4336
      %v4348 = vpop.xlane.xlu0 %4347
      %4349 = vadd.xlane.f32.xlu0 %v4337
      %v4350 = vpop.xlane.xlu0 %4349
      %4351 = vadd.xlane.f32.xlu0 %v4338
      %v4352 = vpop.xlane.xlu0 %4351
      %4353 = vadd.xlane.f32.xlu0 %v4339
      %v4354 = vpop.xlane.xlu0 %4353
      %4355 = vadd.xlane.f32.xlu0 %v4340
      %v4356 = vpop.xlane.xlu0 %4355
      %4357 = vadd.xlane.f32.xlu0 %v4325
      %v4358 = vpop.xlane.xlu0 %4357
      %4359 = vadd.xlane.f32.xlu0 %v4326
      %v4360 = vpop.xlane.xlu0 %4359
      %4361 = vadd.xlane.f32.xlu0 %v4327
      %v4362 = vpop.xlane.xlu0 %4361
      %4363 = vadd.xlane.f32.xlu0 %v4328
      %v4364 = vpop.xlane.xlu0 %4363
      %4365 = vadd.xlane.f32.xlu0 %v4329
      %v4366 = vpop.xlane.xlu0 %4365
      %4367 = vadd.xlane.f32.xlu0 %v4330
      %v4368 = vpop.xlane.xlu0 %4367
      %4369 = vadd.xlane.f32.xlu0 %v4331
      %v4370 = vpop.xlane.xlu0 %4369
      %4371 = vadd.xlane.f32.xlu0 %v4332
      %v4372 = vpop.xlane.xlu0 %4371
      %v4373 = vsub.f32 %v4358, %v4342
      %v4374 = vsub.f32 %v4360, %v4344
      %v4375 = vsub.f32 %v4362, %v4346
      %v4376 = vsub.f32 %v4364, %v4348
      %v4377 = vsub.f32 %v4366, %v4350
      %v4378 = vsub.f32 %v4368, %v4352
      %v4379 = vsub.f32 %v4370, %v4354
      %v4380 = vsub.f32 %v4372, %v4356
      %4381 = vxpose.xlu0.b32.start [1/16] %v4342, 128
      %4382 = vxpose.xlu0.b32.cont [2/16] %v4344, 128
      %4383 = vxpose.xlu0.b32.cont [3/16] %v4346, 128
      %4384 = vxpose.xlu0.b32.cont [4/16] %v4348, 128
      %4385 = vxpose.xlu0.b32.cont [5/16] %v4350, 128
      %4386 = vxpose.xlu0.b32.cont [6/16] %v4352, 128
      %4387 = vxpose.xlu0.b32.cont [7/16] %v4354, 128
      %4388 = vxpose.xlu0.b32.cont [8/16] %v4356, 128
      %4389 = vxpose.xlu0.b32.cont [9/16] %v4373, 128
      %4390 = vxpose.xlu0.b32.cont [10/16] %v4374, 128
      %4391 = vxpose.xlu0.b32.cont [11/16] %v4375, 128
      %4392 = vxpose.xlu0.b32.cont [12/16] %v4376, 128
      %4393 = vxpose.xlu0.b32.cont [13/16] %v4377, 128
      %4394 = vxpose.xlu0.b32.cont [14/16] %v4378, 128
      %4395 = vxpose.xlu0.b32.cont [15/16] %v4379, 128
      %4396 = vxpose.xlu0.b32.end [16/16] %v4380, 128
      %v4397 = vpop.trf.xlu0
      %v4398 = vpop.trf.xlu0
      %v4399 = vpop.trf.xlu0
      %v4400 = vpop.trf.xlu0
      %v4401 = vpop.trf.xlu0
      %v4402 = vpop.trf.xlu0
      %v4403 = vpop.trf.xlu0
      %v4404 = vpop.trf.xlu0
      %v4405 = vpop.trf.xlu0
      %v4406 = vpop.trf.xlu0
      %v4407 = vpop.trf.xlu0
      %v4408 = vpop.trf.xlu0
      %v4409 = vpop.trf.xlu0
      %v4410 = vpop.trf.xlu0
      %v4411 = vpop.trf.xlu0
      %v4412 = vpop.trf.xlu0
      %v4413 = vrot.slane %v466, 4
      %4415 = vxpose.xlu0.b32.start [1/16] %v4413, 128
      %4416 = vxpose.xlu0.b32.cont [2/16] 0.0, 128
      %4417 = vxpose.xlu0.b32.cont [3/16] 0.0, 128
      %4418 = vxpose.xlu0.b32.cont [4/16] 0.0, 128
      %4419 = vxpose.xlu0.b32.cont [5/16] 0.0, 128
      %4420 = vxpose.xlu0.b32.cont [6/16] 0.0, 128
      %4421 = vxpose.xlu0.b32.cont [7/16] 0.0, 128
      %4422 = vxpose.xlu0.b32.cont [8/16] 0.0, 128
      %4423 = vxpose.xlu0.b32.cont [9/16] 0.0, 128
      %4424 = vxpose.xlu0.b32.cont [10/16] 0.0, 128
      %4425 = vxpose.xlu0.b32.cont [11/16] 0.0, 128
      %4426 = vxpose.xlu0.b32.cont [12/16] 0.0, 128
      %4427 = vxpose.xlu0.b32.cont [13/16] 0.0, 128
      %4428 = vxpose.xlu0.b32.cont [14/16] 0.0, 128
      %4429 = vxpose.xlu0.b32.cont [15/16] 0.0, 128
      %4430 = vxpose.xlu0.b32.end [16/16] 0.0, 128
      %v4431 = vpop.trf.xlu0
      %v4432 = vpop.trf.xlu0
      %v4433 = vpop.trf.xlu0
      %v4434 = vpop.trf.xlu0
      %v4435 = vpop.trf.xlu0
      %v4436 = vpop.trf.xlu0
      %v4437 = vpop.trf.xlu0
      %v4438 = vpop.trf.xlu0
      %v4439 = vpop.trf.xlu0
      %v4440 = vpop.trf.xlu0
      %v4441 = vpop.trf.xlu0
      %v4442 = vpop.trf.xlu0
      %v4443 = vpop.trf.xlu0
      %v4444 = vpop.trf.xlu0
      %v4445 = vpop.trf.xlu0
      %v4446 = vpop.trf.xlu0
      %4448 = vset.pattern.permute.xlu0 0
      %4449 = vperm.xlu0 %4448, %v4431
      %v4450 = vpop.permute.xlu0 %4449
      %4453 = vset.pattern.permute.xlu0 0
      %4454 = vperm.xlu0 %4453, %v4432
      %v4455 = vpop.permute.xlu0 %4454
      %4458 = vset.pattern.permute.xlu0 0
      %4459 = vperm.xlu0 %4458, %v4433
      %v4460 = vpop.permute.xlu0 %4459
      %4463 = vset.pattern.permute.xlu0 0
      %4464 = vperm.xlu0 %4463, %v4434
      %v4465 = vpop.permute.xlu0 %4464
      %4468 = vset.pattern.permute.xlu0 0
      %4469 = vperm.xlu0 %4468, %v4435
      %v4470 = vpop.permute.xlu0 %4469
      %4473 = vset.pattern.permute.xlu0 0
      %4474 = vperm.xlu0 %4473, %v4436
      %v4475 = vpop.permute.xlu0 %4474
      %4478 = vset.pattern.permute.xlu0 0
      %4479 = vperm.xlu0 %4478, %v4437
      %v4480 = vpop.permute.xlu0 %4479
      %4483 = vset.pattern.permute.xlu0 0
      %4484 = vperm.xlu0 %4483, %v4438
      %v4485 = vpop.permute.xlu0 %4484
      %4488 = vset.pattern.permute.xlu0 0
      %4489 = vperm.xlu0 %4488, %v4439
      %v4490 = vpop.permute.xlu0 %4489
      %4493 = vset.pattern.permute.xlu0 0
      %4494 = vperm.xlu0 %4493, %v4440
      %v4495 = vpop.permute.xlu0 %4494
      %4498 = vset.pattern.permute.xlu0 0
      %4499 = vperm.xlu0 %4498, %v4441
      %v4500 = vpop.permute.xlu0 %4499
      %4503 = vset.pattern.permute.xlu0 0
      %4504 = vperm.xlu0 %4503, %v4442
      %v4505 = vpop.permute.xlu0 %4504
      %4508 = vset.pattern.permute.xlu0 0
      %4509 = vperm.xlu0 %4508, %v4443
      %v4510 = vpop.permute.xlu0 %4509
      %4513 = vset.pattern.permute.xlu0 0
      %4514 = vperm.xlu0 %4513, %v4444
      %v4515 = vpop.permute.xlu0 %4514
      %4518 = vset.pattern.permute.xlu0 0
      %4519 = vperm.xlu0 %4518, %v4445
      %v4520 = vpop.permute.xlu0 %4519
      %4523 = vset.pattern.permute.xlu0 0
      %4524 = vperm.xlu0 %4523, %v4446
      %v4525 = vpop.permute.xlu0 %4524
      %v4527 = vsel %vm508, %v4450, %v4490
      %v4528 = vsel %vm508, %v4455, %v4495
      %v4529 = vsel %vm508, %v4460, %v4500
      %v4530 = vsel %vm508, %v4465, %v4505
      %v4531 = vsel %vm508, %v4470, %v4510
      %v4532 = vsel %vm508, %v4475, %v4515
      %v4533 = vsel %vm508, %v4480, %v4520
      %v4534 = vsel %vm508, %v4485, %v4525
      %v4535 = vlaneseq
      %v4536 = vshrl.u32 %v4535, 7
      %v4537 = vsub.s32 4, %v4536
      %v4538 = vrot.slane %v470, %v4537
      %v4539 = vmul.f32 %v4313, %v4538
      %v4540 = vmul.f32 %v4314, %v4538
      %v4541 = vmul.f32 %v4315, %v4538
      %v4542 = vmul.f32 %v4316, %v4538
      %v4543 = vmul.f32 %v4317, %v4538
      %v4544 = vmul.f32 %v4318, %v4538
      %v4545 = vmul.f32 %v4319, %v4538
      %v4546 = vmul.f32 %v4320, %v4538
      %v4547 = vsel %vm508, %v4539, 0.0
      %v4548 = vsel %vm508, %v4540, 0.0
      %v4549 = vsel %vm508, %v4541, 0.0
      %v4550 = vsel %vm508, %v4542, 0.0
      %v4551 = vsel %vm508, %v4543, 0.0
      %v4552 = vsel %vm508, %v4544, 0.0
      %v4553 = vsel %vm508, %v4545, 0.0
      %v4554 = vsel %vm508, %v4546, 0.0
      %4555 = vadd.xlane.f32.xlu0 %v4547
      %v4556 = vpop.xlane.xlu0 %4555
      %4557 = vadd.xlane.f32.xlu0 %v4548
      %v4558 = vpop.xlane.xlu0 %4557
      %4559 = vadd.xlane.f32.xlu0 %v4549
      %v4560 = vpop.xlane.xlu0 %4559
      %4561 = vadd.xlane.f32.xlu0 %v4550
      %v4562 = vpop.xlane.xlu0 %4561
      %4563 = vadd.xlane.f32.xlu0 %v4551
      %v4564 = vpop.xlane.xlu0 %4563
      %4565 = vadd.xlane.f32.xlu0 %v4552
      %v4566 = vpop.xlane.xlu0 %4565
      %4567 = vadd.xlane.f32.xlu0 %v4553
      %v4568 = vpop.xlane.xlu0 %4567
      %4569 = vadd.xlane.f32.xlu0 %v4554
      %v4570 = vpop.xlane.xlu0 %4569
      %4571 = vadd.xlane.f32.xlu0 %v4539
      %v4572 = vpop.xlane.xlu0 %4571
      %4573 = vadd.xlane.f32.xlu0 %v4540
      %v4574 = vpop.xlane.xlu0 %4573
      %4575 = vadd.xlane.f32.xlu0 %v4541
      %v4576 = vpop.xlane.xlu0 %4575
      %4577 = vadd.xlane.f32.xlu0 %v4542
      %v4578 = vpop.xlane.xlu0 %4577
      %4579 = vadd.xlane.f32.xlu0 %v4543
      %v4580 = vpop.xlane.xlu0 %4579
      %4581 = vadd.xlane.f32.xlu0 %v4544
      %v4582 = vpop.xlane.xlu0 %4581
      %4583 = vadd.xlane.f32.xlu0 %v4545
      %v4584 = vpop.xlane.xlu0 %4583
      %4585 = vadd.xlane.f32.xlu0 %v4546
      %v4586 = vpop.xlane.xlu0 %4585
      %v4587 = vsub.f32 %v4572, %v4556
      %v4588 = vsub.f32 %v4574, %v4558
      %v4589 = vsub.f32 %v4576, %v4560
      %v4590 = vsub.f32 %v4578, %v4562
      %v4591 = vsub.f32 %v4580, %v4564
      %v4592 = vsub.f32 %v4582, %v4566
      %v4593 = vsub.f32 %v4584, %v4568
      %v4594 = vsub.f32 %v4586, %v4570
      %v4595 = vsel %vm508, %v4556, %v4587
      %v4596 = vsel %vm508, %v4558, %v4588
      %v4597 = vsel %vm508, %v4560, %v4589
      %v4598 = vsel %vm508, %v4562, %v4590
      %v4599 = vsel %vm508, %v4564, %v4591
      %v4600 = vsel %vm508, %v4566, %v4592
      %v4601 = vsel %vm508, %v4568, %v4593
      %v4602 = vsel %vm508, %v4570, %v4594
      %v4603 = vlaneseq
      %v4604 = vshrl.u32 %v4603, 7
      %v4605 = vsub.s32 4, %v4604
      %v4606 = vrot.slane %v454, %v4605
      %v4607 = vmul.f32 %v4313, %v4606
      %v4608 = vmul.f32 %v4314, %v4606
      %v4609 = vmul.f32 %v4315, %v4606
      %v4610 = vmul.f32 %v4316, %v4606
      %v4611 = vmul.f32 %v4317, %v4606
      %v4612 = vmul.f32 %v4318, %v4606
      %v4613 = vmul.f32 %v4319, %v4606
      %v4614 = vmul.f32 %v4320, %v4606
      %v4615 = vlaneseq
      %v4616 = vshrl.u32 %v4615, 7
      %v4617 = vsub.s32 4, %v4616
      %v4618 = vrot.slane %v462, %v4617
      %v4619 = vmul.f32 %v4527, %v4618
      %v4620 = vmul.f32 %v4528, %v4618
      %v4621 = vmul.f32 %v4529, %v4618
      %v4622 = vmul.f32 %v4530, %v4618
      %v4623 = vmul.f32 %v4531, %v4618
      %v4624 = vmul.f32 %v4532, %v4618
      %v4625 = vmul.f32 %v4533, %v4618
      %v4626 = vmul.f32 %v4534, %v4618
      %v4627 = vadd.f32 %v4607, %v4619
      %v4628 = vadd.f32 %v4608, %v4620
      %v4629 = vadd.f32 %v4609, %v4621
      %v4630 = vadd.f32 %v4610, %v4622
      %v4631 = vadd.f32 %v4611, %v4623
      %v4632 = vadd.f32 %v4612, %v4624
      %v4633 = vadd.f32 %v4613, %v4625
      %v4634 = vadd.f32 %v4614, %v4626
      %v4635 = vlaneseq
      %v4636 = vshrl.u32 %v4635, 7
      %v4637 = vsub.s32 4, %v4636
      %v4638 = vrot.slane %v474, %v4637
      %v4639 = vmul.f32 %v4595, %v4638
      %v4640 = vmul.f32 %v4596, %v4638
      %v4641 = vmul.f32 %v4597, %v4638
      %v4642 = vmul.f32 %v4598, %v4638
      %v4643 = vmul.f32 %v4599, %v4638
      %v4644 = vmul.f32 %v4600, %v4638
      %v4645 = vmul.f32 %v4601, %v4638
      %v4646 = vmul.f32 %v4602, %v4638
      %v4647 = vadd.f32 %v4627, %v4639
      %v4648 = vadd.f32 %v4628, %v4640
      %v4649 = vadd.f32 %v4629, %v4641
      %v4650 = vadd.f32 %v4630, %v4642
      %v4651 = vadd.f32 %v4631, %v4643
      %v4652 = vadd.f32 %v4632, %v4644
      %v4653 = vadd.f32 %v4633, %v4645
      %v4654 = vadd.f32 %v4634, %v4646
      %v4655 = vlaneseq
      %v4656 = vshrl.u32 %v4655, 7
      %v4657 = vsub.s32 4, %v4656
      %v4658 = vrot.slane %v458, %v4657
      %v4659 = vmul.f32 %v4647, %v4658
      %v4660 = vmul.f32 %v4648, %v4658
      %v4661 = vmul.f32 %v4649, %v4658
      %v4662 = vmul.f32 %v4650, %v4658
      %v4663 = vmul.f32 %v4651, %v4658
      %v4664 = vmul.f32 %v4652, %v4658
      %v4665 = vmul.f32 %v4653, %v4658
      %v4666 = vmul.f32 %v4654, %v4658
      %v4667 = vsel %vm508, %v4659, 0.0
      %v4668 = vsel %vm508, %v4660, 0.0
      %v4669 = vsel %vm508, %v4661, 0.0
      %v4670 = vsel %vm508, %v4662, 0.0
      %v4671 = vsel %vm508, %v4663, 0.0
      %v4672 = vsel %vm508, %v4664, 0.0
      %v4673 = vsel %vm508, %v4665, 0.0
      %v4674 = vsel %vm508, %v4666, 0.0
      %4675 = vadd.xlane.f32.xlu0 %v4667
      %v4676 = vpop.xlane.xlu0 %4675
      %4677 = vadd.xlane.f32.xlu0 %v4668
      %v4678 = vpop.xlane.xlu0 %4677
      %4679 = vadd.xlane.f32.xlu0 %v4669
      %v4680 = vpop.xlane.xlu0 %4679
      %4681 = vadd.xlane.f32.xlu0 %v4670
      %v4682 = vpop.xlane.xlu0 %4681
      %4683 = vadd.xlane.f32.xlu0 %v4671
      %v4684 = vpop.xlane.xlu0 %4683
      %4685 = vadd.xlane.f32.xlu0 %v4672
      %v4686 = vpop.xlane.xlu0 %4685
      %4687 = vadd.xlane.f32.xlu0 %v4673
      %v4688 = vpop.xlane.xlu0 %4687
      %4689 = vadd.xlane.f32.xlu0 %v4674
      %v4690 = vpop.xlane.xlu0 %4689
      %4691 = vadd.xlane.f32.xlu0 %v4659
      %v4692 = vpop.xlane.xlu0 %4691
      %4693 = vadd.xlane.f32.xlu0 %v4660
      %v4694 = vpop.xlane.xlu0 %4693
      %4695 = vadd.xlane.f32.xlu0 %v4661
      %v4696 = vpop.xlane.xlu0 %4695
      %4697 = vadd.xlane.f32.xlu0 %v4662
      %v4698 = vpop.xlane.xlu0 %4697
      %4699 = vadd.xlane.f32.xlu0 %v4663
      %v4700 = vpop.xlane.xlu0 %4699
      %4701 = vadd.xlane.f32.xlu0 %v4664
      %v4702 = vpop.xlane.xlu0 %4701
      %4703 = vadd.xlane.f32.xlu0 %v4665
      %v4704 = vpop.xlane.xlu0 %4703
      %4705 = vadd.xlane.f32.xlu0 %v4666
      %v4706 = vpop.xlane.xlu0 %4705
      %v4707 = vsub.f32 %v4692, %v4676
      %v4708 = vsub.f32 %v4694, %v4678
      %v4709 = vsub.f32 %v4696, %v4680
      %v4710 = vsub.f32 %v4698, %v4682
      %v4711 = vsub.f32 %v4700, %v4684
      %v4712 = vsub.f32 %v4702, %v4686
      %v4713 = vsub.f32 %v4704, %v4688
      %v4714 = vsub.f32 %v4706, %v4690
      %4715 = vxpose.xlu0.b32.start [1/16] %v4676, 128
      %4716 = vxpose.xlu0.b32.cont [2/16] %v4678, 128
      %4717 = vxpose.xlu0.b32.cont [3/16] %v4680, 128
      %4718 = vxpose.xlu0.b32.cont [4/16] %v4682, 128
      %4719 = vxpose.xlu0.b32.cont [5/16] %v4684, 128
      %4720 = vxpose.xlu0.b32.cont [6/16] %v4686, 128
      %4721 = vxpose.xlu0.b32.cont [7/16] %v4688, 128
      %4722 = vxpose.xlu0.b32.cont [8/16] %v4690, 128
      %4723 = vxpose.xlu0.b32.cont [9/16] %v4707, 128
      %4724 = vxpose.xlu0.b32.cont [10/16] %v4708, 128
      %4725 = vxpose.xlu0.b32.cont [11/16] %v4709, 128
      %4726 = vxpose.xlu0.b32.cont [12/16] %v4710, 128
      %4727 = vxpose.xlu0.b32.cont [13/16] %v4711, 128
      %4728 = vxpose.xlu0.b32.cont [14/16] %v4712, 128
      %4729 = vxpose.xlu0.b32.cont [15/16] %v4713, 128
      %4730 = vxpose.xlu0.b32.end [16/16] %v4714, 128
      %v4731 = vpop.trf.xlu0
      %v4732 = vpop.trf.xlu0
      %v4733 = vpop.trf.xlu0
      %v4734 = vpop.trf.xlu0
      %v4735 = vpop.trf.xlu0
      %v4736 = vpop.trf.xlu0
      %v4737 = vpop.trf.xlu0
      %v4738 = vpop.trf.xlu0
      %v4739 = vpop.trf.xlu0
      %v4740 = vpop.trf.xlu0
      %v4741 = vpop.trf.xlu0
      %v4742 = vpop.trf.xlu0
      %v4743 = vpop.trf.xlu0
      %v4744 = vpop.trf.xlu0
      %v4745 = vpop.trf.xlu0
      %v4746 = vpop.trf.xlu0
      %v4747 = vrot.slane %v466, 5
      %4749 = vxpose.xlu0.b32.start [1/16] %v4747, 128
      %4750 = vxpose.xlu0.b32.cont [2/16] 0.0, 128
      %4751 = vxpose.xlu0.b32.cont [3/16] 0.0, 128
      %4752 = vxpose.xlu0.b32.cont [4/16] 0.0, 128
      %4753 = vxpose.xlu0.b32.cont [5/16] 0.0, 128
      %4754 = vxpose.xlu0.b32.cont [6/16] 0.0, 128
      %4755 = vxpose.xlu0.b32.cont [7/16] 0.0, 128
      %4756 = vxpose.xlu0.b32.cont [8/16] 0.0, 128
      %4757 = vxpose.xlu0.b32.cont [9/16] 0.0, 128
      %4758 = vxpose.xlu0.b32.cont [10/16] 0.0, 128
      %4759 = vxpose.xlu0.b32.cont [11/16] 0.0, 128
      %4760 = vxpose.xlu0.b32.cont [12/16] 0.0, 128
      %4761 = vxpose.xlu0.b32.cont [13/16] 0.0, 128
      %4762 = vxpose.xlu0.b32.cont [14/16] 0.0, 128
      %4763 = vxpose.xlu0.b32.cont [15/16] 0.0, 128
      %4764 = vxpose.xlu0.b32.end [16/16] 0.0, 128
      %v4765 = vpop.trf.xlu0
      %v4766 = vpop.trf.xlu0
      %v4767 = vpop.trf.xlu0
      %v4768 = vpop.trf.xlu0
      %v4769 = vpop.trf.xlu0
      %v4770 = vpop.trf.xlu0
      %v4771 = vpop.trf.xlu0
      %v4772 = vpop.trf.xlu0
      %v4773 = vpop.trf.xlu0
      %v4774 = vpop.trf.xlu0
      %v4775 = vpop.trf.xlu0
      %v4776 = vpop.trf.xlu0
      %v4777 = vpop.trf.xlu0
      %v4778 = vpop.trf.xlu0
      %v4779 = vpop.trf.xlu0
      %v4780 = vpop.trf.xlu0
      %4782 = vset.pattern.permute.xlu0 0
      %4783 = vperm.xlu0 %4782, %v4765
      %v4784 = vpop.permute.xlu0 %4783
      %4787 = vset.pattern.permute.xlu0 0
      %4788 = vperm.xlu0 %4787, %v4766
      %v4789 = vpop.permute.xlu0 %4788
      %4792 = vset.pattern.permute.xlu0 0
      %4793 = vperm.xlu0 %4792, %v4767
      %v4794 = vpop.permute.xlu0 %4793
      %4797 = vset.pattern.permute.xlu0 0
      %4798 = vperm.xlu0 %4797, %v4768
      %v4799 = vpop.permute.xlu0 %4798
      %4802 = vset.pattern.permute.xlu0 0
      %4803 = vperm.xlu0 %4802, %v4769
      %v4804 = vpop.permute.xlu0 %4803
      %4807 = vset.pattern.permute.xlu0 0
      %4808 = vperm.xlu0 %4807, %v4770
      %v4809 = vpop.permute.xlu0 %4808
      %4812 = vset.pattern.permute.xlu0 0
      %4813 = vperm.xlu0 %4812, %v4771
      %v4814 = vpop.permute.xlu0 %4813
      %4817 = vset.pattern.permute.xlu0 0
      %4818 = vperm.xlu0 %4817, %v4772
      %v4819 = vpop.permute.xlu0 %4818
      %4822 = vset.pattern.permute.xlu0 0
      %4823 = vperm.xlu0 %4822, %v4773
      %v4824 = vpop.permute.xlu0 %4823
      %4827 = vset.pattern.permute.xlu0 0
      %4828 = vperm.xlu0 %4827, %v4774
      %v4829 = vpop.permute.xlu0 %4828
      %4832 = vset.pattern.permute.xlu0 0
      %4833 = vperm.xlu0 %4832, %v4775
      %v4834 = vpop.permute.xlu0 %4833
      %4837 = vset.pattern.permute.xlu0 0
      %4838 = vperm.xlu0 %4837, %v4776
      %v4839 = vpop.permute.xlu0 %4838
      %4842 = vset.pattern.permute.xlu0 0
      %4843 = vperm.xlu0 %4842, %v4777
      %v4844 = vpop.permute.xlu0 %4843
      %4847 = vset.pattern.permute.xlu0 0
      %4848 = vperm.xlu0 %4847, %v4778
      %v4849 = vpop.permute.xlu0 %4848
      %4852 = vset.pattern.permute.xlu0 0
      %4853 = vperm.xlu0 %4852, %v4779
      %v4854 = vpop.permute.xlu0 %4853
      %4857 = vset.pattern.permute.xlu0 0
      %4858 = vperm.xlu0 %4857, %v4780
      %v4859 = vpop.permute.xlu0 %4858
      %v4861 = vsel %vm508, %v4784, %v4824
      %v4862 = vsel %vm508, %v4789, %v4829
      %v4863 = vsel %vm508, %v4794, %v4834
      %v4864 = vsel %vm508, %v4799, %v4839
      %v4865 = vsel %vm508, %v4804, %v4844
      %v4866 = vsel %vm508, %v4809, %v4849
      %v4867 = vsel %vm508, %v4814, %v4854
      %v4868 = vsel %vm508, %v4819, %v4859
      %v4869 = vlaneseq
      %v4870 = vshrl.u32 %v4869, 7
      %v4871 = vsub.s32 5, %v4870
      %v4872 = vrot.slane %v470, %v4871
      %v4873 = vmul.f32 %v4647, %v4872
      %v4874 = vmul.f32 %v4648, %v4872
      %v4875 = vmul.f32 %v4649, %v4872
      %v4876 = vmul.f32 %v4650, %v4872
      %v4877 = vmul.f32 %v4651, %v4872
      %v4878 = vmul.f32 %v4652, %v4872
      %v4879 = vmul.f32 %v4653, %v4872
      %v4880 = vmul.f32 %v4654, %v4872
      %v4881 = vsel %vm508, %v4873, 0.0
      %v4882 = vsel %vm508, %v4874, 0.0
      %v4883 = vsel %vm508, %v4875, 0.0
      %v4884 = vsel %vm508, %v4876, 0.0
      %v4885 = vsel %vm508, %v4877, 0.0
      %v4886 = vsel %vm508, %v4878, 0.0
      %v4887 = vsel %vm508, %v4879, 0.0
      %v4888 = vsel %vm508, %v4880, 0.0
      %4889 = vadd.xlane.f32.xlu0 %v4881
      %v4890 = vpop.xlane.xlu0 %4889
      %4891 = vadd.xlane.f32.xlu0 %v4882
      %v4892 = vpop.xlane.xlu0 %4891
      %4893 = vadd.xlane.f32.xlu0 %v4883
      %v4894 = vpop.xlane.xlu0 %4893
      %4895 = vadd.xlane.f32.xlu0 %v4884
      %v4896 = vpop.xlane.xlu0 %4895
      %4897 = vadd.xlane.f32.xlu0 %v4885
      %v4898 = vpop.xlane.xlu0 %4897
      %4899 = vadd.xlane.f32.xlu0 %v4886
      %v4900 = vpop.xlane.xlu0 %4899
      %4901 = vadd.xlane.f32.xlu0 %v4887
      %v4902 = vpop.xlane.xlu0 %4901
      %4903 = vadd.xlane.f32.xlu0 %v4888
      %v4904 = vpop.xlane.xlu0 %4903
      %4905 = vadd.xlane.f32.xlu0 %v4873
      %v4906 = vpop.xlane.xlu0 %4905
      %4907 = vadd.xlane.f32.xlu0 %v4874
      %v4908 = vpop.xlane.xlu0 %4907
      %4909 = vadd.xlane.f32.xlu0 %v4875
      %v4910 = vpop.xlane.xlu0 %4909
      %4911 = vadd.xlane.f32.xlu0 %v4876
      %v4912 = vpop.xlane.xlu0 %4911
      %4913 = vadd.xlane.f32.xlu0 %v4877
      %v4914 = vpop.xlane.xlu0 %4913
      %4915 = vadd.xlane.f32.xlu0 %v4878
      %v4916 = vpop.xlane.xlu0 %4915
      %4917 = vadd.xlane.f32.xlu0 %v4879
      %v4918 = vpop.xlane.xlu0 %4917
      %4919 = vadd.xlane.f32.xlu0 %v4880
      %v4920 = vpop.xlane.xlu0 %4919
      %v4921 = vsub.f32 %v4906, %v4890
      %v4922 = vsub.f32 %v4908, %v4892
      %v4923 = vsub.f32 %v4910, %v4894
      %v4924 = vsub.f32 %v4912, %v4896
      %v4925 = vsub.f32 %v4914, %v4898
      %v4926 = vsub.f32 %v4916, %v4900
      %v4927 = vsub.f32 %v4918, %v4902
      %v4928 = vsub.f32 %v4920, %v4904
      %v4929 = vsel %vm508, %v4890, %v4921
      %v4930 = vsel %vm508, %v4892, %v4922
      %v4931 = vsel %vm508, %v4894, %v4923
      %v4932 = vsel %vm508, %v4896, %v4924
      %v4933 = vsel %vm508, %v4898, %v4925
      %v4934 = vsel %vm508, %v4900, %v4926
      %v4935 = vsel %vm508, %v4902, %v4927
      %v4936 = vsel %vm508, %v4904, %v4928
      %v4937 = vlaneseq
      %v4938 = vshrl.u32 %v4937, 7
      %v4939 = vsub.s32 5, %v4938
      %v4940 = vrot.slane %v454, %v4939
      %v4941 = vmul.f32 %v4647, %v4940
      %v4942 = vmul.f32 %v4648, %v4940
      %v4943 = vmul.f32 %v4649, %v4940
      %v4944 = vmul.f32 %v4650, %v4940
      %v4945 = vmul.f32 %v4651, %v4940
      %v4946 = vmul.f32 %v4652, %v4940
      %v4947 = vmul.f32 %v4653, %v4940
      %v4948 = vmul.f32 %v4654, %v4940
      %v4949 = vlaneseq
      %v4950 = vshrl.u32 %v4949, 7
      %v4951 = vsub.s32 5, %v4950
      %v4952 = vrot.slane %v462, %v4951
      %v4953 = vmul.f32 %v4861, %v4952
      %v4954 = vmul.f32 %v4862, %v4952
      %v4955 = vmul.f32 %v4863, %v4952
      %v4956 = vmul.f32 %v4864, %v4952
      %v4957 = vmul.f32 %v4865, %v4952
      %v4958 = vmul.f32 %v4866, %v4952
      %v4959 = vmul.f32 %v4867, %v4952
      %v4960 = vmul.f32 %v4868, %v4952
      %v4961 = vadd.f32 %v4941, %v4953
      %v4962 = vadd.f32 %v4942, %v4954
      %v4963 = vadd.f32 %v4943, %v4955
      %v4964 = vadd.f32 %v4944, %v4956
      %v4965 = vadd.f32 %v4945, %v4957
      %v4966 = vadd.f32 %v4946, %v4958
      %v4967 = vadd.f32 %v4947, %v4959
      %v4968 = vadd.f32 %v4948, %v4960
      %v4969 = vlaneseq
      %v4970 = vshrl.u32 %v4969, 7
      %v4971 = vsub.s32 5, %v4970
      %v4972 = vrot.slane %v474, %v4971
      %v4973 = vmul.f32 %v4929, %v4972
      %v4974 = vmul.f32 %v4930, %v4972
      %v4975 = vmul.f32 %v4931, %v4972
      %v4976 = vmul.f32 %v4932, %v4972
      %v4977 = vmul.f32 %v4933, %v4972
      %v4978 = vmul.f32 %v4934, %v4972
      %v4979 = vmul.f32 %v4935, %v4972
      %v4980 = vmul.f32 %v4936, %v4972
      %v4981 = vadd.f32 %v4961, %v4973
      %v4982 = vadd.f32 %v4962, %v4974
      %v4983 = vadd.f32 %v4963, %v4975
      %v4984 = vadd.f32 %v4964, %v4976
      %v4985 = vadd.f32 %v4965, %v4977
      %v4986 = vadd.f32 %v4966, %v4978
      %v4987 = vadd.f32 %v4967, %v4979
      %v4988 = vadd.f32 %v4968, %v4980
      %v4989 = vlaneseq
      %v4990 = vshrl.u32 %v4989, 7
      %v4991 = vsub.s32 5, %v4990
      %v4992 = vrot.slane %v458, %v4991
      %v4993 = vmul.f32 %v4981, %v4992
      %v4994 = vmul.f32 %v4982, %v4992
      %v4995 = vmul.f32 %v4983, %v4992
      %v4996 = vmul.f32 %v4984, %v4992
      %v4997 = vmul.f32 %v4985, %v4992
      %v4998 = vmul.f32 %v4986, %v4992
      %v4999 = vmul.f32 %v4987, %v4992
      %v5000 = vmul.f32 %v4988, %v4992
      %v5001 = vsel %vm508, %v4993, 0.0
      %v5002 = vsel %vm508, %v4994, 0.0
      %v5003 = vsel %vm508, %v4995, 0.0
      %v5004 = vsel %vm508, %v4996, 0.0
      %v5005 = vsel %vm508, %v4997, 0.0
      %v5006 = vsel %vm508, %v4998, 0.0
      %v5007 = vsel %vm508, %v4999, 0.0
      %v5008 = vsel %vm508, %v5000, 0.0
      %5009 = vadd.xlane.f32.xlu0 %v5001
      %v5010 = vpop.xlane.xlu0 %5009
      %5011 = vadd.xlane.f32.xlu0 %v5002
      %v5012 = vpop.xlane.xlu0 %5011
      %5013 = vadd.xlane.f32.xlu0 %v5003
      %v5014 = vpop.xlane.xlu0 %5013
      %5015 = vadd.xlane.f32.xlu0 %v5004
      %v5016 = vpop.xlane.xlu0 %5015
      %5017 = vadd.xlane.f32.xlu0 %v5005
      %v5018 = vpop.xlane.xlu0 %5017
      %5019 = vadd.xlane.f32.xlu0 %v5006
      %v5020 = vpop.xlane.xlu0 %5019
      %5021 = vadd.xlane.f32.xlu0 %v5007
      %v5022 = vpop.xlane.xlu0 %5021
      %5023 = vadd.xlane.f32.xlu0 %v5008
      %v5024 = vpop.xlane.xlu0 %5023
      %5025 = vadd.xlane.f32.xlu0 %v4993
      %v5026 = vpop.xlane.xlu0 %5025
      %5027 = vadd.xlane.f32.xlu0 %v4994
      %v5028 = vpop.xlane.xlu0 %5027
      %5029 = vadd.xlane.f32.xlu0 %v4995
      %v5030 = vpop.xlane.xlu0 %5029
      %5031 = vadd.xlane.f32.xlu0 %v4996
      %v5032 = vpop.xlane.xlu0 %5031
      %5033 = vadd.xlane.f32.xlu0 %v4997
      %v5034 = vpop.xlane.xlu0 %5033
      %5035 = vadd.xlane.f32.xlu0 %v4998
      %v5036 = vpop.xlane.xlu0 %5035
      %5037 = vadd.xlane.f32.xlu0 %v4999
      %v5038 = vpop.xlane.xlu0 %5037
      %5039 = vadd.xlane.f32.xlu0 %v5000
      %v5040 = vpop.xlane.xlu0 %5039
      %v5041 = vsub.f32 %v5026, %v5010
      %v5042 = vsub.f32 %v5028, %v5012
      %v5043 = vsub.f32 %v5030, %v5014
      %v5044 = vsub.f32 %v5032, %v5016
      %v5045 = vsub.f32 %v5034, %v5018
      %v5046 = vsub.f32 %v5036, %v5020
      %v5047 = vsub.f32 %v5038, %v5022
      %v5048 = vsub.f32 %v5040, %v5024
      %5049 = vxpose.xlu0.b32.start [1/16] %v5010, 128
      %5050 = vxpose.xlu0.b32.cont [2/16] %v5012, 128
      %5051 = vxpose.xlu0.b32.cont [3/16] %v5014, 128
      %5052 = vxpose.xlu0.b32.cont [4/16] %v5016, 128
      %5053 = vxpose.xlu0.b32.cont [5/16] %v5018, 128
      %5054 = vxpose.xlu0.b32.cont [6/16] %v5020, 128
      %5055 = vxpose.xlu0.b32.cont [7/16] %v5022, 128
      %5056 = vxpose.xlu0.b32.cont [8/16] %v5024, 128
      %5057 = vxpose.xlu0.b32.cont [9/16] %v5041, 128
      %5058 = vxpose.xlu0.b32.cont [10/16] %v5042, 128
      %5059 = vxpose.xlu0.b32.cont [11/16] %v5043, 128
      %5060 = vxpose.xlu0.b32.cont [12/16] %v5044, 128
      %5061 = vxpose.xlu0.b32.cont [13/16] %v5045, 128
      %5062 = vxpose.xlu0.b32.cont [14/16] %v5046, 128
      %5063 = vxpose.xlu0.b32.cont [15/16] %v5047, 128
      %5064 = vxpose.xlu0.b32.end [16/16] %v5048, 128
      %v5065 = vpop.trf.xlu0
      %v5066 = vpop.trf.xlu0
      %v5067 = vpop.trf.xlu0
      %v5068 = vpop.trf.xlu0
      %v5069 = vpop.trf.xlu0
      %v5070 = vpop.trf.xlu0
      %v5071 = vpop.trf.xlu0
      %v5072 = vpop.trf.xlu0
      %v5073 = vpop.trf.xlu0
      %v5074 = vpop.trf.xlu0
      %v5075 = vpop.trf.xlu0
      %v5076 = vpop.trf.xlu0
      %v5077 = vpop.trf.xlu0
      %v5078 = vpop.trf.xlu0
      %v5079 = vpop.trf.xlu0
      %v5080 = vpop.trf.xlu0
      %v5081 = vrot.slane %v466, 6
      %5083 = vxpose.xlu0.b32.start [1/16] %v5081, 128
      %5084 = vxpose.xlu0.b32.cont [2/16] 0.0, 128
      %5085 = vxpose.xlu0.b32.cont [3/16] 0.0, 128
      %5086 = vxpose.xlu0.b32.cont [4/16] 0.0, 128
      %5087 = vxpose.xlu0.b32.cont [5/16] 0.0, 128
      %5088 = vxpose.xlu0.b32.cont [6/16] 0.0, 128
      %5089 = vxpose.xlu0.b32.cont [7/16] 0.0, 128
      %5090 = vxpose.xlu0.b32.cont [8/16] 0.0, 128
      %5091 = vxpose.xlu0.b32.cont [9/16] 0.0, 128
      %5092 = vxpose.xlu0.b32.cont [10/16] 0.0, 128
      %5093 = vxpose.xlu0.b32.cont [11/16] 0.0, 128
      %5094 = vxpose.xlu0.b32.cont [12/16] 0.0, 128
      %5095 = vxpose.xlu0.b32.cont [13/16] 0.0, 128
      %5096 = vxpose.xlu0.b32.cont [14/16] 0.0, 128
      %5097 = vxpose.xlu0.b32.cont [15/16] 0.0, 128
      %5098 = vxpose.xlu0.b32.end [16/16] 0.0, 128
      %v5099 = vpop.trf.xlu0
      %v5100 = vpop.trf.xlu0
      %v5101 = vpop.trf.xlu0
      %v5102 = vpop.trf.xlu0
      %v5103 = vpop.trf.xlu0
      %v5104 = vpop.trf.xlu0
      %v5105 = vpop.trf.xlu0
      %v5106 = vpop.trf.xlu0
      %v5107 = vpop.trf.xlu0
      %v5108 = vpop.trf.xlu0
      %v5109 = vpop.trf.xlu0
      %v5110 = vpop.trf.xlu0
      %v5111 = vpop.trf.xlu0
      %v5112 = vpop.trf.xlu0
      %v5113 = vpop.trf.xlu0
      %v5114 = vpop.trf.xlu0
      %5116 = vset.pattern.permute.xlu0 0
      %5117 = vperm.xlu0 %5116, %v5099
      %v5118 = vpop.permute.xlu0 %5117
      %5121 = vset.pattern.permute.xlu0 0
      %5122 = vperm.xlu0 %5121, %v5100
      %v5123 = vpop.permute.xlu0 %5122
      %5126 = vset.pattern.permute.xlu0 0
      %5127 = vperm.xlu0 %5126, %v5101
      %v5128 = vpop.permute.xlu0 %5127
      %5131 = vset.pattern.permute.xlu0 0
      %5132 = vperm.xlu0 %5131, %v5102
      %v5133 = vpop.permute.xlu0 %5132
      %5136 = vset.pattern.permute.xlu0 0
      %5137 = vperm.xlu0 %5136, %v5103
      %v5138 = vpop.permute.xlu0 %5137
      %5141 = vset.pattern.permute.xlu0 0
      %5142 = vperm.xlu0 %5141, %v5104
      %v5143 = vpop.permute.xlu0 %5142
      %5146 = vset.pattern.permute.xlu0 0
      %5147 = vperm.xlu0 %5146, %v5105
      %v5148 = vpop.permute.xlu0 %5147
      %5151 = vset.pattern.permute.xlu0 0
      %5152 = vperm.xlu0 %5151, %v5106
      %v5153 = vpop.permute.xlu0 %5152
      %5156 = vset.pattern.permute.xlu0 0
      %5157 = vperm.xlu0 %5156, %v5107
      %v5158 = vpop.permute.xlu0 %5157
      %5161 = vset.pattern.permute.xlu0 0
      %5162 = vperm.xlu0 %5161, %v5108
      %v5163 = vpop.permute.xlu0 %5162
      %5166 = vset.pattern.permute.xlu0 0
      %5167 = vperm.xlu0 %5166, %v5109
      %v5168 = vpop.permute.xlu0 %5167
      %5171 = vset.pattern.permute.xlu0 0
      %5172 = vperm.xlu0 %5171, %v5110
      %v5173 = vpop.permute.xlu0 %5172
      %5176 = vset.pattern.permute.xlu0 0
      %5177 = vperm.xlu0 %5176, %v5111
      %v5178 = vpop.permute.xlu0 %5177
      %5181 = vset.pattern.permute.xlu0 0
      %5182 = vperm.xlu0 %5181, %v5112
      %v5183 = vpop.permute.xlu0 %5182
      %5186 = vset.pattern.permute.xlu0 0
      %5187 = vperm.xlu0 %5186, %v5113
      %v5188 = vpop.permute.xlu0 %5187
      %5191 = vset.pattern.permute.xlu0 0
      %5192 = vperm.xlu0 %5191, %v5114
      %v5193 = vpop.permute.xlu0 %5192
      %v5195 = vsel %vm508, %v5118, %v5158
      %v5196 = vsel %vm508, %v5123, %v5163
      %v5197 = vsel %vm508, %v5128, %v5168
      %v5198 = vsel %vm508, %v5133, %v5173
      %v5199 = vsel %vm508, %v5138, %v5178
      %v5200 = vsel %vm508, %v5143, %v5183
      %v5201 = vsel %vm508, %v5148, %v5188
      %v5202 = vsel %vm508, %v5153, %v5193
      %v5203 = vlaneseq
      %v5204 = vshrl.u32 %v5203, 7
      %v5205 = vsub.s32 6, %v5204
      %v5206 = vrot.slane %v470, %v5205
      %v5207 = vmul.f32 %v4981, %v5206
      %v5208 = vmul.f32 %v4982, %v5206
      %v5209 = vmul.f32 %v4983, %v5206
      %v5210 = vmul.f32 %v4984, %v5206
      %v5211 = vmul.f32 %v4985, %v5206
      %v5212 = vmul.f32 %v4986, %v5206
      %v5213 = vmul.f32 %v4987, %v5206
      %v5214 = vmul.f32 %v4988, %v5206
      %v5215 = vsel %vm508, %v5207, 0.0
      %v5216 = vsel %vm508, %v5208, 0.0
      %v5217 = vsel %vm508, %v5209, 0.0
      %v5218 = vsel %vm508, %v5210, 0.0
      %v5219 = vsel %vm508, %v5211, 0.0
      %v5220 = vsel %vm508, %v5212, 0.0
      %v5221 = vsel %vm508, %v5213, 0.0
      %v5222 = vsel %vm508, %v5214, 0.0
      %5223 = vadd.xlane.f32.xlu0 %v5215
      %v5224 = vpop.xlane.xlu0 %5223
      %5225 = vadd.xlane.f32.xlu0 %v5216
      %v5226 = vpop.xlane.xlu0 %5225
      %5227 = vadd.xlane.f32.xlu0 %v5217
      %v5228 = vpop.xlane.xlu0 %5227
      %5229 = vadd.xlane.f32.xlu0 %v5218
      %v5230 = vpop.xlane.xlu0 %5229
      %5231 = vadd.xlane.f32.xlu0 %v5219
      %v5232 = vpop.xlane.xlu0 %5231
      %5233 = vadd.xlane.f32.xlu0 %v5220
      %v5234 = vpop.xlane.xlu0 %5233
      %5235 = vadd.xlane.f32.xlu0 %v5221
      %v5236 = vpop.xlane.xlu0 %5235
      %5237 = vadd.xlane.f32.xlu0 %v5222
      %v5238 = vpop.xlane.xlu0 %5237
      %5239 = vadd.xlane.f32.xlu0 %v5207
      %v5240 = vpop.xlane.xlu0 %5239
      %5241 = vadd.xlane.f32.xlu0 %v5208
      %v5242 = vpop.xlane.xlu0 %5241
      %5243 = vadd.xlane.f32.xlu0 %v5209
      %v5244 = vpop.xlane.xlu0 %5243
      %5245 = vadd.xlane.f32.xlu0 %v5210
      %v5246 = vpop.xlane.xlu0 %5245
      %5247 = vadd.xlane.f32.xlu0 %v5211
      %v5248 = vpop.xlane.xlu0 %5247
      %5249 = vadd.xlane.f32.xlu0 %v5212
      %v5250 = vpop.xlane.xlu0 %5249
      %5251 = vadd.xlane.f32.xlu0 %v5213
      %v5252 = vpop.xlane.xlu0 %5251
      %5253 = vadd.xlane.f32.xlu0 %v5214
      %v5254 = vpop.xlane.xlu0 %5253
      %v5255 = vsub.f32 %v5240, %v5224
      %v5256 = vsub.f32 %v5242, %v5226
      %v5257 = vsub.f32 %v5244, %v5228
      %v5258 = vsub.f32 %v5246, %v5230
      %v5259 = vsub.f32 %v5248, %v5232
      %v5260 = vsub.f32 %v5250, %v5234
      %v5261 = vsub.f32 %v5252, %v5236
      %v5262 = vsub.f32 %v5254, %v5238
      %v5263 = vsel %vm508, %v5224, %v5255
      %v5264 = vsel %vm508, %v5226, %v5256
      %v5265 = vsel %vm508, %v5228, %v5257
      %v5266 = vsel %vm508, %v5230, %v5258
      %v5267 = vsel %vm508, %v5232, %v5259
      %v5268 = vsel %vm508, %v5234, %v5260
      %v5269 = vsel %vm508, %v5236, %v5261
      %v5270 = vsel %vm508, %v5238, %v5262
      %v5271 = vlaneseq
      %v5272 = vshrl.u32 %v5271, 7
      %v5273 = vsub.s32 6, %v5272
      %v5274 = vrot.slane %v454, %v5273
      %v5275 = vmul.f32 %v4981, %v5274
      %v5276 = vmul.f32 %v4982, %v5274
      %v5277 = vmul.f32 %v4983, %v5274
      %v5278 = vmul.f32 %v4984, %v5274
      %v5279 = vmul.f32 %v4985, %v5274
      %v5280 = vmul.f32 %v4986, %v5274
      %v5281 = vmul.f32 %v4987, %v5274
      %v5282 = vmul.f32 %v4988, %v5274
      %v5283 = vlaneseq
      %v5284 = vshrl.u32 %v5283, 7
      %v5285 = vsub.s32 6, %v5284
      %v5286 = vrot.slane %v462, %v5285
      %v5287 = vmul.f32 %v5195, %v5286
      %v5288 = vmul.f32 %v5196, %v5286
      %v5289 = vmul.f32 %v5197, %v5286
      %v5290 = vmul.f32 %v5198, %v5286
      %v5291 = vmul.f32 %v5199, %v5286
      %v5292 = vmul.f32 %v5200, %v5286
      %v5293 = vmul.f32 %v5201, %v5286
      %v5294 = vmul.f32 %v5202, %v5286
      %v5295 = vadd.f32 %v5275, %v5287
      %v5296 = vadd.f32 %v5276, %v5288
      %v5297 = vadd.f32 %v5277, %v5289
      %v5298 = vadd.f32 %v5278, %v5290
      %v5299 = vadd.f32 %v5279, %v5291
      %v5300 = vadd.f32 %v5280, %v5292
      %v5301 = vadd.f32 %v5281, %v5293
      %v5302 = vadd.f32 %v5282, %v5294
      %v5303 = vlaneseq
      %v5304 = vshrl.u32 %v5303, 7
      %v5305 = vsub.s32 6, %v5304
      %v5306 = vrot.slane %v474, %v5305
      %v5307 = vmul.f32 %v5263, %v5306
      %v5308 = vmul.f32 %v5264, %v5306
      %v5309 = vmul.f32 %v5265, %v5306
      %v5310 = vmul.f32 %v5266, %v5306
      %v5311 = vmul.f32 %v5267, %v5306
      %v5312 = vmul.f32 %v5268, %v5306
      %v5313 = vmul.f32 %v5269, %v5306
      %v5314 = vmul.f32 %v5270, %v5306
      %v5315 = vadd.f32 %v5295, %v5307
      %v5316 = vadd.f32 %v5296, %v5308
      %v5317 = vadd.f32 %v5297, %v5309
      %v5318 = vadd.f32 %v5298, %v5310
      %v5319 = vadd.f32 %v5299, %v5311
      %v5320 = vadd.f32 %v5300, %v5312
      %v5321 = vadd.f32 %v5301, %v5313
      %v5322 = vadd.f32 %v5302, %v5314
      %v5323 = vlaneseq
      %v5324 = vshrl.u32 %v5323, 7
      %v5325 = vsub.s32 6, %v5324
      %v5326 = vrot.slane %v458, %v5325
      %v5327 = vmul.f32 %v5315, %v5326
      %v5328 = vmul.f32 %v5316, %v5326
      %v5329 = vmul.f32 %v5317, %v5326
      %v5330 = vmul.f32 %v5318, %v5326
      %v5331 = vmul.f32 %v5319, %v5326
      %v5332 = vmul.f32 %v5320, %v5326
      %v5333 = vmul.f32 %v5321, %v5326
      %v5334 = vmul.f32 %v5322, %v5326
      %v5335 = vsel %vm508, %v5327, 0.0
      %v5336 = vsel %vm508, %v5328, 0.0
      %v5337 = vsel %vm508, %v5329, 0.0
      %v5338 = vsel %vm508, %v5330, 0.0
      %v5339 = vsel %vm508, %v5331, 0.0
      %v5340 = vsel %vm508, %v5332, 0.0
      %v5341 = vsel %vm508, %v5333, 0.0
      %v5342 = vsel %vm508, %v5334, 0.0
      %5343 = vadd.xlane.f32.xlu0 %v5335
      %v5344 = vpop.xlane.xlu0 %5343
      %5345 = vadd.xlane.f32.xlu0 %v5336
      %v5346 = vpop.xlane.xlu0 %5345
      %5347 = vadd.xlane.f32.xlu0 %v5337
      %v5348 = vpop.xlane.xlu0 %5347
      %5349 = vadd.xlane.f32.xlu0 %v5338
      %v5350 = vpop.xlane.xlu0 %5349
      %5351 = vadd.xlane.f32.xlu0 %v5339
      %v5352 = vpop.xlane.xlu0 %5351
      %5353 = vadd.xlane.f32.xlu0 %v5340
      %v5354 = vpop.xlane.xlu0 %5353
      %5355 = vadd.xlane.f32.xlu0 %v5341
      %v5356 = vpop.xlane.xlu0 %5355
      %5357 = vadd.xlane.f32.xlu0 %v5342
      %v5358 = vpop.xlane.xlu0 %5357
      %5359 = vadd.xlane.f32.xlu0 %v5327
      %v5360 = vpop.xlane.xlu0 %5359
      %5361 = vadd.xlane.f32.xlu0 %v5328
      %v5362 = vpop.xlane.xlu0 %5361
      %5363 = vadd.xlane.f32.xlu0 %v5329
      %v5364 = vpop.xlane.xlu0 %5363
      %5365 = vadd.xlane.f32.xlu0 %v5330
      %v5366 = vpop.xlane.xlu0 %5365
      %5367 = vadd.xlane.f32.xlu0 %v5331
      %v5368 = vpop.xlane.xlu0 %5367
      %5369 = vadd.xlane.f32.xlu0 %v5332
      %v5370 = vpop.xlane.xlu0 %5369
      %5371 = vadd.xlane.f32.xlu0 %v5333
      %v5372 = vpop.xlane.xlu0 %5371
      %5373 = vadd.xlane.f32.xlu0 %v5334
      %v5374 = vpop.xlane.xlu0 %5373
      %v5375 = vsub.f32 %v5360, %v5344
      %v5376 = vsub.f32 %v5362, %v5346
      %v5377 = vsub.f32 %v5364, %v5348
      %v5378 = vsub.f32 %v5366, %v5350
      %v5379 = vsub.f32 %v5368, %v5352
      %v5380 = vsub.f32 %v5370, %v5354
      %v5381 = vsub.f32 %v5372, %v5356
      %v5382 = vsub.f32 %v5374, %v5358
      %5383 = vxpose.xlu0.b32.start [1/16] %v5344, 128
      %5384 = vxpose.xlu0.b32.cont [2/16] %v5346, 128
      %5385 = vxpose.xlu0.b32.cont [3/16] %v5348, 128
      %5386 = vxpose.xlu0.b32.cont [4/16] %v5350, 128
      %5387 = vxpose.xlu0.b32.cont [5/16] %v5352, 128
      %5388 = vxpose.xlu0.b32.cont [6/16] %v5354, 128
      %5389 = vxpose.xlu0.b32.cont [7/16] %v5356, 128
      %5390 = vxpose.xlu0.b32.cont [8/16] %v5358, 128
      %5391 = vxpose.xlu0.b32.cont [9/16] %v5375, 128
      %5392 = vxpose.xlu0.b32.cont [10/16] %v5376, 128
      %5393 = vxpose.xlu0.b32.cont [11/16] %v5377, 128
      %5394 = vxpose.xlu0.b32.cont [12/16] %v5378, 128
      %5395 = vxpose.xlu0.b32.cont [13/16] %v5379, 128
      %5396 = vxpose.xlu0.b32.cont [14/16] %v5380, 128
      %5397 = vxpose.xlu0.b32.cont [15/16] %v5381, 128
      %5398 = vxpose.xlu0.b32.end [16/16] %v5382, 128
      %v5399 = vpop.trf.xlu0
      %v5400 = vpop.trf.xlu0
      %v5401 = vpop.trf.xlu0
      %v5402 = vpop.trf.xlu0
      %v5403 = vpop.trf.xlu0
      %v5404 = vpop.trf.xlu0
      %v5405 = vpop.trf.xlu0
      %v5406 = vpop.trf.xlu0
      %v5407 = vpop.trf.xlu0
      %v5408 = vpop.trf.xlu0
      %v5409 = vpop.trf.xlu0
      %v5410 = vpop.trf.xlu0
      %v5411 = vpop.trf.xlu0
      %v5412 = vpop.trf.xlu0
      %v5413 = vpop.trf.xlu0
      %v5414 = vpop.trf.xlu0
      %v5415 = vrot.slane %v466, 7
      %5417 = vxpose.xlu0.b32.start [1/16] %v5415, 128
      %5418 = vxpose.xlu0.b32.cont [2/16] 0.0, 128
      %5419 = vxpose.xlu0.b32.cont [3/16] 0.0, 128
      %5420 = vxpose.xlu0.b32.cont [4/16] 0.0, 128
      %5421 = vxpose.xlu0.b32.cont [5/16] 0.0, 128
      %5422 = vxpose.xlu0.b32.cont [6/16] 0.0, 128
      %5423 = vxpose.xlu0.b32.cont [7/16] 0.0, 128
      %5424 = vxpose.xlu0.b32.cont [8/16] 0.0, 128
      %5425 = vxpose.xlu0.b32.cont [9/16] 0.0, 128
      %5426 = vxpose.xlu0.b32.cont [10/16] 0.0, 128
      %5427 = vxpose.xlu0.b32.cont [11/16] 0.0, 128
      %5428 = vxpose.xlu0.b32.cont [12/16] 0.0, 128
      %5429 = vxpose.xlu0.b32.cont [13/16] 0.0, 128
      %5430 = vxpose.xlu0.b32.cont [14/16] 0.0, 128
      %5431 = vxpose.xlu0.b32.cont [15/16] 0.0, 128
      %5432 = vxpose.xlu0.b32.end [16/16] 0.0, 128
      %v5433 = vpop.trf.xlu0
      %v5434 = vpop.trf.xlu0
      %v5435 = vpop.trf.xlu0
      %v5436 = vpop.trf.xlu0
      %v5437 = vpop.trf.xlu0
      %v5438 = vpop.trf.xlu0
      %v5439 = vpop.trf.xlu0
      %v5440 = vpop.trf.xlu0
      %v5441 = vpop.trf.xlu0
      %v5442 = vpop.trf.xlu0
      %v5443 = vpop.trf.xlu0
      %v5444 = vpop.trf.xlu0
      %v5445 = vpop.trf.xlu0
      %v5446 = vpop.trf.xlu0
      %v5447 = vpop.trf.xlu0
      %v5448 = vpop.trf.xlu0
      %5450 = vset.pattern.permute.xlu0 0
      %5451 = vperm.xlu0 %5450, %v5433
      %v5452 = vpop.permute.xlu0 %5451
      %5455 = vset.pattern.permute.xlu0 0
      %5456 = vperm.xlu0 %5455, %v5434
      %v5457 = vpop.permute.xlu0 %5456
      %5460 = vset.pattern.permute.xlu0 0
      %5461 = vperm.xlu0 %5460, %v5435
      %v5462 = vpop.permute.xlu0 %5461
      %5465 = vset.pattern.permute.xlu0 0
      %5466 = vperm.xlu0 %5465, %v5436
      %v5467 = vpop.permute.xlu0 %5466
      %5470 = vset.pattern.permute.xlu0 0
      %5471 = vperm.xlu0 %5470, %v5437
      %v5472 = vpop.permute.xlu0 %5471
      %5475 = vset.pattern.permute.xlu0 0
      %5476 = vperm.xlu0 %5475, %v5438
      %v5477 = vpop.permute.xlu0 %5476
      %5480 = vset.pattern.permute.xlu0 0
      %5481 = vperm.xlu0 %5480, %v5439
      %v5482 = vpop.permute.xlu0 %5481
      %5485 = vset.pattern.permute.xlu0 0
      %5486 = vperm.xlu0 %5485, %v5440
      %v5487 = vpop.permute.xlu0 %5486
      %5490 = vset.pattern.permute.xlu0 0
      %5491 = vperm.xlu0 %5490, %v5441
      %v5492 = vpop.permute.xlu0 %5491
      %5495 = vset.pattern.permute.xlu0 0
      %5496 = vperm.xlu0 %5495, %v5442
      %v5497 = vpop.permute.xlu0 %5496
      %5500 = vset.pattern.permute.xlu0 0
      %5501 = vperm.xlu0 %5500, %v5443
      %v5502 = vpop.permute.xlu0 %5501
      %5505 = vset.pattern.permute.xlu0 0
      %5506 = vperm.xlu0 %5505, %v5444
      %v5507 = vpop.permute.xlu0 %5506
      %5510 = vset.pattern.permute.xlu0 0
      %5511 = vperm.xlu0 %5510, %v5445
      %v5512 = vpop.permute.xlu0 %5511
      %5515 = vset.pattern.permute.xlu0 0
      %5516 = vperm.xlu0 %5515, %v5446
      %v5517 = vpop.permute.xlu0 %5516
      %5520 = vset.pattern.permute.xlu0 0
      %5521 = vperm.xlu0 %5520, %v5447
      %v5522 = vpop.permute.xlu0 %5521
      %5525 = vset.pattern.permute.xlu0 0
      %5526 = vperm.xlu0 %5525, %v5448
      %v5527 = vpop.permute.xlu0 %5526
      %v5529 = vsel %vm508, %v5452, %v5492
      %v5530 = vsel %vm508, %v5457, %v5497
      %v5531 = vsel %vm508, %v5462, %v5502
      %v5532 = vsel %vm508, %v5467, %v5507
      %v5533 = vsel %vm508, %v5472, %v5512
      %v5534 = vsel %vm508, %v5477, %v5517
      %v5535 = vsel %vm508, %v5482, %v5522
      %v5536 = vsel %vm508, %v5487, %v5527
      %v5537 = vlaneseq
      %v5538 = vshrl.u32 %v5537, 7
      %v5539 = vsub.s32 7, %v5538
      %v5540 = vrot.slane %v470, %v5539
      %v5541 = vmul.f32 %v5315, %v5540
      %v5542 = vmul.f32 %v5316, %v5540
      %v5543 = vmul.f32 %v5317, %v5540
      %v5544 = vmul.f32 %v5318, %v5540
      %v5545 = vmul.f32 %v5319, %v5540
      %v5546 = vmul.f32 %v5320, %v5540
      %v5547 = vmul.f32 %v5321, %v5540
      %v5548 = vmul.f32 %v5322, %v5540
      %v5549 = vsel %vm508, %v5541, 0.0
      %v5550 = vsel %vm508, %v5542, 0.0
      %v5551 = vsel %vm508, %v5543, 0.0
      %v5552 = vsel %vm508, %v5544, 0.0
      %v5553 = vsel %vm508, %v5545, 0.0
      %v5554 = vsel %vm508, %v5546, 0.0
      %v5555 = vsel %vm508, %v5547, 0.0
      %v5556 = vsel %vm508, %v5548, 0.0
      %5557 = vadd.xlane.f32.xlu0 %v5549
      %v5558 = vpop.xlane.xlu0 %5557
      %5559 = vadd.xlane.f32.xlu0 %v5550
      %v5560 = vpop.xlane.xlu0 %5559
      %5561 = vadd.xlane.f32.xlu0 %v5551
      %v5562 = vpop.xlane.xlu0 %5561
      %5563 = vadd.xlane.f32.xlu0 %v5552
      %v5564 = vpop.xlane.xlu0 %5563
      %5565 = vadd.xlane.f32.xlu0 %v5553
      %v5566 = vpop.xlane.xlu0 %5565
      %5567 = vadd.xlane.f32.xlu0 %v5554
      %v5568 = vpop.xlane.xlu0 %5567
      %5569 = vadd.xlane.f32.xlu0 %v5555
      %v5570 = vpop.xlane.xlu0 %5569
      %5571 = vadd.xlane.f32.xlu0 %v5556
      %v5572 = vpop.xlane.xlu0 %5571
      %5573 = vadd.xlane.f32.xlu0 %v5541
      %v5574 = vpop.xlane.xlu0 %5573
      %5575 = vadd.xlane.f32.xlu0 %v5542
      %v5576 = vpop.xlane.xlu0 %5575
      %5577 = vadd.xlane.f32.xlu0 %v5543
      %v5578 = vpop.xlane.xlu0 %5577
      %5579 = vadd.xlane.f32.xlu0 %v5544
      %v5580 = vpop.xlane.xlu0 %5579
      %5581 = vadd.xlane.f32.xlu0 %v5545
      %v5582 = vpop.xlane.xlu0 %5581
      %5583 = vadd.xlane.f32.xlu0 %v5546
      %v5584 = vpop.xlane.xlu0 %5583
      %5585 = vadd.xlane.f32.xlu0 %v5547
      %v5586 = vpop.xlane.xlu0 %5585
      %5587 = vadd.xlane.f32.xlu0 %v5548
      %v5588 = vpop.xlane.xlu0 %5587
      %v5589 = vsub.f32 %v5574, %v5558
      %v5590 = vsub.f32 %v5576, %v5560
      %v5591 = vsub.f32 %v5578, %v5562
      %v5592 = vsub.f32 %v5580, %v5564
      %v5593 = vsub.f32 %v5582, %v5566
      %v5594 = vsub.f32 %v5584, %v5568
      %v5595 = vsub.f32 %v5586, %v5570
      %v5596 = vsub.f32 %v5588, %v5572
      %v5597 = vsel %vm508, %v5558, %v5589
      %v5598 = vsel %vm508, %v5560, %v5590
      %v5599 = vsel %vm508, %v5562, %v5591
      %v5600 = vsel %vm508, %v5564, %v5592
      %v5601 = vsel %vm508, %v5566, %v5593
      %v5602 = vsel %vm508, %v5568, %v5594
      %v5603 = vsel %vm508, %v5570, %v5595
      %v5604 = vsel %vm508, %v5572, %v5596
      %v5605 = vlaneseq
      %v5606 = vshrl.u32 %v5605, 7
      %v5607 = vsub.s32 7, %v5606
      %v5608 = vrot.slane %v454, %v5607
      %v5609 = vmul.f32 %v5315, %v5608
      %v5610 = vmul.f32 %v5316, %v5608
      %v5611 = vmul.f32 %v5317, %v5608
      %v5612 = vmul.f32 %v5318, %v5608
      %v5613 = vmul.f32 %v5319, %v5608
      %v5614 = vmul.f32 %v5320, %v5608
      %v5615 = vmul.f32 %v5321, %v5608
      %v5616 = vmul.f32 %v5322, %v5608
      %v5617 = vlaneseq
      %v5618 = vshrl.u32 %v5617, 7
      %v5619 = vsub.s32 7, %v5618
      %v5620 = vrot.slane %v462, %v5619
      %v5621 = vmul.f32 %v5529, %v5620
      %v5622 = vmul.f32 %v5530, %v5620
      %v5623 = vmul.f32 %v5531, %v5620
      %v5624 = vmul.f32 %v5532, %v5620
      %v5625 = vmul.f32 %v5533, %v5620
      %v5626 = vmul.f32 %v5534, %v5620
      %v5627 = vmul.f32 %v5535, %v5620
      %v5628 = vmul.f32 %v5536, %v5620
      %v5629 = vadd.f32 %v5609, %v5621
      %v5630 = vadd.f32 %v5610, %v5622
      %v5631 = vadd.f32 %v5611, %v5623
      %v5632 = vadd.f32 %v5612, %v5624
      %v5633 = vadd.f32 %v5613, %v5625
      %v5634 = vadd.f32 %v5614, %v5626
      %v5635 = vadd.f32 %v5615, %v5627
      %v5636 = vadd.f32 %v5616, %v5628
      %v5637 = vlaneseq
      %v5638 = vshrl.u32 %v5637, 7
      %v5639 = vsub.s32 7, %v5638
      %v5640 = vrot.slane %v474, %v5639
      %v5641 = vmul.f32 %v5597, %v5640
      %v5642 = vmul.f32 %v5598, %v5640
      %v5643 = vmul.f32 %v5599, %v5640
      %v5644 = vmul.f32 %v5600, %v5640
      %v5645 = vmul.f32 %v5601, %v5640
      %v5646 = vmul.f32 %v5602, %v5640
      %v5647 = vmul.f32 %v5603, %v5640
      %v5648 = vmul.f32 %v5604, %v5640
      %v5649 = vadd.f32 %v5629, %v5641
      %v5650 = vadd.f32 %v5630, %v5642
      %v5651 = vadd.f32 %v5631, %v5643
      %v5652 = vadd.f32 %v5632, %v5644
      %v5653 = vadd.f32 %v5633, %v5645
      %v5654 = vadd.f32 %v5634, %v5646
      %v5655 = vadd.f32 %v5635, %v5647
      %v5656 = vadd.f32 %v5636, %v5648
      %v5657 = vlaneseq
      %v5658 = vshrl.u32 %v5657, 7
      %v5659 = vsub.s32 7, %v5658
      %v5660 = vrot.slane %v458, %v5659
      %v5661 = vmul.f32 %v5649, %v5660
      %v5662 = vmul.f32 %v5650, %v5660
      %v5663 = vmul.f32 %v5651, %v5660
      %v5664 = vmul.f32 %v5652, %v5660
      %v5665 = vmul.f32 %v5653, %v5660
      %v5666 = vmul.f32 %v5654, %v5660
      %v5667 = vmul.f32 %v5655, %v5660
      %v5668 = vmul.f32 %v5656, %v5660
      %v5669 = vsel %vm508, %v5661, 0.0
      %v5670 = vsel %vm508, %v5662, 0.0
      %v5671 = vsel %vm508, %v5663, 0.0
      %v5672 = vsel %vm508, %v5664, 0.0
      %v5673 = vsel %vm508, %v5665, 0.0
      %v5674 = vsel %vm508, %v5666, 0.0
      %v5675 = vsel %vm508, %v5667, 0.0
      %v5676 = vsel %vm508, %v5668, 0.0
      %5677 = vadd.xlane.f32.xlu0 %v5669
      %v5678 = vpop.xlane.xlu0 %5677
      %5679 = vadd.xlane.f32.xlu0 %v5670
      %v5680 = vpop.xlane.xlu0 %5679
      %5681 = vadd.xlane.f32.xlu0 %v5671
      %v5682 = vpop.xlane.xlu0 %5681
      %5683 = vadd.xlane.f32.xlu0 %v5672
      %v5684 = vpop.xlane.xlu0 %5683
      %5685 = vadd.xlane.f32.xlu0 %v5673
      %v5686 = vpop.xlane.xlu0 %5685
      %5687 = vadd.xlane.f32.xlu0 %v5674
      %v5688 = vpop.xlane.xlu0 %5687
      %5689 = vadd.xlane.f32.xlu0 %v5675
      %v5690 = vpop.xlane.xlu0 %5689
      %5691 = vadd.xlane.f32.xlu0 %v5676
      %v5692 = vpop.xlane.xlu0 %5691
      %5693 = vadd.xlane.f32.xlu0 %v5661
      %v5694 = vpop.xlane.xlu0 %5693
      %5695 = vadd.xlane.f32.xlu0 %v5662
      %v5696 = vpop.xlane.xlu0 %5695
      %5697 = vadd.xlane.f32.xlu0 %v5663
      %v5698 = vpop.xlane.xlu0 %5697
      %5699 = vadd.xlane.f32.xlu0 %v5664
      %v5700 = vpop.xlane.xlu0 %5699
      %5701 = vadd.xlane.f32.xlu0 %v5665
      %v5702 = vpop.xlane.xlu0 %5701
      %5703 = vadd.xlane.f32.xlu0 %v5666
      %v5704 = vpop.xlane.xlu0 %5703
      %5705 = vadd.xlane.f32.xlu0 %v5667
      %v5706 = vpop.xlane.xlu0 %5705
      %5707 = vadd.xlane.f32.xlu0 %v5668
      %v5708 = vpop.xlane.xlu0 %5707
      %v5709 = vsub.f32 %v5694, %v5678
      %v5710 = vsub.f32 %v5696, %v5680
      %v5711 = vsub.f32 %v5698, %v5682
      %v5712 = vsub.f32 %v5700, %v5684
      %v5713 = vsub.f32 %v5702, %v5686
      %v5714 = vsub.f32 %v5704, %v5688
      %v5715 = vsub.f32 %v5706, %v5690
      %v5716 = vsub.f32 %v5708, %v5692
      %5717 = vxpose.xlu0.b32.start [1/16] %v5678, 128
      %5718 = vxpose.xlu0.b32.cont [2/16] %v5680, 128
      %5719 = vxpose.xlu0.b32.cont [3/16] %v5682, 128
      %5720 = vxpose.xlu0.b32.cont [4/16] %v5684, 128
      %5721 = vxpose.xlu0.b32.cont [5/16] %v5686, 128
      %5722 = vxpose.xlu0.b32.cont [6/16] %v5688, 128
      %5723 = vxpose.xlu0.b32.cont [7/16] %v5690, 128
      %5724 = vxpose.xlu0.b32.cont [8/16] %v5692, 128
      %5725 = vxpose.xlu0.b32.cont [9/16] %v5709, 128
      %5726 = vxpose.xlu0.b32.cont [10/16] %v5710, 128
      %5727 = vxpose.xlu0.b32.cont [11/16] %v5711, 128
      %5728 = vxpose.xlu0.b32.cont [12/16] %v5712, 128
      %5729 = vxpose.xlu0.b32.cont [13/16] %v5713, 128
      %5730 = vxpose.xlu0.b32.cont [14/16] %v5714, 128
      %5731 = vxpose.xlu0.b32.cont [15/16] %v5715, 128
      %5732 = vxpose.xlu0.b32.end [16/16] %v5716, 128
      %v5733 = vpop.trf.xlu0
      %v5734 = vpop.trf.xlu0
      %v5735 = vpop.trf.xlu0
      %v5736 = vpop.trf.xlu0
      %v5737 = vpop.trf.xlu0
      %v5738 = vpop.trf.xlu0
      %v5739 = vpop.trf.xlu0
      %v5740 = vpop.trf.xlu0
      %v5741 = vpop.trf.xlu0
      %v5742 = vpop.trf.xlu0
      %v5743 = vpop.trf.xlu0
      %v5744 = vpop.trf.xlu0
      %v5745 = vpop.trf.xlu0
      %v5746 = vpop.trf.xlu0
      %v5747 = vpop.trf.xlu0
      %v5748 = vpop.trf.xlu0
      %v5750 = vrot.slane %v1058, 7
      %v5753 = vrot.slane %v1392, 6
      %v5756 = vrot.slane %v1726, 5
      %v5759 = vrot.slane %v2060, 4
      %v5762 = vrot.slane %v2394, 3
      %v5765 = vrot.slane %v2728, 2
      %v5768 = vrot.slane %v3062, 1
      %v5771 = vrot.slane %v3729, 7
      %v5774 = vrot.slane %v4063, 6
      %v5777 = vrot.slane %v4397, 5
      %v5780 = vrot.slane %v4731, 4
      %v5783 = vrot.slane %v5065, 3
      %v5786 = vrot.slane %v5399, 2
      %v5789 = vrot.slane %v5733, 1
      %vm5791 = vcmask 1040384
      %v5792 = vsel %vm5791, %v723, %v5750
      %vm5793 = vcmask 1041408
      %v5794 = vsel %vm5793, %v5792, %v5753
      %vm5795 = vcmask 1042432
      %v5796 = vsel %vm5795, %v5794, %v5756
      %vm5797 = vcmask 1043456
      %v5798 = vsel %vm5797, %v5796, %v5759
      %vm5799 = vcmask 1044480
      %v5800 = vsel %vm5799, %v5798, %v5762
      %vm5801 = vcmask 1045504
      %v5802 = vsel %vm5801, %v5800, %v5765
      %vm5803 = vcmask 1046528
      %v5804 = vsel %vm5803, %v5802, %v5768
      %v5805 = vsel %vm5791, %v3394, %v5771
      %v5806 = vsel %vm5793, %v5805, %v5774
      %v5807 = vsel %vm5795, %v5806, %v5777
      %v5808 = vsel %vm5797, %v5807, %v5780
      %v5809 = vsel %vm5799, %v5808, %v5783
      %v5810 = vsel %vm5801, %v5809, %v5786
      %v5811 = vsel %vm5803, %v5810, %v5789
      %v5812 = vpack.c.bf16 %v5811, %v5804
      %v5814 = vunpack.c.l.b16 %v5812
      %v5815 = vunpack.c.h.b16 %v5812
      %v5816 = vpack.c.b16 %v5814, %v5814
      %v5817 = vpack.c.b16 %v5815, %v5815
      %5820 = vst [vmem:[%s437] sm:$0xf] %v5816
      %5821 = vst [vmem:[%s437 + $0x4] sm:$0xf] %v5817
      %p5822 = scmp.lt.s32.totalorder %s21, 1
      %s5823 = scalar_select %p5822, %s21, 1
      %p5824 = scmp.lt.s32.totalorder %s22, 0
      %s5825 = scalar_select %p5824, %s22, 0
      %s5826 = smul.addr %s5823, 2
      %s5827 = sadd.s32 %s5825, %s5826
      %s5828 = smul.addr %s5827, 4
      %s5829 = scalar_lea.vmem %s6, %s5828
      // Predicated region
      $region45: #{block_forward.21} parent=43 // pred_check
        %p5830 = pneg %p217
      $region46: #{block_forward.21} parent=43 // pred_check_branch
        %5832 = sbr.rel (%p5830) target = $region48
      $region47: #{block_forward.21} parent=43 // pred_region
        _
      $region48: #{block_forward.21} parent=43 // pred_fallthru
        _
    $region44: #{block_forward.21} parent=5 // pred_fallthru
      _
    %p5833 = scmp.le.s32.totalorder 2, %s12
    // Predicated region
    $region49: #{block_forward.21} parent=5 // pred_check
      %p5834 = pneg %p5833
    $region50: #{block_forward.21} parent=5 // pred_check_branch
      %5836 = sbr.rel (%p5834) target = $region52
    $region51: #{block_forward.21} parent=5 // pred_region
      %s5837 = ssub.s32 %s12, 2
      // Predicated region
      $region53: #{block_forward.21} parent=51 // pred_check
        %p5838 = pneg %p223
      $region54: #{block_forward.21} parent=51 // pred_check_branch
        %5840 = sbr.rel (%p5838) target = $region56
      $region55: #{block_forward.21} parent=51 // pred_region
        %p5841 = scmp.lt.s32.totalorder %s23, 1
        %s5842 = scalar_select %p5841, %s23, 1
        %p5843 = scmp.lt.s32.totalorder %s24, 0
        %s5844 = scalar_select %p5843, %s24, 0
        %s5845 = smul.addr %s5842, 2
        %s5846 = sadd.s32 %s5844, %s5845
        %s5847 = smul.addr %s5846, 4
        %s5848 = scalar_lea.vmem %s6, %s5847
      $region56: #{block_forward.21} parent=51 // pred_fallthru
        _
    $region52: #{block_forward.21} parent=5 // pred_fallthru
      _
  $region6: #{block_forward.21} parent=0 // loop_footer
    %s16 = sadd.s32 1, %s12
  $region7: #{block_forward.21} parent=0 // loop_footer_branch
    %11 = sbr.rel target = $region3
  $region8: #{block_forward.21} parent=0 // loop_exit
    _

</llo_original>
